<compile_context>
chip_gen: v6e
topology: v6e:2x2x1
jax: 0.10.0
libtpu: 0.0.40
codegen_flags: <defaults>
</compile_context>

<pallas_src>
import math

import jax
import jax.numpy as jnp
from jax import lax
from jax.experimental import pallas as pl
from jax.experimental.pallas import tpu as pltpu

# ----------------------------- small config ---------------------------------
B = 2            # batch
S = 40           # seq length (forward implies S >= 38: h[:, 1:38, :] = image)
IMG_TOKENS = 37  # tokens 1..37 are overwritten with image_embeds
H = 32           # hidden_size
NH = 4           # heads
DH = H // NH     # 8
FF = 4 * H       # 128, PositionWiseFeedForward inner dim
L = 2            # n_layers
LN_EPS = 1e-12


# ------------------------------ in-kernel math -------------------------------
def _layernorm(x, gamma, beta):
    # x: (rows, H); gamma/beta: (1, H). eps = 1e-12 as in the reference.
    mu = jnp.mean(x, axis=-1, keepdims=True)
    xc = x - mu
    var = jnp.mean(xc * xc, axis=-1, keepdims=True)
    return xc * lax.rsqrt(var + LN_EPS) * gamma + beta


def _erf(x):
    # TODO(synk): torch.erf has no guaranteed Mosaic primitive; use the
    # Abramowitz-Stegun 7.1.26 rational approximation (exp-based, |err|<1.5e-7,
    # plus the approx EUP reciprocal suggested by the perf review).
    a1, a2, a3, a4, a5 = 0.254829592, -0.284496736, 1.421413741, -1.453152027, 1.061405429
    p = 0.3275911
    sgn = jnp.where(x >= 0.0, 1.0, -1.0)
    ax = jnp.abs(x)
    t = pl.reciprocal(1.0 + p * ax, approx=True)
    poly = ((((a5 * t + a4) * t + a3) * t + a2) * t + a1) * t
    return sgn * (1.0 - poly * jnp.exp(-ax * ax))


def _gelu(x):
    # gelu(x) = x * 0.5 * (1 + erf(x / sqrt(2)))  -- matches the reference.
    return x * 0.5 * (1.0 + _erf(x * (1.0 / math.sqrt(2.0))))


# --------------------------------- kernel ------------------------------------
def _transformer_kernel(h_ref, mask_ref, g_ref, be_ref,
                        wq_ref, bq_ref, wk_ref, bk_ref, wv_ref, bv_ref,
                        wo_ref, bo_ref, w1_ref, b1_ref, w2_ref, b2_ref,
                        hs_ref, sc_ref):
    # h_ref:    (B, S, H)           input hidden states (image slots already set)
    # mask_ref: (B, 1, S)           float attention mask (1 = keep, 0 = pad)
    # hs_ref:   (L, B, S, H)        per-layer hidden states
    # sc_ref:   (L, B, NH, S, S)    per-layer attention probabilities (final layout)
    h2d = h_ref[...].reshape(B * S, H)                       # batch folded into rows
    # key-mask bias, broadcast ONCE (hoisted out of the L*NH loops)
    neg_b = jnp.broadcast_to((-10000.0) * (1.0 - mask_ref[...]), (B, S, S))
    scale = 1.0 / math.sqrt(DH)

    for l in range(L):                                       # static unroll, share='none'
        gamma = g_ref[l]                                     # (1, H)   norm1 (shared
        beta = be_ref[l]                                     #          pre-attn / pre-ffn)

        # ---- multi-head self attention (pre-norm) ----
        xn = _layernorm(h2d, gamma, beta)                    # (B*S, H)
        # fused full-width projections: 3 MXU matmuls per layer instead of 12
        q_full = jnp.dot(xn, wq_ref[l], preferred_element_type=jnp.float32) + bq_ref[l]
        k_full = jnp.dot(xn, wk_ref[l], preferred_element_type=jnp.float32) + bk_ref[l]
        v_full = jnp.dot(xn, wv_ref[l], preferred_element_type=jnp.float32) + bv_ref[l]

        ctx_heads = []
        for hh in range(NH):                                 # static unroll over heads
            lo = hh * DH
            q3 = q_full[:, lo:lo + DH].reshape(B, S, DH)     # sublane-aligned reshape
            k3 = k_full[:, lo:lo + DH].reshape(B, S, DH)
            v3 = v_full[:, lo:lo + DH].reshape(B, S, DH)

            s = jnp.einsum('bqd,bkd->bqk', q3, k3,
                           preferred_element_type=jnp.float32) * scale   # (B, S, S)
            s = s + neg_b                                    # scores -= 10000*(1-mask)
            s = s - jnp.max(s, axis=-1, keepdims=True)
            p = jnp.exp(s)
            # exact softmax normalization (parity with torch.softmax)
            p = p * pl.reciprocal(jnp.sum(p, axis=-1, keepdims=True), approx=False)
            for b_i in range(B):                             # write in final layout
                sc_ref[l, b_i, hh] = p[b_i]

            ctx = jnp.einsum('bqk,bkd->bqd', p, v3,
                             preferred_element_type=jnp.float32)         # (B, S, DH)
            ctx_heads.append(ctx.reshape(B * S, DH))

        # head merge along the lane axis + ONE output-projection matmul
        ctx_all = jnp.concatenate(ctx_heads, axis=-1)        # (B*S, H), head-major cols
        proj = jnp.dot(ctx_all, wo_ref[l], preferred_element_type=jnp.float32) + bo_ref[l]
        out1 = h2d + proj                                    # residual (dropout=identity)

        # ---- position-wise feed forward (pre-norm, same norm1 params) ----
        xn2 = _layernorm(out1, gamma, beta)
        f = jnp.dot(xn2, w1_ref[l], preferred_element_type=jnp.float32) + b1_ref[l]   # (B*S, 128)
        f = _gelu(f)
        f = jnp.dot(f, w2_ref[l], preferred_element_type=jnp.float32) + b2_ref[l]     # (B*S, H)
        h2d = out1 + f                                       # residual (dropout=identity)

        hs_ref[l] = h2d.reshape(B, S, H)                     # save layer hidden state


# ------------------------------- wrapper --------------------------------------
@jax.jit
def transformer_forward(image_embeds, h, mask, params):
    # TODO(synk): the in-place slice write `h[:, 1:38, :] = image_embeds` stays
    # as one fused XLA dynamic-update-slice inside this jit; folding it into the
    # kernel would require an unaligned sublane-window store for a ~10 KiB gain.
    h = h.at[:, 1:1 + IMG_TOKENS, :].set(image_embeds)
    mask3 = mask.astype(jnp.float32).reshape(B, 1, S)

    vmem = lambda: pl.BlockSpec(memory_space=pltpu.MemorySpace.VMEM)
    hs, sc = pl.pallas_call(
        _transformer_kernel,
        out_shape=(
            jax.ShapeDtypeStruct((L, B, S, H), jnp.float32),       # hidden states
            jax.ShapeDtypeStruct((L, B, NH, S, S), jnp.float32),   # attn probs (final layout)
        ),
        in_specs=[vmem() for _ in range(16)],
        out_specs=(vmem(), vmem()),
    )(h, mask3,
      params["gamma"], params["beta"],
      params["wq"], params["bq"], params["wk"], params["bk"],
      params["wv"], params["bv"], params["wo"], params["bo"],
      params["w1"], params["b1"], params["w2"], params["b2"])

    return hs, sc


# ------------------------------ parameters ------------------------------------
def init_params(key):
    ks = jax.random.split(key, 12)

    def n(k, shape, scale=0.02):
        return scale * jax.random.normal(k, shape, jnp.float32)

    # math-convention (in, out) weights; q/k/v output columns and the output
    # projection's input rows are head-major (head h -> cols/rows h*DH:(h+1)*DH),
    # matching split_last / merge_last in the PyTorch reference.
    return dict(
        gamma=jnp.ones((L, 1, H), jnp.float32),   # LayerNorm default init
        beta=jnp.zeros((L, 1, H), jnp.float32),
        wq=n(ks[0], (L, H, H)), bq=n(ks[1], (L, 1, H)),
        wk=n(ks[2], (L, H, H)), bk=n(ks[3], (L, 1, H)),
        wv=n(ks[4], (L, H, H)), bv=n(ks[5], (L, 1, H)),
        wo=n(ks[6], (L, H, H)), bo=n(ks[7], (L, 1, H)),
        w1=n(ks[8], (L, H, FF)), b1=n(ks[9], (L, 1, FF)),
        w2=n(ks[10], (L, FF, H)), b2=n(ks[11], (L, 1, H)),
    )


# ---------------------------------- main ---------------------------------------
if __name__ == "__main__":
    key = jax.random.PRNGKey(0)
    k_img, k_h, k_par = jax.random.split(key, 3)

    image_embeds = jax.random.normal(k_img, (B, IMG_TOKENS, H), jnp.float32)
    h0 = jax.random.normal(k_h, (B, S, H), jnp.float32)
    # BERT-style input mask: first `length` tokens valid, rest padding.
    lengths = jnp.array([S, 38], dtype=jnp.int32)
    mask = (jnp.arange(S, dtype=jnp.int32)[None, :] < lengths[:, None]).astype(jnp.float32)

    params = init_params(k_par)

    hidden_states, attn_scores = transformer_forward(image_embeds, h0, mask, params)
    jax.block_until_ready((hidden_states, attn_scores))

    assert hidden_states.shape == (L, B, S, H)
    assert attn_scores.shape == (L, B, NH, S, S)
    assert bool(jnp.all(jnp.isfinite(hidden_states)))
    assert bool(jnp.all(jnp.isfinite(attn_scores)))
    # exact softmax normalization -> rows sum to 1 within fp32 rounding
    assert bool(jnp.allclose(jnp.sum(attn_scores, axis=-1), 1.0, atol=1e-4))
    print("KERNEL_OK")
</pallas_src>

<mosaic_0001>
module attributes {stable_mosaic.version = 11 : i64} {
  func.func @_transformer_kernel(%arg0: memref<2x40x32xf32, #tpu.memory_space<vmem>>, %arg1: memref<2x1x40xf32, #tpu.memory_space<vmem>>, %arg2: memref<2x1x32xf32, #tpu.memory_space<vmem>>, %arg3: memref<2x1x32xf32, #tpu.memory_space<vmem>>, %arg4: memref<2x32x32xf32, #tpu.memory_space<vmem>>, %arg5: memref<2x1x32xf32, #tpu.memory_space<vmem>>, %arg6: memref<2x32x32xf32, #tpu.memory_space<vmem>>, %arg7: memref<2x1x32xf32, #tpu.memory_space<vmem>>, %arg8: memref<2x32x32xf32, #tpu.memory_space<vmem>>, %arg9: memref<2x1x32xf32, #tpu.memory_space<vmem>>, %arg10: memref<2x32x32xf32, #tpu.memory_space<vmem>>, %arg11: memref<2x1x32xf32, #tpu.memory_space<vmem>>, %arg12: memref<2x32x128xf32, #tpu.memory_space<vmem>>, %arg13: memref<2x1x128xf32, #tpu.memory_space<vmem>>, %arg14: memref<2x128x32xf32, #tpu.memory_space<vmem>>, %arg15: memref<2x1x32xf32, #tpu.memory_space<vmem>>, %arg16: memref<2x2x40x32xf32, #tpu.memory_space<vmem>>, %arg17: memref<2x2x4x40x40xf32, #tpu.memory_space<vmem>>) attributes {dimension_semantics = [], scalar_prefetch = 0 : i64, scratch_operands = 0 : i64, tpu.core_type = #tpu.core_type<tc>} {
    %c0 = arith.constant 0 : index
    %c0_0 = arith.constant 0 : index
    %c0_1 = arith.constant 0 : index
    %0 = vector.load %arg0[%c0, %c0_0, %c0_1] : memref<2x40x32xf32, #tpu.memory_space<vmem>>, vector<2x40x32xf32>
    %1 = vector.shape_cast %0 : vector<2x40x32xf32> to vector<80x32xf32>
    %c0_2 = arith.constant 0 : index
    %c0_3 = arith.constant 0 : index
    %c0_4 = arith.constant 0 : index
    %2 = vector.load %arg1[%c0_2, %c0_3, %c0_4] : memref<2x1x40xf32, #tpu.memory_space<vmem>>, vector<2x1x40xf32>
    %cst = arith.constant 1.000000e+00 : f32
    %3 = vector.broadcast %cst : f32 to vector<2x1x40xf32>
    %4 = arith.subf %3, %2 : vector<2x1x40xf32>
    %cst_5 = arith.constant -1.000000e+04 : f32
    %5 = vector.broadcast %cst_5 : f32 to vector<2x1x40xf32>
    %6 = arith.mulf %5, %4 : vector<2x1x40xf32>
    %7 = vector.shape_cast %6 : vector<2x1x40xf32> to vector<2x1x40xf32>
    %8 = vector.broadcast %7 : vector<2x1x40xf32> to vector<2x40x40xf32>
    %c0_6 = arith.constant 0 : index
    %c0_7 = arith.constant 0 : index
    %c0_8 = arith.constant 0 : index
    %9 = vector.load %arg2[%c0_6, %c0_7, %c0_8] : memref<2x1x32xf32, #tpu.memory_space<vmem>>, vector<1x1x32xf32>
    %10 = vector.shape_cast %9 : vector<1x1x32xf32> to vector<1x32xf32>
    %c0_9 = arith.constant 0 : index
    %c0_10 = arith.constant 0 : index
    %c0_11 = arith.constant 0 : index
    %11 = vector.load %arg3[%c0_9, %c0_10, %c0_11] : memref<2x1x32xf32, #tpu.memory_space<vmem>>, vector<1x1x32xf32>
    %12 = vector.shape_cast %11 : vector<1x1x32xf32> to vector<1x32xf32>
    %cst_12 = arith.constant dense<0.000000e+00> : vector<80xf32>
    %13 = vector.multi_reduction <add>, %1, %cst_12 [1] : vector<80x32xf32> to vector<80xf32>
    %14 = vector.shape_cast %13 : vector<80xf32> to vector<80x1xf32>
    %cst_13 = arith.constant 3.200000e+01 : f32
    %15 = vector.broadcast %cst_13 : f32 to vector<80x1xf32>
    %16 = arith.divf %14, %15 : vector<80x1xf32>
    %17 = vector.broadcast %16 : vector<80x1xf32> to vector<80x32xf32>
    %18 = arith.subf %1, %17 : vector<80x32xf32>
    %19 = arith.mulf %18, %18 : vector<80x32xf32>
    %cst_14 = arith.constant dense<0.000000e+00> : vector<80xf32>
    %20 = vector.multi_reduction <add>, %19, %cst_14 [1] : vector<80x32xf32> to vector<80xf32>
    %21 = vector.shape_cast %20 : vector<80xf32> to vector<80x1xf32>
    %cst_15 = arith.constant 3.200000e+01 : f32
    %22 = vector.broadcast %cst_15 : f32 to vector<80x1xf32>
    %23 = arith.divf %21, %22 : vector<80x1xf32>
    %cst_16 = arith.constant 9.99999996E-13 : f32
    %24 = vector.broadcast %cst_16 : f32 to vector<80x1xf32>
    %25 = arith.addf %23, %24 : vector<80x1xf32>
    %26 = math.rsqrt %25 : vector<80x1xf32>
    %27 = vector.broadcast %26 : vector<80x1xf32> to vector<80x32xf32>
    %28 = arith.mulf %18, %27 : vector<80x32xf32>
    %29 = vector.broadcast %10 : vector<1x32xf32> to vector<80x32xf32>
    %30 = arith.mulf %28, %29 : vector<80x32xf32>
    %31 = vector.broadcast %12 : vector<1x32xf32> to vector<80x32xf32>
    %32 = arith.addf %30, %31 : vector<80x32xf32>
    %c0_17 = arith.constant 0 : index
    %c0_18 = arith.constant 0 : index
    %c0_19 = arith.constant 0 : index
    %33 = vector.load %arg4[%c0_17, %c0_18, %c0_19] : memref<2x32x32xf32, #tpu.memory_space<vmem>>, vector<1x32x32xf32>
    %34 = vector.shape_cast %33 : vector<1x32x32xf32> to vector<32x32xf32>
    %cst_20 = arith.constant dense<0.000000e+00> : vector<80x32xf32>
    %35 = tpu.matmul %32, %34, %cst_20 {dimension_numbers = #tpu.dot_dimension_numbers<[1], [0], [0], [1], [0, 0, 1, 1], [], []>} : vector<80x32xf32>, vector<32x32xf32>, vector<80x32xf32> -> vector<80x32xf32>
    %c0_21 = arith.constant 0 : index
    %c0_22 = arith.constant 0 : index
    %c0_23 = arith.constant 0 : index
    %36 = vector.load %arg5[%c0_21, %c0_22, %c0_23] : memref<2x1x32xf32, #tpu.memory_space<vmem>>, vector<1x1x32xf32>
    %37 = vector.shape_cast %36 : vector<1x1x32xf32> to vector<1x32xf32>
    %38 = vector.broadcast %37 : vector<1x32xf32> to vector<80x32xf32>
    %39 = arith.addf %35, %38 : vector<80x32xf32>
    %c0_24 = arith.constant 0 : index
    %c0_25 = arith.constant 0 : index
    %c0_26 = arith.constant 0 : index
    %40 = vector.load %arg6[%c0_24, %c0_25, %c0_26] : memref<2x32x32xf32, #tpu.memory_space<vmem>>, vector<1x32x32xf32>
    %41 = vector.shape_cast %40 : vector<1x32x32xf32> to vector<32x32xf32>
    %cst_27 = arith.constant dense<0.000000e+00> : vector<80x32xf32>
    %42 = tpu.matmul %32, %41, %cst_27 {dimension_numbers = #tpu.dot_dimension_numbers<[1], [0], [0], [1], [0, 0, 1, 1], [], []>} : vector<80x32xf32>, vector<32x32xf32>, vector<80x32xf32> -> vector<80x32xf32>
    %c0_28 = arith.constant 0 : index
    %c0_29 = arith.constant 0 : index
    %c0_30 = arith.constant 0 : index
    %43 = vector.load %arg7[%c0_28, %c0_29, %c0_30] : memref<2x1x32xf32, #tpu.memory_space<vmem>>, vector<1x1x32xf32>
    %44 = vector.shape_cast %43 : vector<1x1x32xf32> to vector<1x32xf32>
    %45 = vector.broadcast %44 : vector<1x32xf32> to vector<80x32xf32>
    %46 = arith.addf %42, %45 : vector<80x32xf32>
    %c0_31 = arith.constant 0 : index
    %c0_32 = arith.constant 0 : index
    %c0_33 = arith.constant 0 : index
    %47 = vector.load %arg8[%c0_31, %c0_32, %c0_33] : memref<2x32x32xf32, #tpu.memory_space<vmem>>, vector<1x32x32xf32>
    %48 = vector.shape_cast %47 : vector<1x32x32xf32> to vector<32x32xf32>
    %cst_34 = arith.constant dense<0.000000e+00> : vector<80x32xf32>
    %49 = tpu.matmul %32, %48, %cst_34 {dimension_numbers = #tpu.dot_dimension_numbers<[1], [0], [0], [1], [0, 0, 1, 1], [], []>} : vector<80x32xf32>, vector<32x32xf32>, vector<80x32xf32> -> vector<80x32xf32>
    %c0_35 = arith.constant 0 : index
    %c0_36 = arith.constant 0 : index
    %c0_37 = arith.constant 0 : index
    %50 = vector.load %arg9[%c0_35, %c0_36, %c0_37] : memref<2x1x32xf32, #tpu.memory_space<vmem>>, vector<1x1x32xf32>
    %51 = vector.shape_cast %50 : vector<1x1x32xf32> to vector<1x32xf32>
    %52 = vector.broadcast %51 : vector<1x32xf32> to vector<80x32xf32>
    %53 = arith.addf %49, %52 : vector<80x32xf32>
    %54 = vector.extract_strided_slice %39 {offsets = [0, 0], sizes = [80, 8], strides = [1, 1]} : vector<80x32xf32> to vector<80x8xf32>
    %55 = vector.shape_cast %54 : vector<80x8xf32> to vector<2x40x8xf32>
    %56 = vector.extract_strided_slice %46 {offsets = [0, 0], sizes = [80, 8], strides = [1, 1]} : vector<80x32xf32> to vector<80x8xf32>
    %57 = vector.shape_cast %56 : vector<80x8xf32> to vector<2x40x8xf32>
    %58 = vector.extract_strided_slice %53 {offsets = [0, 0], sizes = [80, 8], strides = [1, 1]} : vector<80x32xf32> to vector<80x8xf32>
    %59 = vector.shape_cast %58 : vector<80x8xf32> to vector<2x40x8xf32>
    "tpu.trace_start"() <{level = 10 : i32, message = "bqd,bkd->bqk"}> : () -> ()
    %cst_38 = arith.constant dense<0.000000e+00> : vector<2x40x40xf32>
    %60 = tpu.matmul %55, %57, %cst_38 {dimension_numbers = #tpu.dot_dimension_numbers<[2], [2], [1], [1], [0, 0, 0, 1, 1, 1], [0], [0]>} : vector<2x40x8xf32>, vector<2x40x8xf32>, vector<2x40x40xf32> -> vector<2x40x40xf32>
    "tpu.trace_stop"() : () -> ()
    %cst_39 = arith.constant 0.353553385 : f32
    %61 = vector.broadcast %cst_39 : f32 to vector<2x40x40xf32>
    %62 = arith.mulf %60, %61 : vector<2x40x40xf32>
    %63 = arith.addf %62, %8 : vector<2x40x40xf32>
    %cst_40 = arith.constant dense<0xFF800000> : vector<2x40xf32>
    %64 = vector.multi_reduction <maximumf>, %63, %cst_40 [2] : vector<2x40x40xf32> to vector<2x40xf32>
    %65 = vector.shape_cast %64 : vector<2x40xf32> to vector<2x40x1xf32>
    %66 = vector.broadcast %65 : vector<2x40x1xf32> to vector<2x40x40xf32>
    %67 = arith.subf %63, %66 : vector<2x40x40xf32>
    %68 = math.exp %67 : vector<2x40x40xf32>
    %cst_41 = arith.constant dense<0.000000e+00> : vector<2x40xf32>
    %69 = vector.multi_reduction <add>, %68, %cst_41 [2] : vector<2x40x40xf32> to vector<2x40xf32>
    %70 = vector.shape_cast %69 : vector<2x40xf32> to vector<2x40x1xf32>
    %71 = tpu.reciprocal %70 : vector<2x40x1xf32> -> vector<2x40x1xf32>
    %72 = vector.broadcast %71 : vector<2x40x1xf32> to vector<2x40x40xf32>
    %73 = arith.mulf %68, %72 : vector<2x40x40xf32>
    %74 = vector.extract_strided_slice %73 {offsets = [0, 0, 0], sizes = [1, 40, 40], strides = [1, 1, 1]} : vector<2x40x40xf32> to vector<1x40x40xf32>
    %75 = vector.shape_cast %74 : vector<1x40x40xf32> to vector<40x40xf32>
    %c0_42 = arith.constant 0 : index
    %c0_43 = arith.constant 0 : index
    %c0_44 = arith.constant 0 : index
    %c0_45 = arith.constant 0 : index
    %c0_46 = arith.constant 0 : index
    %76 = vector.load %arg17[%c0_42, %c0_43, %c0_44, %c0_45, %c0_46] : memref<2x2x4x40x40xf32, #tpu.memory_space<vmem>>, vector<1x1x1x40x40xf32>
    %77 = vector.shape_cast %76 : vector<1x1x1x40x40xf32> to vector<40x40xf32>
    %78 = vector.shape_cast %75 : vector<40x40xf32> to vector<1x1x1x40x40xf32>
    tpu.vector_store %arg17[%c0_42, %c0_43, %c0_44, %c0_45, %c0_46], %78 {strides = array<i32>} : memref<2x2x4x40x40xf32, #tpu.memory_space<vmem>>, vector<1x1x1x40x40xf32>,
    %79 = vector.extract_strided_slice %73 {offsets = [1, 0, 0], sizes = [1, 40, 40], strides = [1, 1, 1]} : vector<2x40x40xf32> to vector<1x40x40xf32>
    %80 = vector.shape_cast %79 : vector<1x40x40xf32> to vector<40x40xf32>
    %c0_47 = arith.constant 0 : index
    %c1 = arith.constant 1 : index
    %c0_48 = arith.constant 0 : index
    %c0_49 = arith.constant 0 : index
    %c0_50 = arith.constant 0 : index
    %81 = vector.load %arg17[%c0_47, %c1, %c0_48, %c0_49, %c0_50] : memref<2x2x4x40x40xf32, #tpu.memory_space<vmem>>, vector<1x1x1x40x40xf32>
    %82 = vector.shape_cast %81 : vector<1x1x1x40x40xf32> to vector<40x40xf32>
    %83 = vector.shape_cast %80 : vector<40x40xf32> to vector<1x1x1x40x40xf32>
    tpu.vector_store %arg17[%c0_47, %c1, %c0_48, %c0_49, %c0_50], %83 {strides = array<i32>} : memref<2x2x4x40x40xf32, #tpu.memory_space<vmem>>, vector<1x1x1x40x40xf32>,
    "tpu.trace_start"() <{level = 10 : i32, message = "bqk,bkd->bqd"}> : () -> ()
    %cst_51 = arith.constant dense<0.000000e+00> : vector<2x40x8xf32>
    %84 = tpu.matmul %73, %59, %cst_51 {dimension_numbers = #tpu.dot_dimension_numbers<[2], [1], [1], [2], [0, 0, 0, 1, 1, 2], [0], [0]>} : vector<2x40x40xf32>, vector<2x40x8xf32>, vector<2x40x8xf32> -> vector<2x40x8xf32>
    "tpu.trace_stop"() : () -> ()
    %85 = vector.shape_cast %84 : vector<2x40x8xf32> to vector<80x8xf32>
    %86 = vector.extract_strided_slice %39 {offsets = [0, 8], sizes = [80, 8], strides = [1, 1]} : vector<80x32xf32> to vector<80x8xf32>
    %87 = vector.shape_cast %86 : vector<80x8xf32> to vector<2x40x8xf32>
    %88 = vector.extract_strided_slice %46 {offsets = [0, 8], sizes = [80, 8], strides = [1, 1]} : vector<80x32xf32> to vector<80x8xf32>
    %89 = vector.shape_cast %88 : vector<80x8xf32> to vector<2x40x8xf32>
    %90 = vector.extract_strided_slice %53 {offsets = [0, 8], sizes = [80, 8], strides = [1, 1]} : vector<80x32xf32> to vector<80x8xf32>
    %91 = vector.shape_cast %90 : vector<80x8xf32> to vector<2x40x8xf32>
    "tpu.trace_start"() <{level = 10 : i32, message = "bqd,bkd->bqk"}> : () -> ()
    %cst_52 = arith.constant dense<0.000000e+00> : vector<2x40x40xf32>
    %92 = tpu.matmul %87, %89, %cst_52 {dimension_numbers = #tpu.dot_dimension_numbers<[2], [2], [1], [1], [0, 0, 0, 1, 1, 1], [0], [0]>} : vector<2x40x8xf32>, vector<2x40x8xf32>, vector<2x40x40xf32> -> vector<2x40x40xf32>
    "tpu.trace_stop"() : () -> ()
    %cst_53 = arith.constant 0.353553385 : f32
    %93 = vector.broadcast %cst_53 : f32 to vector<2x40x40xf32>
    %94 = arith.mulf %92, %93 : vector<2x40x40xf32>
    %95 = arith.addf %94, %8 : vector<2x40x40xf32>
    %cst_54 = arith.constant dense<0xFF800000> : vector<2x40xf32>
    %96 = vector.multi_reduction <maximumf>, %95, %cst_54 [2] : vector<2x40x40xf32> to vector<2x40xf32>
    %97 = vector.shape_cast %96 : vector<2x40xf32> to vector<2x40x1xf32>
    %98 = vector.broadcast %97 : vector<2x40x1xf32> to vector<2x40x40xf32>
    %99 = arith.subf %95, %98 : vector<2x40x40xf32>
    %100 = math.exp %99 : vector<2x40x40xf32>
    %cst_55 = arith.constant dense<0.000000e+00> : vector<2x40xf32>
    %101 = vector.multi_reduction <add>, %100, %cst_55 [2] : vector<2x40x40xf32> to vector<2x40xf32>
    %102 = vector.shape_cast %101 : vector<2x40xf32> to vector<2x40x1xf32>
    %103 = tpu.reciprocal %102 : vector<2x40x1xf32> -> vector<2x40x1xf32>
    %104 = vector.broadcast %103 : vector<2x40x1xf32> to vector<2x40x40xf32>
    %105 = arith.mulf %100, %104 : vector<2x40x40xf32>
    %106 = vector.extract_strided_slice %105 {offsets = [0, 0, 0], sizes = [1, 40, 40], strides = [1, 1, 1]} : vector<2x40x40xf32> to vector<1x40x40xf32>
    %107 = vector.shape_cast %106 : vector<1x40x40xf32> to vector<40x40xf32>
    %c0_56 = arith.constant 0 : index
    %c0_57 = arith.constant 0 : index
    %c1_58 = arith.constant 1 : index
    %c0_59 = arith.constant 0 : index
    %c0_60 = arith.constant 0 : index
    %108 = vector.load %arg17[%c0_56, %c0_57, %c1_58, %c0_59, %c0_60] : memref<2x2x4x40x40xf32, #tpu.memory_space<vmem>>, vector<1x1x1x40x40xf32>
    %109 = vector.shape_cast %108 : vector<1x1x1x40x40xf32> to vector<40x40xf32>
    %110 = vector.shape_cast %107 : vector<40x40xf32> to vector<1x1x1x40x40xf32>
    tpu.vector_store %arg17[%c0_56, %c0_57, %c1_58, %c0_59, %c0_60], %110 {strides = array<i32>} : memref<2x2x4x40x40xf32, #tpu.memory_space<vmem>>, vector<1x1x1x40x40xf32>,
    %111 = vector.extract_strided_slice %105 {offsets = [1, 0, 0], sizes = [1, 40, 40], strides = [1, 1, 1]} : vector<2x40x40xf32> to vector<1x40x40xf32>
    %112 = vector.shape_cast %111 : vector<1x40x40xf32> to vector<40x40xf32>
    %c0_61 = arith.constant 0 : index
    %c1_62 = arith.constant 1 : index
    %c1_63 = arith.constant 1 : index
    %c0_64 = arith.constant 0 : index
    %c0_65 = arith.constant 0 : index
    %113 = vector.load %arg17[%c0_61, %c1_62, %c1_63, %c0_64, %c0_65] : memref<2x2x4x40x40xf32, #tpu.memory_space<vmem>>, vector<1x1x1x40x40xf32>
    %114 = vector.shape_cast %113 : vector<1x1x1x40x40xf32> to vector<40x40xf32>
    %115 = vector.shape_cast %112 : vector<40x40xf32> to vector<1x1x1x40x40xf32>
    tpu.vector_store %arg17[%c0_61, %c1_62, %c1_63, %c0_64, %c0_65], %115 {strides = array<i32>} : memref<2x2x4x40x40xf32, #tpu.memory_space<vmem>>, vector<1x1x1x40x40xf32>,
    "tpu.trace_start"() <{level = 10 : i32, message = "bqk,bkd->bqd"}> : () -> ()
    %cst_66 = arith.constant dense<0.000000e+00> : vector<2x40x8xf32>
    %116 = tpu.matmul %105, %91, %cst_66 {dimension_numbers = #tpu.dot_dimension_numbers<[2], [1], [1], [2], [0, 0, 0, 1, 1, 2], [0], [0]>} : vector<2x40x40xf32>, vector<2x40x8xf32>, vector<2x40x8xf32> -> vector<2x40x8xf32>
    "tpu.trace_stop"() : () -> ()
    %117 = vector.shape_cast %116 : vector<2x40x8xf32> to vector<80x8xf32>
    %118 = vector.extract_strided_slice %39 {offsets = [0, 16], sizes = [80, 8], strides = [1, 1]} : vector<80x32xf32> to vector<80x8xf32>
    %119 = vector.shape_cast %118 : vector<80x8xf32> to vector<2x40x8xf32>
    %120 = vector.extract_strided_slice %46 {offsets = [0, 16], sizes = [80, 8], strides = [1, 1]} : vector<80x32xf32> to vector<80x8xf32>
    %121 = vector.shape_cast %120 : vector<80x8xf32> to vector<2x40x8xf32>
    %122 = vector.extract_strided_slice %53 {offsets = [0, 16], sizes = [80, 8], strides = [1, 1]} : vector<80x32xf32> to vector<80x8xf32>
    %123 = vector.shape_cast %122 : vector<80x8xf32> to vector<2x40x8xf32>
    "tpu.trace_start"() <{level = 10 : i32, message = "bqd,bkd->bqk"}> : () -> ()
    %cst_67 = arith.constant dense<0.000000e+00> : vector<2x40x40xf32>
    %124 = tpu.matmul %119, %121, %cst_67 {dimension_numbers = #tpu.dot_dimension_numbers<[2], [2], [1], [1], [0, 0, 0, 1, 1, 1], [0], [0]>} : vector<2x40x8xf32>, vector<2x40x8xf32>, vector<2x40x40xf32> -> vector<2x40x40xf32>
    "tpu.trace_stop"() : () -> ()
    %cst_68 = arith.constant 0.353553385 : f32
    %125 = vector.broadcast %cst_68 : f32 to vector<2x40x40xf32>
    %126 = arith.mulf %124, %125 : vector<2x40x40xf32>
    %127 = arith.addf %126, %8 : vector<2x40x40xf32>
    %cst_69 = arith.constant dense<0xFF800000> : vector<2x40xf32>
    %128 = vector.multi_reduction <maximumf>, %127, %cst_69 [2] : vector<2x40x40xf32> to vector<2x40xf32>
    %129 = vector.shape_cast %128 : vector<2x40xf32> to vector<2x40x1xf32>
    %130 = vector.broadcast %129 : vector<2x40x1xf32> to vector<2x40x40xf32>
    %131 = arith.subf %127, %130 : vector<2x40x40xf32>
    %132 = math.exp %131 : vector<2x40x40xf32>
    %cst_70 = arith.constant dense<0.000000e+00> : vector<2x40xf32>
    %133 = vector.multi_reduction <add>, %132, %cst_70 [2] : vector<2x40x40xf32> to vector<2x40xf32>
    %134 = vector.shape_cast %133 : vector<2x40xf32> to vector<2x40x1xf32>
    %135 = tpu.reciprocal %134 : vector<2x40x1xf32> -> vector<2x40x1xf32>
    %136 = vector.broadcast %135 : vector<2x40x1xf32> to vector<2x40x40xf32>
    %137 = arith.mulf %132, %136 : vector<2x40x40xf32>
    %138 = vector.extract_strided_slice %137 {offsets = [0, 0, 0], sizes = [1, 40, 40], strides = [1, 1, 1]} : vector<2x40x40xf32> to vector<1x40x40xf32>
    %139 = vector.shape_cast %138 : vector<1x40x40xf32> to vector<40x40xf32>
    %c0_71 = arith.constant 0 : index
    %c0_72 = arith.constant 0 : index
    %c2 = arith.constant 2 : index
    %c0_73 = arith.constant 0 : index
    %c0_74 = arith.constant 0 : index
    %140 = vector.load %arg17[%c0_71, %c0_72, %c2, %c0_73, %c0_74] : memref<2x2x4x40x40xf32, #tpu.memory_space<vmem>>, vector<1x1x1x40x40xf32>
    %141 = vector.shape_cast %140 : vector<1x1x1x40x40xf32> to vector<40x40xf32>
    %142 = vector.shape_cast %139 : vector<40x40xf32> to vector<1x1x1x40x40xf32>
    tpu.vector_store %arg17[%c0_71, %c0_72, %c2, %c0_73, %c0_74], %142 {strides = array<i32>} : memref<2x2x4x40x40xf32, #tpu.memory_space<vmem>>, vector<1x1x1x40x40xf32>,
    %143 = vector.extract_strided_slice %137 {offsets = [1, 0, 0], sizes = [1, 40, 40], strides = [1, 1, 1]} : vector<2x40x40xf32> to vector<1x40x40xf32>
    %144 = vector.shape_cast %143 : vector<1x40x40xf32> to vector<40x40xf32>
    %c0_75 = arith.constant 0 : index
    %c1_76 = arith.constant 1 : index
    %c2_77 = arith.constant 2 : index
    %c0_78 = arith.constant 0 : index
    %c0_79 = arith.constant 0 : index
    %145 = vector.load %arg17[%c0_75, %c1_76, %c2_77, %c0_78, %c0_79] : memref<2x2x4x40x40xf32, #tpu.memory_space<vmem>>, vector<1x1x1x40x40xf32>
    %146 = vector.shape_cast %145 : vector<1x1x1x40x40xf32> to vector<40x40xf32>
    %147 = vector.shape_cast %144 : vector<40x40xf32> to vector<1x1x1x40x40xf32>
    tpu.vector_store %arg17[%c0_75, %c1_76, %c2_77, %c0_78, %c0_79], %147 {strides = array<i32>} : memref<2x2x4x40x40xf32, #tpu.memory_space<vmem>>, vector<1x1x1x40x40xf32>,
    "tpu.trace_start"() <{level = 10 : i32, message = "bqk,bkd->bqd"}> : () -> ()
    %cst_80 = arith.constant dense<0.000000e+00> : vector<2x40x8xf32>
    %148 = tpu.matmul %137, %123, %cst_80 {dimension_numbers = #tpu.dot_dimension_numbers<[2], [1], [1], [2], [0, 0, 0, 1, 1, 2], [0], [0]>} : vector<2x40x40xf32>, vector<2x40x8xf32>, vector<2x40x8xf32> -> vector<2x40x8xf32>
    "tpu.trace_stop"() : () -> ()
    %149 = vector.shape_cast %148 : vector<2x40x8xf32> to vector<80x8xf32>
    %150 = vector.extract_strided_slice %39 {offsets = [0, 24], sizes = [80, 8], strides = [1, 1]} : vector<80x32xf32> to vector<80x8xf32>
    %151 = vector.shape_cast %150 : vector<80x8xf32> to vector<2x40x8xf32>
    %152 = vector.extract_strided_slice %46 {offsets = [0, 24], sizes = [80, 8], strides = [1, 1]} : vector<80x32xf32> to vector<80x8xf32>
    %153 = vector.shape_cast %152 : vector<80x8xf32> to vector<2x40x8xf32>
    %154 = vector.extract_strided_slice %53 {offsets = [0, 24], sizes = [80, 8], strides = [1, 1]} : vector<80x32xf32> to vector<80x8xf32>
    %155 = vector.shape_cast %154 : vector<80x8xf32> to vector<2x40x8xf32>
    "tpu.trace_start"() <{level = 10 : i32, message = "bqd,bkd->bqk"}> : () -> ()
    %cst_81 = arith.constant dense<0.000000e+00> : vector<2x40x40xf32>
    %156 = tpu.matmul %151, %153, %cst_81 {dimension_numbers = #tpu.dot_dimension_numbers<[2], [2], [1], [1], [0, 0, 0, 1, 1, 1], [0], [0]>} : vector<2x40x8xf32>, vector<2x40x8xf32>, vector<2x40x40xf32> -> vector<2x40x40xf32>
    "tpu.trace_stop"() : () -> ()
    %cst_82 = arith.constant 0.353553385 : f32
    %157 = vector.broadcast %cst_82 : f32 to vector<2x40x40xf32>
    %158 = arith.mulf %156, %157 : vector<2x40x40xf32>
    %159 = arith.addf %158, %8 : vector<2x40x40xf32>
    %cst_83 = arith.constant dense<0xFF800000> : vector<2x40xf32>
    %160 = vector.multi_reduction <maximumf>, %159, %cst_83 [2] : vector<2x40x40xf32> to vector<2x40xf32>
    %161 = vector.shape_cast %160 : vector<2x40xf32> to vector<2x40x1xf32>
    %162 = vector.broadcast %161 : vector<2x40x1xf32> to vector<2x40x40xf32>
    %163 = arith.subf %159, %162 : vector<2x40x40xf32>
    %164 = math.exp %163 : vector<2x40x40xf32>
    %cst_84 = arith.constant dense<0.000000e+00> : vector<2x40xf32>
    %165 = vector.multi_reduction <add>, %164, %cst_84 [2] : vector<2x40x40xf32> to vector<2x40xf32>
    %166 = vector.shape_cast %165 : vector<2x40xf32> to vector<2x40x1xf32>
    %167 = tpu.reciprocal %166 : vector<2x40x1xf32> -> vector<2x40x1xf32>
    %168 = vector.broadcast %167 : vector<2x40x1xf32> to vector<2x40x40xf32>
    %169 = arith.mulf %164, %168 : vector<2x40x40xf32>
    %170 = vector.extract_strided_slice %169 {offsets = [0, 0, 0], sizes = [1, 40, 40], strides = [1, 1, 1]} : vector<2x40x40xf32> to vector<1x40x40xf32>
    %171 = vector.shape_cast %170 : vector<1x40x40xf32> to vector<40x40xf32>
    %c0_85 = arith.constant 0 : index
    %c0_86 = arith.constant 0 : index
    %c3 = arith.constant 3 : index
    %c0_87 = arith.constant 0 : index
    %c0_88 = arith.constant 0 : index
    %172 = vector.load %arg17[%c0_85, %c0_86, %c3, %c0_87, %c0_88] : memref<2x2x4x40x40xf32, #tpu.memory_space<vmem>>, vector<1x1x1x40x40xf32>
    %173 = vector.shape_cast %172 : vector<1x1x1x40x40xf32> to vector<40x40xf32>
    %174 = vector.shape_cast %171 : vector<40x40xf32> to vector<1x1x1x40x40xf32>
    tpu.vector_store %arg17[%c0_85, %c0_86, %c3, %c0_87, %c0_88], %174 {strides = array<i32>} : memref<2x2x4x40x40xf32, #tpu.memory_space<vmem>>, vector<1x1x1x40x40xf32>,
    %175 = vector.extract_strided_slice %169 {offsets = [1, 0, 0], sizes = [1, 40, 40], strides = [1, 1, 1]} : vector<2x40x40xf32> to vector<1x40x40xf32>
    %176 = vector.shape_cast %175 : vector<1x40x40xf32> to vector<40x40xf32>
    %c0_89 = arith.constant 0 : index
    %c1_90 = arith.constant 1 : index
    %c3_91 = arith.constant 3 : index
    %c0_92 = arith.constant 0 : index
    %c0_93 = arith.constant 0 : index
    %177 = vector.load %arg17[%c0_89, %c1_90, %c3_91, %c0_92, %c0_93] : memref<2x2x4x40x40xf32, #tpu.memory_space<vmem>>, vector<1x1x1x40x40xf32>
    %178 = vector.shape_cast %177 : vector<1x1x1x40x40xf32> to vector<40x40xf32>
    %179 = vector.shape_cast %176 : vector<40x40xf32> to vector<1x1x1x40x40xf32>
    tpu.vector_store %arg17[%c0_89, %c1_90, %c3_91, %c0_92, %c0_93], %179 {strides = array<i32>} : memref<2x2x4x40x40xf32, #tpu.memory_space<vmem>>, vector<1x1x1x40x40xf32>,
    "tpu.trace_start"() <{level = 10 : i32, message = "bqk,bkd->bqd"}> : () -> ()
    %cst_94 = arith.constant dense<0.000000e+00> : vector<2x40x8xf32>
    %180 = tpu.matmul %169, %155, %cst_94 {dimension_numbers = #tpu.dot_dimension_numbers<[2], [1], [1], [2], [0, 0, 0, 1, 1, 2], [0], [0]>} : vector<2x40x40xf32>, vector<2x40x8xf32>, vector<2x40x8xf32> -> vector<2x40x8xf32>
    "tpu.trace_stop"() : () -> ()
    %181 = vector.shape_cast %180 : vector<2x40x8xf32> to vector<80x8xf32>
    %182 = tpu.concatenate %85, %117, %149, %181 in 1 : vector<80x8xf32>, vector<80x8xf32>, vector<80x8xf32>, vector<80x8xf32> -> vector<80x32xf32>
    %c0_95 = arith.constant 0 : index
    %c0_96 = arith.constant 0 : index
    %c0_97 = arith.constant 0 : index
    %183 = vector.load %arg10[%c0_95, %c0_96, %c0_97] : memref<2x32x32xf32, #tpu.memory_space<vmem>>, vector<1x32x32xf32>
    %184 = vector.shape_cast %183 : vector<1x32x32xf32> to vector<32x32xf32>
    %cst_98 = arith.constant dense<0.000000e+00> : vector<80x32xf32>
    %185 = tpu.matmul %182, %184, %cst_98 {dimension_numbers = #tpu.dot_dimension_numbers<[1], [0], [0], [1], [0, 0, 1, 1], [], []>} : vector<80x32xf32>, vector<32x32xf32>, vector<80x32xf32> -> vector<80x32xf32>
    %c0_99 = arith.constant 0 : index
    %c0_100 = arith.constant 0 : index
    %c0_101 = arith.constant 0 : index
    %186 = vector.load %arg11[%c0_99, %c0_100, %c0_101] : memref<2x1x32xf32, #tpu.memory_space<vmem>>, vector<1x1x32xf32>
    %187 = vector.shape_cast %186 : vector<1x1x32xf32> to vector<1x32xf32>
    %188 = vector.broadcast %187 : vector<1x32xf32> to vector<80x32xf32>
    %189 = arith.addf %185, %188 : vector<80x32xf32>
    %190 = arith.addf %1, %189 : vector<80x32xf32>
    %cst_102 = arith.constant dense<0.000000e+00> : vector<80xf32>
    %191 = vector.multi_reduction <add>, %190, %cst_102 [1] : vector<80x32xf32> to vector<80xf32>
    %192 = vector.shape_cast %191 : vector<80xf32> to vector<80x1xf32>
    %cst_103 = arith.constant 3.200000e+01 : f32
    %193 = vector.broadcast %cst_103 : f32 to vector<80x1xf32>
    %194 = arith.divf %192, %193 : vector<80x1xf32>
    %195 = vector.broadcast %194 : vector<80x1xf32> to vector<80x32xf32>
    %196 = arith.subf %190, %195 : vector<80x32xf32>
    %197 = arith.mulf %196, %196 : vector<80x32xf32>
    %cst_104 = arith.constant dense<0.000000e+00> : vector<80xf32>
    %198 = vector.multi_reduction <add>, %197, %cst_104 [1] : vector<80x32xf32> to vector<80xf32>
    %199 = vector.shape_cast %198 : vector<80xf32> to vector<80x1xf32>
    %cst_105 = arith.constant 3.200000e+01 : f32
    %200 = vector.broadcast %cst_105 : f32 to vector<80x1xf32>
    %201 = arith.divf %199, %200 : vector<80x1xf32>
    %cst_106 = arith.constant 9.99999996E-13 : f32
    %202 = vector.broadcast %cst_106 : f32 to vector<80x1xf32>
    %203 = arith.addf %201, %202 : vector<80x1xf32>
    %204 = math.rsqrt %203 : vector<80x1xf32>
    %205 = vector.broadcast %204 : vector<80x1xf32> to vector<80x32xf32>
    %206 = arith.mulf %196, %205 : vector<80x32xf32>
    %207 = vector.broadcast %10 : vector<1x32xf32> to vector<80x32xf32>
    %208 = arith.mulf %206, %207 : vector<80x32xf32>
    %209 = vector.broadcast %12 : vector<1x32xf32> to vector<80x32xf32>
    %210 = arith.addf %208, %209 : vector<80x32xf32>
    %c0_107 = arith.constant 0 : index
    %c0_108 = arith.constant 0 : index
    %c0_109 = arith.constant 0 : index
    %211 = vector.load %arg12[%c0_107, %c0_108, %c0_109] : memref<2x32x128xf32, #tpu.memory_space<vmem>>, vector<1x32x128xf32>
    %212 = vector.shape_cast %211 : vector<1x32x128xf32> to vector<32x128xf32>
    %cst_110 = arith.constant dense<0.000000e+00> : vector<80x128xf32>
    %213 = tpu.matmul %210, %212, %cst_110 {dimension_numbers = #tpu.dot_dimension_numbers<[1], [0], [0], [1], [0, 0, 1, 1], [], []>} : vector<80x32xf32>, vector<32x128xf32>, vector<80x128xf32> -> vector<80x128xf32>
    %c0_111 = arith.constant 0 : index
    %c0_112 = arith.constant 0 : index
    %c0_113 = arith.constant 0 : index
    %214 = vector.load %arg13[%c0_111, %c0_112, %c0_113] : memref<2x1x128xf32, #tpu.memory_space<vmem>>, vector<1x1x128xf32>
    %215 = vector.shape_cast %214 : vector<1x1x128xf32> to vector<1x128xf32>
    %216 = vector.broadcast %215 : vector<1x128xf32> to vector<80x128xf32>
    %217 = arith.addf %213, %216 : vector<80x128xf32>
    %cst_114 = arith.constant 5.000000e-01 : f32
    %218 = vector.broadcast %cst_114 : f32 to vector<80x128xf32>
    %219 = arith.mulf %217, %218 : vector<80x128xf32>
    %cst_115 = arith.constant 0.707106769 : f32
    %220 = vector.broadcast %cst_115 : f32 to vector<80x128xf32>
    %221 = arith.mulf %217, %220 : vector<80x128xf32>
    %cst_116 = arith.constant 0.000000e+00 : f32
    %222 = vector.broadcast %cst_116 : f32 to vector<80x128xf32>
    %223 = arith.cmpf oge, %221, %222 : vector<80x128xf32>
    %cst_117 = arith.constant 1.000000e+00 : f32
    %cst_118 = arith.constant -1.000000e+00 : f32
    %224 = vector.broadcast %cst_117 : f32 to vector<80x128xf32>
    %225 = vector.broadcast %cst_118 : f32 to vector<80x128xf32>
    %226 = arith.select %223, %224, %225 : vector<80x128xi1>, vector<80x128xf32>
    %227 = math.absf %221 : vector<80x128xf32>
    %cst_119 = arith.constant 0.327591091 : f32
    %228 = vector.broadcast %cst_119 : f32 to vector<80x128xf32>
    %229 = arith.mulf %228, %227 : vector<80x128xf32>
    %cst_120 = arith.constant 1.000000e+00 : f32
    %230 = vector.broadcast %cst_120 : f32 to vector<80x128xf32>
    %231 = arith.addf %230, %229 : vector<80x128xf32>
    %232 = tpu.reciprocal %231 {approx = true} : vector<80x128xf32> -> vector<80x128xf32>
    %cst_121 = arith.constant 1.06140542 : f32
    %233 = vector.broadcast %cst_121 : f32 to vector<80x128xf32>
    %234 = arith.mulf %233, %232 : vector<80x128xf32>
    %cst_122 = arith.constant -1.45315206 : f32
    %235 = vector.broadcast %cst_122 : f32 to vector<80x128xf32>
    %236 = arith.addf %234, %235 : vector<80x128xf32>
    %237 = arith.mulf %236, %232 : vector<80x128xf32>
    %cst_123 = arith.constant 1.42141378 : f32
    %238 = vector.broadcast %cst_123 : f32 to vector<80x128xf32>
    %239 = arith.addf %237, %238 : vector<80x128xf32>
    %240 = arith.mulf %239, %232 : vector<80x128xf32>
    %cst_124 = arith.constant -0.284496725 : f32
    %241 = vector.broadcast %cst_124 : f32 to vector<80x128xf32>
    %242 = arith.addf %240, %241 : vector<80x128xf32>
    %243 = arith.mulf %242, %232 : vector<80x128xf32>
    %cst_125 = arith.constant 0.254829586 : f32
    %244 = vector.broadcast %cst_125 : f32 to vector<80x128xf32>
    %245 = arith.addf %243, %244 : vector<80x128xf32>
    %246 = arith.mulf %245, %232 : vector<80x128xf32>
    %cst_126 = arith.constant 0.000000e+00 : f32
    %247 = vector.broadcast %cst_126 : f32 to vector<80x128xf32>
    %248 = arith.subf %247, %227 : vector<80x128xf32>
    %249 = arith.mulf %248, %227 : vector<80x128xf32>
    %250 = math.exp %249 : vector<80x128xf32>
    %251 = arith.mulf %246, %250 : vector<80x128xf32>
    %cst_127 = arith.constant 1.000000e+00 : f32
    %252 = vector.broadcast %cst_127 : f32 to vector<80x128xf32>
    %253 = arith.subf %252, %251 : vector<80x128xf32>
    %254 = arith.mulf %226, %253 : vector<80x128xf32>
    %cst_128 = arith.constant 1.000000e+00 : f32
    %255 = vector.broadcast %cst_128 : f32 to vector<80x128xf32>
    %256 = arith.addf %255, %254 : vector<80x128xf32>
    %257 = arith.mulf %219, %256 : vector<80x128xf32>
    %c0_129 = arith.constant 0 : index
    %c0_130 = arith.constant 0 : index
    %c0_131 = arith.constant 0 : index
    %258 = vector.load %arg14[%c0_129, %c0_130, %c0_131] : memref<2x128x32xf32, #tpu.memory_space<vmem>>, vector<1x128x32xf32>
    %259 = vector.shape_cast %258 : vector<1x128x32xf32> to vector<128x32xf32>
    %cst_132 = arith.constant dense<0.000000e+00> : vector<80x32xf32>
    %260 = tpu.matmul %257, %259, %cst_132 {dimension_numbers = #tpu.dot_dimension_numbers<[1], [0], [0], [1], [0, 0, 1, 1], [], []>} : vector<80x128xf32>, vector<128x32xf32>, vector<80x32xf32> -> vector<80x32xf32>
    %c0_133 = arith.constant 0 : index
    %c0_134 = arith.constant 0 : index
    %c0_135 = arith.constant 0 : index
    %261 = vector.load %arg15[%c0_133, %c0_134, %c0_135] : memref<2x1x32xf32, #tpu.memory_space<vmem>>, vector<1x1x32xf32>
    %262 = vector.shape_cast %261 : vector<1x1x32xf32> to vector<1x32xf32>
    %263 = vector.broadcast %262 : vector<1x32xf32> to vector<80x32xf32>
    %264 = arith.addf %260, %263 : vector<80x32xf32>
    %265 = arith.addf %190, %264 : vector<80x32xf32>
    %266 = vector.shape_cast %265 : vector<80x32xf32> to vector<2x40x32xf32>
    %c0_136 = arith.constant 0 : index
    %c0_137 = arith.constant 0 : index
    %c0_138 = arith.constant 0 : index
    %c0_139 = arith.constant 0 : index
    %267 = vector.load %arg16[%c0_136, %c0_137, %c0_138, %c0_139] : memref<2x2x40x32xf32, #tpu.memory_space<vmem>>, vector<1x2x40x32xf32>
    %268 = vector.shape_cast %267 : vector<1x2x40x32xf32> to vector<2x40x32xf32>
    %269 = vector.shape_cast %266 : vector<2x40x32xf32> to vector<1x2x40x32xf32>
    tpu.vector_store %arg16[%c0_136, %c0_137, %c0_138, %c0_139], %269 {strides = array<i32>} : memref<2x2x40x32xf32, #tpu.memory_space<vmem>>, vector<1x2x40x32xf32>,
    %c1_140 = arith.constant 1 : index
    %c0_141 = arith.constant 0 : index
    %c0_142 = arith.constant 0 : index
    %270 = vector.load %arg2[%c1_140, %c0_141, %c0_142] : memref<2x1x32xf32, #tpu.memory_space<vmem>>, vector<1x1x32xf32>
    %271 = vector.shape_cast %270 : vector<1x1x32xf32> to vector<1x32xf32>
    %c1_143 = arith.constant 1 : index
    %c0_144 = arith.constant 0 : index
    %c0_145 = arith.constant 0 : index
    %272 = vector.load %arg3[%c1_143, %c0_144, %c0_145] : memref<2x1x32xf32, #tpu.memory_space<vmem>>, vector<1x1x32xf32>
    %273 = vector.shape_cast %272 : vector<1x1x32xf32> to vector<1x32xf32>
    %cst_146 = arith.constant dense<0.000000e+00> : vector<80xf32>
    %274 = vector.multi_reduction <add>, %265, %cst_146 [1] : vector<80x32xf32> to vector<80xf32>
    %275 = vector.shape_cast %274 : vector<80xf32> to vector<80x1xf32>
    %cst_147 = arith.constant 3.200000e+01 : f32
    %276 = vector.broadcast %cst_147 : f32 to vector<80x1xf32>
    %277 = arith.divf %275, %276 : vector<80x1xf32>
    %278 = vector.broadcast %277 : vector<80x1xf32> to vector<80x32xf32>
    %279 = arith.subf %265, %278 : vector<80x32xf32>
    %280 = arith.mulf %279, %279 : vector<80x32xf32>
    %cst_148 = arith.constant dense<0.000000e+00> : vector<80xf32>
    %281 = vector.multi_reduction <add>, %280, %cst_148 [1] : vector<80x32xf32> to vector<80xf32>
    %282 = vector.shape_cast %281 : vector<80xf32> to vector<80x1xf32>
    %cst_149 = arith.constant 3.200000e+01 : f32
    %283 = vector.broadcast %cst_149 : f32 to vector<80x1xf32>
    %284 = arith.divf %282, %283 : vector<80x1xf32>
    %cst_150 = arith.constant 9.99999996E-13 : f32
    %285 = vector.broadcast %cst_150 : f32 to vector<80x1xf32>
    %286 = arith.addf %284, %285 : vector<80x1xf32>
    %287 = math.rsqrt %286 : vector<80x1xf32>
    %288 = vector.broadcast %287 : vector<80x1xf32> to vector<80x32xf32>
    %289 = arith.mulf %279, %288 : vector<80x32xf32>
    %290 = vector.broadcast %271 : vector<1x32xf32> to vector<80x32xf32>
    %291 = arith.mulf %289, %290 : vector<80x32xf32>
    %292 = vector.broadcast %273 : vector<1x32xf32> to vector<80x32xf32>
    %293 = arith.addf %291, %292 : vector<80x32xf32>
    %c1_151 = arith.constant 1 : index
    %c0_152 = arith.constant 0 : index
    %c0_153 = arith.constant 0 : index
    %294 = vector.load %arg4[%c1_151, %c0_152, %c0_153] : memref<2x32x32xf32, #tpu.memory_space<vmem>>, vector<1x32x32xf32>
    %295 = vector.shape_cast %294 : vector<1x32x32xf32> to vector<32x32xf32>
    %cst_154 = arith.constant dense<0.000000e+00> : vector<80x32xf32>
    %296 = tpu.matmul %293, %295, %cst_154 {dimension_numbers = #tpu.dot_dimension_numbers<[1], [0], [0], [1], [0, 0, 1, 1], [], []>} : vector<80x32xf32>, vector<32x32xf32>, vector<80x32xf32> -> vector<80x32xf32>
    %c1_155 = arith.constant 1 : index
    %c0_156 = arith.constant 0 : index
    %c0_157 = arith.constant 0 : index
    %297 = vector.load %arg5[%c1_155, %c0_156, %c0_157] : memref<2x1x32xf32, #tpu.memory_space<vmem>>, vector<1x1x32xf32>
    %298 = vector.shape_cast %297 : vector<1x1x32xf32> to vector<1x32xf32>
    %299 = vector.broadcast %298 : vector<1x32xf32> to vector<80x32xf32>
    %300 = arith.addf %296, %299 : vector<80x32xf32>
    %c1_158 = arith.constant 1 : index
    %c0_159 = arith.constant 0 : index
    %c0_160 = arith.constant 0 : index
    %301 = vector.load %arg6[%c1_158, %c0_159, %c0_160] : memref<2x32x32xf32, #tpu.memory_space<vmem>>, vector<1x32x32xf32>
    %302 = vector.shape_cast %301 : vector<1x32x32xf32> to vector<32x32xf32>
    %cst_161 = arith.constant dense<0.000000e+00> : vector<80x32xf32>
    %303 = tpu.matmul %293, %302, %cst_161 {dimension_numbers = #tpu.dot_dimension_numbers<[1], [0], [0], [1], [0, 0, 1, 1], [], []>} : vector<80x32xf32>, vector<32x32xf32>, vector<80x32xf32> -> vector<80x32xf32>
    %c1_162 = arith.constant 1 : index
    %c0_163 = arith.constant 0 : index
    %c0_164 = arith.constant 0 : index
    %304 = vector.load %arg7[%c1_162, %c0_163, %c0_164] : memref<2x1x32xf32, #tpu.memory_space<vmem>>, vector<1x1x32xf32>
    %305 = vector.shape_cast %304 : vector<1x1x32xf32> to vector<1x32xf32>
    %306 = vector.broadcast %305 : vector<1x32xf32> to vector<80x32xf32>
    %307 = arith.addf %303, %306 : vector<80x32xf32>
    %c1_165 = arith.constant 1 : index
    %c0_166 = arith.constant 0 : index
    %c0_167 = arith.constant 0 : index
    %308 = vector.load %arg8[%c1_165, %c0_166, %c0_167] : memref<2x32x32xf32, #tpu.memory_space<vmem>>, vector<1x32x32xf32>
    %309 = vector.shape_cast %308 : vector<1x32x32xf32> to vector<32x32xf32>
    %cst_168 = arith.constant dense<0.000000e+00> : vector<80x32xf32>
    %310 = tpu.matmul %293, %309, %cst_168 {dimension_numbers = #tpu.dot_dimension_numbers<[1], [0], [0], [1], [0, 0, 1, 1], [], []>} : vector<80x32xf32>, vector<32x32xf32>, vector<80x32xf32> -> vector<80x32xf32>
    %c1_169 = arith.constant 1 : index
    %c0_170 = arith.constant 0 : index
    %c0_171 = arith.constant 0 : index
    %311 = vector.load %arg9[%c1_169, %c0_170, %c0_171] : memref<2x1x32xf32, #tpu.memory_space<vmem>>, vector<1x1x32xf32>
    %312 = vector.shape_cast %311 : vector<1x1x32xf32> to vector<1x32xf32>
    %313 = vector.broadcast %312 : vector<1x32xf32> to vector<80x32xf32>
    %314 = arith.addf %310, %313 : vector<80x32xf32>
    %315 = vector.extract_strided_slice %300 {offsets = [0, 0], sizes = [80, 8], strides = [1, 1]} : vector<80x32xf32> to vector<80x8xf32>
    %316 = vector.shape_cast %315 : vector<80x8xf32> to vector<2x40x8xf32>
    %317 = vector.extract_strided_slice %307 {offsets = [0, 0], sizes = [80, 8], strides = [1, 1]} : vector<80x32xf32> to vector<80x8xf32>
    %318 = vector.shape_cast %317 : vector<80x8xf32> to vector<2x40x8xf32>
    %319 = vector.extract_strided_slice %314 {offsets = [0, 0], sizes = [80, 8], strides = [1, 1]} : vector<80x32xf32> to vector<80x8xf32>
    %320 = vector.shape_cast %319 : vector<80x8xf32> to vector<2x40x8xf32>
    "tpu.trace_start"() <{level = 10 : i32, message = "bqd,bkd->bqk"}> : () -> ()
    %cst_172 = arith.constant dense<0.000000e+00> : vector<2x40x40xf32>
    %321 = tpu.matmul %316, %318, %cst_172 {dimension_numbers = #tpu.dot_dimension_numbers<[2], [2], [1], [1], [0, 0, 0, 1, 1, 1], [0], [0]>} : vector<2x40x8xf32>, vector<2x40x8xf32>, vector<2x40x40xf32> -> vector<2x40x40xf32>
    "tpu.trace_stop"() : () -> ()
    %cst_173 = arith.constant 0.353553385 : f32
    %322 = vector.broadcast %cst_173 : f32 to vector<2x40x40xf32>
    %323 = arith.mulf %321, %322 : vector<2x40x40xf32>
    %324 = arith.addf %323, %8 : vector<2x40x40xf32>
    %cst_174 = arith.constant dense<0xFF800000> : vector<2x40xf32>
    %325 = vector.multi_reduction <maximumf>, %324, %cst_174 [2] : vector<2x40x40xf32> to vector<2x40xf32>
    %326 = vector.shape_cast %325 : vector<2x40xf32> to vector<2x40x1xf32>
    %327 = vector.broadcast %326 : vector<2x40x1xf32> to vector<2x40x40xf32>
    %328 = arith.subf %324, %327 : vector<2x40x40xf32>
    %329 = math.exp %328 : vector<2x40x40xf32>
    %cst_175 = arith.constant dense<0.000000e+00> : vector<2x40xf32>
    %330 = vector.multi_reduction <add>, %329, %cst_175 [2] : vector<2x40x40xf32> to vector<2x40xf32>
    %331 = vector.shape_cast %330 : vector<2x40xf32> to vector<2x40x1xf32>
    %332 = tpu.reciprocal %331 : vector<2x40x1xf32> -> vector<2x40x1xf32>
    %333 = vector.broadcast %332 : vector<2x40x1xf32> to vector<2x40x40xf32>
    %334 = arith.mulf %329, %333 : vector<2x40x40xf32>
    %335 = vector.extract_strided_slice %334 {offsets = [0, 0, 0], sizes = [1, 40, 40], strides = [1, 1, 1]} : vector<2x40x40xf32> to vector<1x40x40xf32>
    %336 = vector.shape_cast %335 : vector<1x40x40xf32> to vector<40x40xf32>
    %c1_176 = arith.constant 1 : index
    %c0_177 = arith.constant 0 : index
    %c0_178 = arith.constant 0 : index
    %c0_179 = arith.constant 0 : index
    %c0_180 = arith.constant 0 : index
    %337 = vector.load %arg17[%c1_176, %c0_177, %c0_178, %c0_179, %c0_180] : memref<2x2x4x40x40xf32, #tpu.memory_space<vmem>>, vector<1x1x1x40x40xf32>
    %338 = vector.shape_cast %337 : vector<1x1x1x40x40xf32> to vector<40x40xf32>
    %339 = vector.shape_cast %336 : vector<40x40xf32> to vector<1x1x1x40x40xf32>
    tpu.vector_store %arg17[%c1_176, %c0_177, %c0_178, %c0_179, %c0_180], %339 {strides = array<i32>} : memref<2x2x4x40x40xf32, #tpu.memory_space<vmem>>, vector<1x1x1x40x40xf32>,
    %340 = vector.extract_strided_slice %334 {offsets = [1, 0, 0], sizes = [1, 40, 40], strides = [1, 1, 1]} : vector<2x40x40xf32> to vector<1x40x40xf32>
    %341 = vector.shape_cast %340 : vector<1x40x40xf32> to vector<40x40xf32>
    %c1_181 = arith.constant 1 : index
    %c1_182 = arith.constant 1 : index
    %c0_183 = arith.constant 0 : index
    %c0_184 = arith.constant 0 : index
    %c0_185 = arith.constant 0 : index
    %342 = vector.load %arg17[%c1_181, %c1_182, %c0_183, %c0_184, %c0_185] : memref<2x2x4x40x40xf32, #tpu.memory_space<vmem>>, vector<1x1x1x40x40xf32>
    %343 = vector.shape_cast %342 : vector<1x1x1x40x40xf32> to vector<40x40xf32>
    %344 = vector.shape_cast %341 : vector<40x40xf32> to vector<1x1x1x40x40xf32>
    tpu.vector_store %arg17[%c1_181, %c1_182, %c0_183, %c0_184, %c0_185], %344 {strides = array<i32>} : memref<2x2x4x40x40xf32, #tpu.memory_space<vmem>>, vector<1x1x1x40x40xf32>,
    "tpu.trace_start"() <{level = 10 : i32, message = "bqk,bkd->bqd"}> : () -> ()
    %cst_186 = arith.constant dense<0.000000e+00> : vector<2x40x8xf32>
    %345 = tpu.matmul %334, %320, %cst_186 {dimension_numbers = #tpu.dot_dimension_numbers<[2], [1], [1], [2], [0, 0, 0, 1, 1, 2], [0], [0]>} : vector<2x40x40xf32>, vector<2x40x8xf32>, vector<2x40x8xf32> -> vector<2x40x8xf32>
    "tpu.trace_stop"() : () -> ()
    %346 = vector.shape_cast %345 : vector<2x40x8xf32> to vector<80x8xf32>
    %347 = vector.extract_strided_slice %300 {offsets = [0, 8], sizes = [80, 8], strides = [1, 1]} : vector<80x32xf32> to vector<80x8xf32>
    %348 = vector.shape_cast %347 : vector<80x8xf32> to vector<2x40x8xf32>
    %349 = vector.extract_strided_slice %307 {offsets = [0, 8], sizes = [80, 8], strides = [1, 1]} : vector<80x32xf32> to vector<80x8xf32>
    %350 = vector.shape_cast %349 : vector<80x8xf32> to vector<2x40x8xf32>
    %351 = vector.extract_strided_slice %314 {offsets = [0, 8], sizes = [80, 8], strides = [1, 1]} : vector<80x32xf32> to vector<80x8xf32>
    %352 = vector.shape_cast %351 : vector<80x8xf32> to vector<2x40x8xf32>
    "tpu.trace_start"() <{level = 10 : i32, message = "bqd,bkd->bqk"}> : () -> ()
    %cst_187 = arith.constant dense<0.000000e+00> : vector<2x40x40xf32>
    %353 = tpu.matmul %348, %350, %cst_187 {dimension_numbers = #tpu.dot_dimension_numbers<[2], [2], [1], [1], [0, 0, 0, 1, 1, 1], [0], [0]>} : vector<2x40x8xf32>, vector<2x40x8xf32>, vector<2x40x40xf32> -> vector<2x40x40xf32>
    "tpu.trace_stop"() : () -> ()
    %cst_188 = arith.constant 0.353553385 : f32
    %354 = vector.broadcast %cst_188 : f32 to vector<2x40x40xf32>
    %355 = arith.mulf %353, %354 : vector<2x40x40xf32>
    %356 = arith.addf %355, %8 : vector<2x40x40xf32>
    %cst_189 = arith.constant dense<0xFF800000> : vector<2x40xf32>
    %357 = vector.multi_reduction <maximumf>, %356, %cst_189 [2] : vector<2x40x40xf32> to vector<2x40xf32>
    %358 = vector.shape_cast %357 : vector<2x40xf32> to vector<2x40x1xf32>
    %359 = vector.broadcast %358 : vector<2x40x1xf32> to vector<2x40x40xf32>
    %360 = arith.subf %356, %359 : vector<2x40x40xf32>
    %361 = math.exp %360 : vector<2x40x40xf32>
    %cst_190 = arith.constant dense<0.000000e+00> : vector<2x40xf32>
    %362 = vector.multi_reduction <add>, %361, %cst_190 [2] : vector<2x40x40xf32> to vector<2x40xf32>
    %363 = vector.shape_cast %362 : vector<2x40xf32> to vector<2x40x1xf32>
    %364 = tpu.reciprocal %363 : vector<2x40x1xf32> -> vector<2x40x1xf32>
    %365 = vector.broadcast %364 : vector<2x40x1xf32> to vector<2x40x40xf32>
    %366 = arith.mulf %361, %365 : vector<2x40x40xf32>
    %367 = vector.extract_strided_slice %366 {offsets = [0, 0, 0], sizes = [1, 40, 40], strides = [1, 1, 1]} : vector<2x40x40xf32> to vector<1x40x40xf32>
    %368 = vector.shape_cast %367 : vector<1x40x40xf32> to vector<40x40xf32>
    %c1_191 = arith.constant 1 : index
    %c0_192 = arith.constant 0 : index
    %c1_193 = arith.constant 1 : index
    %c0_194 = arith.constant 0 : index
    %c0_195 = arith.constant 0 : index
    %369 = vector.load %arg17[%c1_191, %c0_192, %c1_193, %c0_194, %c0_195] : memref<2x2x4x40x40xf32, #tpu.memory_space<vmem>>, vector<1x1x1x40x40xf32>
    %370 = vector.shape_cast %369 : vector<1x1x1x40x40xf32> to vector<40x40xf32>
    %371 = vector.shape_cast %368 : vector<40x40xf32> to vector<1x1x1x40x40xf32>
    tpu.vector_store %arg17[%c1_191, %c0_192, %c1_193, %c0_194, %c0_195], %371 {strides = array<i32>} : memref<2x2x4x40x40xf32, #tpu.memory_space<vmem>>, vector<1x1x1x40x40xf32>,
    %372 = vector.extract_strided_slice %366 {offsets = [1, 0, 0], sizes = [1, 40, 40], strides = [1, 1, 1]} : vector<2x40x40xf32> to vector<1x40x40xf32>
    %373 = vector.shape_cast %372 : vector<1x40x40xf32> to vector<40x40xf32>
    %c1_196 = arith.constant 1 : index
    %c1_197 = arith.constant 1 : index
    %c1_198 = arith.constant 1 : index
    %c0_199 = arith.constant 0 : index
    %c0_200 = arith.constant 0 : index
    %374 = vector.load %arg17[%c1_196, %c1_197, %c1_198, %c0_199, %c0_200] : memref<2x2x4x40x40xf32, #tpu.memory_space<vmem>>, vector<1x1x1x40x40xf32>
    %375 = vector.shape_cast %374 : vector<1x1x1x40x40xf32> to vector<40x40xf32>
    %376 = vector.shape_cast %373 : vector<40x40xf32> to vector<1x1x1x40x40xf32>
    tpu.vector_store %arg17[%c1_196, %c1_197, %c1_198, %c0_199, %c0_200], %376 {strides = array<i32>} : memref<2x2x4x40x40xf32, #tpu.memory_space<vmem>>, vector<1x1x1x40x40xf32>,
    "tpu.trace_start"() <{level = 10 : i32, message = "bqk,bkd->bqd"}> : () -> ()
    %cst_201 = arith.constant dense<0.000000e+00> : vector<2x40x8xf32>
    %377 = tpu.matmul %366, %352, %cst_201 {dimension_numbers = #tpu.dot_dimension_numbers<[2], [1], [1], [2], [0, 0, 0, 1, 1, 2], [0], [0]>} : vector<2x40x40xf32>, vector<2x40x8xf32>, vector<2x40x8xf32> -> vector<2x40x8xf32>
    "tpu.trace_stop"() : () -> ()
    %378 = vector.shape_cast %377 : vector<2x40x8xf32> to vector<80x8xf32>
    %379 = vector.extract_strided_slice %300 {offsets = [0, 16], sizes = [80, 8], strides = [1, 1]} : vector<80x32xf32> to vector<80x8xf32>
    %380 = vector.shape_cast %379 : vector<80x8xf32> to vector<2x40x8xf32>
    %381 = vector.extract_strided_slice %307 {offsets = [0, 16], sizes = [80, 8], strides = [1, 1]} : vector<80x32xf32> to vector<80x8xf32>
    %382 = vector.shape_cast %381 : vector<80x8xf32> to vector<2x40x8xf32>
    %383 = vector.extract_strided_slice %314 {offsets = [0, 16], sizes = [80, 8], strides = [1, 1]} : vector<80x32xf32> to vector<80x8xf32>
    %384 = vector.shape_cast %383 : vector<80x8xf32> to vector<2x40x8xf32>
    "tpu.trace_start"() <{level = 10 : i32, message = "bqd,bkd->bqk"}> : () -> ()
    %cst_202 = arith.constant dense<0.000000e+00> : vector<2x40x40xf32>
    %385 = tpu.matmul %380, %382, %cst_202 {dimension_numbers = #tpu.dot_dimension_numbers<[2], [2], [1], [1], [0, 0, 0, 1, 1, 1], [0], [0]>} : vector<2x40x8xf32>, vector<2x40x8xf32>, vector<2x40x40xf32> -> vector<2x40x40xf32>
    "tpu.trace_stop"() : () -> ()
    %cst_203 = arith.constant 0.353553385 : f32
    %386 = vector.broadcast %cst_203 : f32 to vector<2x40x40xf32>
    %387 = arith.mulf %385, %386 : vector<2x40x40xf32>
    %388 = arith.addf %387, %8 : vector<2x40x40xf32>
    %cst_204 = arith.constant dense<0xFF800000> : vector<2x40xf32>
    %389 = vector.multi_reduction <maximumf>, %388, %cst_204 [2] : vector<2x40x40xf32> to vector<2x40xf32>
    %390 = vector.shape_cast %389 : vector<2x40xf32> to vector<2x40x1xf32>
    %391 = vector.broadcast %390 : vector<2x40x1xf32> to vector<2x40x40xf32>
    %392 = arith.subf %388, %391 : vector<2x40x40xf32>
    %393 = math.exp %392 : vector<2x40x40xf32>
    %cst_205 = arith.constant dense<0.000000e+00> : vector<2x40xf32>
    %394 = vector.multi_reduction <add>, %393, %cst_205 [2] : vector<2x40x40xf32> to vector<2x40xf32>
    %395 = vector.shape_cast %394 : vector<2x40xf32> to vector<2x40x1xf32>
    %396 = tpu.reciprocal %395 : vector<2x40x1xf32> -> vector<2x40x1xf32>
    %397 = vector.broadcast %396 : vector<2x40x1xf32> to vector<2x40x40xf32>
    %398 = arith.mulf %393, %397 : vector<2x40x40xf32>
    %399 = vector.extract_strided_slice %398 {offsets = [0, 0, 0], sizes = [1, 40, 40], strides = [1, 1, 1]} : vector<2x40x40xf32> to vector<1x40x40xf32>
    %400 = vector.shape_cast %399 : vector<1x40x40xf32> to vector<40x40xf32>
    %c1_206 = arith.constant 1 : index
    %c0_207 = arith.constant 0 : index
    %c2_208 = arith.constant 2 : index
    %c0_209 = arith.constant 0 : index
    %c0_210 = arith.constant 0 : index
    %401 = vector.load %arg17[%c1_206, %c0_207, %c2_208, %c0_209, %c0_210] : memref<2x2x4x40x40xf32, #tpu.memory_space<vmem>>, vector<1x1x1x40x40xf32>
    %402 = vector.shape_cast %401 : vector<1x1x1x40x40xf32> to vector<40x40xf32>
    %403 = vector.shape_cast %400 : vector<40x40xf32> to vector<1x1x1x40x40xf32>
    tpu.vector_store %arg17[%c1_206, %c0_207, %c2_208, %c0_209, %c0_210], %403 {strides = array<i32>} : memref<2x2x4x40x40xf32, #tpu.memory_space<vmem>>, vector<1x1x1x40x40xf32>,
    %404 = vector.extract_strided_slice %398 {offsets = [1, 0, 0], sizes = [1, 40, 40], strides = [1, 1, 1]} : vector<2x40x40xf32> to vector<1x40x40xf32>
    %405 = vector.shape_cast %404 : vector<1x40x40xf32> to vector<40x40xf32>
    %c1_211 = arith.constant 1 : index
    %c1_212 = arith.constant 1 : index
    %c2_213 = arith.constant 2 : index
    %c0_214 = arith.constant 0 : index
    %c0_215 = arith.constant 0 : index
    %406 = vector.load %arg17[%c1_211, %c1_212, %c2_213, %c0_214, %c0_215] : memref<2x2x4x40x40xf32, #tpu.memory_space<vmem>>, vector<1x1x1x40x40xf32>
    %407 = vector.shape_cast %406 : vector<1x1x1x40x40xf32> to vector<40x40xf32>
    %408 = vector.shape_cast %405 : vector<40x40xf32> to vector<1x1x1x40x40xf32>
    tpu.vector_store %arg17[%c1_211, %c1_212, %c2_213, %c0_214, %c0_215], %408 {strides = array<i32>} : memref<2x2x4x40x40xf32, #tpu.memory_space<vmem>>, vector<1x1x1x40x40xf32>,
    "tpu.trace_start"() <{level = 10 : i32, message = "bqk,bkd->bqd"}> : () -> ()
    %cst_216 = arith.constant dense<0.000000e+00> : vector<2x40x8xf32>
    %409 = tpu.matmul %398, %384, %cst_216 {dimension_numbers = #tpu.dot_dimension_numbers<[2], [1], [1], [2], [0, 0, 0, 1, 1, 2], [0], [0]>} : vector<2x40x40xf32>, vector<2x40x8xf32>, vector<2x40x8xf32> -> vector<2x40x8xf32>
    "tpu.trace_stop"() : () -> ()
    %410 = vector.shape_cast %409 : vector<2x40x8xf32> to vector<80x8xf32>
    %411 = vector.extract_strided_slice %300 {offsets = [0, 24], sizes = [80, 8], strides = [1, 1]} : vector<80x32xf32> to vector<80x8xf32>
    %412 = vector.shape_cast %411 : vector<80x8xf32> to vector<2x40x8xf32>
    %413 = vector.extract_strided_slice %307 {offsets = [0, 24], sizes = [80, 8], strides = [1, 1]} : vector<80x32xf32> to vector<80x8xf32>
    %414 = vector.shape_cast %413 : vector<80x8xf32> to vector<2x40x8xf32>
    %415 = vector.extract_strided_slice %314 {offsets = [0, 24], sizes = [80, 8], strides = [1, 1]} : vector<80x32xf32> to vector<80x8xf32>
    %416 = vector.shape_cast %415 : vector<80x8xf32> to vector<2x40x8xf32>
    "tpu.trace_start"() <{level = 10 : i32, message = "bqd,bkd->bqk"}> : () -> ()
    %cst_217 = arith.constant dense<0.000000e+00> : vector<2x40x40xf32>
    %417 = tpu.matmul %412, %414, %cst_217 {dimension_numbers = #tpu.dot_dimension_numbers<[2], [2], [1], [1], [0, 0, 0, 1, 1, 1], [0], [0]>} : vector<2x40x8xf32>, vector<2x40x8xf32>, vector<2x40x40xf32> -> vector<2x40x40xf32>
    "tpu.trace_stop"() : () -> ()
    %cst_218 = arith.constant 0.353553385 : f32
    %418 = vector.broadcast %cst_218 : f32 to vector<2x40x40xf32>
    %419 = arith.mulf %417, %418 : vector<2x40x40xf32>
    %420 = arith.addf %419, %8 : vector<2x40x40xf32>
    %cst_219 = arith.constant dense<0xFF800000> : vector<2x40xf32>
    %421 = vector.multi_reduction <maximumf>, %420, %cst_219 [2] : vector<2x40x40xf32> to vector<2x40xf32>
    %422 = vector.shape_cast %421 : vector<2x40xf32> to vector<2x40x1xf32>
    %423 = vector.broadcast %422 : vector<2x40x1xf32> to vector<2x40x40xf32>
    %424 = arith.subf %420, %423 : vector<2x40x40xf32>
    %425 = math.exp %424 : vector<2x40x40xf32>
    %cst_220 = arith.constant dense<0.000000e+00> : vector<2x40xf32>
    %426 = vector.multi_reduction <add>, %425, %cst_220 [2] : vector<2x40x40xf32> to vector<2x40xf32>
    %427 = vector.shape_cast %426 : vector<2x40xf32> to vector<2x40x1xf32>
    %428 = tpu.reciprocal %427 : vector<2x40x1xf32> -> vector<2x40x1xf32>
    %429 = vector.broadcast %428 : vector<2x40x1xf32> to vector<2x40x40xf32>
    %430 = arith.mulf %425, %429 : vector<2x40x40xf32>
    %431 = vector.extract_strided_slice %430 {offsets = [0, 0, 0], sizes = [1, 40, 40], strides = [1, 1, 1]} : vector<2x40x40xf32> to vector<1x40x40xf32>
    %432 = vector.shape_cast %431 : vector<1x40x40xf32> to vector<40x40xf32>
    %c1_221 = arith.constant 1 : index
    %c0_222 = arith.constant 0 : index
    %c3_223 = arith.constant 3 : index
    %c0_224 = arith.constant 0 : index
    %c0_225 = arith.constant 0 : index
    %433 = vector.load %arg17[%c1_221, %c0_222, %c3_223, %c0_224, %c0_225] : memref<2x2x4x40x40xf32, #tpu.memory_space<vmem>>, vector<1x1x1x40x40xf32>
    %434 = vector.shape_cast %433 : vector<1x1x1x40x40xf32> to vector<40x40xf32>
    %435 = vector.shape_cast %432 : vector<40x40xf32> to vector<1x1x1x40x40xf32>
    tpu.vector_store %arg17[%c1_221, %c0_222, %c3_223, %c0_224, %c0_225], %435 {strides = array<i32>} : memref<2x2x4x40x40xf32, #tpu.memory_space<vmem>>, vector<1x1x1x40x40xf32>,
    %436 = vector.extract_strided_slice %430 {offsets = [1, 0, 0], sizes = [1, 40, 40], strides = [1, 1, 1]} : vector<2x40x40xf32> to vector<1x40x40xf32>
    %437 = vector.shape_cast %436 : vector<1x40x40xf32> to vector<40x40xf32>
    %c1_226 = arith.constant 1 : index
    %c1_227 = arith.constant 1 : index
    %c3_228 = arith.constant 3 : index
    %c0_229 = arith.constant 0 : index
    %c0_230 = arith.constant 0 : index
    %438 = vector.load %arg17[%c1_226, %c1_227, %c3_228, %c0_229, %c0_230] : memref<2x2x4x40x40xf32, #tpu.memory_space<vmem>>, vector<1x1x1x40x40xf32>
    %439 = vector.shape_cast %438 : vector<1x1x1x40x40xf32> to vector<40x40xf32>
    %440 = vector.shape_cast %437 : vector<40x40xf32> to vector<1x1x1x40x40xf32>
    tpu.vector_store %arg17[%c1_226, %c1_227, %c3_228, %c0_229, %c0_230], %440 {strides = array<i32>} : memref<2x2x4x40x40xf32, #tpu.memory_space<vmem>>, vector<1x1x1x40x40xf32>,
    "tpu.trace_start"() <{level = 10 : i32, message = "bqk,bkd->bqd"}> : () -> ()
    %cst_231 = arith.constant dense<0.000000e+00> : vector<2x40x8xf32>
    %441 = tpu.matmul %430, %416, %cst_231 {dimension_numbers = #tpu.dot_dimension_numbers<[2], [1], [1], [2], [0, 0, 0, 1, 1, 2], [0], [0]>} : vector<2x40x40xf32>, vector<2x40x8xf32>, vector<2x40x8xf32> -> vector<2x40x8xf32>
    "tpu.trace_stop"() : () -> ()
    %442 = vector.shape_cast %441 : vector<2x40x8xf32> to vector<80x8xf32>
    %443 = tpu.concatenate %346, %378, %410, %442 in 1 : vector<80x8xf32>, vector<80x8xf32>, vector<80x8xf32>, vector<80x8xf32> -> vector<80x32xf32>
    %c1_232 = arith.constant 1 : index
    %c0_233 = arith.constant 0 : index
    %c0_234 = arith.constant 0 : index
    %444 = vector.load %arg10[%c1_232, %c0_233, %c0_234] : memref<2x32x32xf32, #tpu.memory_space<vmem>>, vector<1x32x32xf32>
    %445 = vector.shape_cast %444 : vector<1x32x32xf32> to vector<32x32xf32>
    %cst_235 = arith.constant dense<0.000000e+00> : vector<80x32xf32>
    %446 = tpu.matmul %443, %445, %cst_235 {dimension_numbers = #tpu.dot_dimension_numbers<[1], [0], [0], [1], [0, 0, 1, 1], [], []>} : vector<80x32xf32>, vector<32x32xf32>, vector<80x32xf32> -> vector<80x32xf32>
    %c1_236 = arith.constant 1 : index
    %c0_237 = arith.constant 0 : index
    %c0_238 = arith.constant 0 : index
    %447 = vector.load %arg11[%c1_236, %c0_237, %c0_238] : memref<2x1x32xf32, #tpu.memory_space<vmem>>, vector<1x1x32xf32>
    %448 = vector.shape_cast %447 : vector<1x1x32xf32> to vector<1x32xf32>
    %449 = vector.broadcast %448 : vector<1x32xf32> to vector<80x32xf32>
    %450 = arith.addf %446, %449 : vector<80x32xf32>
    %451 = arith.addf %265, %450 : vector<80x32xf32>
    %cst_239 = arith.constant dense<0.000000e+00> : vector<80xf32>
    %452 = vector.multi_reduction <add>, %451, %cst_239 [1] : vector<80x32xf32> to vector<80xf32>
    %453 = vector.shape_cast %452 : vector<80xf32> to vector<80x1xf32>
    %cst_240 = arith.constant 3.200000e+01 : f32
    %454 = vector.broadcast %cst_240 : f32 to vector<80x1xf32>
    %455 = arith.divf %453, %454 : vector<80x1xf32>
    %456 = vector.broadcast %455 : vector<80x1xf32> to vector<80x32xf32>
    %457 = arith.subf %451, %456 : vector<80x32xf32>
    %458 = arith.mulf %457, %457 : vector<80x32xf32>
    %cst_241 = arith.constant dense<0.000000e+00> : vector<80xf32>
    %459 = vector.multi_reduction <add>, %458, %cst_241 [1] : vector<80x32xf32> to vector<80xf32>
    %460 = vector.shape_cast %459 : vector<80xf32> to vector<80x1xf32>
    %cst_242 = arith.constant 3.200000e+01 : f32
    %461 = vector.broadcast %cst_242 : f32 to vector<80x1xf32>
    %462 = arith.divf %460, %461 : vector<80x1xf32>
    %cst_243 = arith.constant 9.99999996E-13 : f32
    %463 = vector.broadcast %cst_243 : f32 to vector<80x1xf32>
    %464 = arith.addf %462, %463 : vector<80x1xf32>
    %465 = math.rsqrt %464 : vector<80x1xf32>
    %466 = vector.broadcast %465 : vector<80x1xf32> to vector<80x32xf32>
    %467 = arith.mulf %457, %466 : vector<80x32xf32>
    %468 = vector.broadcast %271 : vector<1x32xf32> to vector<80x32xf32>
    %469 = arith.mulf %467, %468 : vector<80x32xf32>
    %470 = vector.broadcast %273 : vector<1x32xf32> to vector<80x32xf32>
    %471 = arith.addf %469, %470 : vector<80x32xf32>
    %c1_244 = arith.constant 1 : index
    %c0_245 = arith.constant 0 : index
    %c0_246 = arith.constant 0 : index
    %472 = vector.load %arg12[%c1_244, %c0_245, %c0_246] : memref<2x32x128xf32, #tpu.memory_space<vmem>>, vector<1x32x128xf32>
    %473 = vector.shape_cast %472 : vector<1x32x128xf32> to vector<32x128xf32>
    %cst_247 = arith.constant dense<0.000000e+00> : vector<80x128xf32>
    %474 = tpu.matmul %471, %473, %cst_247 {dimension_numbers = #tpu.dot_dimension_numbers<[1], [0], [0], [1], [0, 0, 1, 1], [], []>} : vector<80x32xf32>, vector<32x128xf32>, vector<80x128xf32> -> vector<80x128xf32>
    %c1_248 = arith.constant 1 : index
    %c0_249 = arith.constant 0 : index
    %c0_250 = arith.constant 0 : index
    %475 = vector.load %arg13[%c1_248, %c0_249, %c0_250] : memref<2x1x128xf32, #tpu.memory_space<vmem>>, vector<1x1x128xf32>
    %476 = vector.shape_cast %475 : vector<1x1x128xf32> to vector<1x128xf32>
    %477 = vector.broadcast %476 : vector<1x128xf32> to vector<80x128xf32>
    %478 = arith.addf %474, %477 : vector<80x128xf32>
    %cst_251 = arith.constant 5.000000e-01 : f32
    %479 = vector.broadcast %cst_251 : f32 to vector<80x128xf32>
    %480 = arith.mulf %478, %479 : vector<80x128xf32>
    %cst_252 = arith.constant 0.707106769 : f32
    %481 = vector.broadcast %cst_252 : f32 to vector<80x128xf32>
    %482 = arith.mulf %478, %481 : vector<80x128xf32>
    %cst_253 = arith.constant 0.000000e+00 : f32
    %483 = vector.broadcast %cst_253 : f32 to vector<80x128xf32>
    %484 = arith.cmpf oge, %482, %483 : vector<80x128xf32>
    %cst_254 = arith.constant 1.000000e+00 : f32
    %cst_255 = arith.constant -1.000000e+00 : f32
    %485 = vector.broadcast %cst_254 : f32 to vector<80x128xf32>
    %486 = vector.broadcast %cst_255 : f32 to vector<80x128xf32>
    %487 = arith.select %484, %485, %486 : vector<80x128xi1>, vector<80x128xf32>
    %488 = math.absf %482 : vector<80x128xf32>
    %cst_256 = arith.constant 0.327591091 : f32
    %489 = vector.broadcast %cst_256 : f32 to vector<80x128xf32>
    %490 = arith.mulf %489, %488 : vector<80x128xf32>
    %cst_257 = arith.constant 1.000000e+00 : f32
    %491 = vector.broadcast %cst_257 : f32 to vector<80x128xf32>
    %492 = arith.addf %491, %490 : vector<80x128xf32>
    %493 = tpu.reciprocal %492 {approx = true} : vector<80x128xf32> -> vector<80x128xf32>
    %cst_258 = arith.constant 1.06140542 : f32
    %494 = vector.broadcast %cst_258 : f32 to vector<80x128xf32>
    %495 = arith.mulf %494, %493 : vector<80x128xf32>
    %cst_259 = arith.constant -1.45315206 : f32
    %496 = vector.broadcast %cst_259 : f32 to vector<80x128xf32>
    %497 = arith.addf %495, %496 : vector<80x128xf32>
    %498 = arith.mulf %497, %493 : vector<80x128xf32>
    %cst_260 = arith.constant 1.42141378 : f32
    %499 = vector.broadcast %cst_260 : f32 to vector<80x128xf32>
    %500 = arith.addf %498, %499 : vector<80x128xf32>
    %501 = arith.mulf %500, %493 : vector<80x128xf32>
    %cst_261 = arith.constant -0.284496725 : f32
    %502 = vector.broadcast %cst_261 : f32 to vector<80x128xf32>
    %503 = arith.addf %501, %502 : vector<80x128xf32>
    %504 = arith.mulf %503, %493 : vector<80x128xf32>
    %cst_262 = arith.constant 0.254829586 : f32
    %505 = vector.broadcast %cst_262 : f32 to vector<80x128xf32>
    %506 = arith.addf %504, %505 : vector<80x128xf32>
    %507 = arith.mulf %506, %493 : vector<80x128xf32>
    %cst_263 = arith.constant 0.000000e+00 : f32
    %508 = vector.broadcast %cst_263 : f32 to vector<80x128xf32>
    %509 = arith.subf %508, %488 : vector<80x128xf32>
    %510 = arith.mulf %509, %488 : vector<80x128xf32>
    %511 = math.exp %510 : vector<80x128xf32>
    %512 = arith.mulf %507, %511 : vector<80x128xf32>
    %cst_264 = arith.constant 1.000000e+00 : f32
    %513 = vector.broadcast %cst_264 : f32 to vector<80x128xf32>
    %514 = arith.subf %513, %512 : vector<80x128xf32>
    %515 = arith.mulf %487, %514 : vector<80x128xf32>
    %cst_265 = arith.constant 1.000000e+00 : f32
    %516 = vector.broadcast %cst_265 : f32 to vector<80x128xf32>
    %517 = arith.addf %516, %515 : vector<80x128xf32>
    %518 = arith.mulf %480, %517 : vector<80x128xf32>
    %c1_266 = arith.constant 1 : index
    %c0_267 = arith.constant 0 : index
    %c0_268 = arith.constant 0 : index
    %519 = vector.load %arg14[%c1_266, %c0_267, %c0_268] : memref<2x128x32xf32, #tpu.memory_space<vmem>>, vector<1x128x32xf32>
    %520 = vector.shape_cast %519 : vector<1x128x32xf32> to vector<128x32xf32>
    %cst_269 = arith.constant dense<0.000000e+00> : vector<80x32xf32>
    %521 = tpu.matmul %518, %520, %cst_269 {dimension_numbers = #tpu.dot_dimension_numbers<[1], [0], [0], [1], [0, 0, 1, 1], [], []>} : vector<80x128xf32>, vector<128x32xf32>, vector<80x32xf32> -> vector<80x32xf32>
    %c1_270 = arith.constant 1 : index
    %c0_271 = arith.constant 0 : index
    %c0_272 = arith.constant 0 : index
    %522 = vector.load %arg15[%c1_270, %c0_271, %c0_272] : memref<2x1x32xf32, #tpu.memory_space<vmem>>, vector<1x1x32xf32>
    %523 = vector.shape_cast %522 : vector<1x1x32xf32> to vector<1x32xf32>
    %524 = vector.broadcast %523 : vector<1x32xf32> to vector<80x32xf32>
    %525 = arith.addf %521, %524 : vector<80x32xf32>
    %526 = arith.addf %451, %525 : vector<80x32xf32>
    %527 = vector.shape_cast %526 : vector<80x32xf32> to vector<2x40x32xf32>
    %c1_273 = arith.constant 1 : index
    %c0_274 = arith.constant 0 : index
    %c0_275 = arith.constant 0 : index
    %c0_276 = arith.constant 0 : index
    %528 = vector.load %arg16[%c1_273, %c0_274, %c0_275, %c0_276] : memref<2x2x40x32xf32, #tpu.memory_space<vmem>>, vector<1x2x40x32xf32>
    %529 = vector.shape_cast %528 : vector<1x2x40x32xf32> to vector<2x40x32xf32>
    %530 = vector.shape_cast %527 : vector<2x40x32xf32> to vector<1x2x40x32xf32>
    tpu.vector_store %arg16[%c1_273, %c0_274, %c0_275, %c0_276], %530 {strides = array<i32>} : memref<2x2x40x32xf32, #tpu.memory_space<vmem>>, vector<1x2x40x32xf32>,
    return
  }
}

</mosaic_0001>

<llo_original>
// kernel: transformer_forward.1
$region0: #{transformer_forward.1}
  #allocation0 [shape = 'u32[]', space=smem, size = 0x4, offset = 0x4, fixed_abs, tag = 'smem constant byte address 0x4 - core index']
  #allocation1 [shape = 'u32[144,128]{1,0:T(1,128)}', space=vmem, size = 0x12000, scoped, tag = 'internal scratch']
  %s0 = inlined_call_operand.vmem [shape: f32[2,40,32], index: 0, kind: input, shape index: {}]
  %s1 = inlined_call_operand.vmem [shape: f32[2,1,40], index: 1, kind: input, shape index: {}]
  %s2 = inlined_call_operand.vmem [shape: f32[2,1,32], index: 2, kind: input, shape index: {}]
  %s3 = inlined_call_operand.vmem [shape: f32[2,1,32], index: 3, kind: input, shape index: {}]
  %s4 = inlined_call_operand.vmem [shape: f32[2,32,32], index: 4, kind: input, shape index: {}]
  %s5 = inlined_call_operand.vmem [shape: f32[2,1,32], index: 5, kind: input, shape index: {}]
  %s6 = inlined_call_operand.vmem [shape: f32[2,32,32], index: 6, kind: input, shape index: {}]
  %s7 = inlined_call_operand.vmem [shape: f32[2,1,32], index: 7, kind: input, shape index: {}]
  %s8 = inlined_call_operand.vmem [shape: f32[2,32,32], index: 8, kind: input, shape index: {}]
  %s9 = inlined_call_operand.vmem [shape: f32[2,1,32], index: 9, kind: input, shape index: {}]
  %s10 = inlined_call_operand.vmem [shape: f32[2,32,32], index: 10, kind: input, shape index: {}]
  %s11 = inlined_call_operand.vmem [shape: f32[2,1,32], index: 11, kind: input, shape index: {}]
  %s12 = inlined_call_operand.vmem [shape: f32[2,32,128], index: 12, kind: input, shape index: {}]
  %s13 = inlined_call_operand.vmem [shape: f32[2,1,128], index: 13, kind: input, shape index: {}]
  %s14 = inlined_call_operand.vmem [shape: f32[2,128,32], index: 14, kind: input, shape index: {}]
  %s15 = inlined_call_operand.vmem [shape: f32[2,1,32], index: 15, kind: input, shape index: {}]
  %s16 = inlined_call_operand.vmem [shape: f32[2,2,40,32], index: 16, kind: output, shape index: {0}]
  %s17 = inlined_call_operand.hbm [shape: f32[2,2,4,40,40], index: 17, kind: output, shape index: {1}]
  %18 = xla_tuple %s16, %s17
  %s19 = sld [smem:[#allocation0]]
  $region82: #{transformer_forward.1} parent=0
    _
  %s21 = ssub.s32 1, %s19
  %s22 = scalar_select 0, %s21, %s19
  $region1: #{transformer_forward.1} parent=0
    #allocation2 [shape = 'u8[327680]{0}', space=vmem, size = 0x50000, scoped, tag = 'output window, operand 1, single buffered']
    #allocation3 [shape = 's32[1]{0}', space=sflag, size = 0x4, scoped, tag = 'scoped memory for transformer_forward.1']
    %23 = vsyncpa [#allocation3], 0
    // Predicated region
    $region2: #{transformer_forward.1} parent=1 // pred_check
      _
    $region3: #{transformer_forward.1} parent=1 // pred_check_branch
      %25 = sbr.rel (0) target = $region5
    $region4: #{transformer_forward.1} parent=1 // pred_region
      _
    $region5: #{transformer_forward.1} parent=1 // pred_fallthru
      _
    // Predicated region
    $region6: #{transformer_forward.1} parent=1 // pred_check
      _
    $region7: #{transformer_forward.1} parent=1 // pred_check_branch
      %27 = sbr.rel (0) target = $region9
    $region8: #{transformer_forward.1} parent=1 // pred_region
      _
    $region9: #{transformer_forward.1} parent=1 // pred_fallthru
      _
    // Predicated region
    $region10: #{transformer_forward.1} parent=1 // pred_check
      _
    $region11: #{transformer_forward.1} parent=1 // pred_check_branch
      %29 = sbr.rel (0) target = $region13
    $region12: #{transformer_forward.1} parent=1 // pred_region
      _
    $region13: #{transformer_forward.1} parent=1 // pred_fallthru
      _
    // Predicated region
    $region14: #{transformer_forward.1} parent=1 // pred_check
      _
    $region15: #{transformer_forward.1} parent=1 // pred_check_branch
      %31 = sbr.rel (0) target = $region17
    $region16: #{transformer_forward.1} parent=1 // pred_region
      _
    $region17: #{transformer_forward.1} parent=1 // pred_fallthru
      _
    // Predicated region
    $region18: #{transformer_forward.1} parent=1 // pred_check
      _
    $region19: #{transformer_forward.1} parent=1 // pred_check_branch
      %33 = sbr.rel (0) target = $region21
    $region20: #{transformer_forward.1} parent=1 // pred_region
      _
    $region21: #{transformer_forward.1} parent=1 // pred_fallthru
      _
    // Predicated region
    $region22: #{transformer_forward.1} parent=1 // pred_check
      _
    $region23: #{transformer_forward.1} parent=1 // pred_check_branch
      %35 = sbr.rel (0) target = $region25
    $region24: #{transformer_forward.1} parent=1 // pred_region
      _
    $region25: #{transformer_forward.1} parent=1 // pred_fallthru
      _
    // Predicated region
    $region26: #{transformer_forward.1} parent=1 // pred_check
      _
    $region27: #{transformer_forward.1} parent=1 // pred_check_branch
      %37 = sbr.rel (0) target = $region29
    $region28: #{transformer_forward.1} parent=1 // pred_region
      _
    $region29: #{transformer_forward.1} parent=1 // pred_fallthru
      _
    // Predicated region
    $region30: #{transformer_forward.1} parent=1 // pred_check
      _
    $region31: #{transformer_forward.1} parent=1 // pred_check_branch
      %39 = sbr.rel (0) target = $region33
    $region32: #{transformer_forward.1} parent=1 // pred_region
      _
    $region33: #{transformer_forward.1} parent=1 // pred_fallthru
      _
    // Predicated region
    $region34: #{transformer_forward.1} parent=1 // pred_check
      _
    $region35: #{transformer_forward.1} parent=1 // pred_check_branch
      %41 = sbr.rel (0) target = $region37
    $region36: #{transformer_forward.1} parent=1 // pred_region
      _
    $region37: #{transformer_forward.1} parent=1 // pred_fallthru
      _
    // Predicated region
    $region38: #{transformer_forward.1} parent=1 // pred_check
      _
    $region39: #{transformer_forward.1} parent=1 // pred_check_branch
      %43 = sbr.rel (0) target = $region41
    $region40: #{transformer_forward.1} parent=1 // pred_region
      _
    $region41: #{transformer_forward.1} parent=1 // pred_fallthru
      _
    // Predicated region
    $region42: #{transformer_forward.1} parent=1 // pred_check
      _
    $region43: #{transformer_forward.1} parent=1 // pred_check_branch
      %45 = sbr.rel (0) target = $region45
    $region44: #{transformer_forward.1} parent=1 // pred_region
      _
    $region45: #{transformer_forward.1} parent=1 // pred_fallthru
      _
    // Predicated region
    $region46: #{transformer_forward.1} parent=1 // pred_check
      _
    $region47: #{transformer_forward.1} parent=1 // pred_check_branch
      %47 = sbr.rel (0) target = $region49
    $region48: #{transformer_forward.1} parent=1 // pred_region
      _
    $region49: #{transformer_forward.1} parent=1 // pred_fallthru
      _
    // Predicated region
    $region50: #{transformer_forward.1} parent=1 // pred_check
      _
    $region51: #{transformer_forward.1} parent=1 // pred_check_branch
      %49 = sbr.rel (0) target = $region53
    $region52: #{transformer_forward.1} parent=1 // pred_region
      _
    $region53: #{transformer_forward.1} parent=1 // pred_fallthru
      _
    // Predicated region
    $region54: #{transformer_forward.1} parent=1 // pred_check
      _
    $region55: #{transformer_forward.1} parent=1 // pred_check_branch
      %51 = sbr.rel (0) target = $region57
    $region56: #{transformer_forward.1} parent=1 // pred_region
      _
    $region57: #{transformer_forward.1} parent=1 // pred_fallthru
      _
    // Predicated region
    $region58: #{transformer_forward.1} parent=1 // pred_check
      _
    $region59: #{transformer_forward.1} parent=1 // pred_check_branch
      %53 = sbr.rel (0) target = $region61
    $region60: #{transformer_forward.1} parent=1 // pred_region
      _
    $region61: #{transformer_forward.1} parent=1 // pred_fallthru
      _
    // Predicated region
    $region62: #{transformer_forward.1} parent=1 // pred_check
      _
    $region63: #{transformer_forward.1} parent=1 // pred_check_branch
      %55 = sbr.rel (0) target = $region65
    $region64: #{transformer_forward.1} parent=1 // pred_region
      _
    $region65: #{transformer_forward.1} parent=1 // pred_fallthru
      _
    %v56 = vld [vmem:[%s0] sm:$0xff]
    %v57 = vld [vmem:[%s0 + $0x8] sm:$0xff]
    %v58 = vld [vmem:[%s0 + $0x10] sm:$0xff]
    %v59 = vld [vmem:[%s0 + $0x18] sm:$0xff]
    %v60 = vld [vmem:[%s0 + $0x20] sm:$0xff]
    %v61 = vld [vmem:[%s0 + $0x28] sm:$0xff]
    %v62 = vld [vmem:[%s0 + $0x30] sm:$0xff]
    %v63 = vld [vmem:[%s0 + $0x38] sm:$0xff]
    %v64 = vld [vmem:[%s0 + $0x40] sm:$0xff]
    %v65 = vld [vmem:[%s0 + $0x48] sm:$0xff]
    %v66 = vld [vmem:[%s1] sm:$0x1]
    %v67 = vld [vmem:[%s1 + $0x1] sm:$0x1]
    %v68 = vsub.f32 1.0, %v66
    %v69 = vsub.f32 1.0, %v67
    %v70 = vmul.f32 %v68, -10000.0
    %v71 = vmul.f32 %v69, -10000.0
    %v74 = vlaneseq
    %v75 = vshrl.u32 %v74, 7
    %v76 = vsub.s32 0, %v75
    %v77 = vrot.slane %v70, %v76
    %v78 = vlaneseq
    %v79 = vshrl.u32 %v78, 7
    %v80 = vsub.s32 0, %v79
    %v81 = vrot.slane %v71, %v80
    %v84 = vld [vmem:[%s2] sm:$0x1]
    %v85 = vld [vmem:[%s3] sm:$0x1]
    %vm86 = vcmask 261120
    %v87 = vsel %vm86, %v56, 0.0
    %88 = vadd.xlane.f32.xlu0 %v87
    %v89 = vpop.xlane.xlu0 %88
    %v90 = vsel %vm86, %v57, 0.0
    %91 = vadd.xlane.f32.xlu0 %v90
    %v92 = vpop.xlane.xlu0 %91
    %v93 = vsel %vm86, %v58, 0.0
    %94 = vadd.xlane.f32.xlu0 %v93
    %v95 = vpop.xlane.xlu0 %94
    %v96 = vsel %vm86, %v59, 0.0
    %97 = vadd.xlane.f32.xlu0 %v96
    %v98 = vpop.xlane.xlu0 %97
    %v99 = vsel %vm86, %v60, 0.0
    %100 = vadd.xlane.f32.xlu0 %v99
    %v101 = vpop.xlane.xlu0 %100
    %v102 = vsel %vm86, %v61, 0.0
    %103 = vadd.xlane.f32.xlu0 %v102
    %v104 = vpop.xlane.xlu0 %103
    %v105 = vsel %vm86, %v62, 0.0
    %106 = vadd.xlane.f32.xlu0 %v105
    %v107 = vpop.xlane.xlu0 %106
    %v108 = vsel %vm86, %v63, 0.0
    %109 = vadd.xlane.f32.xlu0 %v108
    %v110 = vpop.xlane.xlu0 %109
    %v111 = vsel %vm86, %v64, 0.0
    %112 = vadd.xlane.f32.xlu0 %v111
    %v113 = vpop.xlane.xlu0 %112
    %v114 = vsel %vm86, %v65, 0.0
    %115 = vadd.xlane.f32.xlu0 %v114
    %v116 = vpop.xlane.xlu0 %115
    %v117 = vrcp.pop 32.0
    %v118 = vmul.f32 %v89, %v117
    %v119 = vmul.f32 %v92, %v117
    %v120 = vmul.f32 %v95, %v117
    %v121 = vmul.f32 %v98, %v117
    %v122 = vmul.f32 %v101, %v117
    %v123 = vmul.f32 %v104, %v117
    %v124 = vmul.f32 %v107, %v117
    %v125 = vmul.f32 %v110, %v117
    %v126 = vmul.f32 %v113, %v117
    %v127 = vmul.f32 %v116, %v117
    %v128 = vsub.f32 %v56, %v118
    %v129 = vsub.f32 %v57, %v119
    %v130 = vsub.f32 %v58, %v120
    %v131 = vsub.f32 %v59, %v121
    %v132 = vsub.f32 %v60, %v122
    %v133 = vsub.f32 %v61, %v123
    %v134 = vsub.f32 %v62, %v124
    %v135 = vsub.f32 %v63, %v125
    %v136 = vsub.f32 %v64, %v126
    %v137 = vsub.f32 %v65, %v127
    %v138 = vmul.f32 %v128, %v128
    %v139 = vmul.f32 %v129, %v129
    %v140 = vmul.f32 %v130, %v130
    %v141 = vmul.f32 %v131, %v131
    %v142 = vmul.f32 %v132, %v132
    %v143 = vmul.f32 %v133, %v133
    %v144 = vmul.f32 %v134, %v134
    %v145 = vmul.f32 %v135, %v135
    %v146 = vmul.f32 %v136, %v136
    %v147 = vmul.f32 %v137, %v137
    %v148 = vsel %vm86, %v138, 0.0
    %149 = vadd.xlane.f32.xlu0 %v148
    %v150 = vpop.xlane.xlu0 %149
    %v151 = vsel %vm86, %v139, 0.0
    %152 = vadd.xlane.f32.xlu0 %v151
    %v153 = vpop.xlane.xlu0 %152
    %v154 = vsel %vm86, %v140, 0.0
    %155 = vadd.xlane.f32.xlu0 %v154
    %v156 = vpop.xlane.xlu0 %155
    %v157 = vsel %vm86, %v141, 0.0
    %158 = vadd.xlane.f32.xlu0 %v157
    %v159 = vpop.xlane.xlu0 %158
    %v160 = vsel %vm86, %v142, 0.0
    %161 = vadd.xlane.f32.xlu0 %v160
    %v162 = vpop.xlane.xlu0 %161
    %v163 = vsel %vm86, %v143, 0.0
    %164 = vadd.xlane.f32.xlu0 %v163
    %v165 = vpop.xlane.xlu0 %164
    %v166 = vsel %vm86, %v144, 0.0
    %167 = vadd.xlane.f32.xlu0 %v166
    %v168 = vpop.xlane.xlu0 %167
    %v169 = vsel %vm86, %v145, 0.0
    %170 = vadd.xlane.f32.xlu0 %v169
    %v171 = vpop.xlane.xlu0 %170
    %v172 = vsel %vm86, %v146, 0.0
    %173 = vadd.xlane.f32.xlu0 %v172
    %v174 = vpop.xlane.xlu0 %173
    %v175 = vsel %vm86, %v147, 0.0
    %176 = vadd.xlane.f32.xlu0 %v175
    %v177 = vpop.xlane.xlu0 %176
    %v178 = vmul.f32 %v150, %v117
    %v179 = vmul.f32 %v153, %v117
    %v180 = vmul.f32 %v156, %v117
    %v181 = vmul.f32 %v159, %v117
    %v182 = vmul.f32 %v162, %v117
    %v183 = vmul.f32 %v165, %v117
    %v184 = vmul.f32 %v168, %v117
    %v185 = vmul.f32 %v171, %v117
    %v186 = vmul.f32 %v174, %v117
    %v187 = vmul.f32 %v177, %v117
    %v188 = vadd.f32 %v178, 1e-12
    %v189 = vadd.f32 %v179, 1e-12
    %v190 = vadd.f32 %v180, 1e-12
    %v191 = vadd.f32 %v181, 1e-12
    %v192 = vadd.f32 %v182, 1e-12
    %v193 = vadd.f32 %v183, 1e-12
    %v194 = vadd.f32 %v184, 1e-12
    %v195 = vadd.f32 %v185, 1e-12
    %v196 = vadd.f32 %v186, 1e-12
    %v197 = vadd.f32 %v187, 1e-12
    %v198 = vrsqrt.pop %v188
    %v199 = vrsqrt.pop %v189
    %v200 = vrsqrt.pop %v190
    %v201 = vrsqrt.pop %v191
    %v202 = vrsqrt.pop %v192
    %v203 = vrsqrt.pop %v193
    %v204 = vrsqrt.pop %v194
    %v205 = vrsqrt.pop %v195
    %v206 = vrsqrt.pop %v196
    %v207 = vrsqrt.pop %v197
    %v208 = vmul.f32 %v128, %v198
    %v209 = vmul.f32 %v129, %v199
    %v210 = vmul.f32 %v130, %v200
    %v211 = vmul.f32 %v131, %v201
    %v212 = vmul.f32 %v132, %v202
    %v213 = vmul.f32 %v133, %v203
    %v214 = vmul.f32 %v134, %v204
    %v215 = vmul.f32 %v135, %v205
    %v216 = vmul.f32 %v136, %v206
    %v217 = vmul.f32 %v137, %v207
    %v219 = vlaneseq
    %v220 = vshrl.u32 %v219, 7
    %v221 = vsub.s32 0, %v220
    %v222 = vrot.slane %v84, %v221
    %v224 = vmul.f32 %v208, %v222
    %v225 = vmul.f32 %v209, %v222
    %v226 = vmul.f32 %v210, %v222
    %v227 = vmul.f32 %v211, %v222
    %v228 = vmul.f32 %v212, %v222
    %v229 = vmul.f32 %v213, %v222
    %v230 = vmul.f32 %v214, %v222
    %v231 = vmul.f32 %v215, %v222
    %v232 = vmul.f32 %v216, %v222
    %v233 = vmul.f32 %v217, %v222
    %v235 = vlaneseq
    %v236 = vshrl.u32 %v235, 7
    %v237 = vsub.s32 0, %v236
    %v238 = vrot.slane %v85, %v237
    %v240 = vadd.f32 %v224, %v238
    %v241 = vadd.f32 %v225, %v238
    %v242 = vadd.f32 %v226, %v238
    %v243 = vadd.f32 %v227, %v238
    %v244 = vadd.f32 %v228, %v238
    %v245 = vadd.f32 %v229, %v238
    %v246 = vadd.f32 %v230, %v238
    %v247 = vadd.f32 %v231, %v238
    %v248 = vadd.f32 %v232, %v238
    %v249 = vadd.f32 %v233, %v238
    %v250 = vld [vmem:[%s4] sm:$0xff]
    %v251 = vld [vmem:[%s4 + $0x8] sm:$0xff]
    %v252 = vld [vmem:[%s4 + $0x10] sm:$0xff]
    %v253 = vld [vmem:[%s4 + $0x18] sm:$0xff]
    %v254 = vld [vmem:[%s5] sm:$0x1]
    %v256 = vlaneseq
    %v257 = vshrl.u32 %v256, 7
    %v258 = vsub.s32 0, %v257
    %v259 = vrot.slane %v254, %v258
    %v262 = vsel %vm86, %v240, 0
    %v265 = vsel %vm86, %v241, 0
    %v268 = vsel %vm86, %v242, 0
    %v271 = vsel %vm86, %v243, 0
    %v274 = vsel %vm86, %v244, 0
    %v277 = vsel %vm86, %v245, 0
    %v280 = vsel %vm86, %v246, 0
    %v283 = vsel %vm86, %v247, 0
    %v286 = vsel %vm86, %v248, 0
    %v289 = vsel %vm86, %v249, 0
    %291 = vmatprep.subr.mxu0 0.0
    %292 = vmatpush1.msra.mxu0 0.0
    %293 = vmatprep.subr.mxu0 0.0
    %294 = vmatpush1.msra.mxu0 0.0
    %295 = vmatprep.subr.mxu0 0.0
    %296 = vmatpush1.msra.mxu0 0.0
    %297 = vmatprep.subr.mxu0 0.0
    %298 = vmatpush1.msra.mxu0 0.0
    %299 = vmatprep.subr.mxu0 0.0
    %300 = vmatpush1.msra.mxu0 0.0
    %301 = vmatprep.subr.mxu0 0.0
    %302 = vmatpush1.msra.mxu0 0.0
    %303 = vmatprep.subr.mxu0 0.0
    %304 = vmatpush1.msra.mxu0 0.0
    %305 = vmatprep.subr.mxu0 0.0
    %306 = vmatpush1.msra.mxu0 0.0
    %307 = vmatprep.subr.mxu0 0.0
    %308 = vmatpush1.msra.mxu0 0.0
    %309 = vmatprep.subr.mxu0 0.0
    %310 = vmatpush1.msra.mxu0 0.0
    %311 = vmatprep.subr.mxu0 0.0
    %312 = vmatpush1.msra.mxu0 0.0
    %313 = vmatprep.subr.mxu0 0.0
    %314 = vmatpush1.msra.mxu0 0.0
    %315 = vmatprep.subr.mxu0 0.0
    %316 = vmatpush1.msra.mxu0 %v253
    %317 = vmatprep.subr.mxu0 0.0
    %318 = vmatpush1.msra.mxu0 %v252
    %319 = vmatprep.subr.mxu0 0.0
    %320 = vmatpush1.msra.mxu0 %v251
    %321 = vmatprep.subr.mxu0 0.0
    %322 = vmatpush1.msra.mxu0 %v250
    %323 = vmatprep.subr.mxu0 0.0
    %324 = vmatpush2.msra.mxu0 0.0
    %325 = vmatprep.subr.mxu0 0.0
    %326 = vmatpush2.msra.mxu0 0.0
    %327 = vmatprep.subr.mxu0 0.0
    %328 = vmatpush2.msra.mxu0 0.0
    %329 = vmatprep.subr.mxu0 0.0
    %330 = vmatpush2.msra.mxu0 0.0
    %331 = vmatprep.subr.mxu0 0.0
    %332 = vmatpush2.msra.mxu0 0.0
    %333 = vmatprep.subr.mxu0 0.0
    %334 = vmatpush2.msra.mxu0 0.0
    %335 = vmatprep.subr.mxu0 0.0
    %336 = vmatpush2.msra.mxu0 0.0
    %337 = vmatprep.subr.mxu0 0.0
    %338 = vmatpush2.msra.mxu0 0.0
    %339 = vmatprep.subr.mxu0 0.0
    %340 = vmatpush2.msra.mxu0 0.0
    %341 = vmatprep.subr.mxu0 0.0
    %342 = vmatpush2.msra.mxu0 0.0
    %343 = vmatprep.subr.mxu0 0.0
    %344 = vmatpush2.msra.mxu0 0.0
    %345 = vmatprep.subr.mxu0 0.0
    %346 = vmatpush2.msra.mxu0 0.0
    %347 = vmatprep.subr.mxu0 0.0
    %348 = vmatpush2.msra.mxu0 0.0
    %349 = vmatprep.subr.mxu0 0.0
    %350 = vmatpush2.msra.mxu0 0.0
    %351 = vmatprep.subr.mxu0 0.0
    %352 = vmatpush2.msra.mxu0 0.0
    %353 = vmatprep.subr.mxu0 0.0
    %354 = vmatpush2.msra.mxu0 0.0
    %355 = vmatprep.mubr.f32.mxu0 0.0
    %356 = vmatmul.mubr.f32.gmra.mxu0 %v262
    %v357 = vpop.f32.mrf.mxu0
    %v358 = vadd.f32 %v259, %v357
    %v359 = vpop.f32.mrf.mxu0
    %360 = vmatprep.mubr.f32.mxu0 0.0
    %361 = vmatmul.mubr.f32.gmra.mxu0 %v265
    %v362 = vpop.f32.mrf.mxu0
    %v363 = vadd.f32 %v259, %v362
    %v364 = vpop.f32.mrf.mxu0
    %365 = vmatprep.mubr.f32.mxu0 0.0
    %366 = vmatmul.mubr.f32.gmra.mxu0 %v268
    %v367 = vpop.f32.mrf.mxu0
    %v368 = vadd.f32 %v259, %v367
    %v369 = vpop.f32.mrf.mxu0
    %370 = vmatprep.mubr.f32.mxu0 0.0
    %371 = vmatmul.mubr.f32.gmra.mxu0 %v271
    %v372 = vpop.f32.mrf.mxu0
    %v373 = vadd.f32 %v259, %v372
    %v374 = vpop.f32.mrf.mxu0
    %375 = vmatprep.mubr.f32.mxu0 0.0
    %376 = vmatmul.mubr.f32.gmra.mxu0 %v274
    %v377 = vpop.f32.mrf.mxu0
    %v378 = vadd.f32 %v259, %v377
    %v379 = vpop.f32.mrf.mxu0
    %380 = vmatprep.mubr.f32.mxu0 0.0
    %381 = vmatmul.mubr.f32.gmra.mxu0 %v277
    %v382 = vpop.f32.mrf.mxu0
    %v383 = vadd.f32 %v259, %v382
    %v384 = vpop.f32.mrf.mxu0
    %385 = vmatprep.mubr.f32.mxu0 0.0
    %386 = vmatmul.mubr.f32.gmra.mxu0 %v280
    %v387 = vpop.f32.mrf.mxu0
    %v388 = vadd.f32 %v259, %v387
    %v389 = vpop.f32.mrf.mxu0
    %390 = vmatprep.mubr.f32.mxu0 0.0
    %391 = vmatmul.mubr.f32.gmra.mxu0 %v283
    %v392 = vpop.f32.mrf.mxu0
    %v393 = vadd.f32 %v259, %v392
    %v394 = vpop.f32.mrf.mxu0
    %395 = vmatprep.mubr.f32.mxu0 0.0
    %396 = vmatmul.mubr.f32.gmra.mxu0 %v286
    %v397 = vpop.f32.mrf.mxu0
    %v398 = vadd.f32 %v259, %v397
    %v399 = vpop.f32.mrf.mxu0
    %400 = vmatprep.mubr.f32.mxu0 0.0
    %401 = vmatmul.mubr.f32.gmra.mxu0 %v289
    %v402 = vpop.f32.mrf.mxu0
    %v403 = vadd.f32 %v259, %v402
    %v404 = vpop.f32.mrf.mxu0
    %405 = vdwg.mxu0
    %v406 = vld [vmem:[%s6] sm:$0xff]
    %v407 = vld [vmem:[%s6 + $0x8] sm:$0xff]
    %v408 = vld [vmem:[%s6 + $0x10] sm:$0xff]
    %v409 = vld [vmem:[%s6 + $0x18] sm:$0xff]
    %v410 = vld [vmem:[%s7] sm:$0x1]
    %v412 = vlaneseq
    %v413 = vshrl.u32 %v412, 7
    %v414 = vsub.s32 0, %v413
    %v415 = vrot.slane %v410, %v414
    %417 = vmatprep.subr.mxu0 0.0
    %418 = vmatpush1.msra.mxu0 0.0
    %419 = vmatprep.subr.mxu0 0.0
    %420 = vmatpush1.msra.mxu0 0.0
    %421 = vmatprep.subr.mxu0 0.0
    %422 = vmatpush1.msra.mxu0 0.0
    %423 = vmatprep.subr.mxu0 0.0
    %424 = vmatpush1.msra.mxu0 0.0
    %425 = vmatprep.subr.mxu0 0.0
    %426 = vmatpush1.msra.mxu0 0.0
    %427 = vmatprep.subr.mxu0 0.0
    %428 = vmatpush1.msra.mxu0 0.0
    %429 = vmatprep.subr.mxu0 0.0
    %430 = vmatpush1.msra.mxu0 0.0
    %431 = vmatprep.subr.mxu0 0.0
    %432 = vmatpush1.msra.mxu0 0.0
    %433 = vmatprep.subr.mxu0 0.0
    %434 = vmatpush1.msra.mxu0 0.0
    %435 = vmatprep.subr.mxu0 0.0
    %436 = vmatpush1.msra.mxu0 0.0
    %437 = vmatprep.subr.mxu0 0.0
    %438 = vmatpush1.msra.mxu0 0.0
    %439 = vmatprep.subr.mxu0 0.0
    %440 = vmatpush1.msra.mxu0 0.0
    %441 = vmatprep.subr.mxu0 0.0
    %442 = vmatpush1.msra.mxu0 %v409
    %443 = vmatprep.subr.mxu0 0.0
    %444 = vmatpush1.msra.mxu0 %v408
    %445 = vmatprep.subr.mxu0 0.0
    %446 = vmatpush1.msra.mxu0 %v407
    %447 = vmatprep.subr.mxu0 0.0
    %448 = vmatpush1.msra.mxu0 %v406
    %449 = vmatprep.subr.mxu0 0.0
    %450 = vmatpush2.msra.mxu0 0.0
    %451 = vmatprep.subr.mxu0 0.0
    %452 = vmatpush2.msra.mxu0 0.0
    %453 = vmatprep.subr.mxu0 0.0
    %454 = vmatpush2.msra.mxu0 0.0
    %455 = vmatprep.subr.mxu0 0.0
    %456 = vmatpush2.msra.mxu0 0.0
    %457 = vmatprep.subr.mxu0 0.0
    %458 = vmatpush2.msra.mxu0 0.0
    %459 = vmatprep.subr.mxu0 0.0
    %460 = vmatpush2.msra.mxu0 0.0
    %461 = vmatprep.subr.mxu0 0.0
    %462 = vmatpush2.msra.mxu0 0.0
    %463 = vmatprep.subr.mxu0 0.0
    %464 = vmatpush2.msra.mxu0 0.0
    %465 = vmatprep.subr.mxu0 0.0
    %466 = vmatpush2.msra.mxu0 0.0
    %467 = vmatprep.subr.mxu0 0.0
    %468 = vmatpush2.msra.mxu0 0.0
    %469 = vmatprep.subr.mxu0 0.0
    %470 = vmatpush2.msra.mxu0 0.0
    %471 = vmatprep.subr.mxu0 0.0
    %472 = vmatpush2.msra.mxu0 0.0
    %473 = vmatprep.subr.mxu0 0.0
    %474 = vmatpush2.msra.mxu0 0.0
    %475 = vmatprep.subr.mxu0 0.0
    %476 = vmatpush2.msra.mxu0 0.0
    %477 = vmatprep.subr.mxu0 0.0
    %478 = vmatpush2.msra.mxu0 0.0
    %479 = vmatprep.subr.mxu0 0.0
    %480 = vmatpush2.msra.mxu0 0.0
    %481 = vmatprep.mubr.f32.mxu0 0.0
    %482 = vmatmul.mubr.f32.gmra.mxu0 %v262
    %v483 = vpop.f32.mrf.mxu0
    %v484 = vadd.f32 %v415, %v483
    %v485 = vpop.f32.mrf.mxu0
    %486 = vmatprep.mubr.f32.mxu0 0.0
    %487 = vmatmul.mubr.f32.gmra.mxu0 %v265
    %v488 = vpop.f32.mrf.mxu0
    %v489 = vadd.f32 %v415, %v488
    %v490 = vpop.f32.mrf.mxu0
    %491 = vmatprep.mubr.f32.mxu0 0.0
    %492 = vmatmul.mubr.f32.gmra.mxu0 %v268
    %v493 = vpop.f32.mrf.mxu0
    %v494 = vadd.f32 %v415, %v493
    %v495 = vpop.f32.mrf.mxu0
    %496 = vmatprep.mubr.f32.mxu0 0.0
    %497 = vmatmul.mubr.f32.gmra.mxu0 %v271
    %v498 = vpop.f32.mrf.mxu0
    %v499 = vadd.f32 %v415, %v498
    %v500 = vpop.f32.mrf.mxu0
    %501 = vmatprep.mubr.f32.mxu0 0.0
    %502 = vmatmul.mubr.f32.gmra.mxu0 %v274
    %v503 = vpop.f32.mrf.mxu0
    %v504 = vadd.f32 %v415, %v503
    %v505 = vpop.f32.mrf.mxu0
    %506 = vmatprep.mubr.f32.mxu0 0.0
    %507 = vmatmul.mubr.f32.gmra.mxu0 %v277
    %v508 = vpop.f32.mrf.mxu0
    %v509 = vadd.f32 %v415, %v508
    %v510 = vpop.f32.mrf.mxu0
    %511 = vmatprep.mubr.f32.mxu0 0.0
    %512 = vmatmul.mubr.f32.gmra.mxu0 %v280
    %v513 = vpop.f32.mrf.mxu0
    %v514 = vadd.f32 %v415, %v513
    %v515 = vpop.f32.mrf.mxu0
    %516 = vmatprep.mubr.f32.mxu0 0.0
    %517 = vmatmul.mubr.f32.gmra.mxu0 %v283
    %v518 = vpop.f32.mrf.mxu0
    %v519 = vadd.f32 %v415, %v518
    %v520 = vpop.f32.mrf.mxu0
    %521 = vmatprep.mubr.f32.mxu0 0.0
    %522 = vmatmul.mubr.f32.gmra.mxu0 %v286
    %v523 = vpop.f32.mrf.mxu0
    %v524 = vadd.f32 %v415, %v523
    %v525 = vpop.f32.mrf.mxu0
    %526 = vmatprep.mubr.f32.mxu0 0.0
    %527 = vmatmul.mubr.f32.gmra.mxu0 %v289
    %v528 = vpop.f32.mrf.mxu0
    %v529 = vadd.f32 %v415, %v528
    %v530 = vpop.f32.mrf.mxu0
    %531 = vdwg.mxu0
    %v532 = vld [vmem:[%s8] sm:$0xff]
    %v533 = vld [vmem:[%s8 + $0x8] sm:$0xff]
    %v534 = vld [vmem:[%s8 + $0x10] sm:$0xff]
    %v535 = vld [vmem:[%s8 + $0x18] sm:$0xff]
    %v536 = vld [vmem:[%s9] sm:$0x1]
    %v538 = vlaneseq
    %v539 = vshrl.u32 %v538, 7
    %v540 = vsub.s32 0, %v539
    %v541 = vrot.slane %v536, %v540
    %543 = vmatprep.subr.mxu0 0.0
    %544 = vmatpush1.msra.mxu0 0.0
    %545 = vmatprep.subr.mxu0 0.0
    %546 = vmatpush1.msra.mxu0 0.0
    %547 = vmatprep.subr.mxu0 0.0
    %548 = vmatpush1.msra.mxu0 0.0
    %549 = vmatprep.subr.mxu0 0.0
    %550 = vmatpush1.msra.mxu0 0.0
    %551 = vmatprep.subr.mxu0 0.0
    %552 = vmatpush1.msra.mxu0 0.0
    %553 = vmatprep.subr.mxu0 0.0
    %554 = vmatpush1.msra.mxu0 0.0
    %555 = vmatprep.subr.mxu0 0.0
    %556 = vmatpush1.msra.mxu0 0.0
    %557 = vmatprep.subr.mxu0 0.0
    %558 = vmatpush1.msra.mxu0 0.0
    %559 = vmatprep.subr.mxu0 0.0
    %560 = vmatpush1.msra.mxu0 0.0
    %561 = vmatprep.subr.mxu0 0.0
    %562 = vmatpush1.msra.mxu0 0.0
    %563 = vmatprep.subr.mxu0 0.0
    %564 = vmatpush1.msra.mxu0 0.0
    %565 = vmatprep.subr.mxu0 0.0
    %566 = vmatpush1.msra.mxu0 0.0
    %567 = vmatprep.subr.mxu0 0.0
    %568 = vmatpush1.msra.mxu0 %v535
    %569 = vmatprep.subr.mxu0 0.0
    %570 = vmatpush1.msra.mxu0 %v534
    %571 = vmatprep.subr.mxu0 0.0
    %572 = vmatpush1.msra.mxu0 %v533
    %573 = vmatprep.subr.mxu0 0.0
    %574 = vmatpush1.msra.mxu0 %v532
    %575 = vmatprep.subr.mxu0 0.0
    %576 = vmatpush2.msra.mxu0 0.0
    %577 = vmatprep.subr.mxu0 0.0
    %578 = vmatpush2.msra.mxu0 0.0
    %579 = vmatprep.subr.mxu0 0.0
    %580 = vmatpush2.msra.mxu0 0.0
    %581 = vmatprep.subr.mxu0 0.0
    %582 = vmatpush2.msra.mxu0 0.0
    %583 = vmatprep.subr.mxu0 0.0
    %584 = vmatpush2.msra.mxu0 0.0
    %585 = vmatprep.subr.mxu0 0.0
    %586 = vmatpush2.msra.mxu0 0.0
    %587 = vmatprep.subr.mxu0 0.0
    %588 = vmatpush2.msra.mxu0 0.0
    %589 = vmatprep.subr.mxu0 0.0
    %590 = vmatpush2.msra.mxu0 0.0
    %591 = vmatprep.subr.mxu0 0.0
    %592 = vmatpush2.msra.mxu0 0.0
    %593 = vmatprep.subr.mxu0 0.0
    %594 = vmatpush2.msra.mxu0 0.0
    %595 = vmatprep.subr.mxu0 0.0
    %596 = vmatpush2.msra.mxu0 0.0
    %597 = vmatprep.subr.mxu0 0.0
    %598 = vmatpush2.msra.mxu0 0.0
    %599 = vmatprep.subr.mxu0 0.0
    %600 = vmatpush2.msra.mxu0 0.0
    %601 = vmatprep.subr.mxu0 0.0
    %602 = vmatpush2.msra.mxu0 0.0
    %603 = vmatprep.subr.mxu0 0.0
    %604 = vmatpush2.msra.mxu0 0.0
    %605 = vmatprep.subr.mxu0 0.0
    %606 = vmatpush2.msra.mxu0 0.0
    %607 = vmatprep.mubr.f32.mxu0 0.0
    %608 = vmatmul.mubr.f32.gmra.mxu0 %v262
    %v609 = vpop.f32.mrf.mxu0
    %v610 = vadd.f32 %v541, %v609
    %v611 = vpop.f32.mrf.mxu0
    %612 = vmatprep.mubr.f32.mxu0 0.0
    %613 = vmatmul.mubr.f32.gmra.mxu0 %v265
    %v614 = vpop.f32.mrf.mxu0
    %v615 = vadd.f32 %v541, %v614
    %v616 = vpop.f32.mrf.mxu0
    %617 = vmatprep.mubr.f32.mxu0 0.0
    %618 = vmatmul.mubr.f32.gmra.mxu0 %v268
    %v619 = vpop.f32.mrf.mxu0
    %v620 = vadd.f32 %v541, %v619
    %v621 = vpop.f32.mrf.mxu0
    %622 = vmatprep.mubr.f32.mxu0 0.0
    %623 = vmatmul.mubr.f32.gmra.mxu0 %v271
    %v624 = vpop.f32.mrf.mxu0
    %v625 = vadd.f32 %v541, %v624
    %v626 = vpop.f32.mrf.mxu0
    %627 = vmatprep.mubr.f32.mxu0 0.0
    %628 = vmatmul.mubr.f32.gmra.mxu0 %v274
    %v629 = vpop.f32.mrf.mxu0
    %v630 = vadd.f32 %v541, %v629
    %v631 = vpop.f32.mrf.mxu0
    %632 = vmatprep.mubr.f32.mxu0 0.0
    %633 = vmatmul.mubr.f32.gmra.mxu0 %v277
    %v634 = vpop.f32.mrf.mxu0
    %v635 = vadd.f32 %v541, %v634
    %v636 = vpop.f32.mrf.mxu0
    %637 = vmatprep.mubr.f32.mxu0 0.0
    %638 = vmatmul.mubr.f32.gmra.mxu0 %v280
    %v639 = vpop.f32.mrf.mxu0
    %v640 = vadd.f32 %v541, %v639
    %v641 = vpop.f32.mrf.mxu0
    %642 = vmatprep.mubr.f32.mxu0 0.0
    %643 = vmatmul.mubr.f32.gmra.mxu0 %v283
    %v644 = vpop.f32.mrf.mxu0
    %v645 = vadd.f32 %v541, %v644
    %v646 = vpop.f32.mrf.mxu0
    %647 = vmatprep.mubr.f32.mxu0 0.0
    %648 = vmatmul.mubr.f32.gmra.mxu0 %v286
    %v649 = vpop.f32.mrf.mxu0
    %v650 = vadd.f32 %v541, %v649
    %v651 = vpop.f32.mrf.mxu0
    %652 = vmatprep.mubr.f32.mxu0 0.0
    %653 = vmatmul.mubr.f32.gmra.mxu0 %v289
    %v654 = vpop.f32.mrf.mxu0
    %v655 = vadd.f32 %v541, %v654
    %v656 = vpop.f32.mrf.mxu0
    %657 = vdwg.mxu0
    %vm658 = vcmask 64512
    %v660 = vsel %vm658, %v358, 0
    %v663 = vsel %vm658, %v363, 0
    %v666 = vsel %vm658, %v368, 0
    %v669 = vsel %vm658, %v373, 0
    %v672 = vsel %vm658, %v378, 0
    %v675 = vsel %vm658, %v484, 0
    %v678 = vsel %vm658, %v489, 0
    %v681 = vsel %vm658, %v494, 0
    %v684 = vsel %vm658, %v499, 0
    %v687 = vsel %vm658, %v504, 0
    %689 = vmatprep.subr.mxu0 0.0
    %690 = vmatpush1.xpose.msra.mxu0 0.0
    %691 = vmatprep.subr.mxu0 0.0
    %692 = vmatpush1.xpose.msra.mxu0 0.0
    %693 = vmatprep.subr.mxu0 0.0
    %694 = vmatpush1.xpose.msra.mxu0 0.0
    %695 = vmatprep.subr.mxu0 0.0
    %696 = vmatpush1.xpose.msra.mxu0 0.0
    %697 = vmatprep.subr.mxu0 0.0
    %698 = vmatpush1.xpose.msra.mxu0 0.0
    %699 = vmatprep.subr.mxu0 0.0
    %700 = vmatpush1.xpose.msra.mxu0 0.0
    %701 = vmatprep.subr.mxu0 0.0
    %702 = vmatpush1.xpose.msra.mxu0 0.0
    %703 = vmatprep.subr.mxu0 0.0
    %704 = vmatpush1.xpose.msra.mxu0 0.0
    %705 = vmatprep.subr.mxu0 0.0
    %706 = vmatpush1.xpose.msra.mxu0 0.0
    %707 = vmatprep.subr.mxu0 0.0
    %708 = vmatpush1.xpose.msra.mxu0 0.0
    %709 = vmatprep.subr.mxu0 0.0
    %710 = vmatpush1.xpose.msra.mxu0 0.0
    %711 = vmatprep.subr.mxu0 0.0
    %712 = vmatpush1.xpose.msra.mxu0 %v687
    %713 = vmatprep.subr.mxu0 0.0
    %714 = vmatpush1.xpose.msra.mxu0 %v684
    %715 = vmatprep.subr.mxu0 0.0
    %716 = vmatpush1.xpose.msra.mxu0 %v681
    %717 = vmatprep.subr.mxu0 0.0
    %718 = vmatpush1.xpose.msra.mxu0 %v678
    %719 = vmatprep.subr.mxu0 0.0
    %720 = vmatpush1.xpose.msra.mxu0 %v675
    %721 = vmatprep.subr.mxu0 0.0
    %722 = vmatpush2.xpose.msra.mxu0 0.0
    %723 = vmatprep.subr.mxu0 0.0
    %724 = vmatpush2.xpose.msra.mxu0 0.0
    %725 = vmatprep.subr.mxu0 0.0
    %726 = vmatpush2.xpose.msra.mxu0 0.0
    %727 = vmatprep.subr.mxu0 0.0
    %728 = vmatpush2.xpose.msra.mxu0 0.0
    %729 = vmatprep.subr.mxu0 0.0
    %730 = vmatpush2.xpose.msra.mxu0 0.0
    %731 = vmatprep.subr.mxu0 0.0
    %732 = vmatpush2.xpose.msra.mxu0 0.0
    %733 = vmatprep.subr.mxu0 0.0
    %734 = vmatpush2.xpose.msra.mxu0 0.0
    %735 = vmatprep.subr.mxu0 0.0
    %736 = vmatpush2.xpose.msra.mxu0 0.0
    %737 = vmatprep.subr.mxu0 0.0
    %738 = vmatpush2.xpose.msra.mxu0 0.0
    %739 = vmatprep.subr.mxu0 0.0
    %740 = vmatpush2.xpose.msra.mxu0 0.0
    %741 = vmatprep.subr.mxu0 0.0
    %742 = vmatpush2.xpose.msra.mxu0 0.0
    %743 = vmatprep.subr.mxu0 0.0
    %744 = vmatpush2.xpose.msra.mxu0 0.0
    %745 = vmatprep.subr.mxu0 0.0
    %746 = vmatpush2.xpose.msra.mxu0 0.0
    %747 = vmatprep.subr.mxu0 0.0
    %748 = vmatpush2.xpose.msra.mxu0 0.0
    %749 = vmatprep.subr.mxu0 0.0
    %750 = vmatpush2.xpose.msra.mxu0 0.0
    %751 = vmatprep.subr.mxu0 0.0
    %752 = vmatpush2.xpose.msra.mxu0 0.0
    %753 = vmatprep.mubr.f32.mxu0 0.0
    %754 = vmatmul.mubr.f32.gmra.mxu0 %v660
    %v755 = vpop.f32.mrf.mxu0
    %v756 = vadd.f32 0.0, %v755
    %v757 = vpop.f32.mrf.mxu0
    %758 = vmatprep.mubr.f32.mxu0 0.0
    %759 = vmatmul.mubr.f32.gmra.mxu0 %v663
    %v760 = vpop.f32.mrf.mxu0
    %v761 = vadd.f32 0.0, %v760
    %v762 = vpop.f32.mrf.mxu0
    %763 = vmatprep.mubr.f32.mxu0 0.0
    %764 = vmatmul.mubr.f32.gmra.mxu0 %v666
    %v765 = vpop.f32.mrf.mxu0
    %v766 = vadd.f32 0.0, %v765
    %v767 = vpop.f32.mrf.mxu0
    %768 = vmatprep.mubr.f32.mxu0 0.0
    %769 = vmatmul.mubr.f32.gmra.mxu0 %v669
    %v770 = vpop.f32.mrf.mxu0
    %v771 = vadd.f32 0.0, %v770
    %v772 = vpop.f32.mrf.mxu0
    %773 = vmatprep.mubr.f32.mxu0 0.0
    %774 = vmatmul.mubr.f32.gmra.mxu0 %v672
    %v775 = vpop.f32.mrf.mxu0
    %v776 = vadd.f32 0.0, %v775
    %v777 = vpop.f32.mrf.mxu0
    %778 = vdwg.mxu0
    %v780 = vsel %vm658, %v383, 0
    %v783 = vsel %vm658, %v388, 0
    %v786 = vsel %vm658, %v393, 0
    %v789 = vsel %vm658, %v398, 0
    %v792 = vsel %vm658, %v403, 0
    %v795 = vsel %vm658, %v509, 0
    %v798 = vsel %vm658, %v514, 0
    %v801 = vsel %vm658, %v519, 0
    %v804 = vsel %vm658, %v524, 0
    %v807 = vsel %vm658, %v529, 0
    %809 = vmatprep.subr.mxu0 0.0
    %810 = vmatpush1.xpose.msra.mxu0 0.0
    %811 = vmatprep.subr.mxu0 0.0
    %812 = vmatpush1.xpose.msra.mxu0 0.0
    %813 = vmatprep.subr.mxu0 0.0
    %814 = vmatpush1.xpose.msra.mxu0 0.0
    %815 = vmatprep.subr.mxu0 0.0
    %816 = vmatpush1.xpose.msra.mxu0 0.0
    %817 = vmatprep.subr.mxu0 0.0
    %818 = vmatpush1.xpose.msra.mxu0 0.0
    %819 = vmatprep.subr.mxu0 0.0
    %820 = vmatpush1.xpose.msra.mxu0 0.0
    %821 = vmatprep.subr.mxu0 0.0
    %822 = vmatpush1.xpose.msra.mxu0 0.0
    %823 = vmatprep.subr.mxu0 0.0
    %824 = vmatpush1.xpose.msra.mxu0 0.0
    %825 = vmatprep.subr.mxu0 0.0
    %826 = vmatpush1.xpose.msra.mxu0 0.0
    %827 = vmatprep.subr.mxu0 0.0
    %828 = vmatpush1.xpose.msra.mxu0 0.0
    %829 = vmatprep.subr.mxu0 0.0
    %830 = vmatpush1.xpose.msra.mxu0 0.0
    %831 = vmatprep.subr.mxu0 0.0
    %832 = vmatpush1.xpose.msra.mxu0 %v807
    %833 = vmatprep.subr.mxu0 0.0
    %834 = vmatpush1.xpose.msra.mxu0 %v804
    %835 = vmatprep.subr.mxu0 0.0
    %836 = vmatpush1.xpose.msra.mxu0 %v801
    %837 = vmatprep.subr.mxu0 0.0
    %838 = vmatpush1.xpose.msra.mxu0 %v798
    %839 = vmatprep.subr.mxu0 0.0
    %840 = vmatpush1.xpose.msra.mxu0 %v795
    %841 = vmatprep.subr.mxu0 0.0
    %842 = vmatpush2.xpose.msra.mxu0 0.0
    %843 = vmatprep.subr.mxu0 0.0
    %844 = vmatpush2.xpose.msra.mxu0 0.0
    %845 = vmatprep.subr.mxu0 0.0
    %846 = vmatpush2.xpose.msra.mxu0 0.0
    %847 = vmatprep.subr.mxu0 0.0
    %848 = vmatpush2.xpose.msra.mxu0 0.0
    %849 = vmatprep.subr.mxu0 0.0
    %850 = vmatpush2.xpose.msra.mxu0 0.0
    %851 = vmatprep.subr.mxu0 0.0
    %852 = vmatpush2.xpose.msra.mxu0 0.0
    %853 = vmatprep.subr.mxu0 0.0
    %854 = vmatpush2.xpose.msra.mxu0 0.0
    %855 = vmatprep.subr.mxu0 0.0
    %856 = vmatpush2.xpose.msra.mxu0 0.0
    %857 = vmatprep.subr.mxu0 0.0
    %858 = vmatpush2.xpose.msra.mxu0 0.0
    %859 = vmatprep.subr.mxu0 0.0
    %860 = vmatpush2.xpose.msra.mxu0 0.0
    %861 = vmatprep.subr.mxu0 0.0
    %862 = vmatpush2.xpose.msra.mxu0 0.0
    %863 = vmatprep.subr.mxu0 0.0
    %864 = vmatpush2.xpose.msra.mxu0 0.0
    %865 = vmatprep.subr.mxu0 0.0
    %866 = vmatpush2.xpose.msra.mxu0 0.0
    %867 = vmatprep.subr.mxu0 0.0
    %868 = vmatpush2.xpose.msra.mxu0 0.0
    %869 = vmatprep.subr.mxu0 0.0
    %870 = vmatpush2.xpose.msra.mxu0 0.0
    %871 = vmatprep.subr.mxu0 0.0
    %872 = vmatpush2.xpose.msra.mxu0 0.0
    %873 = vmatprep.mubr.f32.mxu0 0.0
    %874 = vmatmul.mubr.f32.gmra.mxu0 %v780
    %v875 = vpop.f32.mrf.mxu0
    %v876 = vadd.f32 0.0, %v875
    %v877 = vpop.f32.mrf.mxu0
    %878 = vmatprep.mubr.f32.mxu0 0.0
    %879 = vmatmul.mubr.f32.gmra.mxu0 %v783
    %v880 = vpop.f32.mrf.mxu0
    %v881 = vadd.f32 0.0, %v880
    %v882 = vpop.f32.mrf.mxu0
    %883 = vmatprep.mubr.f32.mxu0 0.0
    %884 = vmatmul.mubr.f32.gmra.mxu0 %v786
    %v885 = vpop.f32.mrf.mxu0
    %v886 = vadd.f32 0.0, %v885
    %v887 = vpop.f32.mrf.mxu0
    %888 = vmatprep.mubr.f32.mxu0 0.0
    %889 = vmatmul.mubr.f32.gmra.mxu0 %v789
    %v890 = vpop.f32.mrf.mxu0
    %v891 = vadd.f32 0.0, %v890
    %v892 = vpop.f32.mrf.mxu0
    %893 = vmatprep.mubr.f32.mxu0 0.0
    %894 = vmatmul.mubr.f32.gmra.mxu0 %v792
    %v895 = vpop.f32.mrf.mxu0
    %v896 = vadd.f32 0.0, %v895
    %v897 = vpop.f32.mrf.mxu0
    %898 = vdwg.mxu0
    %v899 = vmul.f32 %v756, 0.35355338
    %v900 = vmul.f32 %v761, 0.35355338
    %v901 = vmul.f32 %v766, 0.35355338
    %v902 = vmul.f32 %v771, 0.35355338
    %v903 = vmul.f32 %v776, 0.35355338
    %v904 = vmul.f32 %v876, 0.35355338
    %v905 = vmul.f32 %v881, 0.35355338
    %v906 = vmul.f32 %v886, 0.35355338
    %v907 = vmul.f32 %v891, 0.35355338
    %v908 = vmul.f32 %v896, 0.35355338
    %v909 = vadd.f32 %v899, %v77
    %v910 = vadd.f32 %v900, %v77
    %v911 = vadd.f32 %v901, %v77
    %v912 = vadd.f32 %v902, %v77
    %v913 = vadd.f32 %v903, %v77
    %v914 = vadd.f32 %v904, %v81
    %v915 = vadd.f32 %v905, %v81
    %v916 = vadd.f32 %v906, %v81
    %v917 = vadd.f32 %v907, %v81
    %v918 = vadd.f32 %v908, %v81
    %vm919 = vcmask 326656
    %v920 = vsel %vm919, %v909, -inf
    %921 = vmax.xlane.f32.xlu0 %v920
    %v922 = vpop.xlane.xlu0 %921
    %v923 = vsel %vm919, %v910, -inf
    %924 = vmax.xlane.f32.xlu0 %v923
    %v925 = vpop.xlane.xlu0 %924
    %v926 = vsel %vm919, %v911, -inf
    %927 = vmax.xlane.f32.xlu0 %v926
    %v928 = vpop.xlane.xlu0 %927
    %v929 = vsel %vm919, %v912, -inf
    %930 = vmax.xlane.f32.xlu0 %v929
    %v931 = vpop.xlane.xlu0 %930
    %v932 = vsel %vm919, %v913, -inf
    %933 = vmax.xlane.f32.xlu0 %v932
    %v934 = vpop.xlane.xlu0 %933
    %v935 = vsel %vm919, %v914, -inf
    %936 = vmax.xlane.f32.xlu0 %v935
    %v937 = vpop.xlane.xlu0 %936
    %v938 = vsel %vm919, %v915, -inf
    %939 = vmax.xlane.f32.xlu0 %v938
    %v940 = vpop.xlane.xlu0 %939
    %v941 = vsel %vm919, %v916, -inf
    %942 = vmax.xlane.f32.xlu0 %v941
    %v943 = vpop.xlane.xlu0 %942
    %v944 = vsel %vm919, %v917, -inf
    %945 = vmax.xlane.f32.xlu0 %v944
    %v946 = vpop.xlane.xlu0 %945
    %v947 = vsel %vm919, %v918, -inf
    %948 = vmax.xlane.f32.xlu0 %v947
    %v949 = vpop.xlane.xlu0 %948
    %v950 = vsub.f32 %v909, %v922
    %v951 = vsub.f32 %v910, %v925
    %v952 = vsub.f32 %v911, %v928
    %v953 = vsub.f32 %v912, %v931
    %v954 = vsub.f32 %v913, %v934
    %v955 = vsub.f32 %v914, %v937
    %v956 = vsub.f32 %v915, %v940
    %v957 = vsub.f32 %v916, %v943
    %v958 = vsub.f32 %v917, %v946
    %v959 = vsub.f32 %v918, %v949
    %v960 = vmul.f32 %v950, 1.442695
    %v961 = vpow.pop %v960
    %v962 = vmul.f32 %v951, 1.442695
    %v963 = vpow.pop %v962
    %v964 = vmul.f32 %v952, 1.442695
    %v965 = vpow.pop %v964
    %v966 = vmul.f32 %v953, 1.442695
    %v967 = vpow.pop %v966
    %v968 = vmul.f32 %v954, 1.442695
    %v969 = vpow.pop %v968
    %v970 = vmul.f32 %v955, 1.442695
    %v971 = vpow.pop %v970
    %v972 = vmul.f32 %v956, 1.442695
    %v973 = vpow.pop %v972
    %v974 = vmul.f32 %v957, 1.442695
    %v975 = vpow.pop %v974
    %v976 = vmul.f32 %v958, 1.442695
    %v977 = vpow.pop %v976
    %v978 = vmul.f32 %v959, 1.442695
    %v979 = vpow.pop %v978
    %v980 = vsel %vm919, %v961, 0.0
    %981 = vadd.xlane.f32.xlu0 %v980
    %v982 = vpop.xlane.xlu0 %981
    %v983 = vsel %vm919, %v963, 0.0
    %984 = vadd.xlane.f32.xlu0 %v983
    %v985 = vpop.xlane.xlu0 %984
    %v986 = vsel %vm919, %v965, 0.0
    %987 = vadd.xlane.f32.xlu0 %v986
    %v988 = vpop.xlane.xlu0 %987
    %v989 = vsel %vm919, %v967, 0.0
    %990 = vadd.xlane.f32.xlu0 %v989
    %v991 = vpop.xlane.xlu0 %990
    %v992 = vsel %vm919, %v969, 0.0
    %993 = vadd.xlane.f32.xlu0 %v992
    %v994 = vpop.xlane.xlu0 %993
    %v995 = vsel %vm919, %v971, 0.0
    %996 = vadd.xlane.f32.xlu0 %v995
    %v997 = vpop.xlane.xlu0 %996
    %v998 = vsel %vm919, %v973, 0.0
    %999 = vadd.xlane.f32.xlu0 %v998
    %v1000 = vpop.xlane.xlu0 %999
    %v1001 = vsel %vm919, %v975, 0.0
    %1002 = vadd.xlane.f32.xlu0 %v1001
    %v1003 = vpop.xlane.xlu0 %1002
    %v1004 = vsel %vm919, %v977, 0.0
    %1005 = vadd.xlane.f32.xlu0 %v1004
    %v1006 = vpop.xlane.xlu0 %1005
    %v1007 = vsel %vm919, %v979, 0.0
    %1008 = vadd.xlane.f32.xlu0 %v1007
    %v1009 = vpop.xlane.xlu0 %1008
    %v1010 = vrcp.pop %v982
    %v1011 = vrcp.pop %v985
    %v1012 = vrcp.pop %v988
    %v1013 = vrcp.pop %v991
    %v1014 = vrcp.pop %v994
    %v1015 = vrcp.pop %v997
    %v1016 = vrcp.pop %v1000
    %v1017 = vrcp.pop %v1003
    %v1018 = vrcp.pop %v1006
    %v1019 = vrcp.pop %v1009
    %v1020 = vmul.f32 %v961, %v1010
    %v1021 = vmul.f32 %v963, %v1011
    %v1022 = vmul.f32 %v965, %v1012
    %v1023 = vmul.f32 %v967, %v1013
    %v1024 = vmul.f32 %v969, %v1014
    %v1025 = vmul.f32 %v971, %v1015
    %v1026 = vmul.f32 %v973, %v1016
    %v1027 = vmul.f32 %v975, %v1017
    %v1028 = vmul.f32 %v977, %v1018
    %v1029 = vmul.f32 %v979, %v1019
    %1030 = vst.msk [vmem:[#allocation2] sm:$0xff] %vm919, %v1020
    %1031 = vst.msk [vmem:[#allocation2 + $0x8] sm:$0xff] %vm919, %v1021
    %1032 = vst.msk [vmem:[#allocation2 + $0x10] sm:$0xff] %vm919, %v1022
    %1033 = vst.msk [vmem:[#allocation2 + $0x18] sm:$0xff] %vm919, %v1023
    %1034 = vst.msk [vmem:[#allocation2 + $0x20] sm:$0xff] %vm919, %v1024
    %s1035 = scalar_lea.vmem [#allocation2], 160
    %1036 = vst.msk [vmem:[%s1035] sm:$0xff] %vm919, %v1025
    %1037 = vst.msk [vmem:[%s1035 + $0x8] sm:$0xff] %vm919, %v1026
    %1038 = vst.msk [vmem:[%s1035 + $0x10] sm:$0xff] %vm919, %v1027
    %1039 = vst.msk [vmem:[%s1035 + $0x18] sm:$0xff] %vm919, %v1028
    %1040 = vst.msk [vmem:[%s1035 + $0x20] sm:$0xff] %vm919, %v1029
    %v1042 = vsel %vm919, %v1020, 0
    %v1045 = vsel %vm919, %v1021, 0
    %v1048 = vsel %vm919, %v1022, 0
    %v1051 = vsel %vm919, %v1023, 0
    %v1054 = vsel %vm919, %v1024, 0
    %1056 = vmatprep.subr.mxu0 0.0
    %1057 = vmatpush1.msra.mxu0 0.0
    %1058 = vmatprep.subr.mxu0 0.0
    %1059 = vmatpush1.msra.mxu0 0.0
    %1060 = vmatprep.subr.mxu0 0.0
    %1061 = vmatpush1.msra.mxu0 0.0
    %1062 = vmatprep.subr.mxu0 0.0
    %1063 = vmatpush1.msra.mxu0 0.0
    %1064 = vmatprep.subr.mxu0 0.0
    %1065 = vmatpush1.msra.mxu0 0.0
    %1066 = vmatprep.subr.mxu0 0.0
    %1067 = vmatpush1.msra.mxu0 0.0
    %1068 = vmatprep.subr.mxu0 0.0
    %1069 = vmatpush1.msra.mxu0 0.0
    %1070 = vmatprep.subr.mxu0 0.0
    %1071 = vmatpush1.msra.mxu0 0.0
    %1072 = vmatprep.subr.mxu0 0.0
    %1073 = vmatpush1.msra.mxu0 0.0
    %1074 = vmatprep.subr.mxu0 0.0
    %1075 = vmatpush1.msra.mxu0 0.0
    %1076 = vmatprep.subr.mxu0 0.0
    %1077 = vmatpush1.msra.mxu0 0.0
    %1078 = vmatprep.subr.mxu0 0.0
    %1079 = vmatpush1.msra.mxu0 %v630
    %1080 = vmatprep.subr.mxu0 0.0
    %1081 = vmatpush1.msra.mxu0 %v625
    %1082 = vmatprep.subr.mxu0 0.0
    %1083 = vmatpush1.msra.mxu0 %v620
    %1084 = vmatprep.subr.mxu0 0.0
    %1085 = vmatpush1.msra.mxu0 %v615
    %1086 = vmatprep.subr.mxu0 0.0
    %1087 = vmatpush1.msra.mxu0 %v610
    %1088 = vmatprep.subr.mxu0 0.0
    %1089 = vmatpush2.msra.mxu0 0.0
    %1090 = vmatprep.subr.mxu0 0.0
    %1091 = vmatpush2.msra.mxu0 0.0
    %1092 = vmatprep.subr.mxu0 0.0
    %1093 = vmatpush2.msra.mxu0 0.0
    %1094 = vmatprep.subr.mxu0 0.0
    %1095 = vmatpush2.msra.mxu0 0.0
    %1096 = vmatprep.subr.mxu0 0.0
    %1097 = vmatpush2.msra.mxu0 0.0
    %1098 = vmatprep.subr.mxu0 0.0
    %1099 = vmatpush2.msra.mxu0 0.0
    %1100 = vmatprep.subr.mxu0 0.0
    %1101 = vmatpush2.msra.mxu0 0.0
    %1102 = vmatprep.subr.mxu0 0.0
    %1103 = vmatpush2.msra.mxu0 0.0
    %1104 = vmatprep.subr.mxu0 0.0
    %1105 = vmatpush2.msra.mxu0 0.0
    %1106 = vmatprep.subr.mxu0 0.0
    %1107 = vmatpush2.msra.mxu0 0.0
    %1108 = vmatprep.subr.mxu0 0.0
    %1109 = vmatpush2.msra.mxu0 0.0
    %1110 = vmatprep.subr.mxu0 0.0
    %1111 = vmatpush2.msra.mxu0 0.0
    %1112 = vmatprep.subr.mxu0 0.0
    %1113 = vmatpush2.msra.mxu0 0.0
    %1114 = vmatprep.subr.mxu0 0.0
    %1115 = vmatpush2.msra.mxu0 0.0
    %1116 = vmatprep.subr.mxu0 0.0
    %1117 = vmatpush2.msra.mxu0 0.0
    %1118 = vmatprep.subr.mxu0 0.0
    %1119 = vmatpush2.msra.mxu0 0.0
    %1120 = vmatprep.mubr.f32.mxu0 0.0
    %1121 = vmatmul.mubr.f32.gmra.mxu0 %v1042
    %v1122 = vpop.f32.mrf.mxu0
    %v1123 = vadd.f32 0.0, %v1122
    %v1124 = vpop.f32.mrf.mxu0
    %1125 = vmatprep.mubr.f32.mxu0 0.0
    %1126 = vmatmul.mubr.f32.gmra.mxu0 %v1045
    %v1127 = vpop.f32.mrf.mxu0
    %v1128 = vadd.f32 0.0, %v1127
    %v1129 = vpop.f32.mrf.mxu0
    %1130 = vmatprep.mubr.f32.mxu0 0.0
    %1131 = vmatmul.mubr.f32.gmra.mxu0 %v1048
    %v1132 = vpop.f32.mrf.mxu0
    %v1133 = vadd.f32 0.0, %v1132
    %v1134 = vpop.f32.mrf.mxu0
    %1135 = vmatprep.mubr.f32.mxu0 0.0
    %1136 = vmatmul.mubr.f32.gmra.mxu0 %v1051
    %v1137 = vpop.f32.mrf.mxu0
    %v1138 = vadd.f32 0.0, %v1137
    %v1139 = vpop.f32.mrf.mxu0
    %1140 = vmatprep.mubr.f32.mxu0 0.0
    %1141 = vmatmul.mubr.f32.gmra.mxu0 %v1054
    %v1142 = vpop.f32.mrf.mxu0
    %v1143 = vadd.f32 0.0, %v1142
    %v1144 = vpop.f32.mrf.mxu0
    %1145 = vdwg.mxu0
    %v1147 = vsel %vm919, %v1025, 0
    %v1150 = vsel %vm919, %v1026, 0
    %v1153 = vsel %vm919, %v1027, 0
    %v1156 = vsel %vm919, %v1028, 0
    %v1159 = vsel %vm919, %v1029, 0
    %1161 = vmatprep.subr.mxu0 0.0
    %1162 = vmatpush1.msra.mxu0 0.0
    %1163 = vmatprep.subr.mxu0 0.0
    %1164 = vmatpush1.msra.mxu0 0.0
    %1165 = vmatprep.subr.mxu0 0.0
    %1166 = vmatpush1.msra.mxu0 0.0
    %1167 = vmatprep.subr.mxu0 0.0
    %1168 = vmatpush1.msra.mxu0 0.0
    %1169 = vmatprep.subr.mxu0 0.0
    %1170 = vmatpush1.msra.mxu0 0.0
    %1171 = vmatprep.subr.mxu0 0.0
    %1172 = vmatpush1.msra.mxu0 0.0
    %1173 = vmatprep.subr.mxu0 0.0
    %1174 = vmatpush1.msra.mxu0 0.0
    %1175 = vmatprep.subr.mxu0 0.0
    %1176 = vmatpush1.msra.mxu0 0.0
    %1177 = vmatprep.subr.mxu0 0.0
    %1178 = vmatpush1.msra.mxu0 0.0
    %1179 = vmatprep.subr.mxu0 0.0
    %1180 = vmatpush1.msra.mxu0 0.0
    %1181 = vmatprep.subr.mxu0 0.0
    %1182 = vmatpush1.msra.mxu0 0.0
    %1183 = vmatprep.subr.mxu0 0.0
    %1184 = vmatpush1.msra.mxu0 %v655
    %1185 = vmatprep.subr.mxu0 0.0
    %1186 = vmatpush1.msra.mxu0 %v650
    %1187 = vmatprep.subr.mxu0 0.0
    %1188 = vmatpush1.msra.mxu0 %v645
    %1189 = vmatprep.subr.mxu0 0.0
    %1190 = vmatpush1.msra.mxu0 %v640
    %1191 = vmatprep.subr.mxu0 0.0
    %1192 = vmatpush1.msra.mxu0 %v635
    %1193 = vmatprep.subr.mxu0 0.0
    %1194 = vmatpush2.msra.mxu0 0.0
    %1195 = vmatprep.subr.mxu0 0.0
    %1196 = vmatpush2.msra.mxu0 0.0
    %1197 = vmatprep.subr.mxu0 0.0
    %1198 = vmatpush2.msra.mxu0 0.0
    %1199 = vmatprep.subr.mxu0 0.0
    %1200 = vmatpush2.msra.mxu0 0.0
    %1201 = vmatprep.subr.mxu0 0.0
    %1202 = vmatpush2.msra.mxu0 0.0
    %1203 = vmatprep.subr.mxu0 0.0
    %1204 = vmatpush2.msra.mxu0 0.0
    %1205 = vmatprep.subr.mxu0 0.0
    %1206 = vmatpush2.msra.mxu0 0.0
    %1207 = vmatprep.subr.mxu0 0.0
    %1208 = vmatpush2.msra.mxu0 0.0
    %1209 = vmatprep.subr.mxu0 0.0
    %1210 = vmatpush2.msra.mxu0 0.0
    %1211 = vmatprep.subr.mxu0 0.0
    %1212 = vmatpush2.msra.mxu0 0.0
    %1213 = vmatprep.subr.mxu0 0.0
    %1214 = vmatpush2.msra.mxu0 0.0
    %1215 = vmatprep.subr.mxu0 0.0
    %1216 = vmatpush2.msra.mxu0 0.0
    %1217 = vmatprep.subr.mxu0 0.0
    %1218 = vmatpush2.msra.mxu0 0.0
    %1219 = vmatprep.subr.mxu0 0.0
    %1220 = vmatpush2.msra.mxu0 0.0
    %1221 = vmatprep.subr.mxu0 0.0
    %1222 = vmatpush2.msra.mxu0 0.0
    %1223 = vmatprep.subr.mxu0 0.0
    %1224 = vmatpush2.msra.mxu0 0.0
    %1225 = vmatprep.mubr.f32.mxu0 0.0
    %1226 = vmatmul.mubr.f32.gmra.mxu0 %v1147
    %v1227 = vpop.f32.mrf.mxu0
    %v1228 = vadd.f32 0.0, %v1227
    %v1229 = vpop.f32.mrf.mxu0
    %1230 = vmatprep.mubr.f32.mxu0 0.0
    %1231 = vmatmul.mubr.f32.gmra.mxu0 %v1150
    %v1232 = vpop.f32.mrf.mxu0
    %v1233 = vadd.f32 0.0, %v1232
    %v1234 = vpop.f32.mrf.mxu0
    %1235 = vmatprep.mubr.f32.mxu0 0.0
    %1236 = vmatmul.mubr.f32.gmra.mxu0 %v1153
    %v1237 = vpop.f32.mrf.mxu0
    %v1238 = vadd.f32 0.0, %v1237
    %v1239 = vpop.f32.mrf.mxu0
    %1240 = vmatprep.mubr.f32.mxu0 0.0
    %1241 = vmatmul.mubr.f32.gmra.mxu0 %v1156
    %v1242 = vpop.f32.mrf.mxu0
    %v1243 = vadd.f32 0.0, %v1242
    %v1244 = vpop.f32.mrf.mxu0
    %1245 = vmatprep.mubr.f32.mxu0 0.0
    %1246 = vmatmul.mubr.f32.gmra.mxu0 %v1159
    %v1247 = vpop.f32.mrf.mxu0
    %v1248 = vadd.f32 0.0, %v1247
    %v1249 = vpop.f32.mrf.mxu0
    %1250 = vdwg.mxu0
    %1251 = vrot.lane.b32.xlu0 %v358, 120
    %v1252 = vpop.permute.xlu0 %1251
    %1253 = vrot.lane.b32.xlu0 %v363, 120
    %v1254 = vpop.permute.xlu0 %1253
    %1255 = vrot.lane.b32.xlu0 %v368, 120
    %v1256 = vpop.permute.xlu0 %1255
    %1257 = vrot.lane.b32.xlu0 %v373, 120
    %v1258 = vpop.permute.xlu0 %1257
    %1259 = vrot.lane.b32.xlu0 %v378, 120
    %v1260 = vpop.permute.xlu0 %1259
    %1261 = vrot.lane.b32.xlu0 %v484, 120
    %v1262 = vpop.permute.xlu0 %1261
    %1263 = vrot.lane.b32.xlu0 %v489, 120
    %v1264 = vpop.permute.xlu0 %1263
    %1265 = vrot.lane.b32.xlu0 %v494, 120
    %v1266 = vpop.permute.xlu0 %1265
    %1267 = vrot.lane.b32.xlu0 %v499, 120
    %v1268 = vpop.permute.xlu0 %1267
    %1269 = vrot.lane.b32.xlu0 %v504, 120
    %v1270 = vpop.permute.xlu0 %1269
    %v1271 = vsel %vm658, %v1252, 0
    %v1273 = vsel %vm658, %v1254, 0
    %v1275 = vsel %vm658, %v1256, 0
    %v1277 = vsel %vm658, %v1258, 0
    %v1279 = vsel %vm658, %v1260, 0
    %v1281 = vsel %vm658, %v1262, 0
    %v1283 = vsel %vm658, %v1264, 0
    %v1285 = vsel %vm658, %v1266, 0
    %v1287 = vsel %vm658, %v1268, 0
    %v1289 = vsel %vm658, %v1270, 0
    %1291 = vmatprep.subr.mxu0 0.0
    %1292 = vmatpush1.xpose.msra.mxu0 0.0
    %1293 = vmatprep.subr.mxu0 0.0
    %1294 = vmatpush1.xpose.msra.mxu0 0.0
    %1295 = vmatprep.subr.mxu0 0.0
    %1296 = vmatpush1.xpose.msra.mxu0 0.0
    %1297 = vmatprep.subr.mxu0 0.0
    %1298 = vmatpush1.xpose.msra.mxu0 0.0
    %1299 = vmatprep.subr.mxu0 0.0
    %1300 = vmatpush1.xpose.msra.mxu0 0.0
    %1301 = vmatprep.subr.mxu0 0.0
    %1302 = vmatpush1.xpose.msra.mxu0 0.0
    %1303 = vmatprep.subr.mxu0 0.0
    %1304 = vmatpush1.xpose.msra.mxu0 0.0
    %1305 = vmatprep.subr.mxu0 0.0
    %1306 = vmatpush1.xpose.msra.mxu0 0.0
    %1307 = vmatprep.subr.mxu0 0.0
    %1308 = vmatpush1.xpose.msra.mxu0 0.0
    %1309 = vmatprep.subr.mxu0 0.0
    %1310 = vmatpush1.xpose.msra.mxu0 0.0
    %1311 = vmatprep.subr.mxu0 0.0
    %1312 = vmatpush1.xpose.msra.mxu0 0.0
    %1313 = vmatprep.subr.mxu0 0.0
    %1314 = vmatpush1.xpose.msra.mxu0 %v1289
    %1315 = vmatprep.subr.mxu0 0.0
    %1316 = vmatpush1.xpose.msra.mxu0 %v1287
    %1317 = vmatprep.subr.mxu0 0.0
    %1318 = vmatpush1.xpose.msra.mxu0 %v1285
    %1319 = vmatprep.subr.mxu0 0.0
    %1320 = vmatpush1.xpose.msra.mxu0 %v1283
    %1321 = vmatprep.subr.mxu0 0.0
    %1322 = vmatpush1.xpose.msra.mxu0 %v1281
    %1323 = vmatprep.subr.mxu0 0.0
    %1324 = vmatpush2.xpose.msra.mxu0 0.0
    %1325 = vmatprep.subr.mxu0 0.0
    %1326 = vmatpush2.xpose.msra.mxu0 0.0
    %1327 = vmatprep.subr.mxu0 0.0
    %1328 = vmatpush2.xpose.msra.mxu0 0.0
    %1329 = vmatprep.subr.mxu0 0.0
    %1330 = vmatpush2.xpose.msra.mxu0 0.0
    %1331 = vmatprep.subr.mxu0 0.0
    %1332 = vmatpush2.xpose.msra.mxu0 0.0
    %1333 = vmatprep.subr.mxu0 0.0
    %1334 = vmatpush2.xpose.msra.mxu0 0.0
    %1335 = vmatprep.subr.mxu0 0.0
    %1336 = vmatpush2.xpose.msra.mxu0 0.0
    %1337 = vmatprep.subr.mxu0 0.0
    %1338 = vmatpush2.xpose.msra.mxu0 0.0
    %1339 = vmatprep.subr.mxu0 0.0
    %1340 = vmatpush2.xpose.msra.mxu0 0.0
    %1341 = vmatprep.subr.mxu0 0.0
    %1342 = vmatpush2.xpose.msra.mxu0 0.0
    %1343 = vmatprep.subr.mxu0 0.0
    %1344 = vmatpush2.xpose.msra.mxu0 0.0
    %1345 = vmatprep.subr.mxu0 0.0
    %1346 = vmatpush2.xpose.msra.mxu0 0.0
    %1347 = vmatprep.subr.mxu0 0.0
    %1348 = vmatpush2.xpose.msra.mxu0 0.0
    %1349 = vmatprep.subr.mxu0 0.0
    %1350 = vmatpush2.xpose.msra.mxu0 0.0
    %1351 = vmatprep.subr.mxu0 0.0
    %1352 = vmatpush2.xpose.msra.mxu0 0.0
    %1353 = vmatprep.subr.mxu0 0.0
    %1354 = vmatpush2.xpose.msra.mxu0 0.0
    %1355 = vmatprep.mubr.f32.mxu0 0.0
    %1356 = vmatmul.mubr.f32.gmra.mxu0 %v1271
    %v1357 = vpop.f32.mrf.mxu0
    %v1358 = vadd.f32 0.0, %v1357
    %v1359 = vpop.f32.mrf.mxu0
    %1360 = vmatprep.mubr.f32.mxu0 0.0
    %1361 = vmatmul.mubr.f32.gmra.mxu0 %v1273
    %v1362 = vpop.f32.mrf.mxu0
    %v1363 = vadd.f32 0.0, %v1362
    %v1364 = vpop.f32.mrf.mxu0
    %1365 = vmatprep.mubr.f32.mxu0 0.0
    %1366 = vmatmul.mubr.f32.gmra.mxu0 %v1275
    %v1367 = vpop.f32.mrf.mxu0
    %v1368 = vadd.f32 0.0, %v1367
    %v1369 = vpop.f32.mrf.mxu0
    %1370 = vmatprep.mubr.f32.mxu0 0.0
    %1371 = vmatmul.mubr.f32.gmra.mxu0 %v1277
    %v1372 = vpop.f32.mrf.mxu0
    %v1373 = vadd.f32 0.0, %v1372
    %v1374 = vpop.f32.mrf.mxu0
    %1375 = vmatprep.mubr.f32.mxu0 0.0
    %1376 = vmatmul.mubr.f32.gmra.mxu0 %v1279
    %v1377 = vpop.f32.mrf.mxu0
    %v1378 = vadd.f32 0.0, %v1377
    %v1379 = vpop.f32.mrf.mxu0
    %1380 = vdwg.mxu0
    %1381 = vrot.lane.b32.xlu0 %v383, 120
    %v1382 = vpop.permute.xlu0 %1381
    %1383 = vrot.lane.b32.xlu0 %v388, 120
    %v1384 = vpop.permute.xlu0 %1383
    %1385 = vrot.lane.b32.xlu0 %v393, 120
    %v1386 = vpop.permute.xlu0 %1385
    %1387 = vrot.lane.b32.xlu0 %v398, 120
    %v1388 = vpop.permute.xlu0 %1387
    %1389 = vrot.lane.b32.xlu0 %v403, 120
    %v1390 = vpop.permute.xlu0 %1389
    %1391 = vrot.lane.b32.xlu0 %v509, 120
    %v1392 = vpop.permute.xlu0 %1391
    %1393 = vrot.lane.b32.xlu0 %v514, 120
    %v1394 = vpop.permute.xlu0 %1393
    %1395 = vrot.lane.b32.xlu0 %v519, 120
    %v1396 = vpop.permute.xlu0 %1395
    %1397 = vrot.lane.b32.xlu0 %v524, 120
    %v1398 = vpop.permute.xlu0 %1397
    %1399 = vrot.lane.b32.xlu0 %v529, 120
    %v1400 = vpop.permute.xlu0 %1399
    %v1401 = vsel %vm658, %v1382, 0
    %v1403 = vsel %vm658, %v1384, 0
    %v1405 = vsel %vm658, %v1386, 0
    %v1407 = vsel %vm658, %v1388, 0
    %v1409 = vsel %vm658, %v1390, 0
    %v1411 = vsel %vm658, %v1392, 0
    %v1413 = vsel %vm658, %v1394, 0
    %v1415 = vsel %vm658, %v1396, 0
    %v1417 = vsel %vm658, %v1398, 0
    %v1419 = vsel %vm658, %v1400, 0
    %1421 = vmatprep.subr.mxu0 0.0
    %1422 = vmatpush1.xpose.msra.mxu0 0.0
    %1423 = vmatprep.subr.mxu0 0.0
    %1424 = vmatpush1.xpose.msra.mxu0 0.0
    %1425 = vmatprep.subr.mxu0 0.0
    %1426 = vmatpush1.xpose.msra.mxu0 0.0
    %1427 = vmatprep.subr.mxu0 0.0
    %1428 = vmatpush1.xpose.msra.mxu0 0.0
    %1429 = vmatprep.subr.mxu0 0.0
    %1430 = vmatpush1.xpose.msra.mxu0 0.0
    %1431 = vmatprep.subr.mxu0 0.0
    %1432 = vmatpush1.xpose.msra.mxu0 0.0
    %1433 = vmatprep.subr.mxu0 0.0
    %1434 = vmatpush1.xpose.msra.mxu0 0.0
    %1435 = vmatprep.subr.mxu0 0.0
    %1436 = vmatpush1.xpose.msra.mxu0 0.0
    %1437 = vmatprep.subr.mxu0 0.0
    %1438 = vmatpush1.xpose.msra.mxu0 0.0
    %1439 = vmatprep.subr.mxu0 0.0
    %1440 = vmatpush1.xpose.msra.mxu0 0.0
    %1441 = vmatprep.subr.mxu0 0.0
    %1442 = vmatpush1.xpose.msra.mxu0 0.0
    %1443 = vmatprep.subr.mxu0 0.0
    %1444 = vmatpush1.xpose.msra.mxu0 %v1419
    %1445 = vmatprep.subr.mxu0 0.0
    %1446 = vmatpush1.xpose.msra.mxu0 %v1417
    %1447 = vmatprep.subr.mxu0 0.0
    %1448 = vmatpush1.xpose.msra.mxu0 %v1415
    %1449 = vmatprep.subr.mxu0 0.0
    %1450 = vmatpush1.xpose.msra.mxu0 %v1413
    %1451 = vmatprep.subr.mxu0 0.0
    %1452 = vmatpush1.xpose.msra.mxu0 %v1411
    %1453 = vmatprep.subr.mxu0 0.0
    %1454 = vmatpush2.xpose.msra.mxu0 0.0
    %1455 = vmatprep.subr.mxu0 0.0
    %1456 = vmatpush2.xpose.msra.mxu0 0.0
    %1457 = vmatprep.subr.mxu0 0.0
    %1458 = vmatpush2.xpose.msra.mxu0 0.0
    %1459 = vmatprep.subr.mxu0 0.0
    %1460 = vmatpush2.xpose.msra.mxu0 0.0
    %1461 = vmatprep.subr.mxu0 0.0
    %1462 = vmatpush2.xpose.msra.mxu0 0.0
    %1463 = vmatprep.subr.mxu0 0.0
    %1464 = vmatpush2.xpose.msra.mxu0 0.0
    %1465 = vmatprep.subr.mxu0 0.0
    %1466 = vmatpush2.xpose.msra.mxu0 0.0
    %1467 = vmatprep.subr.mxu0 0.0
    %1468 = vmatpush2.xpose.msra.mxu0 0.0
    %1469 = vmatprep.subr.mxu0 0.0
    %1470 = vmatpush2.xpose.msra.mxu0 0.0
    %1471 = vmatprep.subr.mxu0 0.0
    %1472 = vmatpush2.xpose.msra.mxu0 0.0
    %1473 = vmatprep.subr.mxu0 0.0
    %1474 = vmatpush2.xpose.msra.mxu0 0.0
    %1475 = vmatprep.subr.mxu0 0.0
    %1476 = vmatpush2.xpose.msra.mxu0 0.0
    %1477 = vmatprep.subr.mxu0 0.0
    %1478 = vmatpush2.xpose.msra.mxu0 0.0
    %1479 = vmatprep.subr.mxu0 0.0
    %1480 = vmatpush2.xpose.msra.mxu0 0.0
    %1481 = vmatprep.subr.mxu0 0.0
    %1482 = vmatpush2.xpose.msra.mxu0 0.0
    %1483 = vmatprep.subr.mxu0 0.0
    %1484 = vmatpush2.xpose.msra.mxu0 0.0
    %1485 = vmatprep.mubr.f32.mxu0 0.0
    %1486 = vmatmul.mubr.f32.gmra.mxu0 %v1401
    %v1487 = vpop.f32.mrf.mxu0
    %v1488 = vadd.f32 0.0, %v1487
    %v1489 = vpop.f32.mrf.mxu0
    %1490 = vmatprep.mubr.f32.mxu0 0.0
    %1491 = vmatmul.mubr.f32.gmra.mxu0 %v1403
    %v1492 = vpop.f32.mrf.mxu0
    %v1493 = vadd.f32 0.0, %v1492
    %v1494 = vpop.f32.mrf.mxu0
    %1495 = vmatprep.mubr.f32.mxu0 0.0
    %1496 = vmatmul.mubr.f32.gmra.mxu0 %v1405
    %v1497 = vpop.f32.mrf.mxu0
    %v1498 = vadd.f32 0.0, %v1497
    %v1499 = vpop.f32.mrf.mxu0
    %1500 = vmatprep.mubr.f32.mxu0 0.0
    %1501 = vmatmul.mubr.f32.gmra.mxu0 %v1407
    %v1502 = vpop.f32.mrf.mxu0
    %v1503 = vadd.f32 0.0, %v1502
    %v1504 = vpop.f32.mrf.mxu0
    %1505 = vmatprep.mubr.f32.mxu0 0.0
    %1506 = vmatmul.mubr.f32.gmra.mxu0 %v1409
    %v1507 = vpop.f32.mrf.mxu0
    %v1508 = vadd.f32 0.0, %v1507
    %v1509 = vpop.f32.mrf.mxu0
    %1510 = vdwg.mxu0
    %v1511 = vmul.f32 %v1358, 0.35355338
    %v1512 = vmul.f32 %v1363, 0.35355338
    %v1513 = vmul.f32 %v1368, 0.35355338
    %v1514 = vmul.f32 %v1373, 0.35355338
    %v1515 = vmul.f32 %v1378, 0.35355338
    %v1516 = vmul.f32 %v1488, 0.35355338
    %v1517 = vmul.f32 %v1493, 0.35355338
    %v1518 = vmul.f32 %v1498, 0.35355338
    %v1519 = vmul.f32 %v1503, 0.35355338
    %v1520 = vmul.f32 %v1508, 0.35355338
    %v1521 = vadd.f32 %v1511, %v77
    %v1522 = vadd.f32 %v1512, %v77
    %v1523 = vadd.f32 %v1513, %v77
    %v1524 = vadd.f32 %v1514, %v77
    %v1525 = vadd.f32 %v1515, %v77
    %v1526 = vadd.f32 %v1516, %v81
    %v1527 = vadd.f32 %v1517, %v81
    %v1528 = vadd.f32 %v1518, %v81
    %v1529 = vadd.f32 %v1519, %v81
    %v1530 = vadd.f32 %v1520, %v81
    %v1531 = vsel %vm919, %v1521, -inf
    %1532 = vmax.xlane.f32.xlu0 %v1531
    %v1533 = vpop.xlane.xlu0 %1532
    %v1534 = vsel %vm919, %v1522, -inf
    %1535 = vmax.xlane.f32.xlu0 %v1534
    %v1536 = vpop.xlane.xlu0 %1535
    %v1537 = vsel %vm919, %v1523, -inf
    %1538 = vmax.xlane.f32.xlu0 %v1537
    %v1539 = vpop.xlane.xlu0 %1538
    %v1540 = vsel %vm919, %v1524, -inf
    %1541 = vmax.xlane.f32.xlu0 %v1540
    %v1542 = vpop.xlane.xlu0 %1541
    %v1543 = vsel %vm919, %v1525, -inf
    %1544 = vmax.xlane.f32.xlu0 %v1543
    %v1545 = vpop.xlane.xlu0 %1544
    %v1546 = vsel %vm919, %v1526, -inf
    %1547 = vmax.xlane.f32.xlu0 %v1546
    %v1548 = vpop.xlane.xlu0 %1547
    %v1549 = vsel %vm919, %v1527, -inf
    %1550 = vmax.xlane.f32.xlu0 %v1549
    %v1551 = vpop.xlane.xlu0 %1550
    %v1552 = vsel %vm919, %v1528, -inf
    %1553 = vmax.xlane.f32.xlu0 %v1552
    %v1554 = vpop.xlane.xlu0 %1553
    %v1555 = vsel %vm919, %v1529, -inf
    %1556 = vmax.xlane.f32.xlu0 %v1555
    %v1557 = vpop.xlane.xlu0 %1556
    %v1558 = vsel %vm919, %v1530, -inf
    %1559 = vmax.xlane.f32.xlu0 %v1558
    %v1560 = vpop.xlane.xlu0 %1559
    %v1561 = vsub.f32 %v1521, %v1533
    %v1562 = vsub.f32 %v1522, %v1536
    %v1563 = vsub.f32 %v1523, %v1539
    %v1564 = vsub.f32 %v1524, %v1542
    %v1565 = vsub.f32 %v1525, %v1545
    %v1566 = vsub.f32 %v1526, %v1548
    %v1567 = vsub.f32 %v1527, %v1551
    %v1568 = vsub.f32 %v1528, %v1554
    %v1569 = vsub.f32 %v1529, %v1557
    %v1570 = vsub.f32 %v1530, %v1560
    %v1571 = vmul.f32 %v1561, 1.442695
    %v1572 = vpow.pop %v1571
    %v1573 = vmul.f32 %v1562, 1.442695
    %v1574 = vpow.pop %v1573
    %v1575 = vmul.f32 %v1563, 1.442695
    %v1576 = vpow.pop %v1575
    %v1577 = vmul.f32 %v1564, 1.442695
    %v1578 = vpow.pop %v1577
    %v1579 = vmul.f32 %v1565, 1.442695
    %v1580 = vpow.pop %v1579
    %v1581 = vmul.f32 %v1566, 1.442695
    %v1582 = vpow.pop %v1581
    %v1583 = vmul.f32 %v1567, 1.442695
    %v1584 = vpow.pop %v1583
    %v1585 = vmul.f32 %v1568, 1.442695
    %v1586 = vpow.pop %v1585
    %v1587 = vmul.f32 %v1569, 1.442695
    %v1588 = vpow.pop %v1587
    %v1589 = vmul.f32 %v1570, 1.442695
    %v1590 = vpow.pop %v1589
    %v1591 = vsel %vm919, %v1572, 0.0
    %1592 = vadd.xlane.f32.xlu0 %v1591
    %v1593 = vpop.xlane.xlu0 %1592
    %v1594 = vsel %vm919, %v1574, 0.0
    %1595 = vadd.xlane.f32.xlu0 %v1594
    %v1596 = vpop.xlane.xlu0 %1595
    %v1597 = vsel %vm919, %v1576, 0.0
    %1598 = vadd.xlane.f32.xlu0 %v1597
    %v1599 = vpop.xlane.xlu0 %1598
    %v1600 = vsel %vm919, %v1578, 0.0
    %1601 = vadd.xlane.f32.xlu0 %v1600
    %v1602 = vpop.xlane.xlu0 %1601
    %v1603 = vsel %vm919, %v1580, 0.0
    %1604 = vadd.xlane.f32.xlu0 %v1603
    %v1605 = vpop.xlane.xlu0 %1604
    %v1606 = vsel %vm919, %v1582, 0.0
    %1607 = vadd.xlane.f32.xlu0 %v1606
    %v1608 = vpop.xlane.xlu0 %1607
    %v1609 = vsel %vm919, %v1584, 0.0
    %1610 = vadd.xlane.f32.xlu0 %v1609
    %v1611 = vpop.xlane.xlu0 %1610
    %v1612 = vsel %vm919, %v1586, 0.0
    %1613 = vadd.xlane.f32.xlu0 %v1612
    %v1614 = vpop.xlane.xlu0 %1613
    %v1615 = vsel %vm919, %v1588, 0.0
    %1616 = vadd.xlane.f32.xlu0 %v1615
    %v1617 = vpop.xlane.xlu0 %1616
    %v1618 = vsel %vm919, %v1590, 0.0
    %1619 = vadd.xlane.f32.xlu0 %v1618
    %v1620 = vpop.xlane.xlu0 %1619
    %v1621 = vrcp.pop %v1593
    %v1622 = vrcp.pop %v1596
    %v1623 = vrcp.pop %v1599
    %v1624 = vrcp.pop %v1602
    %v1625 = vrcp.pop %v1605
    %v1626 = vrcp.pop %v1608
    %v1627 = vrcp.pop %v1611
    %v1628 = vrcp.pop %v1614
    %v1629 = vrcp.pop %v1617
    %v1630 = vrcp.pop %v1620
    %v1631 = vmul.f32 %v1572, %v1621
    %v1632 = vmul.f32 %v1574, %v1622
    %v1633 = vmul.f32 %v1576, %v1623
    %v1634 = vmul.f32 %v1578, %v1624
    %v1635 = vmul.f32 %v1580, %v1625
    %v1636 = vmul.f32 %v1582, %v1626
    %v1637 = vmul.f32 %v1584, %v1627
    %v1638 = vmul.f32 %v1586, %v1628
    %v1639 = vmul.f32 %v1588, %v1629
    %v1640 = vmul.f32 %v1590, %v1630
    %s1641 = scalar_lea.vmem [#allocation2], 40
    %1642 = vst.msk [vmem:[%s1641] sm:$0xff] %vm919, %v1631
    %1643 = vst.msk [vmem:[%s1641 + $0x8] sm:$0xff] %vm919, %v1632
    %1644 = vst.msk [vmem:[%s1641 + $0x10] sm:$0xff] %vm919, %v1633
    %1645 = vst.msk [vmem:[%s1641 + $0x18] sm:$0xff] %vm919, %v1634
    %1646 = vst.msk [vmem:[%s1641 + $0x20] sm:$0xff] %vm919, %v1635
    %s1647 = scalar_lea.vmem [#allocation2], 200
    %1648 = vst.msk [vmem:[%s1647] sm:$0xff] %vm919, %v1636
    %1649 = vst.msk [vmem:[%s1647 + $0x8] sm:$0xff] %vm919, %v1637
    %1650 = vst.msk [vmem:[%s1647 + $0x10] sm:$0xff] %vm919, %v1638
    %1651 = vst.msk [vmem:[%s1647 + $0x18] sm:$0xff] %vm919, %v1639
    %1652 = vst.msk [vmem:[%s1647 + $0x20] sm:$0xff] %vm919, %v1640
    %1658 = vrot.lane.b32.xlu0 %v610, 120
    %v1659 = vpop.permute.xlu0 %1658
    %1660 = vrot.lane.b32.xlu0 %v615, 120
    %v1661 = vpop.permute.xlu0 %1660
    %1662 = vrot.lane.b32.xlu0 %v620, 120
    %v1663 = vpop.permute.xlu0 %1662
    %1664 = vrot.lane.b32.xlu0 %v625, 120
    %v1665 = vpop.permute.xlu0 %1664
    %1666 = vrot.lane.b32.xlu0 %v630, 120
    %v1667 = vpop.permute.xlu0 %1666
    %v1674 = vsel %vm919, %v1631, 0
    %v1677 = vsel %vm919, %v1632, 0
    %v1680 = vsel %vm919, %v1633, 0
    %v1683 = vsel %vm919, %v1634, 0
    %v1686 = vsel %vm919, %v1635, 0
    %1688 = vmatprep.subr.mxu0 0.0
    %1689 = vmatpush1.msra.mxu0 0.0
    %1690 = vmatprep.subr.mxu0 0.0
    %1691 = vmatpush1.msra.mxu0 0.0
    %1692 = vmatprep.subr.mxu0 0.0
    %1693 = vmatpush1.msra.mxu0 0.0
    %1694 = vmatprep.subr.mxu0 0.0
    %1695 = vmatpush1.msra.mxu0 0.0
    %1696 = vmatprep.subr.mxu0 0.0
    %1697 = vmatpush1.msra.mxu0 0.0
    %1698 = vmatprep.subr.mxu0 0.0
    %1699 = vmatpush1.msra.mxu0 0.0
    %1700 = vmatprep.subr.mxu0 0.0
    %1701 = vmatpush1.msra.mxu0 0.0
    %1702 = vmatprep.subr.mxu0 0.0
    %1703 = vmatpush1.msra.mxu0 0.0
    %1704 = vmatprep.subr.mxu0 0.0
    %1705 = vmatpush1.msra.mxu0 0.0
    %1706 = vmatprep.subr.mxu0 0.0
    %1707 = vmatpush1.msra.mxu0 0.0
    %1708 = vmatprep.subr.mxu0 0.0
    %1709 = vmatpush1.msra.mxu0 0.0
    %1710 = vmatprep.subr.mxu0 0.0
    %1711 = vmatpush1.msra.mxu0 %v1667
    %1712 = vmatprep.subr.mxu0 0.0
    %1713 = vmatpush1.msra.mxu0 %v1665
    %1714 = vmatprep.subr.mxu0 0.0
    %1715 = vmatpush1.msra.mxu0 %v1663
    %1716 = vmatprep.subr.mxu0 0.0
    %1717 = vmatpush1.msra.mxu0 %v1661
    %1718 = vmatprep.subr.mxu0 0.0
    %1719 = vmatpush1.msra.mxu0 %v1659
    %1720 = vmatprep.subr.mxu0 0.0
    %1721 = vmatpush2.msra.mxu0 0.0
    %1722 = vmatprep.subr.mxu0 0.0
    %1723 = vmatpush2.msra.mxu0 0.0
    %1724 = vmatprep.subr.mxu0 0.0
    %1725 = vmatpush2.msra.mxu0 0.0
    %1726 = vmatprep.subr.mxu0 0.0
    %1727 = vmatpush2.msra.mxu0 0.0
    %1728 = vmatprep.subr.mxu0 0.0
    %1729 = vmatpush2.msra.mxu0 0.0
    %1730 = vmatprep.subr.mxu0 0.0
    %1731 = vmatpush2.msra.mxu0 0.0
    %1732 = vmatprep.subr.mxu0 0.0
    %1733 = vmatpush2.msra.mxu0 0.0
    %1734 = vmatprep.subr.mxu0 0.0
    %1735 = vmatpush2.msra.mxu0 0.0
    %1736 = vmatprep.subr.mxu0 0.0
    %1737 = vmatpush2.msra.mxu0 0.0
    %1738 = vmatprep.subr.mxu0 0.0
    %1739 = vmatpush2.msra.mxu0 0.0
    %1740 = vmatprep.subr.mxu0 0.0
    %1741 = vmatpush2.msra.mxu0 0.0
    %1742 = vmatprep.subr.mxu0 0.0
    %1743 = vmatpush2.msra.mxu0 0.0
    %1744 = vmatprep.subr.mxu0 0.0
    %1745 = vmatpush2.msra.mxu0 0.0
    %1746 = vmatprep.subr.mxu0 0.0
    %1747 = vmatpush2.msra.mxu0 0.0
    %1748 = vmatprep.subr.mxu0 0.0
    %1749 = vmatpush2.msra.mxu0 0.0
    %1750 = vmatprep.subr.mxu0 0.0
    %1751 = vmatpush2.msra.mxu0 0.0
    %1752 = vmatprep.mubr.f32.mxu0 0.0
    %1753 = vmatmul.mubr.f32.gmra.mxu0 %v1674
    %v1754 = vpop.f32.mrf.mxu0
    %v1755 = vadd.f32 0.0, %v1754
    %v1756 = vpop.f32.mrf.mxu0
    %1757 = vmatprep.mubr.f32.mxu0 0.0
    %1758 = vmatmul.mubr.f32.gmra.mxu0 %v1677
    %v1759 = vpop.f32.mrf.mxu0
    %v1760 = vadd.f32 0.0, %v1759
    %v1761 = vpop.f32.mrf.mxu0
    %1762 = vmatprep.mubr.f32.mxu0 0.0
    %1763 = vmatmul.mubr.f32.gmra.mxu0 %v1680
    %v1764 = vpop.f32.mrf.mxu0
    %v1765 = vadd.f32 0.0, %v1764
    %v1766 = vpop.f32.mrf.mxu0
    %1767 = vmatprep.mubr.f32.mxu0 0.0
    %1768 = vmatmul.mubr.f32.gmra.mxu0 %v1683
    %v1769 = vpop.f32.mrf.mxu0
    %v1770 = vadd.f32 0.0, %v1769
    %v1771 = vpop.f32.mrf.mxu0
    %1772 = vmatprep.mubr.f32.mxu0 0.0
    %1773 = vmatmul.mubr.f32.gmra.mxu0 %v1686
    %v1774 = vpop.f32.mrf.mxu0
    %v1775 = vadd.f32 0.0, %v1774
    %v1776 = vpop.f32.mrf.mxu0
    %1777 = vdwg.mxu0
    %1783 = vrot.lane.b32.xlu0 %v635, 120
    %v1784 = vpop.permute.xlu0 %1783
    %1785 = vrot.lane.b32.xlu0 %v640, 120
    %v1786 = vpop.permute.xlu0 %1785
    %1787 = vrot.lane.b32.xlu0 %v645, 120
    %v1788 = vpop.permute.xlu0 %1787
    %1789 = vrot.lane.b32.xlu0 %v650, 120
    %v1790 = vpop.permute.xlu0 %1789
    %1791 = vrot.lane.b32.xlu0 %v655, 120
    %v1792 = vpop.permute.xlu0 %1791
    %v1799 = vsel %vm919, %v1636, 0
    %v1802 = vsel %vm919, %v1637, 0
    %v1805 = vsel %vm919, %v1638, 0
    %v1808 = vsel %vm919, %v1639, 0
    %v1811 = vsel %vm919, %v1640, 0
    %1813 = vmatprep.subr.mxu0 0.0
    %1814 = vmatpush1.msra.mxu0 0.0
    %1815 = vmatprep.subr.mxu0 0.0
    %1816 = vmatpush1.msra.mxu0 0.0
    %1817 = vmatprep.subr.mxu0 0.0
    %1818 = vmatpush1.msra.mxu0 0.0
    %1819 = vmatprep.subr.mxu0 0.0
    %1820 = vmatpush1.msra.mxu0 0.0
    %1821 = vmatprep.subr.mxu0 0.0
    %1822 = vmatpush1.msra.mxu0 0.0
    %1823 = vmatprep.subr.mxu0 0.0
    %1824 = vmatpush1.msra.mxu0 0.0
    %1825 = vmatprep.subr.mxu0 0.0
    %1826 = vmatpush1.msra.mxu0 0.0
    %1827 = vmatprep.subr.mxu0 0.0
    %1828 = vmatpush1.msra.mxu0 0.0
    %1829 = vmatprep.subr.mxu0 0.0
    %1830 = vmatpush1.msra.mxu0 0.0
    %1831 = vmatprep.subr.mxu0 0.0
    %1832 = vmatpush1.msra.mxu0 0.0
    %1833 = vmatprep.subr.mxu0 0.0
    %1834 = vmatpush1.msra.mxu0 0.0
    %1835 = vmatprep.subr.mxu0 0.0
    %1836 = vmatpush1.msra.mxu0 %v1792
    %1837 = vmatprep.subr.mxu0 0.0
    %1838 = vmatpush1.msra.mxu0 %v1790
    %1839 = vmatprep.subr.mxu0 0.0
    %1840 = vmatpush1.msra.mxu0 %v1788
    %1841 = vmatprep.subr.mxu0 0.0
    %1842 = vmatpush1.msra.mxu0 %v1786
    %1843 = vmatprep.subr.mxu0 0.0
    %1844 = vmatpush1.msra.mxu0 %v1784
    %1845 = vmatprep.subr.mxu0 0.0
    %1846 = vmatpush2.msra.mxu0 0.0
    %1847 = vmatprep.subr.mxu0 0.0
    %1848 = vmatpush2.msra.mxu0 0.0
    %1849 = vmatprep.subr.mxu0 0.0
    %1850 = vmatpush2.msra.mxu0 0.0
    %1851 = vmatprep.subr.mxu0 0.0
    %1852 = vmatpush2.msra.mxu0 0.0
    %1853 = vmatprep.subr.mxu0 0.0
    %1854 = vmatpush2.msra.mxu0 0.0
    %1855 = vmatprep.subr.mxu0 0.0
    %1856 = vmatpush2.msra.mxu0 0.0
    %1857 = vmatprep.subr.mxu0 0.0
    %1858 = vmatpush2.msra.mxu0 0.0
    %1859 = vmatprep.subr.mxu0 0.0
    %1860 = vmatpush2.msra.mxu0 0.0
    %1861 = vmatprep.subr.mxu0 0.0
    %1862 = vmatpush2.msra.mxu0 0.0
    %1863 = vmatprep.subr.mxu0 0.0
    %1864 = vmatpush2.msra.mxu0 0.0
    %1865 = vmatprep.subr.mxu0 0.0
    %1866 = vmatpush2.msra.mxu0 0.0
    %1867 = vmatprep.subr.mxu0 0.0
    %1868 = vmatpush2.msra.mxu0 0.0
    %1869 = vmatprep.subr.mxu0 0.0
    %1870 = vmatpush2.msra.mxu0 0.0
    %1871 = vmatprep.subr.mxu0 0.0
    %1872 = vmatpush2.msra.mxu0 0.0
    %1873 = vmatprep.subr.mxu0 0.0
    %1874 = vmatpush2.msra.mxu0 0.0
    %1875 = vmatprep.subr.mxu0 0.0
    %1876 = vmatpush2.msra.mxu0 0.0
    %1877 = vmatprep.mubr.f32.mxu0 0.0
    %1878 = vmatmul.mubr.f32.gmra.mxu0 %v1799
    %v1879 = vpop.f32.mrf.mxu0
    %v1880 = vadd.f32 0.0, %v1879
    %v1881 = vpop.f32.mrf.mxu0
    %1882 = vmatprep.mubr.f32.mxu0 0.0
    %1883 = vmatmul.mubr.f32.gmra.mxu0 %v1802
    %v1884 = vpop.f32.mrf.mxu0
    %v1885 = vadd.f32 0.0, %v1884
    %v1886 = vpop.f32.mrf.mxu0
    %1887 = vmatprep.mubr.f32.mxu0 0.0
    %1888 = vmatmul.mubr.f32.gmra.mxu0 %v1805
    %v1889 = vpop.f32.mrf.mxu0
    %v1890 = vadd.f32 0.0, %v1889
    %v1891 = vpop.f32.mrf.mxu0
    %1892 = vmatprep.mubr.f32.mxu0 0.0
    %1893 = vmatmul.mubr.f32.gmra.mxu0 %v1808
    %v1894 = vpop.f32.mrf.mxu0
    %v1895 = vadd.f32 0.0, %v1894
    %v1896 = vpop.f32.mrf.mxu0
    %1897 = vmatprep.mubr.f32.mxu0 0.0
    %1898 = vmatmul.mubr.f32.gmra.mxu0 %v1811
    %v1899 = vpop.f32.mrf.mxu0
    %v1900 = vadd.f32 0.0, %v1899
    %v1901 = vpop.f32.mrf.mxu0
    %1902 = vdwg.mxu0
    %1903 = vrot.lane.b32.xlu0 %v358, 112
    %v1904 = vpop.permute.xlu0 %1903
    %1905 = vrot.lane.b32.xlu0 %v363, 112
    %v1906 = vpop.permute.xlu0 %1905
    %1907 = vrot.lane.b32.xlu0 %v368, 112
    %v1908 = vpop.permute.xlu0 %1907
    %1909 = vrot.lane.b32.xlu0 %v373, 112
    %v1910 = vpop.permute.xlu0 %1909
    %1911 = vrot.lane.b32.xlu0 %v378, 112
    %v1912 = vpop.permute.xlu0 %1911
    %1913 = vrot.lane.b32.xlu0 %v484, 112
    %v1914 = vpop.permute.xlu0 %1913
    %1915 = vrot.lane.b32.xlu0 %v489, 112
    %v1916 = vpop.permute.xlu0 %1915
    %1917 = vrot.lane.b32.xlu0 %v494, 112
    %v1918 = vpop.permute.xlu0 %1917
    %1919 = vrot.lane.b32.xlu0 %v499, 112
    %v1920 = vpop.permute.xlu0 %1919
    %1921 = vrot.lane.b32.xlu0 %v504, 112
    %v1922 = vpop.permute.xlu0 %1921
    %v1923 = vsel %vm658, %v1904, 0
    %v1925 = vsel %vm658, %v1906, 0
    %v1927 = vsel %vm658, %v1908, 0
    %v1929 = vsel %vm658, %v1910, 0
    %v1931 = vsel %vm658, %v1912, 0
    %v1933 = vsel %vm658, %v1914, 0
    %v1935 = vsel %vm658, %v1916, 0
    %v1937 = vsel %vm658, %v1918, 0
    %v1939 = vsel %vm658, %v1920, 0
    %v1941 = vsel %vm658, %v1922, 0
    %1943 = vmatprep.subr.mxu0 0.0
    %1944 = vmatpush1.xpose.msra.mxu0 0.0
    %1945 = vmatprep.subr.mxu0 0.0
    %1946 = vmatpush1.xpose.msra.mxu0 0.0
    %1947 = vmatprep.subr.mxu0 0.0
    %1948 = vmatpush1.xpose.msra.mxu0 0.0
    %1949 = vmatprep.subr.mxu0 0.0
    %1950 = vmatpush1.xpose.msra.mxu0 0.0
    %1951 = vmatprep.subr.mxu0 0.0
    %1952 = vmatpush1.xpose.msra.mxu0 0.0
    %1953 = vmatprep.subr.mxu0 0.0
    %1954 = vmatpush1.xpose.msra.mxu0 0.0
    %1955 = vmatprep.subr.mxu0 0.0
    %1956 = vmatpush1.xpose.msra.mxu0 0.0
    %1957 = vmatprep.subr.mxu0 0.0
    %1958 = vmatpush1.xpose.msra.mxu0 0.0
    %1959 = vmatprep.subr.mxu0 0.0
    %1960 = vmatpush1.xpose.msra.mxu0 0.0
    %1961 = vmatprep.subr.mxu0 0.0
    %1962 = vmatpush1.xpose.msra.mxu0 0.0
    %1963 = vmatprep.subr.mxu0 0.0
    %1964 = vmatpush1.xpose.msra.mxu0 0.0
    %1965 = vmatprep.subr.mxu0 0.0
    %1966 = vmatpush1.xpose.msra.mxu0 %v1941
    %1967 = vmatprep.subr.mxu0 0.0
    %1968 = vmatpush1.xpose.msra.mxu0 %v1939
    %1969 = vmatprep.subr.mxu0 0.0
    %1970 = vmatpush1.xpose.msra.mxu0 %v1937
    %1971 = vmatprep.subr.mxu0 0.0
    %1972 = vmatpush1.xpose.msra.mxu0 %v1935
    %1973 = vmatprep.subr.mxu0 0.0
    %1974 = vmatpush1.xpose.msra.mxu0 %v1933
    %1975 = vmatprep.subr.mxu0 0.0
    %1976 = vmatpush2.xpose.msra.mxu0 0.0
    %1977 = vmatprep.subr.mxu0 0.0
    %1978 = vmatpush2.xpose.msra.mxu0 0.0
    %1979 = vmatprep.subr.mxu0 0.0
    %1980 = vmatpush2.xpose.msra.mxu0 0.0
    %1981 = vmatprep.subr.mxu0 0.0
    %1982 = vmatpush2.xpose.msra.mxu0 0.0
    %1983 = vmatprep.subr.mxu0 0.0
    %1984 = vmatpush2.xpose.msra.mxu0 0.0
    %1985 = vmatprep.subr.mxu0 0.0
    %1986 = vmatpush2.xpose.msra.mxu0 0.0
    %1987 = vmatprep.subr.mxu0 0.0
    %1988 = vmatpush2.xpose.msra.mxu0 0.0
    %1989 = vmatprep.subr.mxu0 0.0
    %1990 = vmatpush2.xpose.msra.mxu0 0.0
    %1991 = vmatprep.subr.mxu0 0.0
    %1992 = vmatpush2.xpose.msra.mxu0 0.0
    %1993 = vmatprep.subr.mxu0 0.0
    %1994 = vmatpush2.xpose.msra.mxu0 0.0
    %1995 = vmatprep.subr.mxu0 0.0
    %1996 = vmatpush2.xpose.msra.mxu0 0.0
    %1997 = vmatprep.subr.mxu0 0.0
    %1998 = vmatpush2.xpose.msra.mxu0 0.0
    %1999 = vmatprep.subr.mxu0 0.0
    %2000 = vmatpush2.xpose.msra.mxu0 0.0
    %2001 = vmatprep.subr.mxu0 0.0
    %2002 = vmatpush2.xpose.msra.mxu0 0.0
    %2003 = vmatprep.subr.mxu0 0.0
    %2004 = vmatpush2.xpose.msra.mxu0 0.0
    %2005 = vmatprep.subr.mxu0 0.0
    %2006 = vmatpush2.xpose.msra.mxu0 0.0
    %2007 = vmatprep.mubr.f32.mxu0 0.0
    %2008 = vmatmul.mubr.f32.gmra.mxu0 %v1923
    %v2009 = vpop.f32.mrf.mxu0
    %v2010 = vadd.f32 0.0, %v2009
    %v2011 = vpop.f32.mrf.mxu0
    %2012 = vmatprep.mubr.f32.mxu0 0.0
    %2013 = vmatmul.mubr.f32.gmra.mxu0 %v1925
    %v2014 = vpop.f32.mrf.mxu0
    %v2015 = vadd.f32 0.0, %v2014
    %v2016 = vpop.f32.mrf.mxu0
    %2017 = vmatprep.mubr.f32.mxu0 0.0
    %2018 = vmatmul.mubr.f32.gmra.mxu0 %v1927
    %v2019 = vpop.f32.mrf.mxu0
    %v2020 = vadd.f32 0.0, %v2019
    %v2021 = vpop.f32.mrf.mxu0
    %2022 = vmatprep.mubr.f32.mxu0 0.0
    %2023 = vmatmul.mubr.f32.gmra.mxu0 %v1929
    %v2024 = vpop.f32.mrf.mxu0
    %v2025 = vadd.f32 0.0, %v2024
    %v2026 = vpop.f32.mrf.mxu0
    %2027 = vmatprep.mubr.f32.mxu0 0.0
    %2028 = vmatmul.mubr.f32.gmra.mxu0 %v1931
    %v2029 = vpop.f32.mrf.mxu0
    %v2030 = vadd.f32 0.0, %v2029
    %v2031 = vpop.f32.mrf.mxu0
    %2032 = vdwg.mxu0
    %2033 = vrot.lane.b32.xlu0 %v383, 112
    %v2034 = vpop.permute.xlu0 %2033
    %2035 = vrot.lane.b32.xlu0 %v388, 112
    %v2036 = vpop.permute.xlu0 %2035
    %2037 = vrot.lane.b32.xlu0 %v393, 112
    %v2038 = vpop.permute.xlu0 %2037
    %2039 = vrot.lane.b32.xlu0 %v398, 112
    %v2040 = vpop.permute.xlu0 %2039
    %2041 = vrot.lane.b32.xlu0 %v403, 112
    %v2042 = vpop.permute.xlu0 %2041
    %2043 = vrot.lane.b32.xlu0 %v509, 112
    %v2044 = vpop.permute.xlu0 %2043
    %2045 = vrot.lane.b32.xlu0 %v514, 112
    %v2046 = vpop.permute.xlu0 %2045
    %2047 = vrot.lane.b32.xlu0 %v519, 112
    %v2048 = vpop.permute.xlu0 %2047
    %2049 = vrot.lane.b32.xlu0 %v524, 112
    %v2050 = vpop.permute.xlu0 %2049
    %2051 = vrot.lane.b32.xlu0 %v529, 112
    %v2052 = vpop.permute.xlu0 %2051
    %v2053 = vsel %vm658, %v2034, 0
    %v2055 = vsel %vm658, %v2036, 0
    %v2057 = vsel %vm658, %v2038, 0
    %v2059 = vsel %vm658, %v2040, 0
    %v2061 = vsel %vm658, %v2042, 0
    %v2063 = vsel %vm658, %v2044, 0
    %v2065 = vsel %vm658, %v2046, 0
    %v2067 = vsel %vm658, %v2048, 0
    %v2069 = vsel %vm658, %v2050, 0
    %v2071 = vsel %vm658, %v2052, 0
    %2073 = vmatprep.subr.mxu0 0.0
    %2074 = vmatpush1.xpose.msra.mxu0 0.0
    %2075 = vmatprep.subr.mxu0 0.0
    %2076 = vmatpush1.xpose.msra.mxu0 0.0
    %2077 = vmatprep.subr.mxu0 0.0
    %2078 = vmatpush1.xpose.msra.mxu0 0.0
    %2079 = vmatprep.subr.mxu0 0.0
    %2080 = vmatpush1.xpose.msra.mxu0 0.0
    %2081 = vmatprep.subr.mxu0 0.0
    %2082 = vmatpush1.xpose.msra.mxu0 0.0
    %2083 = vmatprep.subr.mxu0 0.0
    %2084 = vmatpush1.xpose.msra.mxu0 0.0
    %2085 = vmatprep.subr.mxu0 0.0
    %2086 = vmatpush1.xpose.msra.mxu0 0.0
    %2087 = vmatprep.subr.mxu0 0.0
    %2088 = vmatpush1.xpose.msra.mxu0 0.0
    %2089 = vmatprep.subr.mxu0 0.0
    %2090 = vmatpush1.xpose.msra.mxu0 0.0
    %2091 = vmatprep.subr.mxu0 0.0
    %2092 = vmatpush1.xpose.msra.mxu0 0.0
    %2093 = vmatprep.subr.mxu0 0.0
    %2094 = vmatpush1.xpose.msra.mxu0 0.0
    %2095 = vmatprep.subr.mxu0 0.0
    %2096 = vmatpush1.xpose.msra.mxu0 %v2071
    %2097 = vmatprep.subr.mxu0 0.0
    %2098 = vmatpush1.xpose.msra.mxu0 %v2069
    %2099 = vmatprep.subr.mxu0 0.0
    %2100 = vmatpush1.xpose.msra.mxu0 %v2067
    %2101 = vmatprep.subr.mxu0 0.0
    %2102 = vmatpush1.xpose.msra.mxu0 %v2065
    %2103 = vmatprep.subr.mxu0 0.0
    %2104 = vmatpush1.xpose.msra.mxu0 %v2063
    %2105 = vmatprep.subr.mxu0 0.0
    %2106 = vmatpush2.xpose.msra.mxu0 0.0
    %2107 = vmatprep.subr.mxu0 0.0
    %2108 = vmatpush2.xpose.msra.mxu0 0.0
    %2109 = vmatprep.subr.mxu0 0.0
    %2110 = vmatpush2.xpose.msra.mxu0 0.0
    %2111 = vmatprep.subr.mxu0 0.0
    %2112 = vmatpush2.xpose.msra.mxu0 0.0
    %2113 = vmatprep.subr.mxu0 0.0
    %2114 = vmatpush2.xpose.msra.mxu0 0.0
    %2115 = vmatprep.subr.mxu0 0.0
    %2116 = vmatpush2.xpose.msra.mxu0 0.0
    %2117 = vmatprep.subr.mxu0 0.0
    %2118 = vmatpush2.xpose.msra.mxu0 0.0
    %2119 = vmatprep.subr.mxu0 0.0
    %2120 = vmatpush2.xpose.msra.mxu0 0.0
    %2121 = vmatprep.subr.mxu0 0.0
    %2122 = vmatpush2.xpose.msra.mxu0 0.0
    %2123 = vmatprep.subr.mxu0 0.0
    %2124 = vmatpush2.xpose.msra.mxu0 0.0
    %2125 = vmatprep.subr.mxu0 0.0
    %2126 = vmatpush2.xpose.msra.mxu0 0.0
    %2127 = vmatprep.subr.mxu0 0.0
    %2128 = vmatpush2.xpose.msra.mxu0 0.0
    %2129 = vmatprep.subr.mxu0 0.0
    %2130 = vmatpush2.xpose.msra.mxu0 0.0
    %2131 = vmatprep.subr.mxu0 0.0
    %2132 = vmatpush2.xpose.msra.mxu0 0.0
    %2133 = vmatprep.subr.mxu0 0.0
    %2134 = vmatpush2.xpose.msra.mxu0 0.0
    %2135 = vmatprep.subr.mxu0 0.0
    %2136 = vmatpush2.xpose.msra.mxu0 0.0
    %2137 = vmatprep.mubr.f32.mxu0 0.0
    %2138 = vmatmul.mubr.f32.gmra.mxu0 %v2053
    %v2139 = vpop.f32.mrf.mxu0
    %v2140 = vadd.f32 0.0, %v2139
    %v2141 = vpop.f32.mrf.mxu0
    %2142 = vmatprep.mubr.f32.mxu0 0.0
    %2143 = vmatmul.mubr.f32.gmra.mxu0 %v2055
    %v2144 = vpop.f32.mrf.mxu0
    %v2145 = vadd.f32 0.0, %v2144
    %v2146 = vpop.f32.mrf.mxu0
    %2147 = vmatprep.mubr.f32.mxu0 0.0
    %2148 = vmatmul.mubr.f32.gmra.mxu0 %v2057
    %v2149 = vpop.f32.mrf.mxu0
    %v2150 = vadd.f32 0.0, %v2149
    %v2151 = vpop.f32.mrf.mxu0
    %2152 = vmatprep.mubr.f32.mxu0 0.0
    %2153 = vmatmul.mubr.f32.gmra.mxu0 %v2059
    %v2154 = vpop.f32.mrf.mxu0
    %v2155 = vadd.f32 0.0, %v2154
    %v2156 = vpop.f32.mrf.mxu0
    %2157 = vmatprep.mubr.f32.mxu0 0.0
    %2158 = vmatmul.mubr.f32.gmra.mxu0 %v2061
    %v2159 = vpop.f32.mrf.mxu0
    %v2160 = vadd.f32 0.0, %v2159
    %v2161 = vpop.f32.mrf.mxu0
    %2162 = vdwg.mxu0
    %v2163 = vmul.f32 %v2010, 0.35355338
    %v2164 = vmul.f32 %v2015, 0.35355338
    %v2165 = vmul.f32 %v2020, 0.35355338
    %v2166 = vmul.f32 %v2025, 0.35355338
    %v2167 = vmul.f32 %v2030, 0.35355338
    %v2168 = vmul.f32 %v2140, 0.35355338
    %v2169 = vmul.f32 %v2145, 0.35355338
    %v2170 = vmul.f32 %v2150, 0.35355338
    %v2171 = vmul.f32 %v2155, 0.35355338
    %v2172 = vmul.f32 %v2160, 0.35355338
    %v2173 = vadd.f32 %v2163, %v77
    %v2174 = vadd.f32 %v2164, %v77
    %v2175 = vadd.f32 %v2165, %v77
    %v2176 = vadd.f32 %v2166, %v77
    %v2177 = vadd.f32 %v2167, %v77
    %v2178 = vadd.f32 %v2168, %v81
    %v2179 = vadd.f32 %v2169, %v81
    %v2180 = vadd.f32 %v2170, %v81
    %v2181 = vadd.f32 %v2171, %v81
    %v2182 = vadd.f32 %v2172, %v81
    %v2183 = vsel %vm919, %v2173, -inf
    %2184 = vmax.xlane.f32.xlu0 %v2183
    %v2185 = vpop.xlane.xlu0 %2184
    %v2186 = vsel %vm919, %v2174, -inf
    %2187 = vmax.xlane.f32.xlu0 %v2186
    %v2188 = vpop.xlane.xlu0 %2187
    %v2189 = vsel %vm919, %v2175, -inf
    %2190 = vmax.xlane.f32.xlu0 %v2189
    %v2191 = vpop.xlane.xlu0 %2190
    %v2192 = vsel %vm919, %v2176, -inf
    %2193 = vmax.xlane.f32.xlu0 %v2192
    %v2194 = vpop.xlane.xlu0 %2193
    %v2195 = vsel %vm919, %v2177, -inf
    %2196 = vmax.xlane.f32.xlu0 %v2195
    %v2197 = vpop.xlane.xlu0 %2196
    %v2198 = vsel %vm919, %v2178, -inf
    %2199 = vmax.xlane.f32.xlu0 %v2198
    %v2200 = vpop.xlane.xlu0 %2199
    %v2201 = vsel %vm919, %v2179, -inf
    %2202 = vmax.xlane.f32.xlu0 %v2201
    %v2203 = vpop.xlane.xlu0 %2202
    %v2204 = vsel %vm919, %v2180, -inf
    %2205 = vmax.xlane.f32.xlu0 %v2204
    %v2206 = vpop.xlane.xlu0 %2205
    %v2207 = vsel %vm919, %v2181, -inf
    %2208 = vmax.xlane.f32.xlu0 %v2207
    %v2209 = vpop.xlane.xlu0 %2208
    %v2210 = vsel %vm919, %v2182, -inf
    %2211 = vmax.xlane.f32.xlu0 %v2210
    %v2212 = vpop.xlane.xlu0 %2211
    %v2213 = vsub.f32 %v2173, %v2185
    %v2214 = vsub.f32 %v2174, %v2188
    %v2215 = vsub.f32 %v2175, %v2191
    %v2216 = vsub.f32 %v2176, %v2194
    %v2217 = vsub.f32 %v2177, %v2197
    %v2218 = vsub.f32 %v2178, %v2200
    %v2219 = vsub.f32 %v2179, %v2203
    %v2220 = vsub.f32 %v2180, %v2206
    %v2221 = vsub.f32 %v2181, %v2209
    %v2222 = vsub.f32 %v2182, %v2212
    %v2223 = vmul.f32 %v2213, 1.442695
    %v2224 = vpow.pop %v2223
    %v2225 = vmul.f32 %v2214, 1.442695
    %v2226 = vpow.pop %v2225
    %v2227 = vmul.f32 %v2215, 1.442695
    %v2228 = vpow.pop %v2227
    %v2229 = vmul.f32 %v2216, 1.442695
    %v2230 = vpow.pop %v2229
    %v2231 = vmul.f32 %v2217, 1.442695
    %v2232 = vpow.pop %v2231
    %v2233 = vmul.f32 %v2218, 1.442695
    %v2234 = vpow.pop %v2233
    %v2235 = vmul.f32 %v2219, 1.442695
    %v2236 = vpow.pop %v2235
    %v2237 = vmul.f32 %v2220, 1.442695
    %v2238 = vpow.pop %v2237
    %v2239 = vmul.f32 %v2221, 1.442695
    %v2240 = vpow.pop %v2239
    %v2241 = vmul.f32 %v2222, 1.442695
    %v2242 = vpow.pop %v2241
    %v2243 = vsel %vm919, %v2224, 0.0
    %2244 = vadd.xlane.f32.xlu0 %v2243
    %v2245 = vpop.xlane.xlu0 %2244
    %v2246 = vsel %vm919, %v2226, 0.0
    %2247 = vadd.xlane.f32.xlu0 %v2246
    %v2248 = vpop.xlane.xlu0 %2247
    %v2249 = vsel %vm919, %v2228, 0.0
    %2250 = vadd.xlane.f32.xlu0 %v2249
    %v2251 = vpop.xlane.xlu0 %2250
    %v2252 = vsel %vm919, %v2230, 0.0
    %2253 = vadd.xlane.f32.xlu0 %v2252
    %v2254 = vpop.xlane.xlu0 %2253
    %v2255 = vsel %vm919, %v2232, 0.0
    %2256 = vadd.xlane.f32.xlu0 %v2255
    %v2257 = vpop.xlane.xlu0 %2256
    %v2258 = vsel %vm919, %v2234, 0.0
    %2259 = vadd.xlane.f32.xlu0 %v2258
    %v2260 = vpop.xlane.xlu0 %2259
    %v2261 = vsel %vm919, %v2236, 0.0
    %2262 = vadd.xlane.f32.xlu0 %v2261
    %v2263 = vpop.xlane.xlu0 %2262
    %v2264 = vsel %vm919, %v2238, 0.0
    %2265 = vadd.xlane.f32.xlu0 %v2264
    %v2266 = vpop.xlane.xlu0 %2265
    %v2267 = vsel %vm919, %v2240, 0.0
    %2268 = vadd.xlane.f32.xlu0 %v2267
    %v2269 = vpop.xlane.xlu0 %2268
    %v2270 = vsel %vm919, %v2242, 0.0
    %2271 = vadd.xlane.f32.xlu0 %v2270
    %v2272 = vpop.xlane.xlu0 %2271
    %v2273 = vrcp.pop %v2245
    %v2274 = vrcp.pop %v2248
    %v2275 = vrcp.pop %v2251
    %v2276 = vrcp.pop %v2254
    %v2277 = vrcp.pop %v2257
    %v2278 = vrcp.pop %v2260
    %v2279 = vrcp.pop %v2263
    %v2280 = vrcp.pop %v2266
    %v2281 = vrcp.pop %v2269
    %v2282 = vrcp.pop %v2272
    %v2283 = vmul.f32 %v2224, %v2273
    %v2284 = vmul.f32 %v2226, %v2274
    %v2285 = vmul.f32 %v2228, %v2275
    %v2286 = vmul.f32 %v2230, %v2276
    %v2287 = vmul.f32 %v2232, %v2277
    %v2288 = vmul.f32 %v2234, %v2278
    %v2289 = vmul.f32 %v2236, %v2279
    %v2290 = vmul.f32 %v2238, %v2280
    %v2291 = vmul.f32 %v2240, %v2281
    %v2292 = vmul.f32 %v2242, %v2282
    %s2293 = scalar_lea.vmem [#allocation2], 80
    %2294 = vst.msk [vmem:[%s2293] sm:$0xff] %vm919, %v2283
    %2295 = vst.msk [vmem:[%s2293 + $0x8] sm:$0xff] %vm919, %v2284
    %2296 = vst.msk [vmem:[%s2293 + $0x10] sm:$0xff] %vm919, %v2285
    %2297 = vst.msk [vmem:[%s2293 + $0x18] sm:$0xff] %vm919, %v2286
    %2298 = vst.msk [vmem:[%s2293 + $0x20] sm:$0xff] %vm919, %v2287
    %s2299 = scalar_lea.vmem [#allocation2], 240
    %2300 = vst.msk [vmem:[%s2299] sm:$0xff] %vm919, %v2288
    %2301 = vst.msk [vmem:[%s2299 + $0x8] sm:$0xff] %vm919, %v2289
    %2302 = vst.msk [vmem:[%s2299 + $0x10] sm:$0xff] %vm919, %v2290
    %2303 = vst.msk [vmem:[%s2299 + $0x18] sm:$0xff] %vm919, %v2291
    %2304 = vst.msk [vmem:[%s2299 + $0x20] sm:$0xff] %vm919, %v2292
    %2305 = vrot.lane.b32.xlu0 %v610, 112
    %v2306 = vpop.permute.xlu0 %2305
    %2307 = vrot.lane.b32.xlu0 %v615, 112
    %v2308 = vpop.permute.xlu0 %2307
    %2309 = vrot.lane.b32.xlu0 %v620, 112
    %v2310 = vpop.permute.xlu0 %2309
    %2311 = vrot.lane.b32.xlu0 %v625, 112
    %v2312 = vpop.permute.xlu0 %2311
    %2313 = vrot.lane.b32.xlu0 %v630, 112
    %v2314 = vpop.permute.xlu0 %2313
    %v2321 = vsel %vm919, %v2283, 0
    %v2324 = vsel %vm919, %v2284, 0
    %v2327 = vsel %vm919, %v2285, 0
    %v2330 = vsel %vm919, %v2286, 0
    %v2333 = vsel %vm919, %v2287, 0
    %2335 = vmatprep.subr.mxu0 0.0
    %2336 = vmatpush1.msra.mxu0 0.0
    %2337 = vmatprep.subr.mxu0 0.0
    %2338 = vmatpush1.msra.mxu0 0.0
    %2339 = vmatprep.subr.mxu0 0.0
    %2340 = vmatpush1.msra.mxu0 0.0
    %2341 = vmatprep.subr.mxu0 0.0
    %2342 = vmatpush1.msra.mxu0 0.0
    %2343 = vmatprep.subr.mxu0 0.0
    %2344 = vmatpush1.msra.mxu0 0.0
    %2345 = vmatprep.subr.mxu0 0.0
    %2346 = vmatpush1.msra.mxu0 0.0
    %2347 = vmatprep.subr.mxu0 0.0
    %2348 = vmatpush1.msra.mxu0 0.0
    %2349 = vmatprep.subr.mxu0 0.0
    %2350 = vmatpush1.msra.mxu0 0.0
    %2351 = vmatprep.subr.mxu0 0.0
    %2352 = vmatpush1.msra.mxu0 0.0
    %2353 = vmatprep.subr.mxu0 0.0
    %2354 = vmatpush1.msra.mxu0 0.0
    %2355 = vmatprep.subr.mxu0 0.0
    %2356 = vmatpush1.msra.mxu0 0.0
    %2357 = vmatprep.subr.mxu0 0.0
    %2358 = vmatpush1.msra.mxu0 %v2314
    %2359 = vmatprep.subr.mxu0 0.0
    %2360 = vmatpush1.msra.mxu0 %v2312
    %2361 = vmatprep.subr.mxu0 0.0
    %2362 = vmatpush1.msra.mxu0 %v2310
    %2363 = vmatprep.subr.mxu0 0.0
    %2364 = vmatpush1.msra.mxu0 %v2308
    %2365 = vmatprep.subr.mxu0 0.0
    %2366 = vmatpush1.msra.mxu0 %v2306
    %2367 = vmatprep.subr.mxu0 0.0
    %2368 = vmatpush2.msra.mxu0 0.0
    %2369 = vmatprep.subr.mxu0 0.0
    %2370 = vmatpush2.msra.mxu0 0.0
    %2371 = vmatprep.subr.mxu0 0.0
    %2372 = vmatpush2.msra.mxu0 0.0
    %2373 = vmatprep.subr.mxu0 0.0
    %2374 = vmatpush2.msra.mxu0 0.0
    %2375 = vmatprep.subr.mxu0 0.0
    %2376 = vmatpush2.msra.mxu0 0.0
    %2377 = vmatprep.subr.mxu0 0.0
    %2378 = vmatpush2.msra.mxu0 0.0
    %2379 = vmatprep.subr.mxu0 0.0
    %2380 = vmatpush2.msra.mxu0 0.0
    %2381 = vmatprep.subr.mxu0 0.0
    %2382 = vmatpush2.msra.mxu0 0.0
    %2383 = vmatprep.subr.mxu0 0.0
    %2384 = vmatpush2.msra.mxu0 0.0
    %2385 = vmatprep.subr.mxu0 0.0
    %2386 = vmatpush2.msra.mxu0 0.0
    %2387 = vmatprep.subr.mxu0 0.0
    %2388 = vmatpush2.msra.mxu0 0.0
    %2389 = vmatprep.subr.mxu0 0.0
    %2390 = vmatpush2.msra.mxu0 0.0
    %2391 = vmatprep.subr.mxu0 0.0
    %2392 = vmatpush2.msra.mxu0 0.0
    %2393 = vmatprep.subr.mxu0 0.0
    %2394 = vmatpush2.msra.mxu0 0.0
    %2395 = vmatprep.subr.mxu0 0.0
    %2396 = vmatpush2.msra.mxu0 0.0
    %2397 = vmatprep.subr.mxu0 0.0
    %2398 = vmatpush2.msra.mxu0 0.0
    %2399 = vmatprep.mubr.f32.mxu0 0.0
    %2400 = vmatmul.mubr.f32.gmra.mxu0 %v2321
    %v2401 = vpop.f32.mrf.mxu0
    %v2402 = vadd.f32 0.0, %v2401
    %v2403 = vpop.f32.mrf.mxu0
    %2404 = vmatprep.mubr.f32.mxu0 0.0
    %2405 = vmatmul.mubr.f32.gmra.mxu0 %v2324
    %v2406 = vpop.f32.mrf.mxu0
    %v2407 = vadd.f32 0.0, %v2406
    %v2408 = vpop.f32.mrf.mxu0
    %2409 = vmatprep.mubr.f32.mxu0 0.0
    %2410 = vmatmul.mubr.f32.gmra.mxu0 %v2327
    %v2411 = vpop.f32.mrf.mxu0
    %v2412 = vadd.f32 0.0, %v2411
    %v2413 = vpop.f32.mrf.mxu0
    %2414 = vmatprep.mubr.f32.mxu0 0.0
    %2415 = vmatmul.mubr.f32.gmra.mxu0 %v2330
    %v2416 = vpop.f32.mrf.mxu0
    %v2417 = vadd.f32 0.0, %v2416
    %v2418 = vpop.f32.mrf.mxu0
    %2419 = vmatprep.mubr.f32.mxu0 0.0
    %2420 = vmatmul.mubr.f32.gmra.mxu0 %v2333
    %v2421 = vpop.f32.mrf.mxu0
    %v2422 = vadd.f32 0.0, %v2421
    %v2423 = vpop.f32.mrf.mxu0
    %2424 = vdwg.mxu0
    %2425 = vrot.lane.b32.xlu0 %v635, 112
    %v2426 = vpop.permute.xlu0 %2425
    %2427 = vrot.lane.b32.xlu0 %v640, 112
    %v2428 = vpop.permute.xlu0 %2427
    %2429 = vrot.lane.b32.xlu0 %v645, 112
    %v2430 = vpop.permute.xlu0 %2429
    %2431 = vrot.lane.b32.xlu0 %v650, 112
    %v2432 = vpop.permute.xlu0 %2431
    %2433 = vrot.lane.b32.xlu0 %v655, 112
    %v2434 = vpop.permute.xlu0 %2433
    %v2441 = vsel %vm919, %v2288, 0
    %v2444 = vsel %vm919, %v2289, 0
    %v2447 = vsel %vm919, %v2290, 0
    %v2450 = vsel %vm919, %v2291, 0
    %v2453 = vsel %vm919, %v2292, 0
    %2455 = vmatprep.subr.mxu0 0.0
    %2456 = vmatpush1.msra.mxu0 0.0
    %2457 = vmatprep.subr.mxu0 0.0
    %2458 = vmatpush1.msra.mxu0 0.0
    %2459 = vmatprep.subr.mxu0 0.0
    %2460 = vmatpush1.msra.mxu0 0.0
    %2461 = vmatprep.subr.mxu0 0.0
    %2462 = vmatpush1.msra.mxu0 0.0
    %2463 = vmatprep.subr.mxu0 0.0
    %2464 = vmatpush1.msra.mxu0 0.0
    %2465 = vmatprep.subr.mxu0 0.0
    %2466 = vmatpush1.msra.mxu0 0.0
    %2467 = vmatprep.subr.mxu0 0.0
    %2468 = vmatpush1.msra.mxu0 0.0
    %2469 = vmatprep.subr.mxu0 0.0
    %2470 = vmatpush1.msra.mxu0 0.0
    %2471 = vmatprep.subr.mxu0 0.0
    %2472 = vmatpush1.msra.mxu0 0.0
    %2473 = vmatprep.subr.mxu0 0.0
    %2474 = vmatpush1.msra.mxu0 0.0
    %2475 = vmatprep.subr.mxu0 0.0
    %2476 = vmatpush1.msra.mxu0 0.0
    %2477 = vmatprep.subr.mxu0 0.0
    %2478 = vmatpush1.msra.mxu0 %v2434
    %2479 = vmatprep.subr.mxu0 0.0
    %2480 = vmatpush1.msra.mxu0 %v2432
    %2481 = vmatprep.subr.mxu0 0.0
    %2482 = vmatpush1.msra.mxu0 %v2430
    %2483 = vmatprep.subr.mxu0 0.0
    %2484 = vmatpush1.msra.mxu0 %v2428
    %2485 = vmatprep.subr.mxu0 0.0
    %2486 = vmatpush1.msra.mxu0 %v2426
    %2487 = vmatprep.subr.mxu0 0.0
    %2488 = vmatpush2.msra.mxu0 0.0
    %2489 = vmatprep.subr.mxu0 0.0
    %2490 = vmatpush2.msra.mxu0 0.0
    %2491 = vmatprep.subr.mxu0 0.0
    %2492 = vmatpush2.msra.mxu0 0.0
    %2493 = vmatprep.subr.mxu0 0.0
    %2494 = vmatpush2.msra.mxu0 0.0
    %2495 = vmatprep.subr.mxu0 0.0
    %2496 = vmatpush2.msra.mxu0 0.0
    %2497 = vmatprep.subr.mxu0 0.0
    %2498 = vmatpush2.msra.mxu0 0.0
    %2499 = vmatprep.subr.mxu0 0.0
    %2500 = vmatpush2.msra.mxu0 0.0
    %2501 = vmatprep.subr.mxu0 0.0
    %2502 = vmatpush2.msra.mxu0 0.0
    %2503 = vmatprep.subr.mxu0 0.0
    %2504 = vmatpush2.msra.mxu0 0.0
    %2505 = vmatprep.subr.mxu0 0.0
    %2506 = vmatpush2.msra.mxu0 0.0
    %2507 = vmatprep.subr.mxu0 0.0
    %2508 = vmatpush2.msra.mxu0 0.0
    %2509 = vmatprep.subr.mxu0 0.0
    %2510 = vmatpush2.msra.mxu0 0.0
    %2511 = vmatprep.subr.mxu0 0.0
    %2512 = vmatpush2.msra.mxu0 0.0
    %2513 = vmatprep.subr.mxu0 0.0
    %2514 = vmatpush2.msra.mxu0 0.0
    %2515 = vmatprep.subr.mxu0 0.0
    %2516 = vmatpush2.msra.mxu0 0.0
    %2517 = vmatprep.subr.mxu0 0.0
    %2518 = vmatpush2.msra.mxu0 0.0
    %2519 = vmatprep.mubr.f32.mxu0 0.0
    %2520 = vmatmul.mubr.f32.gmra.mxu0 %v2441
    %v2521 = vpop.f32.mrf.mxu0
    %v2522 = vadd.f32 0.0, %v2521
    %v2523 = vpop.f32.mrf.mxu0
    %2524 = vmatprep.mubr.f32.mxu0 0.0
    %2525 = vmatmul.mubr.f32.gmra.mxu0 %v2444
    %v2526 = vpop.f32.mrf.mxu0
    %v2527 = vadd.f32 0.0, %v2526
    %v2528 = vpop.f32.mrf.mxu0
    %2529 = vmatprep.mubr.f32.mxu0 0.0
    %2530 = vmatmul.mubr.f32.gmra.mxu0 %v2447
    %v2531 = vpop.f32.mrf.mxu0
    %v2532 = vadd.f32 0.0, %v2531
    %v2533 = vpop.f32.mrf.mxu0
    %2534 = vmatprep.mubr.f32.mxu0 0.0
    %2535 = vmatmul.mubr.f32.gmra.mxu0 %v2450
    %v2536 = vpop.f32.mrf.mxu0
    %v2537 = vadd.f32 0.0, %v2536
    %v2538 = vpop.f32.mrf.mxu0
    %2539 = vmatprep.mubr.f32.mxu0 0.0
    %2540 = vmatmul.mubr.f32.gmra.mxu0 %v2453
    %v2541 = vpop.f32.mrf.mxu0
    %v2542 = vadd.f32 0.0, %v2541
    %v2543 = vpop.f32.mrf.mxu0
    %2544 = vdwg.mxu0
    %2545 = vrot.lane.b32.xlu0 %v358, 104
    %v2546 = vpop.permute.xlu0 %2545
    %2547 = vrot.lane.b32.xlu0 %v363, 104
    %v2548 = vpop.permute.xlu0 %2547
    %2549 = vrot.lane.b32.xlu0 %v368, 104
    %v2550 = vpop.permute.xlu0 %2549
    %2551 = vrot.lane.b32.xlu0 %v373, 104
    %v2552 = vpop.permute.xlu0 %2551
    %2553 = vrot.lane.b32.xlu0 %v378, 104
    %v2554 = vpop.permute.xlu0 %2553
    %2555 = vrot.lane.b32.xlu0 %v484, 104
    %v2556 = vpop.permute.xlu0 %2555
    %2557 = vrot.lane.b32.xlu0 %v489, 104
    %v2558 = vpop.permute.xlu0 %2557
    %2559 = vrot.lane.b32.xlu0 %v494, 104
    %v2560 = vpop.permute.xlu0 %2559
    %2561 = vrot.lane.b32.xlu0 %v499, 104
    %v2562 = vpop.permute.xlu0 %2561
    %2563 = vrot.lane.b32.xlu0 %v504, 104
    %v2564 = vpop.permute.xlu0 %2563
    %v2565 = vsel %vm658, %v2546, 0
    %v2567 = vsel %vm658, %v2548, 0
    %v2569 = vsel %vm658, %v2550, 0
    %v2571 = vsel %vm658, %v2552, 0
    %v2573 = vsel %vm658, %v2554, 0
    %v2575 = vsel %vm658, %v2556, 0
    %v2577 = vsel %vm658, %v2558, 0
    %v2579 = vsel %vm658, %v2560, 0
    %v2581 = vsel %vm658, %v2562, 0
    %v2583 = vsel %vm658, %v2564, 0
    %2585 = vmatprep.subr.mxu0 0.0
    %2586 = vmatpush1.xpose.msra.mxu0 0.0
    %2587 = vmatprep.subr.mxu0 0.0
    %2588 = vmatpush1.xpose.msra.mxu0 0.0
    %2589 = vmatprep.subr.mxu0 0.0
    %2590 = vmatpush1.xpose.msra.mxu0 0.0
    %2591 = vmatprep.subr.mxu0 0.0
    %2592 = vmatpush1.xpose.msra.mxu0 0.0
    %2593 = vmatprep.subr.mxu0 0.0
    %2594 = vmatpush1.xpose.msra.mxu0 0.0
    %2595 = vmatprep.subr.mxu0 0.0
    %2596 = vmatpush1.xpose.msra.mxu0 0.0
    %2597 = vmatprep.subr.mxu0 0.0
    %2598 = vmatpush1.xpose.msra.mxu0 0.0
    %2599 = vmatprep.subr.mxu0 0.0
    %2600 = vmatpush1.xpose.msra.mxu0 0.0
    %2601 = vmatprep.subr.mxu0 0.0
    %2602 = vmatpush1.xpose.msra.mxu0 0.0
    %2603 = vmatprep.subr.mxu0 0.0
    %2604 = vmatpush1.xpose.msra.mxu0 0.0
    %2605 = vmatprep.subr.mxu0 0.0
    %2606 = vmatpush1.xpose.msra.mxu0 0.0
    %2607 = vmatprep.subr.mxu0 0.0
    %2608 = vmatpush1.xpose.msra.mxu0 %v2583
    %2609 = vmatprep.subr.mxu0 0.0
    %2610 = vmatpush1.xpose.msra.mxu0 %v2581
    %2611 = vmatprep.subr.mxu0 0.0
    %2612 = vmatpush1.xpose.msra.mxu0 %v2579
    %2613 = vmatprep.subr.mxu0 0.0
    %2614 = vmatpush1.xpose.msra.mxu0 %v2577
    %2615 = vmatprep.subr.mxu0 0.0
    %2616 = vmatpush1.xpose.msra.mxu0 %v2575
    %2617 = vmatprep.subr.mxu0 0.0
    %2618 = vmatpush2.xpose.msra.mxu0 0.0
    %2619 = vmatprep.subr.mxu0 0.0
    %2620 = vmatpush2.xpose.msra.mxu0 0.0
    %2621 = vmatprep.subr.mxu0 0.0
    %2622 = vmatpush2.xpose.msra.mxu0 0.0
    %2623 = vmatprep.subr.mxu0 0.0
    %2624 = vmatpush2.xpose.msra.mxu0 0.0
    %2625 = vmatprep.subr.mxu0 0.0
    %2626 = vmatpush2.xpose.msra.mxu0 0.0
    %2627 = vmatprep.subr.mxu0 0.0
    %2628 = vmatpush2.xpose.msra.mxu0 0.0
    %2629 = vmatprep.subr.mxu0 0.0
    %2630 = vmatpush2.xpose.msra.mxu0 0.0
    %2631 = vmatprep.subr.mxu0 0.0
    %2632 = vmatpush2.xpose.msra.mxu0 0.0
    %2633 = vmatprep.subr.mxu0 0.0
    %2634 = vmatpush2.xpose.msra.mxu0 0.0
    %2635 = vmatprep.subr.mxu0 0.0
    %2636 = vmatpush2.xpose.msra.mxu0 0.0
    %2637 = vmatprep.subr.mxu0 0.0
    %2638 = vmatpush2.xpose.msra.mxu0 0.0
    %2639 = vmatprep.subr.mxu0 0.0
    %2640 = vmatpush2.xpose.msra.mxu0 0.0
    %2641 = vmatprep.subr.mxu0 0.0
    %2642 = vmatpush2.xpose.msra.mxu0 0.0
    %2643 = vmatprep.subr.mxu0 0.0
    %2644 = vmatpush2.xpose.msra.mxu0 0.0
    %2645 = vmatprep.subr.mxu0 0.0
    %2646 = vmatpush2.xpose.msra.mxu0 0.0
    %2647 = vmatprep.subr.mxu0 0.0
    %2648 = vmatpush2.xpose.msra.mxu0 0.0
    %2649 = vmatprep.mubr.f32.mxu0 0.0
    %2650 = vmatmul.mubr.f32.gmra.mxu0 %v2565
    %v2651 = vpop.f32.mrf.mxu0
    %v2652 = vadd.f32 0.0, %v2651
    %v2653 = vpop.f32.mrf.mxu0
    %2654 = vmatprep.mubr.f32.mxu0 0.0
    %2655 = vmatmul.mubr.f32.gmra.mxu0 %v2567
    %v2656 = vpop.f32.mrf.mxu0
    %v2657 = vadd.f32 0.0, %v2656
    %v2658 = vpop.f32.mrf.mxu0
    %2659 = vmatprep.mubr.f32.mxu0 0.0
    %2660 = vmatmul.mubr.f32.gmra.mxu0 %v2569
    %v2661 = vpop.f32.mrf.mxu0
    %v2662 = vadd.f32 0.0, %v2661
    %v2663 = vpop.f32.mrf.mxu0
    %2664 = vmatprep.mubr.f32.mxu0 0.0
    %2665 = vmatmul.mubr.f32.gmra.mxu0 %v2571
    %v2666 = vpop.f32.mrf.mxu0
    %v2667 = vadd.f32 0.0, %v2666
    %v2668 = vpop.f32.mrf.mxu0
    %2669 = vmatprep.mubr.f32.mxu0 0.0
    %2670 = vmatmul.mubr.f32.gmra.mxu0 %v2573
    %v2671 = vpop.f32.mrf.mxu0
    %v2672 = vadd.f32 0.0, %v2671
    %v2673 = vpop.f32.mrf.mxu0
    %2674 = vdwg.mxu0
    %2675 = vrot.lane.b32.xlu0 %v383, 104
    %v2676 = vpop.permute.xlu0 %2675
    %2677 = vrot.lane.b32.xlu0 %v388, 104
    %v2678 = vpop.permute.xlu0 %2677
    %2679 = vrot.lane.b32.xlu0 %v393, 104
    %v2680 = vpop.permute.xlu0 %2679
    %2681 = vrot.lane.b32.xlu0 %v398, 104
    %v2682 = vpop.permute.xlu0 %2681
    %2683 = vrot.lane.b32.xlu0 %v403, 104
    %v2684 = vpop.permute.xlu0 %2683
    %2685 = vrot.lane.b32.xlu0 %v509, 104
    %v2686 = vpop.permute.xlu0 %2685
    %2687 = vrot.lane.b32.xlu0 %v514, 104
    %v2688 = vpop.permute.xlu0 %2687
    %2689 = vrot.lane.b32.xlu0 %v519, 104
    %v2690 = vpop.permute.xlu0 %2689
    %2691 = vrot.lane.b32.xlu0 %v524, 104
    %v2692 = vpop.permute.xlu0 %2691
    %2693 = vrot.lane.b32.xlu0 %v529, 104
    %v2694 = vpop.permute.xlu0 %2693
    %v2695 = vsel %vm658, %v2676, 0
    %v2697 = vsel %vm658, %v2678, 0
    %v2699 = vsel %vm658, %v2680, 0
    %v2701 = vsel %vm658, %v2682, 0
    %v2703 = vsel %vm658, %v2684, 0
    %v2705 = vsel %vm658, %v2686, 0
    %v2707 = vsel %vm658, %v2688, 0
    %v2709 = vsel %vm658, %v2690, 0
    %v2711 = vsel %vm658, %v2692, 0
    %v2713 = vsel %vm658, %v2694, 0
    %2715 = vmatprep.subr.mxu0 0.0
    %2716 = vmatpush1.xpose.msra.mxu0 0.0
    %2717 = vmatprep.subr.mxu0 0.0
    %2718 = vmatpush1.xpose.msra.mxu0 0.0
    %2719 = vmatprep.subr.mxu0 0.0
    %2720 = vmatpush1.xpose.msra.mxu0 0.0
    %2721 = vmatprep.subr.mxu0 0.0
    %2722 = vmatpush1.xpose.msra.mxu0 0.0
    %2723 = vmatprep.subr.mxu0 0.0
    %2724 = vmatpush1.xpose.msra.mxu0 0.0
    %2725 = vmatprep.subr.mxu0 0.0
    %2726 = vmatpush1.xpose.msra.mxu0 0.0
    %2727 = vmatprep.subr.mxu0 0.0
    %2728 = vmatpush1.xpose.msra.mxu0 0.0
    %2729 = vmatprep.subr.mxu0 0.0
    %2730 = vmatpush1.xpose.msra.mxu0 0.0
    %2731 = vmatprep.subr.mxu0 0.0
    %2732 = vmatpush1.xpose.msra.mxu0 0.0
    %2733 = vmatprep.subr.mxu0 0.0
    %2734 = vmatpush1.xpose.msra.mxu0 0.0
    %2735 = vmatprep.subr.mxu0 0.0
    %2736 = vmatpush1.xpose.msra.mxu0 0.0
    %2737 = vmatprep.subr.mxu0 0.0
    %2738 = vmatpush1.xpose.msra.mxu0 %v2713
    %2739 = vmatprep.subr.mxu0 0.0
    %2740 = vmatpush1.xpose.msra.mxu0 %v2711
    %2741 = vmatprep.subr.mxu0 0.0
    %2742 = vmatpush1.xpose.msra.mxu0 %v2709
    %2743 = vmatprep.subr.mxu0 0.0
    %2744 = vmatpush1.xpose.msra.mxu0 %v2707
    %2745 = vmatprep.subr.mxu0 0.0
    %2746 = vmatpush1.xpose.msra.mxu0 %v2705
    %2747 = vmatprep.subr.mxu0 0.0
    %2748 = vmatpush2.xpose.msra.mxu0 0.0
    %2749 = vmatprep.subr.mxu0 0.0
    %2750 = vmatpush2.xpose.msra.mxu0 0.0
    %2751 = vmatprep.subr.mxu0 0.0
    %2752 = vmatpush2.xpose.msra.mxu0 0.0
    %2753 = vmatprep.subr.mxu0 0.0
    %2754 = vmatpush2.xpose.msra.mxu0 0.0
    %2755 = vmatprep.subr.mxu0 0.0
    %2756 = vmatpush2.xpose.msra.mxu0 0.0
    %2757 = vmatprep.subr.mxu0 0.0
    %2758 = vmatpush2.xpose.msra.mxu0 0.0
    %2759 = vmatprep.subr.mxu0 0.0
    %2760 = vmatpush2.xpose.msra.mxu0 0.0
    %2761 = vmatprep.subr.mxu0 0.0
    %2762 = vmatpush2.xpose.msra.mxu0 0.0
    %2763 = vmatprep.subr.mxu0 0.0
    %2764 = vmatpush2.xpose.msra.mxu0 0.0
    %2765 = vmatprep.subr.mxu0 0.0
    %2766 = vmatpush2.xpose.msra.mxu0 0.0
    %2767 = vmatprep.subr.mxu0 0.0
    %2768 = vmatpush2.xpose.msra.mxu0 0.0
    %2769 = vmatprep.subr.mxu0 0.0
    %2770 = vmatpush2.xpose.msra.mxu0 0.0
    %2771 = vmatprep.subr.mxu0 0.0
    %2772 = vmatpush2.xpose.msra.mxu0 0.0
    %2773 = vmatprep.subr.mxu0 0.0
    %2774 = vmatpush2.xpose.msra.mxu0 0.0
    %2775 = vmatprep.subr.mxu0 0.0
    %2776 = vmatpush2.xpose.msra.mxu0 0.0
    %2777 = vmatprep.subr.mxu0 0.0
    %2778 = vmatpush2.xpose.msra.mxu0 0.0
    %2779 = vmatprep.mubr.f32.mxu0 0.0
    %2780 = vmatmul.mubr.f32.gmra.mxu0 %v2695
    %v2781 = vpop.f32.mrf.mxu0
    %v2782 = vadd.f32 0.0, %v2781
    %v2783 = vpop.f32.mrf.mxu0
    %2784 = vmatprep.mubr.f32.mxu0 0.0
    %2785 = vmatmul.mubr.f32.gmra.mxu0 %v2697
    %v2786 = vpop.f32.mrf.mxu0
    %v2787 = vadd.f32 0.0, %v2786
    %v2788 = vpop.f32.mrf.mxu0
    %2789 = vmatprep.mubr.f32.mxu0 0.0
    %2790 = vmatmul.mubr.f32.gmra.mxu0 %v2699
    %v2791 = vpop.f32.mrf.mxu0
    %v2792 = vadd.f32 0.0, %v2791
    %v2793 = vpop.f32.mrf.mxu0
    %2794 = vmatprep.mubr.f32.mxu0 0.0
    %2795 = vmatmul.mubr.f32.gmra.mxu0 %v2701
    %v2796 = vpop.f32.mrf.mxu0
    %v2797 = vadd.f32 0.0, %v2796
    %v2798 = vpop.f32.mrf.mxu0
    %2799 = vmatprep.mubr.f32.mxu0 0.0
    %2800 = vmatmul.mubr.f32.gmra.mxu0 %v2703
    %v2801 = vpop.f32.mrf.mxu0
    %v2802 = vadd.f32 0.0, %v2801
    %v2803 = vpop.f32.mrf.mxu0
    %2804 = vdwg.mxu0
    %v2805 = vmul.f32 %v2652, 0.35355338
    %v2806 = vmul.f32 %v2657, 0.35355338
    %v2807 = vmul.f32 %v2662, 0.35355338
    %v2808 = vmul.f32 %v2667, 0.35355338
    %v2809 = vmul.f32 %v2672, 0.35355338
    %v2810 = vmul.f32 %v2782, 0.35355338
    %v2811 = vmul.f32 %v2787, 0.35355338
    %v2812 = vmul.f32 %v2792, 0.35355338
    %v2813 = vmul.f32 %v2797, 0.35355338
    %v2814 = vmul.f32 %v2802, 0.35355338
    %v2815 = vadd.f32 %v2805, %v77
    %v2816 = vadd.f32 %v2806, %v77
    %v2817 = vadd.f32 %v2807, %v77
    %v2818 = vadd.f32 %v2808, %v77
    %v2819 = vadd.f32 %v2809, %v77
    %v2820 = vadd.f32 %v2810, %v81
    %v2821 = vadd.f32 %v2811, %v81
    %v2822 = vadd.f32 %v2812, %v81
    %v2823 = vadd.f32 %v2813, %v81
    %v2824 = vadd.f32 %v2814, %v81
    %v2825 = vsel %vm919, %v2815, -inf
    %2826 = vmax.xlane.f32.xlu0 %v2825
    %v2827 = vpop.xlane.xlu0 %2826
    %v2828 = vsel %vm919, %v2816, -inf
    %2829 = vmax.xlane.f32.xlu0 %v2828
    %v2830 = vpop.xlane.xlu0 %2829
    %v2831 = vsel %vm919, %v2817, -inf
    %2832 = vmax.xlane.f32.xlu0 %v2831
    %v2833 = vpop.xlane.xlu0 %2832
    %v2834 = vsel %vm919, %v2818, -inf
    %2835 = vmax.xlane.f32.xlu0 %v2834
    %v2836 = vpop.xlane.xlu0 %2835
    %v2837 = vsel %vm919, %v2819, -inf
    %2838 = vmax.xlane.f32.xlu0 %v2837
    %v2839 = vpop.xlane.xlu0 %2838
    %v2840 = vsel %vm919, %v2820, -inf
    %2841 = vmax.xlane.f32.xlu0 %v2840
    %v2842 = vpop.xlane.xlu0 %2841
    %v2843 = vsel %vm919, %v2821, -inf
    %2844 = vmax.xlane.f32.xlu0 %v2843
    %v2845 = vpop.xlane.xlu0 %2844
    %v2846 = vsel %vm919, %v2822, -inf
    %2847 = vmax.xlane.f32.xlu0 %v2846
    %v2848 = vpop.xlane.xlu0 %2847
    %v2849 = vsel %vm919, %v2823, -inf
    %2850 = vmax.xlane.f32.xlu0 %v2849
    %v2851 = vpop.xlane.xlu0 %2850
    %v2852 = vsel %vm919, %v2824, -inf
    %2853 = vmax.xlane.f32.xlu0 %v2852
    %v2854 = vpop.xlane.xlu0 %2853
    %v2855 = vsub.f32 %v2815, %v2827
    %v2856 = vsub.f32 %v2816, %v2830
    %v2857 = vsub.f32 %v2817, %v2833
    %v2858 = vsub.f32 %v2818, %v2836
    %v2859 = vsub.f32 %v2819, %v2839
    %v2860 = vsub.f32 %v2820, %v2842
    %v2861 = vsub.f32 %v2821, %v2845
    %v2862 = vsub.f32 %v2822, %v2848
    %v2863 = vsub.f32 %v2823, %v2851
    %v2864 = vsub.f32 %v2824, %v2854
    %v2865 = vmul.f32 %v2855, 1.442695
    %v2866 = vpow.pop %v2865
    %v2867 = vmul.f32 %v2856, 1.442695
    %v2868 = vpow.pop %v2867
    %v2869 = vmul.f32 %v2857, 1.442695
    %v2870 = vpow.pop %v2869
    %v2871 = vmul.f32 %v2858, 1.442695
    %v2872 = vpow.pop %v2871
    %v2873 = vmul.f32 %v2859, 1.442695
    %v2874 = vpow.pop %v2873
    %v2875 = vmul.f32 %v2860, 1.442695
    %v2876 = vpow.pop %v2875
    %v2877 = vmul.f32 %v2861, 1.442695
    %v2878 = vpow.pop %v2877
    %v2879 = vmul.f32 %v2862, 1.442695
    %v2880 = vpow.pop %v2879
    %v2881 = vmul.f32 %v2863, 1.442695
    %v2882 = vpow.pop %v2881
    %v2883 = vmul.f32 %v2864, 1.442695
    %v2884 = vpow.pop %v2883
    %v2885 = vsel %vm919, %v2866, 0.0
    %2886 = vadd.xlane.f32.xlu0 %v2885
    %v2887 = vpop.xlane.xlu0 %2886
    %v2888 = vsel %vm919, %v2868, 0.0
    %2889 = vadd.xlane.f32.xlu0 %v2888
    %v2890 = vpop.xlane.xlu0 %2889
    %v2891 = vsel %vm919, %v2870, 0.0
    %2892 = vadd.xlane.f32.xlu0 %v2891
    %v2893 = vpop.xlane.xlu0 %2892
    %v2894 = vsel %vm919, %v2872, 0.0
    %2895 = vadd.xlane.f32.xlu0 %v2894
    %v2896 = vpop.xlane.xlu0 %2895
    %v2897 = vsel %vm919, %v2874, 0.0
    %2898 = vadd.xlane.f32.xlu0 %v2897
    %v2899 = vpop.xlane.xlu0 %2898
    %v2900 = vsel %vm919, %v2876, 0.0
    %2901 = vadd.xlane.f32.xlu0 %v2900
    %v2902 = vpop.xlane.xlu0 %2901
    %v2903 = vsel %vm919, %v2878, 0.0
    %2904 = vadd.xlane.f32.xlu0 %v2903
    %v2905 = vpop.xlane.xlu0 %2904
    %v2906 = vsel %vm919, %v2880, 0.0
    %2907 = vadd.xlane.f32.xlu0 %v2906
    %v2908 = vpop.xlane.xlu0 %2907
    %v2909 = vsel %vm919, %v2882, 0.0
    %2910 = vadd.xlane.f32.xlu0 %v2909
    %v2911 = vpop.xlane.xlu0 %2910
    %v2912 = vsel %vm919, %v2884, 0.0
    %2913 = vadd.xlane.f32.xlu0 %v2912
    %v2914 = vpop.xlane.xlu0 %2913
    %v2915 = vrcp.pop %v2887
    %v2916 = vrcp.pop %v2890
    %v2917 = vrcp.pop %v2893
    %v2918 = vrcp.pop %v2896
    %v2919 = vrcp.pop %v2899
    %v2920 = vrcp.pop %v2902
    %v2921 = vrcp.pop %v2905
    %v2922 = vrcp.pop %v2908
    %v2923 = vrcp.pop %v2911
    %v2924 = vrcp.pop %v2914
    %v2925 = vmul.f32 %v2866, %v2915
    %v2926 = vmul.f32 %v2868, %v2916
    %v2927 = vmul.f32 %v2870, %v2917
    %v2928 = vmul.f32 %v2872, %v2918
    %v2929 = vmul.f32 %v2874, %v2919
    %v2930 = vmul.f32 %v2876, %v2920
    %v2931 = vmul.f32 %v2878, %v2921
    %v2932 = vmul.f32 %v2880, %v2922
    %v2933 = vmul.f32 %v2882, %v2923
    %v2934 = vmul.f32 %v2884, %v2924
    %s2935 = scalar_lea.vmem [#allocation2], 120
    %2936 = vst.msk [vmem:[%s2935] sm:$0xff] %vm919, %v2925
    %2937 = vst.msk [vmem:[%s2935 + $0x8] sm:$0xff] %vm919, %v2926
    %2938 = vst.msk [vmem:[%s2935 + $0x10] sm:$0xff] %vm919, %v2927
    %2939 = vst.msk [vmem:[%s2935 + $0x18] sm:$0xff] %vm919, %v2928
    %2940 = vst.msk [vmem:[%s2935 + $0x20] sm:$0xff] %vm919, %v2929
    %s2941 = scalar_lea.vmem [#allocation2], 280
    %2942 = vst.msk [vmem:[%s2941] sm:$0xff] %vm919, %v2930
    %2943 = vst.msk [vmem:[%s2941 + $0x8] sm:$0xff] %vm919, %v2931
    %2944 = vst.msk [vmem:[%s2941 + $0x10] sm:$0xff] %vm919, %v2932
    %2945 = vst.msk [vmem:[%s2941 + $0x18] sm:$0xff] %vm919, %v2933
    %2946 = vst.msk [vmem:[%s2941 + $0x20] sm:$0xff] %vm919, %v2934
    %2947 = vrot.lane.b32.xlu0 %v610, 104
    %v2948 = vpop.permute.xlu0 %2947
    %2949 = vrot.lane.b32.xlu0 %v615, 104
    %v2950 = vpop.permute.xlu0 %2949
    %2951 = vrot.lane.b32.xlu0 %v620, 104
    %v2952 = vpop.permute.xlu0 %2951
    %2953 = vrot.lane.b32.xlu0 %v625, 104
    %v2954 = vpop.permute.xlu0 %2953
    %2955 = vrot.lane.b32.xlu0 %v630, 104
    %v2956 = vpop.permute.xlu0 %2955
    %v2963 = vsel %vm919, %v2925, 0
    %v2966 = vsel %vm919, %v2926, 0
    %v2969 = vsel %vm919, %v2927, 0
    %v2972 = vsel %vm919, %v2928, 0
    %v2975 = vsel %vm919, %v2929, 0
    %2977 = vmatprep.subr.mxu0 0.0
    %2978 = vmatpush1.msra.mxu0 0.0
    %2979 = vmatprep.subr.mxu0 0.0
    %2980 = vmatpush1.msra.mxu0 0.0
    %2981 = vmatprep.subr.mxu0 0.0
    %2982 = vmatpush1.msra.mxu0 0.0
    %2983 = vmatprep.subr.mxu0 0.0
    %2984 = vmatpush1.msra.mxu0 0.0
    %2985 = vmatprep.subr.mxu0 0.0
    %2986 = vmatpush1.msra.mxu0 0.0
    %2987 = vmatprep.subr.mxu0 0.0
    %2988 = vmatpush1.msra.mxu0 0.0
    %2989 = vmatprep.subr.mxu0 0.0
    %2990 = vmatpush1.msra.mxu0 0.0
    %2991 = vmatprep.subr.mxu0 0.0
    %2992 = vmatpush1.msra.mxu0 0.0
    %2993 = vmatprep.subr.mxu0 0.0
    %2994 = vmatpush1.msra.mxu0 0.0
    %2995 = vmatprep.subr.mxu0 0.0
    %2996 = vmatpush1.msra.mxu0 0.0
    %2997 = vmatprep.subr.mxu0 0.0
    %2998 = vmatpush1.msra.mxu0 0.0
    %2999 = vmatprep.subr.mxu0 0.0
    %3000 = vmatpush1.msra.mxu0 %v2956
    %3001 = vmatprep.subr.mxu0 0.0
    %3002 = vmatpush1.msra.mxu0 %v2954
    %3003 = vmatprep.subr.mxu0 0.0
    %3004 = vmatpush1.msra.mxu0 %v2952
    %3005 = vmatprep.subr.mxu0 0.0
    %3006 = vmatpush1.msra.mxu0 %v2950
    %3007 = vmatprep.subr.mxu0 0.0
    %3008 = vmatpush1.msra.mxu0 %v2948
    %3009 = vmatprep.subr.mxu0 0.0
    %3010 = vmatpush2.msra.mxu0 0.0
    %3011 = vmatprep.subr.mxu0 0.0
    %3012 = vmatpush2.msra.mxu0 0.0
    %3013 = vmatprep.subr.mxu0 0.0
    %3014 = vmatpush2.msra.mxu0 0.0
    %3015 = vmatprep.subr.mxu0 0.0
    %3016 = vmatpush2.msra.mxu0 0.0
    %3017 = vmatprep.subr.mxu0 0.0
    %3018 = vmatpush2.msra.mxu0 0.0
    %3019 = vmatprep.subr.mxu0 0.0
    %3020 = vmatpush2.msra.mxu0 0.0
    %3021 = vmatprep.subr.mxu0 0.0
    %3022 = vmatpush2.msra.mxu0 0.0
    %3023 = vmatprep.subr.mxu0 0.0
    %3024 = vmatpush2.msra.mxu0 0.0
    %3025 = vmatprep.subr.mxu0 0.0
    %3026 = vmatpush2.msra.mxu0 0.0
    %3027 = vmatprep.subr.mxu0 0.0
    %3028 = vmatpush2.msra.mxu0 0.0
    %3029 = vmatprep.subr.mxu0 0.0
    %3030 = vmatpush2.msra.mxu0 0.0
    %3031 = vmatprep.subr.mxu0 0.0
    %3032 = vmatpush2.msra.mxu0 0.0
    %3033 = vmatprep.subr.mxu0 0.0
    %3034 = vmatpush2.msra.mxu0 0.0
    %3035 = vmatprep.subr.mxu0 0.0
    %3036 = vmatpush2.msra.mxu0 0.0
    %3037 = vmatprep.subr.mxu0 0.0
    %3038 = vmatpush2.msra.mxu0 0.0
    %3039 = vmatprep.subr.mxu0 0.0
    %3040 = vmatpush2.msra.mxu0 0.0
    %3041 = vmatprep.mubr.f32.mxu0 0.0
    %3042 = vmatmul.mubr.f32.gmra.mxu0 %v2963
    %v3043 = vpop.f32.mrf.mxu0
    %v3044 = vadd.f32 0.0, %v3043
    %v3045 = vpop.f32.mrf.mxu0
    %3046 = vmatprep.mubr.f32.mxu0 0.0
    %3047 = vmatmul.mubr.f32.gmra.mxu0 %v2966
    %v3048 = vpop.f32.mrf.mxu0
    %v3049 = vadd.f32 0.0, %v3048
    %v3050 = vpop.f32.mrf.mxu0
    %3051 = vmatprep.mubr.f32.mxu0 0.0
    %3052 = vmatmul.mubr.f32.gmra.mxu0 %v2969
    %v3053 = vpop.f32.mrf.mxu0
    %v3054 = vadd.f32 0.0, %v3053
    %v3055 = vpop.f32.mrf.mxu0
    %3056 = vmatprep.mubr.f32.mxu0 0.0
    %3057 = vmatmul.mubr.f32.gmra.mxu0 %v2972
    %v3058 = vpop.f32.mrf.mxu0
    %v3059 = vadd.f32 0.0, %v3058
    %v3060 = vpop.f32.mrf.mxu0
    %3061 = vmatprep.mubr.f32.mxu0 0.0
    %3062 = vmatmul.mubr.f32.gmra.mxu0 %v2975
    %v3063 = vpop.f32.mrf.mxu0
    %v3064 = vadd.f32 0.0, %v3063
    %v3065 = vpop.f32.mrf.mxu0
    %3066 = vdwg.mxu0
    %3067 = vrot.lane.b32.xlu0 %v635, 104
    %v3068 = vpop.permute.xlu0 %3067
    %3069 = vrot.lane.b32.xlu0 %v640, 104
    %v3070 = vpop.permute.xlu0 %3069
    %3071 = vrot.lane.b32.xlu0 %v645, 104
    %v3072 = vpop.permute.xlu0 %3071
    %3073 = vrot.lane.b32.xlu0 %v650, 104
    %v3074 = vpop.permute.xlu0 %3073
    %3075 = vrot.lane.b32.xlu0 %v655, 104
    %v3076 = vpop.permute.xlu0 %3075
    %v3083 = vsel %vm919, %v2930, 0
    %v3086 = vsel %vm919, %v2931, 0
    %v3089 = vsel %vm919, %v2932, 0
    %v3092 = vsel %vm919, %v2933, 0
    %v3095 = vsel %vm919, %v2934, 0
    %3097 = vmatprep.subr.mxu0 0.0
    %3098 = vmatpush1.msra.mxu0 0.0
    %3099 = vmatprep.subr.mxu0 0.0
    %3100 = vmatpush1.msra.mxu0 0.0
    %3101 = vmatprep.subr.mxu0 0.0
    %3102 = vmatpush1.msra.mxu0 0.0
    %3103 = vmatprep.subr.mxu0 0.0
    %3104 = vmatpush1.msra.mxu0 0.0
    %3105 = vmatprep.subr.mxu0 0.0
    %3106 = vmatpush1.msra.mxu0 0.0
    %3107 = vmatprep.subr.mxu0 0.0
    %3108 = vmatpush1.msra.mxu0 0.0
    %3109 = vmatprep.subr.mxu0 0.0
    %3110 = vmatpush1.msra.mxu0 0.0
    %3111 = vmatprep.subr.mxu0 0.0
    %3112 = vmatpush1.msra.mxu0 0.0
    %3113 = vmatprep.subr.mxu0 0.0
    %3114 = vmatpush1.msra.mxu0 0.0
    %3115 = vmatprep.subr.mxu0 0.0
    %3116 = vmatpush1.msra.mxu0 0.0
    %3117 = vmatprep.subr.mxu0 0.0
    %3118 = vmatpush1.msra.mxu0 0.0
    %3119 = vmatprep.subr.mxu0 0.0
    %3120 = vmatpush1.msra.mxu0 %v3076
    %3121 = vmatprep.subr.mxu0 0.0
    %3122 = vmatpush1.msra.mxu0 %v3074
    %3123 = vmatprep.subr.mxu0 0.0
    %3124 = vmatpush1.msra.mxu0 %v3072
    %3125 = vmatprep.subr.mxu0 0.0
    %3126 = vmatpush1.msra.mxu0 %v3070
    %3127 = vmatprep.subr.mxu0 0.0
    %3128 = vmatpush1.msra.mxu0 %v3068
    %3129 = vmatprep.subr.mxu0 0.0
    %3130 = vmatpush2.msra.mxu0 0.0
    %3131 = vmatprep.subr.mxu0 0.0
    %3132 = vmatpush2.msra.mxu0 0.0
    %3133 = vmatprep.subr.mxu0 0.0
    %3134 = vmatpush2.msra.mxu0 0.0
    %3135 = vmatprep.subr.mxu0 0.0
    %3136 = vmatpush2.msra.mxu0 0.0
    %3137 = vmatprep.subr.mxu0 0.0
    %3138 = vmatpush2.msra.mxu0 0.0
    %3139 = vmatprep.subr.mxu0 0.0
    %3140 = vmatpush2.msra.mxu0 0.0
    %3141 = vmatprep.subr.mxu0 0.0
    %3142 = vmatpush2.msra.mxu0 0.0
    %3143 = vmatprep.subr.mxu0 0.0
    %3144 = vmatpush2.msra.mxu0 0.0
    %3145 = vmatprep.subr.mxu0 0.0
    %3146 = vmatpush2.msra.mxu0 0.0
    %3147 = vmatprep.subr.mxu0 0.0
    %3148 = vmatpush2.msra.mxu0 0.0
    %3149 = vmatprep.subr.mxu0 0.0
    %3150 = vmatpush2.msra.mxu0 0.0
    %3151 = vmatprep.subr.mxu0 0.0
    %3152 = vmatpush2.msra.mxu0 0.0
    %3153 = vmatprep.subr.mxu0 0.0
    %3154 = vmatpush2.msra.mxu0 0.0
    %3155 = vmatprep.subr.mxu0 0.0
    %3156 = vmatpush2.msra.mxu0 0.0
    %3157 = vmatprep.subr.mxu0 0.0
    %3158 = vmatpush2.msra.mxu0 0.0
    %3159 = vmatprep.subr.mxu0 0.0
    %3160 = vmatpush2.msra.mxu0 0.0
    %3161 = vmatprep.mubr.f32.mxu0 0.0
    %3162 = vmatmul.mubr.f32.gmra.mxu0 %v3083
    %v3163 = vpop.f32.mrf.mxu0
    %v3164 = vadd.f32 0.0, %v3163
    %v3165 = vpop.f32.mrf.mxu0
    %3166 = vmatprep.mubr.f32.mxu0 0.0
    %3167 = vmatmul.mubr.f32.gmra.mxu0 %v3086
    %v3168 = vpop.f32.mrf.mxu0
    %v3169 = vadd.f32 0.0, %v3168
    %v3170 = vpop.f32.mrf.mxu0
    %3171 = vmatprep.mubr.f32.mxu0 0.0
    %3172 = vmatmul.mubr.f32.gmra.mxu0 %v3089
    %v3173 = vpop.f32.mrf.mxu0
    %v3174 = vadd.f32 0.0, %v3173
    %v3175 = vpop.f32.mrf.mxu0
    %3176 = vmatprep.mubr.f32.mxu0 0.0
    %3177 = vmatmul.mubr.f32.gmra.mxu0 %v3092
    %v3178 = vpop.f32.mrf.mxu0
    %v3179 = vadd.f32 0.0, %v3178
    %v3180 = vpop.f32.mrf.mxu0
    %3181 = vmatprep.mubr.f32.mxu0 0.0
    %3182 = vmatmul.mubr.f32.gmra.mxu0 %v3095
    %v3183 = vpop.f32.mrf.mxu0
    %v3184 = vadd.f32 0.0, %v3183
    %v3185 = vpop.f32.mrf.mxu0
    %3186 = vdwg.mxu0
    %3197 = vrot.lane.b32.xlu0 %v1755, 8
    %v3198 = vpop.permute.xlu0 %3197
    %3199 = vrot.lane.b32.xlu0 %v1760, 8
    %v3200 = vpop.permute.xlu0 %3199
    %3201 = vrot.lane.b32.xlu0 %v1765, 8
    %v3202 = vpop.permute.xlu0 %3201
    %3203 = vrot.lane.b32.xlu0 %v1770, 8
    %v3204 = vpop.permute.xlu0 %3203
    %3205 = vrot.lane.b32.xlu0 %v1775, 8
    %v3206 = vpop.permute.xlu0 %3205
    %3207 = vrot.lane.b32.xlu0 %v1880, 8
    %v3208 = vpop.permute.xlu0 %3207
    %3209 = vrot.lane.b32.xlu0 %v1885, 8
    %v3210 = vpop.permute.xlu0 %3209
    %3211 = vrot.lane.b32.xlu0 %v1890, 8
    %v3212 = vpop.permute.xlu0 %3211
    %3213 = vrot.lane.b32.xlu0 %v1895, 8
    %v3214 = vpop.permute.xlu0 %3213
    %3215 = vrot.lane.b32.xlu0 %v1900, 8
    %v3216 = vpop.permute.xlu0 %3215
    %3237 = vrot.lane.b32.xlu0 %v2402, 16
    %v3238 = vpop.permute.xlu0 %3237
    %3239 = vrot.lane.b32.xlu0 %v2407, 16
    %v3240 = vpop.permute.xlu0 %3239
    %3241 = vrot.lane.b32.xlu0 %v2412, 16
    %v3242 = vpop.permute.xlu0 %3241
    %3243 = vrot.lane.b32.xlu0 %v2417, 16
    %v3244 = vpop.permute.xlu0 %3243
    %3245 = vrot.lane.b32.xlu0 %v2422, 16
    %v3246 = vpop.permute.xlu0 %3245
    %3247 = vrot.lane.b32.xlu0 %v2522, 16
    %v3248 = vpop.permute.xlu0 %3247
    %3249 = vrot.lane.b32.xlu0 %v2527, 16
    %v3250 = vpop.permute.xlu0 %3249
    %3251 = vrot.lane.b32.xlu0 %v2532, 16
    %v3252 = vpop.permute.xlu0 %3251
    %3253 = vrot.lane.b32.xlu0 %v2537, 16
    %v3254 = vpop.permute.xlu0 %3253
    %3255 = vrot.lane.b32.xlu0 %v2542, 16
    %v3256 = vpop.permute.xlu0 %3255
    %3277 = vrot.lane.b32.xlu0 %v3044, 24
    %v3278 = vpop.permute.xlu0 %3277
    %3279 = vrot.lane.b32.xlu0 %v3049, 24
    %v3280 = vpop.permute.xlu0 %3279
    %3281 = vrot.lane.b32.xlu0 %v3054, 24
    %v3282 = vpop.permute.xlu0 %3281
    %3283 = vrot.lane.b32.xlu0 %v3059, 24
    %v3284 = vpop.permute.xlu0 %3283
    %3285 = vrot.lane.b32.xlu0 %v3064, 24
    %v3286 = vpop.permute.xlu0 %3285
    %3287 = vrot.lane.b32.xlu0 %v3164, 24
    %v3288 = vpop.permute.xlu0 %3287
    %3289 = vrot.lane.b32.xlu0 %v3169, 24
    %v3290 = vpop.permute.xlu0 %3289
    %3291 = vrot.lane.b32.xlu0 %v3174, 24
    %v3292 = vpop.permute.xlu0 %3291
    %3293 = vrot.lane.b32.xlu0 %v3179, 24
    %v3294 = vpop.permute.xlu0 %3293
    %3295 = vrot.lane.b32.xlu0 %v3184, 24
    %v3296 = vpop.permute.xlu0 %3295
    %v3307 = vsel %vm658, %v1123, %v3198
    %v3308 = vsel %vm658, %v1128, %v3200
    %v3309 = vsel %vm658, %v1133, %v3202
    %v3310 = vsel %vm658, %v1138, %v3204
    %v3311 = vsel %vm658, %v1143, %v3206
    %v3312 = vsel %vm658, %v1228, %v3208
    %v3313 = vsel %vm658, %v1233, %v3210
    %v3314 = vsel %vm658, %v1238, %v3212
    %v3315 = vsel %vm658, %v1243, %v3214
    %v3316 = vsel %vm658, %v1248, %v3216
    %vm3317 = vcmask 130048
    %v3318 = vsel %vm3317, %v3307, %v3238
    %v3319 = vsel %vm3317, %v3308, %v3240
    %v3320 = vsel %vm3317, %v3309, %v3242
    %v3321 = vsel %vm3317, %v3310, %v3244
    %v3322 = vsel %vm3317, %v3311, %v3246
    %v3323 = vsel %vm3317, %v3312, %v3248
    %v3324 = vsel %vm3317, %v3313, %v3250
    %v3325 = vsel %vm3317, %v3314, %v3252
    %v3326 = vsel %vm3317, %v3315, %v3254
    %v3327 = vsel %vm3317, %v3316, %v3256
    %vm3328 = vcmask 195584
    %v3329 = vsel %vm3328, %v3318, %v3278
    %v3330 = vsel %vm3328, %v3319, %v3280
    %v3331 = vsel %vm3328, %v3320, %v3282
    %v3332 = vsel %vm3328, %v3321, %v3284
    %v3333 = vsel %vm3328, %v3322, %v3286
    %v3334 = vsel %vm3328, %v3323, %v3288
    %v3335 = vsel %vm3328, %v3324, %v3290
    %v3336 = vsel %vm3328, %v3325, %v3292
    %v3337 = vsel %vm3328, %v3326, %v3294
    %v3338 = vsel %vm3328, %v3327, %v3296
    %v3339 = vld [vmem:[%s10] sm:$0xff]
    %v3340 = vld [vmem:[%s10 + $0x8] sm:$0xff]
    %v3341 = vld [vmem:[%s10 + $0x10] sm:$0xff]
    %v3342 = vld [vmem:[%s10 + $0x18] sm:$0xff]
    %v3343 = vld [vmem:[%s11] sm:$0x1]
    %v3345 = vlaneseq
    %v3346 = vshrl.u32 %v3345, 7
    %v3347 = vsub.s32 0, %v3346
    %v3348 = vrot.slane %v3343, %v3347
    %v3351 = vsel %vm86, %v3329, 0
    %v3354 = vsel %vm86, %v3330, 0
    %v3357 = vsel %vm86, %v3331, 0
    %v3360 = vsel %vm86, %v3332, 0
    %v3363 = vsel %vm86, %v3333, 0
    %v3366 = vsel %vm86, %v3334, 0
    %v3369 = vsel %vm86, %v3335, 0
    %v3372 = vsel %vm86, %v3336, 0
    %v3375 = vsel %vm86, %v3337, 0
    %v3378 = vsel %vm86, %v3338, 0
    %3380 = vmatprep.subr.mxu0 0.0
    %3381 = vmatpush1.msra.mxu0 0.0
    %3382 = vmatprep.subr.mxu0 0.0
    %3383 = vmatpush1.msra.mxu0 0.0
    %3384 = vmatprep.subr.mxu0 0.0
    %3385 = vmatpush1.msra.mxu0 0.0
    %3386 = vmatprep.subr.mxu0 0.0
    %3387 = vmatpush1.msra.mxu0 0.0
    %3388 = vmatprep.subr.mxu0 0.0
    %3389 = vmatpush1.msra.mxu0 0.0
    %3390 = vmatprep.subr.mxu0 0.0
    %3391 = vmatpush1.msra.mxu0 0.0
    %3392 = vmatprep.subr.mxu0 0.0
    %3393 = vmatpush1.msra.mxu0 0.0
    %3394 = vmatprep.subr.mxu0 0.0
    %3395 = vmatpush1.msra.mxu0 0.0
    %3396 = vmatprep.subr.mxu0 0.0
    %3397 = vmatpush1.msra.mxu0 0.0
    %3398 = vmatprep.subr.mxu0 0.0
    %3399 = vmatpush1.msra.mxu0 0.0
    %3400 = vmatprep.subr.mxu0 0.0
    %3401 = vmatpush1.msra.mxu0 0.0
    %3402 = vmatprep.subr.mxu0 0.0
    %3403 = vmatpush1.msra.mxu0 0.0
    %3404 = vmatprep.subr.mxu0 0.0
    %3405 = vmatpush1.msra.mxu0 %v3342
    %3406 = vmatprep.subr.mxu0 0.0
    %3407 = vmatpush1.msra.mxu0 %v3341
    %3408 = vmatprep.subr.mxu0 0.0
    %3409 = vmatpush1.msra.mxu0 %v3340
    %3410 = vmatprep.subr.mxu0 0.0
    %3411 = vmatpush1.msra.mxu0 %v3339
    %3412 = vmatprep.subr.mxu0 0.0
    %3413 = vmatpush2.msra.mxu0 0.0
    %3414 = vmatprep.subr.mxu0 0.0
    %3415 = vmatpush2.msra.mxu0 0.0
    %3416 = vmatprep.subr.mxu0 0.0
    %3417 = vmatpush2.msra.mxu0 0.0
    %3418 = vmatprep.subr.mxu0 0.0
    %3419 = vmatpush2.msra.mxu0 0.0
    %3420 = vmatprep.subr.mxu0 0.0
    %3421 = vmatpush2.msra.mxu0 0.0
    %3422 = vmatprep.subr.mxu0 0.0
    %3423 = vmatpush2.msra.mxu0 0.0
    %3424 = vmatprep.subr.mxu0 0.0
    %3425 = vmatpush2.msra.mxu0 0.0
    %3426 = vmatprep.subr.mxu0 0.0
    %3427 = vmatpush2.msra.mxu0 0.0
    %3428 = vmatprep.subr.mxu0 0.0
    %3429 = vmatpush2.msra.mxu0 0.0
    %3430 = vmatprep.subr.mxu0 0.0
    %3431 = vmatpush2.msra.mxu0 0.0
    %3432 = vmatprep.subr.mxu0 0.0
    %3433 = vmatpush2.msra.mxu0 0.0
    %3434 = vmatprep.subr.mxu0 0.0
    %3435 = vmatpush2.msra.mxu0 0.0
    %3436 = vmatprep.subr.mxu0 0.0
    %3437 = vmatpush2.msra.mxu0 0.0
    %3438 = vmatprep.subr.mxu0 0.0
    %3439 = vmatpush2.msra.mxu0 0.0
    %3440 = vmatprep.subr.mxu0 0.0
    %3441 = vmatpush2.msra.mxu0 0.0
    %3442 = vmatprep.subr.mxu0 0.0
    %3443 = vmatpush2.msra.mxu0 0.0
    %3444 = vmatprep.mubr.f32.mxu0 0.0
    %3445 = vmatmul.mubr.f32.gmra.mxu0 %v3351
    %v3446 = vpop.f32.mrf.mxu0
    %v3447 = vadd.f32 %v3348, %v3446
    %v3448 = vpop.f32.mrf.mxu0
    %3449 = vmatprep.mubr.f32.mxu0 0.0
    %3450 = vmatmul.mubr.f32.gmra.mxu0 %v3354
    %v3451 = vpop.f32.mrf.mxu0
    %v3452 = vadd.f32 %v3348, %v3451
    %v3453 = vpop.f32.mrf.mxu0
    %3454 = vmatprep.mubr.f32.mxu0 0.0
    %3455 = vmatmul.mubr.f32.gmra.mxu0 %v3357
    %v3456 = vpop.f32.mrf.mxu0
    %v3457 = vadd.f32 %v3348, %v3456
    %v3458 = vpop.f32.mrf.mxu0
    %3459 = vmatprep.mubr.f32.mxu0 0.0
    %3460 = vmatmul.mubr.f32.gmra.mxu0 %v3360
    %v3461 = vpop.f32.mrf.mxu0
    %v3462 = vadd.f32 %v3348, %v3461
    %v3463 = vpop.f32.mrf.mxu0
    %3464 = vmatprep.mubr.f32.mxu0 0.0
    %3465 = vmatmul.mubr.f32.gmra.mxu0 %v3363
    %v3466 = vpop.f32.mrf.mxu0
    %v3467 = vadd.f32 %v3348, %v3466
    %v3468 = vpop.f32.mrf.mxu0
    %3469 = vmatprep.mubr.f32.mxu0 0.0
    %3470 = vmatmul.mubr.f32.gmra.mxu0 %v3366
    %v3471 = vpop.f32.mrf.mxu0
    %v3472 = vadd.f32 %v3348, %v3471
    %v3473 = vpop.f32.mrf.mxu0
    %3474 = vmatprep.mubr.f32.mxu0 0.0
    %3475 = vmatmul.mubr.f32.gmra.mxu0 %v3369
    %v3476 = vpop.f32.mrf.mxu0
    %v3477 = vadd.f32 %v3348, %v3476
    %v3478 = vpop.f32.mrf.mxu0
    %3479 = vmatprep.mubr.f32.mxu0 0.0
    %3480 = vmatmul.mubr.f32.gmra.mxu0 %v3372
    %v3481 = vpop.f32.mrf.mxu0
    %v3482 = vadd.f32 %v3348, %v3481
    %v3483 = vpop.f32.mrf.mxu0
    %3484 = vmatprep.mubr.f32.mxu0 0.0
    %3485 = vmatmul.mubr.f32.gmra.mxu0 %v3375
    %v3486 = vpop.f32.mrf.mxu0
    %v3487 = vadd.f32 %v3348, %v3486
    %v3488 = vpop.f32.mrf.mxu0
    %3489 = vmatprep.mubr.f32.mxu0 0.0
    %3490 = vmatmul.mubr.f32.gmra.mxu0 %v3378
    %v3491 = vpop.f32.mrf.mxu0
    %v3492 = vadd.f32 %v3348, %v3491
    %v3493 = vpop.f32.mrf.mxu0
    %3494 = vdwg.mxu0
    %v3495 = vadd.f32 %v56, %v3447
    %v3496 = vadd.f32 %v57, %v3452
    %v3497 = vadd.f32 %v58, %v3457
    %v3498 = vadd.f32 %v59, %v3462
    %v3499 = vadd.f32 %v60, %v3467
    %v3500 = vadd.f32 %v61, %v3472
    %v3501 = vadd.f32 %v62, %v3477
    %v3502 = vadd.f32 %v63, %v3482
    %v3503 = vadd.f32 %v64, %v3487
    %v3504 = vadd.f32 %v65, %v3492
    %v3505 = vsel %vm86, %v3495, 0.0
    %3506 = vadd.xlane.f32.xlu0 %v3505
    %v3507 = vpop.xlane.xlu0 %3506
    %v3508 = vsel %vm86, %v3496, 0.0
    %3509 = vadd.xlane.f32.xlu0 %v3508
    %v3510 = vpop.xlane.xlu0 %3509
    %v3511 = vsel %vm86, %v3497, 0.0
    %3512 = vadd.xlane.f32.xlu0 %v3511
    %v3513 = vpop.xlane.xlu0 %3512
    %v3514 = vsel %vm86, %v3498, 0.0
    %3515 = vadd.xlane.f32.xlu0 %v3514
    %v3516 = vpop.xlane.xlu0 %3515
    %v3517 = vsel %vm86, %v3499, 0.0
    %3518 = vadd.xlane.f32.xlu0 %v3517
    %v3519 = vpop.xlane.xlu0 %3518
    %v3520 = vsel %vm86, %v3500, 0.0
    %3521 = vadd.xlane.f32.xlu0 %v3520
    %v3522 = vpop.xlane.xlu0 %3521
    %v3523 = vsel %vm86, %v3501, 0.0
    %3524 = vadd.xlane.f32.xlu0 %v3523
    %v3525 = vpop.xlane.xlu0 %3524
    %v3526 = vsel %vm86, %v3502, 0.0
    %3527 = vadd.xlane.f32.xlu0 %v3526
    %v3528 = vpop.xlane.xlu0 %3527
    %v3529 = vsel %vm86, %v3503, 0.0
    %3530 = vadd.xlane.f32.xlu0 %v3529
    %v3531 = vpop.xlane.xlu0 %3530
    %v3532 = vsel %vm86, %v3504, 0.0
    %3533 = vadd.xlane.f32.xlu0 %v3532
    %v3534 = vpop.xlane.xlu0 %3533
    %v3535 = vmul.f32 %v3507, %v117
    %v3536 = vmul.f32 %v3510, %v117
    %v3537 = vmul.f32 %v3513, %v117
    %v3538 = vmul.f32 %v3516, %v117
    %v3539 = vmul.f32 %v3519, %v117
    %v3540 = vmul.f32 %v3522, %v117
    %v3541 = vmul.f32 %v3525, %v117
    %v3542 = vmul.f32 %v3528, %v117
    %v3543 = vmul.f32 %v3531, %v117
    %v3544 = vmul.f32 %v3534, %v117
    %v3545 = vsub.f32 %v3495, %v3535
    %v3546 = vsub.f32 %v3496, %v3536
    %v3547 = vsub.f32 %v3497, %v3537
    %v3548 = vsub.f32 %v3498, %v3538
    %v3549 = vsub.f32 %v3499, %v3539
    %v3550 = vsub.f32 %v3500, %v3540
    %v3551 = vsub.f32 %v3501, %v3541
    %v3552 = vsub.f32 %v3502, %v3542
    %v3553 = vsub.f32 %v3503, %v3543
    %v3554 = vsub.f32 %v3504, %v3544
    %v3555 = vmul.f32 %v3545, %v3545
    %v3556 = vmul.f32 %v3546, %v3546
    %v3557 = vmul.f32 %v3547, %v3547
    %v3558 = vmul.f32 %v3548, %v3548
    %v3559 = vmul.f32 %v3549, %v3549
    %v3560 = vmul.f32 %v3550, %v3550
    %v3561 = vmul.f32 %v3551, %v3551
    %v3562 = vmul.f32 %v3552, %v3552
    %v3563 = vmul.f32 %v3553, %v3553
    %v3564 = vmul.f32 %v3554, %v3554
    %v3565 = vsel %vm86, %v3555, 0.0
    %3566 = vadd.xlane.f32.xlu0 %v3565
    %v3567 = vpop.xlane.xlu0 %3566
    %v3568 = vsel %vm86, %v3556, 0.0
    %3569 = vadd.xlane.f32.xlu0 %v3568
    %v3570 = vpop.xlane.xlu0 %3569
    %v3571 = vsel %vm86, %v3557, 0.0
    %3572 = vadd.xlane.f32.xlu0 %v3571
    %v3573 = vpop.xlane.xlu0 %3572
    %v3574 = vsel %vm86, %v3558, 0.0
    %3575 = vadd.xlane.f32.xlu0 %v3574
    %v3576 = vpop.xlane.xlu0 %3575
    %v3577 = vsel %vm86, %v3559, 0.0
    %3578 = vadd.xlane.f32.xlu0 %v3577
    %v3579 = vpop.xlane.xlu0 %3578
    %v3580 = vsel %vm86, %v3560, 0.0
    %3581 = vadd.xlane.f32.xlu0 %v3580
    %v3582 = vpop.xlane.xlu0 %3581
    %v3583 = vsel %vm86, %v3561, 0.0
    %3584 = vadd.xlane.f32.xlu0 %v3583
    %v3585 = vpop.xlane.xlu0 %3584
    %v3586 = vsel %vm86, %v3562, 0.0
    %3587 = vadd.xlane.f32.xlu0 %v3586
    %v3588 = vpop.xlane.xlu0 %3587
    %v3589 = vsel %vm86, %v3563, 0.0
    %3590 = vadd.xlane.f32.xlu0 %v3589
    %v3591 = vpop.xlane.xlu0 %3590
    %v3592 = vsel %vm86, %v3564, 0.0
    %3593 = vadd.xlane.f32.xlu0 %v3592
    %v3594 = vpop.xlane.xlu0 %3593
    %v3595 = vmul.f32 %v3567, %v117
    %v3596 = vmul.f32 %v3570, %v117
    %v3597 = vmul.f32 %v3573, %v117
    %v3598 = vmul.f32 %v3576, %v117
    %v3599 = vmul.f32 %v3579, %v117
    %v3600 = vmul.f32 %v3582, %v117
    %v3601 = vmul.f32 %v3585, %v117
    %v3602 = vmul.f32 %v3588, %v117
    %v3603 = vmul.f32 %v3591, %v117
    %v3604 = vmul.f32 %v3594, %v117
    %v3605 = vadd.f32 %v3595, 1e-12
    %v3606 = vadd.f32 %v3596, 1e-12
    %v3607 = vadd.f32 %v3597, 1e-12
    %v3608 = vadd.f32 %v3598, 1e-12
    %v3609 = vadd.f32 %v3599, 1e-12
    %v3610 = vadd.f32 %v3600, 1e-12
    %v3611 = vadd.f32 %v3601, 1e-12
    %v3612 = vadd.f32 %v3602, 1e-12
    %v3613 = vadd.f32 %v3603, 1e-12
    %v3614 = vadd.f32 %v3604, 1e-12
    %v3615 = vrsqrt.pop %v3605
    %v3616 = vrsqrt.pop %v3606
    %v3617 = vrsqrt.pop %v3607
    %v3618 = vrsqrt.pop %v3608
    %v3619 = vrsqrt.pop %v3609
    %v3620 = vrsqrt.pop %v3610
    %v3621 = vrsqrt.pop %v3611
    %v3622 = vrsqrt.pop %v3612
    %v3623 = vrsqrt.pop %v3613
    %v3624 = vrsqrt.pop %v3614
    %v3625 = vmul.f32 %v3545, %v3615
    %v3626 = vmul.f32 %v3546, %v3616
    %v3627 = vmul.f32 %v3547, %v3617
    %v3628 = vmul.f32 %v3548, %v3618
    %v3629 = vmul.f32 %v3549, %v3619
    %v3630 = vmul.f32 %v3550, %v3620
    %v3631 = vmul.f32 %v3551, %v3621
    %v3632 = vmul.f32 %v3552, %v3622
    %v3633 = vmul.f32 %v3553, %v3623
    %v3634 = vmul.f32 %v3554, %v3624
    %v3635 = vmul.f32 %v3625, %v222
    %v3636 = vmul.f32 %v3626, %v222
    %v3637 = vmul.f32 %v3627, %v222
    %v3638 = vmul.f32 %v3628, %v222
    %v3639 = vmul.f32 %v3629, %v222
    %v3640 = vmul.f32 %v3630, %v222
    %v3641 = vmul.f32 %v3631, %v222
    %v3642 = vmul.f32 %v3632, %v222
    %v3643 = vmul.f32 %v3633, %v222
    %v3644 = vmul.f32 %v3634, %v222
    %v3645 = vadd.f32 %v3635, %v238
    %v3646 = vadd.f32 %v3636, %v238
    %v3647 = vadd.f32 %v3637, %v238
    %v3648 = vadd.f32 %v3638, %v238
    %v3649 = vadd.f32 %v3639, %v238
    %v3650 = vadd.f32 %v3640, %v238
    %v3651 = vadd.f32 %v3641, %v238
    %v3652 = vadd.f32 %v3642, %v238
    %v3653 = vadd.f32 %v3643, %v238
    %v3654 = vadd.f32 %v3644, %v238
    %v3655 = vld [vmem:[%s12] sm:$0xff]
    %v3656 = vld [vmem:[%s12 + $0x8] sm:$0xff]
    %v3657 = vld [vmem:[%s12 + $0x10] sm:$0xff]
    %v3658 = vld [vmem:[%s12 + $0x18] sm:$0xff]
    %v3659 = vld [vmem:[%s13] sm:$0x1]
    %v3661 = vlaneseq
    %v3662 = vshrl.u32 %v3661, 7
    %v3663 = vsub.s32 0, %v3662
    %v3664 = vrot.slane %v3659, %v3663
    %v3667 = vsel %vm86, %v3645, 0
    %v3670 = vsel %vm86, %v3646, 0
    %v3673 = vsel %vm86, %v3647, 0
    %v3676 = vsel %vm86, %v3648, 0
    %v3679 = vsel %vm86, %v3649, 0
    %v3682 = vsel %vm86, %v3650, 0
    %v3685 = vsel %vm86, %v3651, 0
    %v3688 = vsel %vm86, %v3652, 0
    %v3691 = vsel %vm86, %v3653, 0
    %v3694 = vsel %vm86, %v3654, 0
    %3696 = vmatprep.subr.mxu0 0.0
    %3697 = vmatpush1.msra.mxu0 0.0
    %3698 = vmatprep.subr.mxu0 0.0
    %3699 = vmatpush1.msra.mxu0 0.0
    %3700 = vmatprep.subr.mxu0 0.0
    %3701 = vmatpush1.msra.mxu0 0.0
    %3702 = vmatprep.subr.mxu0 0.0
    %3703 = vmatpush1.msra.mxu0 0.0
    %3704 = vmatprep.subr.mxu0 0.0
    %3705 = vmatpush1.msra.mxu0 0.0
    %3706 = vmatprep.subr.mxu0 0.0
    %3707 = vmatpush1.msra.mxu0 0.0
    %3708 = vmatprep.subr.mxu0 0.0
    %3709 = vmatpush1.msra.mxu0 0.0
    %3710 = vmatprep.subr.mxu0 0.0
    %3711 = vmatpush1.msra.mxu0 0.0
    %3712 = vmatprep.subr.mxu0 0.0
    %3713 = vmatpush1.msra.mxu0 0.0
    %3714 = vmatprep.subr.mxu0 0.0
    %3715 = vmatpush1.msra.mxu0 0.0
    %3716 = vmatprep.subr.mxu0 0.0
    %3717 = vmatpush1.msra.mxu0 0.0
    %3718 = vmatprep.subr.mxu0 0.0
    %3719 = vmatpush1.msra.mxu0 0.0
    %3720 = vmatprep.subr.mxu0 0.0
    %3721 = vmatpush1.msra.mxu0 %v3658
    %3722 = vmatprep.subr.mxu0 0.0
    %3723 = vmatpush1.msra.mxu0 %v3657
    %3724 = vmatprep.subr.mxu0 0.0
    %3725 = vmatpush1.msra.mxu0 %v3656
    %3726 = vmatprep.subr.mxu0 0.0
    %3727 = vmatpush1.msra.mxu0 %v3655
    %3728 = vmatprep.subr.mxu0 0.0
    %3729 = vmatpush2.msra.mxu0 0.0
    %3730 = vmatprep.subr.mxu0 0.0
    %3731 = vmatpush2.msra.mxu0 0.0
    %3732 = vmatprep.subr.mxu0 0.0
    %3733 = vmatpush2.msra.mxu0 0.0
    %3734 = vmatprep.subr.mxu0 0.0
    %3735 = vmatpush2.msra.mxu0 0.0
    %3736 = vmatprep.subr.mxu0 0.0
    %3737 = vmatpush2.msra.mxu0 0.0
    %3738 = vmatprep.subr.mxu0 0.0
    %3739 = vmatpush2.msra.mxu0 0.0
    %3740 = vmatprep.subr.mxu0 0.0
    %3741 = vmatpush2.msra.mxu0 0.0
    %3742 = vmatprep.subr.mxu0 0.0
    %3743 = vmatpush2.msra.mxu0 0.0
    %3744 = vmatprep.subr.mxu0 0.0
    %3745 = vmatpush2.msra.mxu0 0.0
    %3746 = vmatprep.subr.mxu0 0.0
    %3747 = vmatpush2.msra.mxu0 0.0
    %3748 = vmatprep.subr.mxu0 0.0
    %3749 = vmatpush2.msra.mxu0 0.0
    %3750 = vmatprep.subr.mxu0 0.0
    %3751 = vmatpush2.msra.mxu0 0.0
    %3752 = vmatprep.subr.mxu0 0.0
    %3753 = vmatpush2.msra.mxu0 0.0
    %3754 = vmatprep.subr.mxu0 0.0
    %3755 = vmatpush2.msra.mxu0 0.0
    %3756 = vmatprep.subr.mxu0 0.0
    %3757 = vmatpush2.msra.mxu0 0.0
    %3758 = vmatprep.subr.mxu0 0.0
    %3759 = vmatpush2.msra.mxu0 0.0
    %3760 = vmatprep.mubr.f32.mxu0 0.0
    %3761 = vmatmul.mubr.f32.gmra.mxu0 %v3667
    %v3762 = vpop.f32.mrf.mxu0
    %v3763 = vadd.f32 %v3664, %v3762
    %v3764 = vpop.f32.mrf.mxu0
    %3765 = vmatprep.mubr.f32.mxu0 0.0
    %3766 = vmatmul.mubr.f32.gmra.mxu0 %v3670
    %v3767 = vpop.f32.mrf.mxu0
    %v3768 = vadd.f32 %v3664, %v3767
    %v3769 = vpop.f32.mrf.mxu0
    %3770 = vmatprep.mubr.f32.mxu0 0.0
    %3771 = vmatmul.mubr.f32.gmra.mxu0 %v3673
    %v3772 = vpop.f32.mrf.mxu0
    %v3773 = vadd.f32 %v3664, %v3772
    %v3774 = vpop.f32.mrf.mxu0
    %3775 = vmatprep.mubr.f32.mxu0 0.0
    %3776 = vmatmul.mubr.f32.gmra.mxu0 %v3676
    %v3777 = vpop.f32.mrf.mxu0
    %v3778 = vadd.f32 %v3664, %v3777
    %v3779 = vpop.f32.mrf.mxu0
    %3780 = vmatprep.mubr.f32.mxu0 0.0
    %3781 = vmatmul.mubr.f32.gmra.mxu0 %v3679
    %v3782 = vpop.f32.mrf.mxu0
    %v3783 = vadd.f32 %v3664, %v3782
    %v3784 = vpop.f32.mrf.mxu0
    %3785 = vmatprep.mubr.f32.mxu0 0.0
    %3786 = vmatmul.mubr.f32.gmra.mxu0 %v3682
    %v3787 = vpop.f32.mrf.mxu0
    %v3788 = vadd.f32 %v3664, %v3787
    %v3789 = vpop.f32.mrf.mxu0
    %3790 = vmatprep.mubr.f32.mxu0 0.0
    %3791 = vmatmul.mubr.f32.gmra.mxu0 %v3685
    %v3792 = vpop.f32.mrf.mxu0
    %v3793 = vadd.f32 %v3664, %v3792
    %v3794 = vpop.f32.mrf.mxu0
    %3795 = vmatprep.mubr.f32.mxu0 0.0
    %3796 = vmatmul.mubr.f32.gmra.mxu0 %v3688
    %v3797 = vpop.f32.mrf.mxu0
    %v3798 = vadd.f32 %v3664, %v3797
    %v3799 = vpop.f32.mrf.mxu0
    %3800 = vmatprep.mubr.f32.mxu0 0.0
    %3801 = vmatmul.mubr.f32.gmra.mxu0 %v3691
    %v3802 = vpop.f32.mrf.mxu0
    %v3803 = vadd.f32 %v3664, %v3802
    %v3804 = vpop.f32.mrf.mxu0
    %3805 = vmatprep.mubr.f32.mxu0 0.0
    %3806 = vmatmul.mubr.f32.gmra.mxu0 %v3694
    %v3807 = vpop.f32.mrf.mxu0
    %v3808 = vadd.f32 %v3664, %v3807
    %v3809 = vpop.f32.mrf.mxu0
    %3810 = vdwg.mxu0
    %v3811 = vmul.f32 %v3763, 0.5
    %v3812 = vmul.f32 %v3768, 0.5
    %v3813 = vmul.f32 %v3773, 0.5
    %v3814 = vmul.f32 %v3778, 0.5
    %v3815 = vmul.f32 %v3783, 0.5
    %v3816 = vmul.f32 %v3788, 0.5
    %v3817 = vmul.f32 %v3793, 0.5
    %v3818 = vmul.f32 %v3798, 0.5
    %v3819 = vmul.f32 %v3803, 0.5
    %v3820 = vmul.f32 %v3808, 0.5
    %v3821 = vmul.f32 %v3763, 0.70710677
    %v3822 = vmul.f32 %v3768, 0.70710677
    %v3823 = vmul.f32 %v3773, 0.70710677
    %v3824 = vmul.f32 %v3778, 0.70710677
    %v3825 = vmul.f32 %v3783, 0.70710677
    %v3826 = vmul.f32 %v3788, 0.70710677
    %v3827 = vmul.f32 %v3793, 0.70710677
    %v3828 = vmul.f32 %v3798, 0.70710677
    %v3829 = vmul.f32 %v3803, 0.70710677
    %v3830 = vmul.f32 %v3808, 0.70710677
    %vm3831 = vcmp.ge.f32.partialorder %v3821, 0.0
    %vm3832 = vcmp.ge.f32.partialorder %v3822, 0.0
    %vm3833 = vcmp.ge.f32.partialorder %v3823, 0.0
    %vm3834 = vcmp.ge.f32.partialorder %v3824, 0.0
    %vm3835 = vcmp.ge.f32.partialorder %v3825, 0.0
    %vm3836 = vcmp.ge.f32.partialorder %v3826, 0.0
    %vm3837 = vcmp.ge.f32.partialorder %v3827, 0.0
    %vm3838 = vcmp.ge.f32.partialorder %v3828, 0.0
    %vm3839 = vcmp.ge.f32.partialorder %v3829, 0.0
    %vm3840 = vcmp.ge.f32.partialorder %v3830, 0.0
    %v3841 = vsel %vm3831, 1.0, -1.0
    %v3842 = vsel %vm3832, 1.0, -1.0
    %v3843 = vsel %vm3833, 1.0, -1.0
    %v3844 = vsel %vm3834, 1.0, -1.0
    %v3845 = vsel %vm3835, 1.0, -1.0
    %v3846 = vsel %vm3836, 1.0, -1.0
    %v3847 = vsel %vm3837, 1.0, -1.0
    %v3848 = vsel %vm3838, 1.0, -1.0
    %v3849 = vsel %vm3839, 1.0, -1.0
    %v3850 = vsel %vm3840, 1.0, -1.0
    %v3851 = vand.u32 2147483647, %v3821
    %v3852 = vand.u32 2147483647, %v3822
    %v3853 = vand.u32 2147483647, %v3823
    %v3854 = vand.u32 2147483647, %v3824
    %v3855 = vand.u32 2147483647, %v3825
    %v3856 = vand.u32 2147483647, %v3826
    %v3857 = vand.u32 2147483647, %v3827
    %v3858 = vand.u32 2147483647, %v3828
    %v3859 = vand.u32 2147483647, %v3829
    %v3860 = vand.u32 2147483647, %v3830
    %v3861 = vmul.f32 %v3851, 0.3275911
    %v3862 = vmul.f32 %v3852, 0.3275911
    %v3863 = vmul.f32 %v3853, 0.3275911
    %v3864 = vmul.f32 %v3854, 0.3275911
    %v3865 = vmul.f32 %v3855, 0.3275911
    %v3866 = vmul.f32 %v3856, 0.3275911
    %v3867 = vmul.f32 %v3857, 0.3275911
    %v3868 = vmul.f32 %v3858, 0.3275911
    %v3869 = vmul.f32 %v3859, 0.3275911
    %v3870 = vmul.f32 %v3860, 0.3275911
    %v3871 = vadd.f32 %v3861, 1.0
    %v3872 = vadd.f32 %v3862, 1.0
    %v3873 = vadd.f32 %v3863, 1.0
    %v3874 = vadd.f32 %v3864, 1.0
    %v3875 = vadd.f32 %v3865, 1.0
    %v3876 = vadd.f32 %v3866, 1.0
    %v3877 = vadd.f32 %v3867, 1.0
    %v3878 = vadd.f32 %v3868, 1.0
    %v3879 = vadd.f32 %v3869, 1.0
    %v3880 = vadd.f32 %v3870, 1.0
    %v3881 = vrcp.pop %v3871
    %v3882 = vrcp.pop %v3872
    %v3883 = vrcp.pop %v3873
    %v3884 = vrcp.pop %v3874
    %v3885 = vrcp.pop %v3875
    %v3886 = vrcp.pop %v3876
    %v3887 = vrcp.pop %v3877
    %v3888 = vrcp.pop %v3878
    %v3889 = vrcp.pop %v3879
    %v3890 = vrcp.pop %v3880
    %v3891 = vmul.f32 %v3881, 1.0614054
    %v3892 = vmul.f32 %v3882, 1.0614054
    %v3893 = vmul.f32 %v3883, 1.0614054
    %v3894 = vmul.f32 %v3884, 1.0614054
    %v3895 = vmul.f32 %v3885, 1.0614054
    %v3896 = vmul.f32 %v3886, 1.0614054
    %v3897 = vmul.f32 %v3887, 1.0614054
    %v3898 = vmul.f32 %v3888, 1.0614054
    %v3899 = vmul.f32 %v3889, 1.0614054
    %v3900 = vmul.f32 %v3890, 1.0614054
    %v3901 = vadd.f32 %v3891, -1.4531521
    %v3902 = vadd.f32 %v3892, -1.4531521
    %v3903 = vadd.f32 %v3893, -1.4531521
    %v3904 = vadd.f32 %v3894, -1.4531521
    %v3905 = vadd.f32 %v3895, -1.4531521
    %v3906 = vadd.f32 %v3896, -1.4531521
    %v3907 = vadd.f32 %v3897, -1.4531521
    %v3908 = vadd.f32 %v3898, -1.4531521
    %v3909 = vadd.f32 %v3899, -1.4531521
    %v3910 = vadd.f32 %v3900, -1.4531521
    %v3911 = vmul.f32 %v3901, %v3881
    %v3912 = vmul.f32 %v3902, %v3882
    %v3913 = vmul.f32 %v3903, %v3883
    %v3914 = vmul.f32 %v3904, %v3884
    %v3915 = vmul.f32 %v3905, %v3885
    %v3916 = vmul.f32 %v3906, %v3886
    %v3917 = vmul.f32 %v3907, %v3887
    %v3918 = vmul.f32 %v3908, %v3888
    %v3919 = vmul.f32 %v3909, %v3889
    %v3920 = vmul.f32 %v3910, %v3890
    %v3921 = vadd.f32 %v3911, 1.4214138
    %v3922 = vadd.f32 %v3912, 1.4214138
    %v3923 = vadd.f32 %v3913, 1.4214138
    %v3924 = vadd.f32 %v3914, 1.4214138
    %v3925 = vadd.f32 %v3915, 1.4214138
    %v3926 = vadd.f32 %v3916, 1.4214138
    %v3927 = vadd.f32 %v3917, 1.4214138
    %v3928 = vadd.f32 %v3918, 1.4214138
    %v3929 = vadd.f32 %v3919, 1.4214138
    %v3930 = vadd.f32 %v3920, 1.4214138
    %v3931 = vmul.f32 %v3921, %v3881
    %v3932 = vmul.f32 %v3922, %v3882
    %v3933 = vmul.f32 %v3923, %v3883
    %v3934 = vmul.f32 %v3924, %v3884
    %v3935 = vmul.f32 %v3925, %v3885
    %v3936 = vmul.f32 %v3926, %v3886
    %v3937 = vmul.f32 %v3927, %v3887
    %v3938 = vmul.f32 %v3928, %v3888
    %v3939 = vmul.f32 %v3929, %v3889
    %v3940 = vmul.f32 %v3930, %v3890
    %v3941 = vadd.f32 %v3931, -0.28449672
    %v3942 = vadd.f32 %v3932, -0.28449672
    %v3943 = vadd.f32 %v3933, -0.28449672
    %v3944 = vadd.f32 %v3934, -0.28449672
    %v3945 = vadd.f32 %v3935, -0.28449672
    %v3946 = vadd.f32 %v3936, -0.28449672
    %v3947 = vadd.f32 %v3937, -0.28449672
    %v3948 = vadd.f32 %v3938, -0.28449672
    %v3949 = vadd.f32 %v3939, -0.28449672
    %v3950 = vadd.f32 %v3940, -0.28449672
    %v3951 = vmul.f32 %v3941, %v3881
    %v3952 = vmul.f32 %v3942, %v3882
    %v3953 = vmul.f32 %v3943, %v3883
    %v3954 = vmul.f32 %v3944, %v3884
    %v3955 = vmul.f32 %v3945, %v3885
    %v3956 = vmul.f32 %v3946, %v3886
    %v3957 = vmul.f32 %v3947, %v3887
    %v3958 = vmul.f32 %v3948, %v3888
    %v3959 = vmul.f32 %v3949, %v3889
    %v3960 = vmul.f32 %v3950, %v3890
    %v3961 = vadd.f32 %v3951, 0.2548296
    %v3962 = vadd.f32 %v3952, 0.2548296
    %v3963 = vadd.f32 %v3953, 0.2548296
    %v3964 = vadd.f32 %v3954, 0.2548296
    %v3965 = vadd.f32 %v3955, 0.2548296
    %v3966 = vadd.f32 %v3956, 0.2548296
    %v3967 = vadd.f32 %v3957, 0.2548296
    %v3968 = vadd.f32 %v3958, 0.2548296
    %v3969 = vadd.f32 %v3959, 0.2548296
    %v3970 = vadd.f32 %v3960, 0.2548296
    %v3971 = vmul.f32 %v3961, %v3881
    %v3972 = vmul.f32 %v3962, %v3882
    %v3973 = vmul.f32 %v3963, %v3883
    %v3974 = vmul.f32 %v3964, %v3884
    %v3975 = vmul.f32 %v3965, %v3885
    %v3976 = vmul.f32 %v3966, %v3886
    %v3977 = vmul.f32 %v3967, %v3887
    %v3978 = vmul.f32 %v3968, %v3888
    %v3979 = vmul.f32 %v3969, %v3889
    %v3980 = vmul.f32 %v3970, %v3890
    %v3981 = vsub.f32 0.0, %v3851
    %v3982 = vsub.f32 0.0, %v3852
    %v3983 = vsub.f32 0.0, %v3853
    %v3984 = vsub.f32 0.0, %v3854
    %v3985 = vsub.f32 0.0, %v3855
    %v3986 = vsub.f32 0.0, %v3856
    %v3987 = vsub.f32 0.0, %v3857
    %v3988 = vsub.f32 0.0, %v3858
    %v3989 = vsub.f32 0.0, %v3859
    %v3990 = vsub.f32 0.0, %v3860
    %v3991 = vmul.f32 %v3981, %v3851
    %v3992 = vmul.f32 %v3982, %v3852
    %v3993 = vmul.f32 %v3983, %v3853
    %v3994 = vmul.f32 %v3984, %v3854
    %v3995 = vmul.f32 %v3985, %v3855
    %v3996 = vmul.f32 %v3986, %v3856
    %v3997 = vmul.f32 %v3987, %v3857
    %v3998 = vmul.f32 %v3988, %v3858
    %v3999 = vmul.f32 %v3989, %v3859
    %v4000 = vmul.f32 %v3990, %v3860
    %v4001 = vmul.f32 %v3991, 1.442695
    %v4002 = vpow.pop %v4001
    %v4003 = vmul.f32 %v3992, 1.442695
    %v4004 = vpow.pop %v4003
    %v4005 = vmul.f32 %v3993, 1.442695
    %v4006 = vpow.pop %v4005
    %v4007 = vmul.f32 %v3994, 1.442695
    %v4008 = vpow.pop %v4007
    %v4009 = vmul.f32 %v3995, 1.442695
    %v4010 = vpow.pop %v4009
    %v4011 = vmul.f32 %v3996, 1.442695
    %v4012 = vpow.pop %v4011
    %v4013 = vmul.f32 %v3997, 1.442695
    %v4014 = vpow.pop %v4013
    %v4015 = vmul.f32 %v3998, 1.442695
    %v4016 = vpow.pop %v4015
    %v4017 = vmul.f32 %v3999, 1.442695
    %v4018 = vpow.pop %v4017
    %v4019 = vmul.f32 %v4000, 1.442695
    %v4020 = vpow.pop %v4019
    %v4021 = vmul.f32 %v3971, %v4002
    %v4022 = vmul.f32 %v3972, %v4004
    %v4023 = vmul.f32 %v3973, %v4006
    %v4024 = vmul.f32 %v3974, %v4008
    %v4025 = vmul.f32 %v3975, %v4010
    %v4026 = vmul.f32 %v3976, %v4012
    %v4027 = vmul.f32 %v3977, %v4014
    %v4028 = vmul.f32 %v3978, %v4016
    %v4029 = vmul.f32 %v3979, %v4018
    %v4030 = vmul.f32 %v3980, %v4020
    %v4031 = vsub.f32 1.0, %v4021
    %v4032 = vsub.f32 1.0, %v4022
    %v4033 = vsub.f32 1.0, %v4023
    %v4034 = vsub.f32 1.0, %v4024
    %v4035 = vsub.f32 1.0, %v4025
    %v4036 = vsub.f32 1.0, %v4026
    %v4037 = vsub.f32 1.0, %v4027
    %v4038 = vsub.f32 1.0, %v4028
    %v4039 = vsub.f32 1.0, %v4029
    %v4040 = vsub.f32 1.0, %v4030
    %v4041 = vmul.f32 %v3841, %v4031
    %v4042 = vmul.f32 %v3842, %v4032
    %v4043 = vmul.f32 %v3843, %v4033
    %v4044 = vmul.f32 %v3844, %v4034
    %v4045 = vmul.f32 %v3845, %v4035
    %v4046 = vmul.f32 %v3846, %v4036
    %v4047 = vmul.f32 %v3847, %v4037
    %v4048 = vmul.f32 %v3848, %v4038
    %v4049 = vmul.f32 %v3849, %v4039
    %v4050 = vmul.f32 %v3850, %v4040
    %v4051 = vadd.f32 %v4041, 1.0
    %v4052 = vadd.f32 %v4042, 1.0
    %v4053 = vadd.f32 %v4043, 1.0
    %v4054 = vadd.f32 %v4044, 1.0
    %v4055 = vadd.f32 %v4045, 1.0
    %v4056 = vadd.f32 %v4046, 1.0
    %v4057 = vadd.f32 %v4047, 1.0
    %v4058 = vadd.f32 %v4048, 1.0
    %v4059 = vadd.f32 %v4049, 1.0
    %v4060 = vadd.f32 %v4050, 1.0
    %v4061 = vmul.f32 %v3811, %v4051
    %v4062 = vmul.f32 %v3812, %v4052
    %v4063 = vmul.f32 %v3813, %v4053
    %v4064 = vmul.f32 %v3814, %v4054
    %v4065 = vmul.f32 %v3815, %v4055
    %v4066 = vmul.f32 %v3816, %v4056
    %v4067 = vmul.f32 %v3817, %v4057
    %v4068 = vmul.f32 %v3818, %v4058
    %v4069 = vmul.f32 %v3819, %v4059
    %v4070 = vmul.f32 %v3820, %v4060
    %v4071 = vld [vmem:[%s14] sm:$0xff]
    %v4072 = vld [vmem:[%s14 + $0x8] sm:$0xff]
    %v4073 = vld [vmem:[%s14 + $0x10] sm:$0xff]
    %v4074 = vld [vmem:[%s14 + $0x18] sm:$0xff]
    %v4075 = vld [vmem:[%s14 + $0x20] sm:$0xff]
    %v4076 = vld [vmem:[%s14 + $0x28] sm:$0xff]
    %v4077 = vld [vmem:[%s14 + $0x30] sm:$0xff]
    %v4078 = vld [vmem:[%s14 + $0x38] sm:$0xff]
    %v4079 = vld [vmem:[%s14 + $0x40] sm:$0xff]
    %v4080 = vld [vmem:[%s14 + $0x48] sm:$0xff]
    %v4081 = vld [vmem:[%s14 + $0x50] sm:$0xff]
    %v4082 = vld [vmem:[%s14 + $0x58] sm:$0xff]
    %v4083 = vld [vmem:[%s14 + $0x60] sm:$0xff]
    %v4084 = vld [vmem:[%s14 + $0x68] sm:$0xff]
    %v4085 = vld [vmem:[%s14 + $0x70] sm:$0xff]
    %v4086 = vld [vmem:[%s14 + $0x78] sm:$0xff]
    %v4087 = vld [vmem:[%s15] sm:$0x1]
    %v4089 = vlaneseq
    %v4090 = vshrl.u32 %v4089, 7
    %v4091 = vsub.s32 0, %v4090
    %v4092 = vrot.slane %v4087, %v4091
    %4094 = vmatprep.subr.mxu0 0.0
    %4095 = vmatpush1.msra.mxu0 %v4086
    %4096 = vmatprep.subr.mxu0 0.0
    %4097 = vmatpush1.msra.mxu0 %v4085
    %4098 = vmatprep.subr.mxu0 0.0
    %4099 = vmatpush1.msra.mxu0 %v4084
    %4100 = vmatprep.subr.mxu0 0.0
    %4101 = vmatpush1.msra.mxu0 %v4083
    %4102 = vmatprep.subr.mxu0 0.0
    %4103 = vmatpush1.msra.mxu0 %v4082
    %4104 = vmatprep.subr.mxu0 0.0
    %4105 = vmatpush1.msra.mxu0 %v4081
    %4106 = vmatprep.subr.mxu0 0.0
    %4107 = vmatpush1.msra.mxu0 %v4080
    %4108 = vmatprep.subr.mxu0 0.0
    %4109 = vmatpush1.msra.mxu0 %v4079
    %4110 = vmatprep.subr.mxu0 0.0
    %4111 = vmatpush1.msra.mxu0 %v4078
    %4112 = vmatprep.subr.mxu0 0.0
    %4113 = vmatpush1.msra.mxu0 %v4077
    %4114 = vmatprep.subr.mxu0 0.0
    %4115 = vmatpush1.msra.mxu0 %v4076
    %4116 = vmatprep.subr.mxu0 0.0
    %4117 = vmatpush1.msra.mxu0 %v4075
    %4118 = vmatprep.subr.mxu0 0.0
    %4119 = vmatpush1.msra.mxu0 %v4074
    %4120 = vmatprep.subr.mxu0 0.0
    %4121 = vmatpush1.msra.mxu0 %v4073
    %4122 = vmatprep.subr.mxu0 0.0
    %4123 = vmatpush1.msra.mxu0 %v4072
    %4124 = vmatprep.subr.mxu0 0.0
    %4125 = vmatpush1.msra.mxu0 %v4071
    %4126 = vmatprep.subr.mxu0 0.0
    %4127 = vmatpush2.msra.mxu0 0.0
    %4128 = vmatprep.subr.mxu0 0.0
    %4129 = vmatpush2.msra.mxu0 0.0
    %4130 = vmatprep.subr.mxu0 0.0
    %4131 = vmatpush2.msra.mxu0 0.0
    %4132 = vmatprep.subr.mxu0 0.0
    %4133 = vmatpush2.msra.mxu0 0.0
    %4134 = vmatprep.subr.mxu0 0.0
    %4135 = vmatpush2.msra.mxu0 0.0
    %4136 = vmatprep.subr.mxu0 0.0
    %4137 = vmatpush2.msra.mxu0 0.0
    %4138 = vmatprep.subr.mxu0 0.0
    %4139 = vmatpush2.msra.mxu0 0.0
    %4140 = vmatprep.subr.mxu0 0.0
    %4141 = vmatpush2.msra.mxu0 0.0
    %4142 = vmatprep.subr.mxu0 0.0
    %4143 = vmatpush2.msra.mxu0 0.0
    %4144 = vmatprep.subr.mxu0 0.0
    %4145 = vmatpush2.msra.mxu0 0.0
    %4146 = vmatprep.subr.mxu0 0.0
    %4147 = vmatpush2.msra.mxu0 0.0
    %4148 = vmatprep.subr.mxu0 0.0
    %4149 = vmatpush2.msra.mxu0 0.0
    %4150 = vmatprep.subr.mxu0 0.0
    %4151 = vmatpush2.msra.mxu0 0.0
    %4152 = vmatprep.subr.mxu0 0.0
    %4153 = vmatpush2.msra.mxu0 0.0
    %4154 = vmatprep.subr.mxu0 0.0
    %4155 = vmatpush2.msra.mxu0 0.0
    %4156 = vmatprep.subr.mxu0 0.0
    %4157 = vmatpush2.msra.mxu0 0.0
    %4158 = vmatprep.mubr.f32.mxu0 0.0
    %4159 = vmatmul.mubr.f32.gmra.mxu0 %v4061
    %v4160 = vpop.f32.mrf.mxu0
    %v4161 = vadd.f32 %v4092, %v4160
    %v4162 = vpop.f32.mrf.mxu0
    %4163 = vmatprep.mubr.f32.mxu0 0.0
    %4164 = vmatmul.mubr.f32.gmra.mxu0 %v4062
    %v4165 = vpop.f32.mrf.mxu0
    %v4166 = vadd.f32 %v4092, %v4165
    %v4167 = vpop.f32.mrf.mxu0
    %4168 = vmatprep.mubr.f32.mxu0 0.0
    %4169 = vmatmul.mubr.f32.gmra.mxu0 %v4063
    %v4170 = vpop.f32.mrf.mxu0
    %v4171 = vadd.f32 %v4092, %v4170
    %v4172 = vpop.f32.mrf.mxu0
    %4173 = vmatprep.mubr.f32.mxu0 0.0
    %4174 = vmatmul.mubr.f32.gmra.mxu0 %v4064
    %v4175 = vpop.f32.mrf.mxu0
    %v4176 = vadd.f32 %v4092, %v4175
    %v4177 = vpop.f32.mrf.mxu0
    %4178 = vmatprep.mubr.f32.mxu0 0.0
    %4179 = vmatmul.mubr.f32.gmra.mxu0 %v4065
    %v4180 = vpop.f32.mrf.mxu0
    %v4181 = vadd.f32 %v4092, %v4180
    %v4182 = vpop.f32.mrf.mxu0
    %4183 = vmatprep.mubr.f32.mxu0 0.0
    %4184 = vmatmul.mubr.f32.gmra.mxu0 %v4066
    %v4185 = vpop.f32.mrf.mxu0
    %v4186 = vadd.f32 %v4092, %v4185
    %v4187 = vpop.f32.mrf.mxu0
    %4188 = vmatprep.mubr.f32.mxu0 0.0
    %4189 = vmatmul.mubr.f32.gmra.mxu0 %v4067
    %v4190 = vpop.f32.mrf.mxu0
    %v4191 = vadd.f32 %v4092, %v4190
    %v4192 = vpop.f32.mrf.mxu0
    %4193 = vmatprep.mubr.f32.mxu0 0.0
    %4194 = vmatmul.mubr.f32.gmra.mxu0 %v4068
    %v4195 = vpop.f32.mrf.mxu0
    %v4196 = vadd.f32 %v4092, %v4195
    %v4197 = vpop.f32.mrf.mxu0
    %4198 = vmatprep.mubr.f32.mxu0 0.0
    %4199 = vmatmul.mubr.f32.gmra.mxu0 %v4069
    %v4200 = vpop.f32.mrf.mxu0
    %v4201 = vadd.f32 %v4092, %v4200
    %v4202 = vpop.f32.mrf.mxu0
    %4203 = vmatprep.mubr.f32.mxu0 0.0
    %4204 = vmatmul.mubr.f32.gmra.mxu0 %v4070
    %v4205 = vpop.f32.mrf.mxu0
    %v4206 = vadd.f32 %v4092, %v4205
    %v4207 = vpop.f32.mrf.mxu0
    %4208 = vdwg.mxu0
    %v4209 = vadd.f32 %v3495, %v4161
    %v4210 = vadd.f32 %v3496, %v4166
    %v4211 = vadd.f32 %v3497, %v4171
    %v4212 = vadd.f32 %v3498, %v4176
    %v4213 = vadd.f32 %v3499, %v4181
    %v4214 = vadd.f32 %v3500, %v4186
    %v4215 = vadd.f32 %v3501, %v4191
    %v4216 = vadd.f32 %v3502, %v4196
    %v4217 = vadd.f32 %v3503, %v4201
    %v4218 = vadd.f32 %v3504, %v4206
    %4219 = vst.msk [vmem:[%s16] sm:$0xff] %vm86, %v4209
    %4220 = vst.msk [vmem:[%s16 + $0x8] sm:$0xff] %vm86, %v4210
    %4221 = vst.msk [vmem:[%s16 + $0x10] sm:$0xff] %vm86, %v4211
    %4222 = vst.msk [vmem:[%s16 + $0x18] sm:$0xff] %vm86, %v4212
    %4223 = vst.msk [vmem:[%s16 + $0x20] sm:$0xff] %vm86, %v4213
    %4224 = vst.msk [vmem:[%s16 + $0x28] sm:$0xff] %vm86, %v4214
    %4225 = vst.msk [vmem:[%s16 + $0x30] sm:$0xff] %vm86, %v4215
    %4226 = vst.msk [vmem:[%s16 + $0x38] sm:$0xff] %vm86, %v4216
    %4227 = vst.msk [vmem:[%s16 + $0x40] sm:$0xff] %vm86, %v4217
    %4228 = vst.msk [vmem:[%s16 + $0x48] sm:$0xff] %vm86, %v4218
    %s4229 = scalar_lea.vmem %s2, 1
    %v4230 = vld [vmem:[%s4229] sm:$0x1]
    %s4231 = scalar_lea.vmem %s3, 1
    %v4232 = vld [vmem:[%s4231] sm:$0x1]
    %v4233 = vsel %vm86, %v4209, 0.0
    %4234 = vadd.xlane.f32.xlu0 %v4233
    %v4235 = vpop.xlane.xlu0 %4234
    %v4236 = vsel %vm86, %v4210, 0.0
    %4237 = vadd.xlane.f32.xlu0 %v4236
    %v4238 = vpop.xlane.xlu0 %4237
    %v4239 = vsel %vm86, %v4211, 0.0
    %4240 = vadd.xlane.f32.xlu0 %v4239
    %v4241 = vpop.xlane.xlu0 %4240
    %v4242 = vsel %vm86, %v4212, 0.0
    %4243 = vadd.xlane.f32.xlu0 %v4242
    %v4244 = vpop.xlane.xlu0 %4243
    %v4245 = vsel %vm86, %v4213, 0.0
    %4246 = vadd.xlane.f32.xlu0 %v4245
    %v4247 = vpop.xlane.xlu0 %4246
    %v4248 = vsel %vm86, %v4214, 0.0
    %4249 = vadd.xlane.f32.xlu0 %v4248
    %v4250 = vpop.xlane.xlu0 %4249
    %v4251 = vsel %vm86, %v4215, 0.0
    %4252 = vadd.xlane.f32.xlu0 %v4251
    %v4253 = vpop.xlane.xlu0 %4252
    %v4254 = vsel %vm86, %v4216, 0.0
    %4255 = vadd.xlane.f32.xlu0 %v4254
    %v4256 = vpop.xlane.xlu0 %4255
    %v4257 = vsel %vm86, %v4217, 0.0
    %4258 = vadd.xlane.f32.xlu0 %v4257
    %v4259 = vpop.xlane.xlu0 %4258
    %v4260 = vsel %vm86, %v4218, 0.0
    %4261 = vadd.xlane.f32.xlu0 %v4260
    %v4262 = vpop.xlane.xlu0 %4261
    %v4263 = vmul.f32 %v4235, %v117
    %v4264 = vmul.f32 %v4238, %v117
    %v4265 = vmul.f32 %v4241, %v117
    %v4266 = vmul.f32 %v4244, %v117
    %v4267 = vmul.f32 %v4247, %v117
    %v4268 = vmul.f32 %v4250, %v117
    %v4269 = vmul.f32 %v4253, %v117
    %v4270 = vmul.f32 %v4256, %v117
    %v4271 = vmul.f32 %v4259, %v117
    %v4272 = vmul.f32 %v4262, %v117
    %v4273 = vsub.f32 %v4209, %v4263
    %v4274 = vsub.f32 %v4210, %v4264
    %v4275 = vsub.f32 %v4211, %v4265
    %v4276 = vsub.f32 %v4212, %v4266
    %v4277 = vsub.f32 %v4213, %v4267
    %v4278 = vsub.f32 %v4214, %v4268
    %v4279 = vsub.f32 %v4215, %v4269
    %v4280 = vsub.f32 %v4216, %v4270
    %v4281 = vsub.f32 %v4217, %v4271
    %v4282 = vsub.f32 %v4218, %v4272
    %v4283 = vmul.f32 %v4273, %v4273
    %v4284 = vmul.f32 %v4274, %v4274
    %v4285 = vmul.f32 %v4275, %v4275
    %v4286 = vmul.f32 %v4276, %v4276
    %v4287 = vmul.f32 %v4277, %v4277
    %v4288 = vmul.f32 %v4278, %v4278
    %v4289 = vmul.f32 %v4279, %v4279
    %v4290 = vmul.f32 %v4280, %v4280
    %v4291 = vmul.f32 %v4281, %v4281
    %v4292 = vmul.f32 %v4282, %v4282
    %v4293 = vsel %vm86, %v4283, 0.0
    %4294 = vadd.xlane.f32.xlu0 %v4293
    %v4295 = vpop.xlane.xlu0 %4294
    %v4296 = vsel %vm86, %v4284, 0.0
    %4297 = vadd.xlane.f32.xlu0 %v4296
    %v4298 = vpop.xlane.xlu0 %4297
    %v4299 = vsel %vm86, %v4285, 0.0
    %4300 = vadd.xlane.f32.xlu0 %v4299
    %v4301 = vpop.xlane.xlu0 %4300
    %v4302 = vsel %vm86, %v4286, 0.0
    %4303 = vadd.xlane.f32.xlu0 %v4302
    %v4304 = vpop.xlane.xlu0 %4303
    %v4305 = vsel %vm86, %v4287, 0.0
    %4306 = vadd.xlane.f32.xlu0 %v4305
    %v4307 = vpop.xlane.xlu0 %4306
    %v4308 = vsel %vm86, %v4288, 0.0
    %4309 = vadd.xlane.f32.xlu0 %v4308
    %v4310 = vpop.xlane.xlu0 %4309
    %v4311 = vsel %vm86, %v4289, 0.0
    %4312 = vadd.xlane.f32.xlu0 %v4311
    %v4313 = vpop.xlane.xlu0 %4312
    %v4314 = vsel %vm86, %v4290, 0.0
    %4315 = vadd.xlane.f32.xlu0 %v4314
    %v4316 = vpop.xlane.xlu0 %4315
    %v4317 = vsel %vm86, %v4291, 0.0
    %4318 = vadd.xlane.f32.xlu0 %v4317
    %v4319 = vpop.xlane.xlu0 %4318
    %v4320 = vsel %vm86, %v4292, 0.0
    %4321 = vadd.xlane.f32.xlu0 %v4320
    %v4322 = vpop.xlane.xlu0 %4321
    %v4323 = vmul.f32 %v4295, %v117
    %v4324 = vmul.f32 %v4298, %v117
    %v4325 = vmul.f32 %v4301, %v117
    %v4326 = vmul.f32 %v4304, %v117
    %v4327 = vmul.f32 %v4307, %v117
    %v4328 = vmul.f32 %v4310, %v117
    %v4329 = vmul.f32 %v4313, %v117
    %v4330 = vmul.f32 %v4316, %v117
    %v4331 = vmul.f32 %v4319, %v117
    %v4332 = vmul.f32 %v4322, %v117
    %v4333 = vadd.f32 %v4323, 1e-12
    %v4334 = vadd.f32 %v4324, 1e-12
    %v4335 = vadd.f32 %v4325, 1e-12
    %v4336 = vadd.f32 %v4326, 1e-12
    %v4337 = vadd.f32 %v4327, 1e-12
    %v4338 = vadd.f32 %v4328, 1e-12
    %v4339 = vadd.f32 %v4329, 1e-12
    %v4340 = vadd.f32 %v4330, 1e-12
    %v4341 = vadd.f32 %v4331, 1e-12
    %v4342 = vadd.f32 %v4332, 1e-12
    %v4343 = vrsqrt.pop %v4333
    %v4344 = vrsqrt.pop %v4334
    %v4345 = vrsqrt.pop %v4335
    %v4346 = vrsqrt.pop %v4336
    %v4347 = vrsqrt.pop %v4337
    %v4348 = vrsqrt.pop %v4338
    %v4349 = vrsqrt.pop %v4339
    %v4350 = vrsqrt.pop %v4340
    %v4351 = vrsqrt.pop %v4341
    %v4352 = vrsqrt.pop %v4342
    %v4353 = vmul.f32 %v4273, %v4343
    %v4354 = vmul.f32 %v4274, %v4344
    %v4355 = vmul.f32 %v4275, %v4345
    %v4356 = vmul.f32 %v4276, %v4346
    %v4357 = vmul.f32 %v4277, %v4347
    %v4358 = vmul.f32 %v4278, %v4348
    %v4359 = vmul.f32 %v4279, %v4349
    %v4360 = vmul.f32 %v4280, %v4350
    %v4361 = vmul.f32 %v4281, %v4351
    %v4362 = vmul.f32 %v4282, %v4352
    %v4364 = vlaneseq
    %v4365 = vshrl.u32 %v4364, 7
    %v4366 = vsub.s32 0, %v4365
    %v4367 = vrot.slane %v4230, %v4366
    %v4369 = vmul.f32 %v4353, %v4367
    %v4370 = vmul.f32 %v4354, %v4367
    %v4371 = vmul.f32 %v4355, %v4367
    %v4372 = vmul.f32 %v4356, %v4367
    %v4373 = vmul.f32 %v4357, %v4367
    %v4374 = vmul.f32 %v4358, %v4367
    %v4375 = vmul.f32 %v4359, %v4367
    %v4376 = vmul.f32 %v4360, %v4367
    %v4377 = vmul.f32 %v4361, %v4367
    %v4378 = vmul.f32 %v4362, %v4367
    %v4380 = vlaneseq
    %v4381 = vshrl.u32 %v4380, 7
    %v4382 = vsub.s32 0, %v4381
    %v4383 = vrot.slane %v4232, %v4382
    %v4385 = vadd.f32 %v4369, %v4383
    %v4386 = vadd.f32 %v4370, %v4383
    %v4387 = vadd.f32 %v4371, %v4383
    %v4388 = vadd.f32 %v4372, %v4383
    %v4389 = vadd.f32 %v4373, %v4383
    %v4390 = vadd.f32 %v4374, %v4383
    %v4391 = vadd.f32 %v4375, %v4383
    %v4392 = vadd.f32 %v4376, %v4383
    %v4393 = vadd.f32 %v4377, %v4383
    %v4394 = vadd.f32 %v4378, %v4383
    %s4395 = scalar_lea.vmem %s4, 32
    %v4396 = vld [vmem:[%s4395] sm:$0xff]
    %v4397 = vld [vmem:[%s4395 + $0x8] sm:$0xff]
    %v4398 = vld [vmem:[%s4395 + $0x10] sm:$0xff]
    %v4399 = vld [vmem:[%s4395 + $0x18] sm:$0xff]
    %s4400 = scalar_lea.vmem %s5, 1
    %v4401 = vld [vmem:[%s4400] sm:$0x1]
    %v4403 = vlaneseq
    %v4404 = vshrl.u32 %v4403, 7
    %v4405 = vsub.s32 0, %v4404
    %v4406 = vrot.slane %v4401, %v4405
    %v4409 = vsel %vm86, %v4385, 0
    %v4412 = vsel %vm86, %v4386, 0
    %v4415 = vsel %vm86, %v4387, 0
    %v4418 = vsel %vm86, %v4388, 0
    %v4421 = vsel %vm86, %v4389, 0
    %v4424 = vsel %vm86, %v4390, 0
    %v4427 = vsel %vm86, %v4391, 0
    %v4430 = vsel %vm86, %v4392, 0
    %v4433 = vsel %vm86, %v4393, 0
    %v4436 = vsel %vm86, %v4394, 0
    %4438 = vmatprep.subr.mxu0 0.0
    %4439 = vmatpush1.msra.mxu0 0.0
    %4440 = vmatprep.subr.mxu0 0.0
    %4441 = vmatpush1.msra.mxu0 0.0
    %4442 = vmatprep.subr.mxu0 0.0
    %4443 = vmatpush1.msra.mxu0 0.0
    %4444 = vmatprep.subr.mxu0 0.0
    %4445 = vmatpush1.msra.mxu0 0.0
    %4446 = vmatprep.subr.mxu0 0.0
    %4447 = vmatpush1.msra.mxu0 0.0
    %4448 = vmatprep.subr.mxu0 0.0
    %4449 = vmatpush1.msra.mxu0 0.0
    %4450 = vmatprep.subr.mxu0 0.0
    %4451 = vmatpush1.msra.mxu0 0.0
    %4452 = vmatprep.subr.mxu0 0.0
    %4453 = vmatpush1.msra.mxu0 0.0
    %4454 = vmatprep.subr.mxu0 0.0
    %4455 = vmatpush1.msra.mxu0 0.0
    %4456 = vmatprep.subr.mxu0 0.0
    %4457 = vmatpush1.msra.mxu0 0.0
    %4458 = vmatprep.subr.mxu0 0.0
    %4459 = vmatpush1.msra.mxu0 0.0
    %4460 = vmatprep.subr.mxu0 0.0
    %4461 = vmatpush1.msra.mxu0 0.0
    %4462 = vmatprep.subr.mxu0 0.0
    %4463 = vmatpush1.msra.mxu0 %v4399
    %4464 = vmatprep.subr.mxu0 0.0
    %4465 = vmatpush1.msra.mxu0 %v4398
    %4466 = vmatprep.subr.mxu0 0.0
    %4467 = vmatpush1.msra.mxu0 %v4397
    %4468 = vmatprep.subr.mxu0 0.0
    %4469 = vmatpush1.msra.mxu0 %v4396
    %4470 = vmatprep.subr.mxu0 0.0
    %4471 = vmatpush2.msra.mxu0 0.0
    %4472 = vmatprep.subr.mxu0 0.0
    %4473 = vmatpush2.msra.mxu0 0.0
    %4474 = vmatprep.subr.mxu0 0.0
    %4475 = vmatpush2.msra.mxu0 0.0
    %4476 = vmatprep.subr.mxu0 0.0
    %4477 = vmatpush2.msra.mxu0 0.0
    %4478 = vmatprep.subr.mxu0 0.0
    %4479 = vmatpush2.msra.mxu0 0.0
    %4480 = vmatprep.subr.mxu0 0.0
    %4481 = vmatpush2.msra.mxu0 0.0
    %4482 = vmatprep.subr.mxu0 0.0
    %4483 = vmatpush2.msra.mxu0 0.0
    %4484 = vmatprep.subr.mxu0 0.0
    %4485 = vmatpush2.msra.mxu0 0.0
    %4486 = vmatprep.subr.mxu0 0.0
    %4487 = vmatpush2.msra.mxu0 0.0
    %4488 = vmatprep.subr.mxu0 0.0
    %4489 = vmatpush2.msra.mxu0 0.0
    %4490 = vmatprep.subr.mxu0 0.0
    %4491 = vmatpush2.msra.mxu0 0.0
    %4492 = vmatprep.subr.mxu0 0.0
    %4493 = vmatpush2.msra.mxu0 0.0
    %4494 = vmatprep.subr.mxu0 0.0
    %4495 = vmatpush2.msra.mxu0 0.0
    %4496 = vmatprep.subr.mxu0 0.0
    %4497 = vmatpush2.msra.mxu0 0.0
    %4498 = vmatprep.subr.mxu0 0.0
    %4499 = vmatpush2.msra.mxu0 0.0
    %4500 = vmatprep.subr.mxu0 0.0
    %4501 = vmatpush2.msra.mxu0 0.0
    %4502 = vmatprep.mubr.f32.mxu0 0.0
    %4503 = vmatmul.mubr.f32.gmra.mxu0 %v4409
    %v4504 = vpop.f32.mrf.mxu0
    %v4505 = vadd.f32 %v4406, %v4504
    %v4506 = vpop.f32.mrf.mxu0
    %4507 = vmatprep.mubr.f32.mxu0 0.0
    %4508 = vmatmul.mubr.f32.gmra.mxu0 %v4412
    %v4509 = vpop.f32.mrf.mxu0
    %v4510 = vadd.f32 %v4406, %v4509
    %v4511 = vpop.f32.mrf.mxu0
    %4512 = vmatprep.mubr.f32.mxu0 0.0
    %4513 = vmatmul.mubr.f32.gmra.mxu0 %v4415
    %v4514 = vpop.f32.mrf.mxu0
    %v4515 = vadd.f32 %v4406, %v4514
    %v4516 = vpop.f32.mrf.mxu0
    %4517 = vmatprep.mubr.f32.mxu0 0.0
    %4518 = vmatmul.mubr.f32.gmra.mxu0 %v4418
    %v4519 = vpop.f32.mrf.mxu0
    %v4520 = vadd.f32 %v4406, %v4519
    %v4521 = vpop.f32.mrf.mxu0
    %4522 = vmatprep.mubr.f32.mxu0 0.0
    %4523 = vmatmul.mubr.f32.gmra.mxu0 %v4421
    %v4524 = vpop.f32.mrf.mxu0
    %v4525 = vadd.f32 %v4406, %v4524
    %v4526 = vpop.f32.mrf.mxu0
    %4527 = vmatprep.mubr.f32.mxu0 0.0
    %4528 = vmatmul.mubr.f32.gmra.mxu0 %v4424
    %v4529 = vpop.f32.mrf.mxu0
    %v4530 = vadd.f32 %v4406, %v4529
    %v4531 = vpop.f32.mrf.mxu0
    %4532 = vmatprep.mubr.f32.mxu0 0.0
    %4533 = vmatmul.mubr.f32.gmra.mxu0 %v4427
    %v4534 = vpop.f32.mrf.mxu0
    %v4535 = vadd.f32 %v4406, %v4534
    %v4536 = vpop.f32.mrf.mxu0
    %4537 = vmatprep.mubr.f32.mxu0 0.0
    %4538 = vmatmul.mubr.f32.gmra.mxu0 %v4430
    %v4539 = vpop.f32.mrf.mxu0
    %v4540 = vadd.f32 %v4406, %v4539
    %v4541 = vpop.f32.mrf.mxu0
    %4542 = vmatprep.mubr.f32.mxu0 0.0
    %4543 = vmatmul.mubr.f32.gmra.mxu0 %v4433
    %v4544 = vpop.f32.mrf.mxu0
    %v4545 = vadd.f32 %v4406, %v4544
    %v4546 = vpop.f32.mrf.mxu0
    %4547 = vmatprep.mubr.f32.mxu0 0.0
    %4548 = vmatmul.mubr.f32.gmra.mxu0 %v4436
    %v4549 = vpop.f32.mrf.mxu0
    %v4550 = vadd.f32 %v4406, %v4549
    %v4551 = vpop.f32.mrf.mxu0
    %4552 = vdwg.mxu0
    %s4553 = scalar_lea.vmem %s6, 32
    %v4554 = vld [vmem:[%s4553] sm:$0xff]
    %v4555 = vld [vmem:[%s4553 + $0x8] sm:$0xff]
    %v4556 = vld [vmem:[%s4553 + $0x10] sm:$0xff]
    %v4557 = vld [vmem:[%s4553 + $0x18] sm:$0xff]
    %s4558 = scalar_lea.vmem %s7, 1
    %v4559 = vld [vmem:[%s4558] sm:$0x1]
    %v4561 = vlaneseq
    %v4562 = vshrl.u32 %v4561, 7
    %v4563 = vsub.s32 0, %v4562
    %v4564 = vrot.slane %v4559, %v4563
    %4566 = vmatprep.subr.mxu0 0.0
    %4567 = vmatpush1.msra.mxu0 0.0
    %4568 = vmatprep.subr.mxu0 0.0
    %4569 = vmatpush1.msra.mxu0 0.0
    %4570 = vmatprep.subr.mxu0 0.0
    %4571 = vmatpush1.msra.mxu0 0.0
    %4572 = vmatprep.subr.mxu0 0.0
    %4573 = vmatpush1.msra.mxu0 0.0
    %4574 = vmatprep.subr.mxu0 0.0
    %4575 = vmatpush1.msra.mxu0 0.0
    %4576 = vmatprep.subr.mxu0 0.0
    %4577 = vmatpush1.msra.mxu0 0.0
    %4578 = vmatprep.subr.mxu0 0.0
    %4579 = vmatpush1.msra.mxu0 0.0
    %4580 = vmatprep.subr.mxu0 0.0
    %4581 = vmatpush1.msra.mxu0 0.0
    %4582 = vmatprep.subr.mxu0 0.0
    %4583 = vmatpush1.msra.mxu0 0.0
    %4584 = vmatprep.subr.mxu0 0.0
    %4585 = vmatpush1.msra.mxu0 0.0
    %4586 = vmatprep.subr.mxu0 0.0
    %4587 = vmatpush1.msra.mxu0 0.0
    %4588 = vmatprep.subr.mxu0 0.0
    %4589 = vmatpush1.msra.mxu0 0.0
    %4590 = vmatprep.subr.mxu0 0.0
    %4591 = vmatpush1.msra.mxu0 %v4557
    %4592 = vmatprep.subr.mxu0 0.0
    %4593 = vmatpush1.msra.mxu0 %v4556
    %4594 = vmatprep.subr.mxu0 0.0
    %4595 = vmatpush1.msra.mxu0 %v4555
    %4596 = vmatprep.subr.mxu0 0.0
    %4597 = vmatpush1.msra.mxu0 %v4554
    %4598 = vmatprep.subr.mxu0 0.0
    %4599 = vmatpush2.msra.mxu0 0.0
    %4600 = vmatprep.subr.mxu0 0.0
    %4601 = vmatpush2.msra.mxu0 0.0
    %4602 = vmatprep.subr.mxu0 0.0
    %4603 = vmatpush2.msra.mxu0 0.0
    %4604 = vmatprep.subr.mxu0 0.0
    %4605 = vmatpush2.msra.mxu0 0.0
    %4606 = vmatprep.subr.mxu0 0.0
    %4607 = vmatpush2.msra.mxu0 0.0
    %4608 = vmatprep.subr.mxu0 0.0
    %4609 = vmatpush2.msra.mxu0 0.0
    %4610 = vmatprep.subr.mxu0 0.0
    %4611 = vmatpush2.msra.mxu0 0.0
    %4612 = vmatprep.subr.mxu0 0.0
    %4613 = vmatpush2.msra.mxu0 0.0
    %4614 = vmatprep.subr.mxu0 0.0
    %4615 = vmatpush2.msra.mxu0 0.0
    %4616 = vmatprep.subr.mxu0 0.0
    %4617 = vmatpush2.msra.mxu0 0.0
    %4618 = vmatprep.subr.mxu0 0.0
    %4619 = vmatpush2.msra.mxu0 0.0
    %4620 = vmatprep.subr.mxu0 0.0
    %4621 = vmatpush2.msra.mxu0 0.0
    %4622 = vmatprep.subr.mxu0 0.0
    %4623 = vmatpush2.msra.mxu0 0.0
    %4624 = vmatprep.subr.mxu0 0.0
    %4625 = vmatpush2.msra.mxu0 0.0
    %4626 = vmatprep.subr.mxu0 0.0
    %4627 = vmatpush2.msra.mxu0 0.0
    %4628 = vmatprep.subr.mxu0 0.0
    %4629 = vmatpush2.msra.mxu0 0.0
    %4630 = vmatprep.mubr.f32.mxu0 0.0
    %4631 = vmatmul.mubr.f32.gmra.mxu0 %v4409
    %v4632 = vpop.f32.mrf.mxu0
    %v4633 = vadd.f32 %v4564, %v4632
    %v4634 = vpop.f32.mrf.mxu0
    %4635 = vmatprep.mubr.f32.mxu0 0.0
    %4636 = vmatmul.mubr.f32.gmra.mxu0 %v4412
    %v4637 = vpop.f32.mrf.mxu0
    %v4638 = vadd.f32 %v4564, %v4637
    %v4639 = vpop.f32.mrf.mxu0
    %4640 = vmatprep.mubr.f32.mxu0 0.0
    %4641 = vmatmul.mubr.f32.gmra.mxu0 %v4415
    %v4642 = vpop.f32.mrf.mxu0
    %v4643 = vadd.f32 %v4564, %v4642
    %v4644 = vpop.f32.mrf.mxu0
    %4645 = vmatprep.mubr.f32.mxu0 0.0
    %4646 = vmatmul.mubr.f32.gmra.mxu0 %v4418
    %v4647 = vpop.f32.mrf.mxu0
    %v4648 = vadd.f32 %v4564, %v4647
    %v4649 = vpop.f32.mrf.mxu0
    %4650 = vmatprep.mubr.f32.mxu0 0.0
    %4651 = vmatmul.mubr.f32.gmra.mxu0 %v4421
    %v4652 = vpop.f32.mrf.mxu0
    %v4653 = vadd.f32 %v4564, %v4652
    %v4654 = vpop.f32.mrf.mxu0
    %4655 = vmatprep.mubr.f32.mxu0 0.0
    %4656 = vmatmul.mubr.f32.gmra.mxu0 %v4424
    %v4657 = vpop.f32.mrf.mxu0
    %v4658 = vadd.f32 %v4564, %v4657
    %v4659 = vpop.f32.mrf.mxu0
    %4660 = vmatprep.mubr.f32.mxu0 0.0
    %4661 = vmatmul.mubr.f32.gmra.mxu0 %v4427
    %v4662 = vpop.f32.mrf.mxu0
    %v4663 = vadd.f32 %v4564, %v4662
    %v4664 = vpop.f32.mrf.mxu0
    %4665 = vmatprep.mubr.f32.mxu0 0.0
    %4666 = vmatmul.mubr.f32.gmra.mxu0 %v4430
    %v4667 = vpop.f32.mrf.mxu0
    %v4668 = vadd.f32 %v4564, %v4667
    %v4669 = vpop.f32.mrf.mxu0
    %4670 = vmatprep.mubr.f32.mxu0 0.0
    %4671 = vmatmul.mubr.f32.gmra.mxu0 %v4433
    %v4672 = vpop.f32.mrf.mxu0
    %v4673 = vadd.f32 %v4564, %v4672
    %v4674 = vpop.f32.mrf.mxu0
    %4675 = vmatprep.mubr.f32.mxu0 0.0
    %4676 = vmatmul.mubr.f32.gmra.mxu0 %v4436
    %v4677 = vpop.f32.mrf.mxu0
    %v4678 = vadd.f32 %v4564, %v4677
    %v4679 = vpop.f32.mrf.mxu0
    %4680 = vdwg.mxu0
    %s4681 = scalar_lea.vmem %s8, 32
    %v4682 = vld [vmem:[%s4681] sm:$0xff]
    %v4683 = vld [vmem:[%s4681 + $0x8] sm:$0xff]
    %v4684 = vld [vmem:[%s4681 + $0x10] sm:$0xff]
    %v4685 = vld [vmem:[%s4681 + $0x18] sm:$0xff]
    %s4686 = scalar_lea.vmem %s9, 1
    %v4687 = vld [vmem:[%s4686] sm:$0x1]
    %v4689 = vlaneseq
    %v4690 = vshrl.u32 %v4689, 7
    %v4691 = vsub.s32 0, %v4690
    %v4692 = vrot.slane %v4687, %v4691
    %4694 = vmatprep.subr.mxu0 0.0
    %4695 = vmatpush1.msra.mxu0 0.0
    %4696 = vmatprep.subr.mxu0 0.0
    %4697 = vmatpush1.msra.mxu0 0.0
    %4698 = vmatprep.subr.mxu0 0.0
    %4699 = vmatpush1.msra.mxu0 0.0
    %4700 = vmatprep.subr.mxu0 0.0
    %4701 = vmatpush1.msra.mxu0 0.0
    %4702 = vmatprep.subr.mxu0 0.0
    %4703 = vmatpush1.msra.mxu0 0.0
    %4704 = vmatprep.subr.mxu0 0.0
    %4705 = vmatpush1.msra.mxu0 0.0
    %4706 = vmatprep.subr.mxu0 0.0
    %4707 = vmatpush1.msra.mxu0 0.0
    %4708 = vmatprep.subr.mxu0 0.0
    %4709 = vmatpush1.msra.mxu0 0.0
    %4710 = vmatprep.subr.mxu0 0.0
    %4711 = vmatpush1.msra.mxu0 0.0
    %4712 = vmatprep.subr.mxu0 0.0
    %4713 = vmatpush1.msra.mxu0 0.0
    %4714 = vmatprep.subr.mxu0 0.0
    %4715 = vmatpush1.msra.mxu0 0.0
    %4716 = vmatprep.subr.mxu0 0.0
    %4717 = vmatpush1.msra.mxu0 0.0
    %4718 = vmatprep.subr.mxu0 0.0
    %4719 = vmatpush1.msra.mxu0 %v4685
    %4720 = vmatprep.subr.mxu0 0.0
    %4721 = vmatpush1.msra.mxu0 %v4684
    %4722 = vmatprep.subr.mxu0 0.0
    %4723 = vmatpush1.msra.mxu0 %v4683
    %4724 = vmatprep.subr.mxu0 0.0
    %4725 = vmatpush1.msra.mxu0 %v4682
    %4726 = vmatprep.subr.mxu0 0.0
    %4727 = vmatpush2.msra.mxu0 0.0
    %4728 = vmatprep.subr.mxu0 0.0
    %4729 = vmatpush2.msra.mxu0 0.0
    %4730 = vmatprep.subr.mxu0 0.0
    %4731 = vmatpush2.msra.mxu0 0.0
    %4732 = vmatprep.subr.mxu0 0.0
    %4733 = vmatpush2.msra.mxu0 0.0
    %4734 = vmatprep.subr.mxu0 0.0
    %4735 = vmatpush2.msra.mxu0 0.0
    %4736 = vmatprep.subr.mxu0 0.0
    %4737 = vmatpush2.msra.mxu0 0.0
    %4738 = vmatprep.subr.mxu0 0.0
    %4739 = vmatpush2.msra.mxu0 0.0
    %4740 = vmatprep.subr.mxu0 0.0
    %4741 = vmatpush2.msra.mxu0 0.0
    %4742 = vmatprep.subr.mxu0 0.0
    %4743 = vmatpush2.msra.mxu0 0.0
    %4744 = vmatprep.subr.mxu0 0.0
    %4745 = vmatpush2.msra.mxu0 0.0
    %4746 = vmatprep.subr.mxu0 0.0
    %4747 = vmatpush2.msra.mxu0 0.0
    %4748 = vmatprep.subr.mxu0 0.0
    %4749 = vmatpush2.msra.mxu0 0.0
    %4750 = vmatprep.subr.mxu0 0.0
    %4751 = vmatpush2.msra.mxu0 0.0
    %4752 = vmatprep.subr.mxu0 0.0
    %4753 = vmatpush2.msra.mxu0 0.0
    %4754 = vmatprep.subr.mxu0 0.0
    %4755 = vmatpush2.msra.mxu0 0.0
    %4756 = vmatprep.subr.mxu0 0.0
    %4757 = vmatpush2.msra.mxu0 0.0
    %4758 = vmatprep.mubr.f32.mxu0 0.0
    %4759 = vmatmul.mubr.f32.gmra.mxu0 %v4409
    %v4760 = vpop.f32.mrf.mxu0
    %v4761 = vadd.f32 %v4692, %v4760
    %v4762 = vpop.f32.mrf.mxu0
    %4763 = vmatprep.mubr.f32.mxu0 0.0
    %4764 = vmatmul.mubr.f32.gmra.mxu0 %v4412
    %v4765 = vpop.f32.mrf.mxu0
    %v4766 = vadd.f32 %v4692, %v4765
    %v4767 = vpop.f32.mrf.mxu0
    %4768 = vmatprep.mubr.f32.mxu0 0.0
    %4769 = vmatmul.mubr.f32.gmra.mxu0 %v4415
    %v4770 = vpop.f32.mrf.mxu0
    %v4771 = vadd.f32 %v4692, %v4770
    %v4772 = vpop.f32.mrf.mxu0
    %4773 = vmatprep.mubr.f32.mxu0 0.0
    %4774 = vmatmul.mubr.f32.gmra.mxu0 %v4418
    %v4775 = vpop.f32.mrf.mxu0
    %v4776 = vadd.f32 %v4692, %v4775
    %v4777 = vpop.f32.mrf.mxu0
    %4778 = vmatprep.mubr.f32.mxu0 0.0
    %4779 = vmatmul.mubr.f32.gmra.mxu0 %v4421
    %v4780 = vpop.f32.mrf.mxu0
    %v4781 = vadd.f32 %v4692, %v4780
    %v4782 = vpop.f32.mrf.mxu0
    %4783 = vmatprep.mubr.f32.mxu0 0.0
    %4784 = vmatmul.mubr.f32.gmra.mxu0 %v4424
    %v4785 = vpop.f32.mrf.mxu0
    %v4786 = vadd.f32 %v4692, %v4785
    %v4787 = vpop.f32.mrf.mxu0
    %4788 = vmatprep.mubr.f32.mxu0 0.0
    %4789 = vmatmul.mubr.f32.gmra.mxu0 %v4427
    %v4790 = vpop.f32.mrf.mxu0
    %v4791 = vadd.f32 %v4692, %v4790
    %v4792 = vpop.f32.mrf.mxu0
    %4793 = vmatprep.mubr.f32.mxu0 0.0
    %4794 = vmatmul.mubr.f32.gmra.mxu0 %v4430
    %v4795 = vpop.f32.mrf.mxu0
    %v4796 = vadd.f32 %v4692, %v4795
    %v4797 = vpop.f32.mrf.mxu0
    %4798 = vmatprep.mubr.f32.mxu0 0.0
    %4799 = vmatmul.mubr.f32.gmra.mxu0 %v4433
    %v4800 = vpop.f32.mrf.mxu0
    %v4801 = vadd.f32 %v4692, %v4800
    %v4802 = vpop.f32.mrf.mxu0
    %4803 = vmatprep.mubr.f32.mxu0 0.0
    %4804 = vmatmul.mubr.f32.gmra.mxu0 %v4436
    %v4805 = vpop.f32.mrf.mxu0
    %v4806 = vadd.f32 %v4692, %v4805
    %v4807 = vpop.f32.mrf.mxu0
    %4808 = vdwg.mxu0
    %v4810 = vsel %vm658, %v4505, 0
    %v4813 = vsel %vm658, %v4510, 0
    %v4816 = vsel %vm658, %v4515, 0
    %v4819 = vsel %vm658, %v4520, 0
    %v4822 = vsel %vm658, %v4525, 0
    %v4825 = vsel %vm658, %v4633, 0
    %v4828 = vsel %vm658, %v4638, 0
    %v4831 = vsel %vm658, %v4643, 0
    %v4834 = vsel %vm658, %v4648, 0
    %v4837 = vsel %vm658, %v4653, 0
    %4839 = vmatprep.subr.mxu0 0.0
    %4840 = vmatpush1.xpose.msra.mxu0 0.0
    %4841 = vmatprep.subr.mxu0 0.0
    %4842 = vmatpush1.xpose.msra.mxu0 0.0
    %4843 = vmatprep.subr.mxu0 0.0
    %4844 = vmatpush1.xpose.msra.mxu0 0.0
    %4845 = vmatprep.subr.mxu0 0.0
    %4846 = vmatpush1.xpose.msra.mxu0 0.0
    %4847 = vmatprep.subr.mxu0 0.0
    %4848 = vmatpush1.xpose.msra.mxu0 0.0
    %4849 = vmatprep.subr.mxu0 0.0
    %4850 = vmatpush1.xpose.msra.mxu0 0.0
    %4851 = vmatprep.subr.mxu0 0.0
    %4852 = vmatpush1.xpose.msra.mxu0 0.0
    %4853 = vmatprep.subr.mxu0 0.0
    %4854 = vmatpush1.xpose.msra.mxu0 0.0
    %4855 = vmatprep.subr.mxu0 0.0
    %4856 = vmatpush1.xpose.msra.mxu0 0.0
    %4857 = vmatprep.subr.mxu0 0.0
    %4858 = vmatpush1.xpose.msra.mxu0 0.0
    %4859 = vmatprep.subr.mxu0 0.0
    %4860 = vmatpush1.xpose.msra.mxu0 0.0
    %4861 = vmatprep.subr.mxu0 0.0
    %4862 = vmatpush1.xpose.msra.mxu0 %v4837
    %4863 = vmatprep.subr.mxu0 0.0
    %4864 = vmatpush1.xpose.msra.mxu0 %v4834
    %4865 = vmatprep.subr.mxu0 0.0
    %4866 = vmatpush1.xpose.msra.mxu0 %v4831
    %4867 = vmatprep.subr.mxu0 0.0
    %4868 = vmatpush1.xpose.msra.mxu0 %v4828
    %4869 = vmatprep.subr.mxu0 0.0
    %4870 = vmatpush1.xpose.msra.mxu0 %v4825
    %4871 = vmatprep.subr.mxu0 0.0
    %4872 = vmatpush2.xpose.msra.mxu0 0.0
    %4873 = vmatprep.subr.mxu0 0.0
    %4874 = vmatpush2.xpose.msra.mxu0 0.0
    %4875 = vmatprep.subr.mxu0 0.0
    %4876 = vmatpush2.xpose.msra.mxu0 0.0
    %4877 = vmatprep.subr.mxu0 0.0
    %4878 = vmatpush2.xpose.msra.mxu0 0.0
    %4879 = vmatprep.subr.mxu0 0.0
    %4880 = vmatpush2.xpose.msra.mxu0 0.0
    %4881 = vmatprep.subr.mxu0 0.0
    %4882 = vmatpush2.xpose.msra.mxu0 0.0
    %4883 = vmatprep.subr.mxu0 0.0
    %4884 = vmatpush2.xpose.msra.mxu0 0.0
    %4885 = vmatprep.subr.mxu0 0.0
    %4886 = vmatpush2.xpose.msra.mxu0 0.0
    %4887 = vmatprep.subr.mxu0 0.0
    %4888 = vmatpush2.xpose.msra.mxu0 0.0
    %4889 = vmatprep.subr.mxu0 0.0
    %4890 = vmatpush2.xpose.msra.mxu0 0.0
    %4891 = vmatprep.subr.mxu0 0.0
    %4892 = vmatpush2.xpose.msra.mxu0 0.0
    %4893 = vmatprep.subr.mxu0 0.0
    %4894 = vmatpush2.xpose.msra.mxu0 0.0
    %4895 = vmatprep.subr.mxu0 0.0
    %4896 = vmatpush2.xpose.msra.mxu0 0.0
    %4897 = vmatprep.subr.mxu0 0.0
    %4898 = vmatpush2.xpose.msra.mxu0 0.0
    %4899 = vmatprep.subr.mxu0 0.0
    %4900 = vmatpush2.xpose.msra.mxu0 0.0
    %4901 = vmatprep.subr.mxu0 0.0
    %4902 = vmatpush2.xpose.msra.mxu0 0.0
    %4903 = vmatprep.mubr.f32.mxu0 0.0
    %4904 = vmatmul.mubr.f32.gmra.mxu0 %v4810
    %v4905 = vpop.f32.mrf.mxu0
    %v4906 = vadd.f32 0.0, %v4905
    %v4907 = vpop.f32.mrf.mxu0
    %4908 = vmatprep.mubr.f32.mxu0 0.0
    %4909 = vmatmul.mubr.f32.gmra.mxu0 %v4813
    %v4910 = vpop.f32.mrf.mxu0
    %v4911 = vadd.f32 0.0, %v4910
    %v4912 = vpop.f32.mrf.mxu0
    %4913 = vmatprep.mubr.f32.mxu0 0.0
    %4914 = vmatmul.mubr.f32.gmra.mxu0 %v4816
    %v4915 = vpop.f32.mrf.mxu0
    %v4916 = vadd.f32 0.0, %v4915
    %v4917 = vpop.f32.mrf.mxu0
    %4918 = vmatprep.mubr.f32.mxu0 0.0
    %4919 = vmatmul.mubr.f32.gmra.mxu0 %v4819
    %v4920 = vpop.f32.mrf.mxu0
    %v4921 = vadd.f32 0.0, %v4920
    %v4922 = vpop.f32.mrf.mxu0
    %4923 = vmatprep.mubr.f32.mxu0 0.0
    %4924 = vmatmul.mubr.f32.gmra.mxu0 %v4822
    %v4925 = vpop.f32.mrf.mxu0
    %v4926 = vadd.f32 0.0, %v4925
    %v4927 = vpop.f32.mrf.mxu0
    %4928 = vdwg.mxu0
    %v4930 = vsel %vm658, %v4530, 0
    %v4933 = vsel %vm658, %v4535, 0
    %v4936 = vsel %vm658, %v4540, 0
    %v4939 = vsel %vm658, %v4545, 0
    %v4942 = vsel %vm658, %v4550, 0
    %v4945 = vsel %vm658, %v4658, 0
    %v4948 = vsel %vm658, %v4663, 0
    %v4951 = vsel %vm658, %v4668, 0
    %v4954 = vsel %vm658, %v4673, 0
    %v4957 = vsel %vm658, %v4678, 0
    %4959 = vmatprep.subr.mxu0 0.0
    %4960 = vmatpush1.xpose.msra.mxu0 0.0
    %4961 = vmatprep.subr.mxu0 0.0
    %4962 = vmatpush1.xpose.msra.mxu0 0.0
    %4963 = vmatprep.subr.mxu0 0.0
    %4964 = vmatpush1.xpose.msra.mxu0 0.0
    %4965 = vmatprep.subr.mxu0 0.0
    %4966 = vmatpush1.xpose.msra.mxu0 0.0
    %4967 = vmatprep.subr.mxu0 0.0
    %4968 = vmatpush1.xpose.msra.mxu0 0.0
    %4969 = vmatprep.subr.mxu0 0.0
    %4970 = vmatpush1.xpose.msra.mxu0 0.0
    %4971 = vmatprep.subr.mxu0 0.0
    %4972 = vmatpush1.xpose.msra.mxu0 0.0
    %4973 = vmatprep.subr.mxu0 0.0
    %4974 = vmatpush1.xpose.msra.mxu0 0.0
    %4975 = vmatprep.subr.mxu0 0.0
    %4976 = vmatpush1.xpose.msra.mxu0 0.0
    %4977 = vmatprep.subr.mxu0 0.0
    %4978 = vmatpush1.xpose.msra.mxu0 0.0
    %4979 = vmatprep.subr.mxu0 0.0
    %4980 = vmatpush1.xpose.msra.mxu0 0.0
    %4981 = vmatprep.subr.mxu0 0.0
    %4982 = vmatpush1.xpose.msra.mxu0 %v4957
    %4983 = vmatprep.subr.mxu0 0.0
    %4984 = vmatpush1.xpose.msra.mxu0 %v4954
    %4985 = vmatprep.subr.mxu0 0.0
    %4986 = vmatpush1.xpose.msra.mxu0 %v4951
    %4987 = vmatprep.subr.mxu0 0.0
    %4988 = vmatpush1.xpose.msra.mxu0 %v4948
    %4989 = vmatprep.subr.mxu0 0.0
    %4990 = vmatpush1.xpose.msra.mxu0 %v4945
    %4991 = vmatprep.subr.mxu0 0.0
    %4992 = vmatpush2.xpose.msra.mxu0 0.0
    %4993 = vmatprep.subr.mxu0 0.0
    %4994 = vmatpush2.xpose.msra.mxu0 0.0
    %4995 = vmatprep.subr.mxu0 0.0
    %4996 = vmatpush2.xpose.msra.mxu0 0.0
    %4997 = vmatprep.subr.mxu0 0.0
    %4998 = vmatpush2.xpose.msra.mxu0 0.0
    %4999 = vmatprep.subr.mxu0 0.0
    %5000 = vmatpush2.xpose.msra.mxu0 0.0
    %5001 = vmatprep.subr.mxu0 0.0
    %5002 = vmatpush2.xpose.msra.mxu0 0.0
    %5003 = vmatprep.subr.mxu0 0.0
    %5004 = vmatpush2.xpose.msra.mxu0 0.0
    %5005 = vmatprep.subr.mxu0 0.0
    %5006 = vmatpush2.xpose.msra.mxu0 0.0
    %5007 = vmatprep.subr.mxu0 0.0
    %5008 = vmatpush2.xpose.msra.mxu0 0.0
    %5009 = vmatprep.subr.mxu0 0.0
    %5010 = vmatpush2.xpose.msra.mxu0 0.0
    %5011 = vmatprep.subr.mxu0 0.0
    %5012 = vmatpush2.xpose.msra.mxu0 0.0
    %5013 = vmatprep.subr.mxu0 0.0
    %5014 = vmatpush2.xpose.msra.mxu0 0.0
    %5015 = vmatprep.subr.mxu0 0.0
    %5016 = vmatpush2.xpose.msra.mxu0 0.0
    %5017 = vmatprep.subr.mxu0 0.0
    %5018 = vmatpush2.xpose.msra.mxu0 0.0
    %5019 = vmatprep.subr.mxu0 0.0
    %5020 = vmatpush2.xpose.msra.mxu0 0.0
    %5021 = vmatprep.subr.mxu0 0.0
    %5022 = vmatpush2.xpose.msra.mxu0 0.0
    %5023 = vmatprep.mubr.f32.mxu0 0.0
    %5024 = vmatmul.mubr.f32.gmra.mxu0 %v4930
    %v5025 = vpop.f32.mrf.mxu0
    %v5026 = vadd.f32 0.0, %v5025
    %v5027 = vpop.f32.mrf.mxu0
    %5028 = vmatprep.mubr.f32.mxu0 0.0
    %5029 = vmatmul.mubr.f32.gmra.mxu0 %v4933
    %v5030 = vpop.f32.mrf.mxu0
    %v5031 = vadd.f32 0.0, %v5030
    %v5032 = vpop.f32.mrf.mxu0
    %5033 = vmatprep.mubr.f32.mxu0 0.0
    %5034 = vmatmul.mubr.f32.gmra.mxu0 %v4936
    %v5035 = vpop.f32.mrf.mxu0
    %v5036 = vadd.f32 0.0, %v5035
    %v5037 = vpop.f32.mrf.mxu0
    %5038 = vmatprep.mubr.f32.mxu0 0.0
    %5039 = vmatmul.mubr.f32.gmra.mxu0 %v4939
    %v5040 = vpop.f32.mrf.mxu0
    %v5041 = vadd.f32 0.0, %v5040
    %v5042 = vpop.f32.mrf.mxu0
    %5043 = vmatprep.mubr.f32.mxu0 0.0
    %5044 = vmatmul.mubr.f32.gmra.mxu0 %v4942
    %v5045 = vpop.f32.mrf.mxu0
    %v5046 = vadd.f32 0.0, %v5045
    %v5047 = vpop.f32.mrf.mxu0
    %5048 = vdwg.mxu0
    %v5049 = vmul.f32 %v4906, 0.35355338
    %v5050 = vmul.f32 %v4911, 0.35355338
    %v5051 = vmul.f32 %v4916, 0.35355338
    %v5052 = vmul.f32 %v4921, 0.35355338
    %v5053 = vmul.f32 %v4926, 0.35355338
    %v5054 = vmul.f32 %v5026, 0.35355338
    %v5055 = vmul.f32 %v5031, 0.35355338
    %v5056 = vmul.f32 %v5036, 0.35355338
    %v5057 = vmul.f32 %v5041, 0.35355338
    %v5058 = vmul.f32 %v5046, 0.35355338
    %v5059 = vadd.f32 %v5049, %v77
    %v5060 = vadd.f32 %v5050, %v77
    %v5061 = vadd.f32 %v5051, %v77
    %v5062 = vadd.f32 %v5052, %v77
    %v5063 = vadd.f32 %v5053, %v77
    %v5064 = vadd.f32 %v5054, %v81
    %v5065 = vadd.f32 %v5055, %v81
    %v5066 = vadd.f32 %v5056, %v81
    %v5067 = vadd.f32 %v5057, %v81
    %v5068 = vadd.f32 %v5058, %v81
    %v5069 = vsel %vm919, %v5059, -inf
    %5070 = vmax.xlane.f32.xlu0 %v5069
    %v5071 = vpop.xlane.xlu0 %5070
    %v5072 = vsel %vm919, %v5060, -inf
    %5073 = vmax.xlane.f32.xlu0 %v5072
    %v5074 = vpop.xlane.xlu0 %5073
    %v5075 = vsel %vm919, %v5061, -inf
    %5076 = vmax.xlane.f32.xlu0 %v5075
    %v5077 = vpop.xlane.xlu0 %5076
    %v5078 = vsel %vm919, %v5062, -inf
    %5079 = vmax.xlane.f32.xlu0 %v5078
    %v5080 = vpop.xlane.xlu0 %5079
    %v5081 = vsel %vm919, %v5063, -inf
    %5082 = vmax.xlane.f32.xlu0 %v5081
    %v5083 = vpop.xlane.xlu0 %5082
    %v5084 = vsel %vm919, %v5064, -inf
    %5085 = vmax.xlane.f32.xlu0 %v5084
    %v5086 = vpop.xlane.xlu0 %5085
    %v5087 = vsel %vm919, %v5065, -inf
    %5088 = vmax.xlane.f32.xlu0 %v5087
    %v5089 = vpop.xlane.xlu0 %5088
    %v5090 = vsel %vm919, %v5066, -inf
    %5091 = vmax.xlane.f32.xlu0 %v5090
    %v5092 = vpop.xlane.xlu0 %5091
    %v5093 = vsel %vm919, %v5067, -inf
    %5094 = vmax.xlane.f32.xlu0 %v5093
    %v5095 = vpop.xlane.xlu0 %5094
    %v5096 = vsel %vm919, %v5068, -inf
    %5097 = vmax.xlane.f32.xlu0 %v5096
    %v5098 = vpop.xlane.xlu0 %5097
    %v5099 = vsub.f32 %v5059, %v5071
    %v5100 = vsub.f32 %v5060, %v5074
    %v5101 = vsub.f32 %v5061, %v5077
    %v5102 = vsub.f32 %v5062, %v5080
    %v5103 = vsub.f32 %v5063, %v5083
    %v5104 = vsub.f32 %v5064, %v5086
    %v5105 = vsub.f32 %v5065, %v5089
    %v5106 = vsub.f32 %v5066, %v5092
    %v5107 = vsub.f32 %v5067, %v5095
    %v5108 = vsub.f32 %v5068, %v5098
    %v5109 = vmul.f32 %v5099, 1.442695
    %v5110 = vpow.pop %v5109
    %v5111 = vmul.f32 %v5100, 1.442695
    %v5112 = vpow.pop %v5111
    %v5113 = vmul.f32 %v5101, 1.442695
    %v5114 = vpow.pop %v5113
    %v5115 = vmul.f32 %v5102, 1.442695
    %v5116 = vpow.pop %v5115
    %v5117 = vmul.f32 %v5103, 1.442695
    %v5118 = vpow.pop %v5117
    %v5119 = vmul.f32 %v5104, 1.442695
    %v5120 = vpow.pop %v5119
    %v5121 = vmul.f32 %v5105, 1.442695
    %v5122 = vpow.pop %v5121
    %v5123 = vmul.f32 %v5106, 1.442695
    %v5124 = vpow.pop %v5123
    %v5125 = vmul.f32 %v5107, 1.442695
    %v5126 = vpow.pop %v5125
    %v5127 = vmul.f32 %v5108, 1.442695
    %v5128 = vpow.pop %v5127
    %v5129 = vsel %vm919, %v5110, 0.0
    %5130 = vadd.xlane.f32.xlu0 %v5129
    %v5131 = vpop.xlane.xlu0 %5130
    %v5132 = vsel %vm919, %v5112, 0.0
    %5133 = vadd.xlane.f32.xlu0 %v5132
    %v5134 = vpop.xlane.xlu0 %5133
    %v5135 = vsel %vm919, %v5114, 0.0
    %5136 = vadd.xlane.f32.xlu0 %v5135
    %v5137 = vpop.xlane.xlu0 %5136
    %v5138 = vsel %vm919, %v5116, 0.0
    %5139 = vadd.xlane.f32.xlu0 %v5138
    %v5140 = vpop.xlane.xlu0 %5139
    %v5141 = vsel %vm919, %v5118, 0.0
    %5142 = vadd.xlane.f32.xlu0 %v5141
    %v5143 = vpop.xlane.xlu0 %5142
    %v5144 = vsel %vm919, %v5120, 0.0
    %5145 = vadd.xlane.f32.xlu0 %v5144
    %v5146 = vpop.xlane.xlu0 %5145
    %v5147 = vsel %vm919, %v5122, 0.0
    %5148 = vadd.xlane.f32.xlu0 %v5147
    %v5149 = vpop.xlane.xlu0 %5148
    %v5150 = vsel %vm919, %v5124, 0.0
    %5151 = vadd.xlane.f32.xlu0 %v5150
    %v5152 = vpop.xlane.xlu0 %5151
    %v5153 = vsel %vm919, %v5126, 0.0
    %5154 = vadd.xlane.f32.xlu0 %v5153
    %v5155 = vpop.xlane.xlu0 %5154
    %v5156 = vsel %vm919, %v5128, 0.0
    %5157 = vadd.xlane.f32.xlu0 %v5156
    %v5158 = vpop.xlane.xlu0 %5157
    %v5159 = vrcp.pop %v5131
    %v5160 = vrcp.pop %v5134
    %v5161 = vrcp.pop %v5137
    %v5162 = vrcp.pop %v5140
    %v5163 = vrcp.pop %v5143
    %v5164 = vrcp.pop %v5146
    %v5165 = vrcp.pop %v5149
    %v5166 = vrcp.pop %v5152
    %v5167 = vrcp.pop %v5155
    %v5168 = vrcp.pop %v5158
    %v5169 = vmul.f32 %v5110, %v5159
    %v5170 = vmul.f32 %v5112, %v5160
    %v5171 = vmul.f32 %v5114, %v5161
    %v5172 = vmul.f32 %v5116, %v5162
    %v5173 = vmul.f32 %v5118, %v5163
    %v5174 = vmul.f32 %v5120, %v5164
    %v5175 = vmul.f32 %v5122, %v5165
    %v5176 = vmul.f32 %v5124, %v5166
    %v5177 = vmul.f32 %v5126, %v5167
    %v5178 = vmul.f32 %v5128, %v5168
    %s5179 = scalar_lea.vmem [#allocation2], 320
    %5180 = vst.msk [vmem:[%s5179] sm:$0xff] %vm919, %v5169
    %5181 = vst.msk [vmem:[%s5179 + $0x8] sm:$0xff] %vm919, %v5170
    %5182 = vst.msk [vmem:[%s5179 + $0x10] sm:$0xff] %vm919, %v5171
    %5183 = vst.msk [vmem:[%s5179 + $0x18] sm:$0xff] %vm919, %v5172
    %5184 = vst.msk [vmem:[%s5179 + $0x20] sm:$0xff] %vm919, %v5173
    %s5185 = scalar_lea.vmem [#allocation2], 480
    %5186 = vst.msk [vmem:[%s5185] sm:$0xff] %vm919, %v5174
    %5187 = vst.msk [vmem:[%s5185 + $0x8] sm:$0xff] %vm919, %v5175
    %5188 = vst.msk [vmem:[%s5185 + $0x10] sm:$0xff] %vm919, %v5176
    %5189 = vst.msk [vmem:[%s5185 + $0x18] sm:$0xff] %vm919, %v5177
    %5190 = vst.msk [vmem:[%s5185 + $0x20] sm:$0xff] %vm919, %v5178
    %v5192 = vsel %vm919, %v5169, 0
    %v5195 = vsel %vm919, %v5170, 0
    %v5198 = vsel %vm919, %v5171, 0
    %v5201 = vsel %vm919, %v5172, 0
    %v5204 = vsel %vm919, %v5173, 0
    %5206 = vmatprep.subr.mxu0 0.0
    %5207 = vmatpush1.msra.mxu0 0.0
    %5208 = vmatprep.subr.mxu0 0.0
    %5209 = vmatpush1.msra.mxu0 0.0
    %5210 = vmatprep.subr.mxu0 0.0
    %5211 = vmatpush1.msra.mxu0 0.0
    %5212 = vmatprep.subr.mxu0 0.0
    %5213 = vmatpush1.msra.mxu0 0.0
    %5214 = vmatprep.subr.mxu0 0.0
    %5215 = vmatpush1.msra.mxu0 0.0
    %5216 = vmatprep.subr.mxu0 0.0
    %5217 = vmatpush1.msra.mxu0 0.0
    %5218 = vmatprep.subr.mxu0 0.0
    %5219 = vmatpush1.msra.mxu0 0.0
    %5220 = vmatprep.subr.mxu0 0.0
    %5221 = vmatpush1.msra.mxu0 0.0
    %5222 = vmatprep.subr.mxu0 0.0
    %5223 = vmatpush1.msra.mxu0 0.0
    %5224 = vmatprep.subr.mxu0 0.0
    %5225 = vmatpush1.msra.mxu0 0.0
    %5226 = vmatprep.subr.mxu0 0.0
    %5227 = vmatpush1.msra.mxu0 0.0
    %5228 = vmatprep.subr.mxu0 0.0
    %5229 = vmatpush1.msra.mxu0 %v4781
    %5230 = vmatprep.subr.mxu0 0.0
    %5231 = vmatpush1.msra.mxu0 %v4776
    %5232 = vmatprep.subr.mxu0 0.0
    %5233 = vmatpush1.msra.mxu0 %v4771
    %5234 = vmatprep.subr.mxu0 0.0
    %5235 = vmatpush1.msra.mxu0 %v4766
    %5236 = vmatprep.subr.mxu0 0.0
    %5237 = vmatpush1.msra.mxu0 %v4761
    %5238 = vmatprep.subr.mxu0 0.0
    %5239 = vmatpush2.msra.mxu0 0.0
    %5240 = vmatprep.subr.mxu0 0.0
    %5241 = vmatpush2.msra.mxu0 0.0
    %5242 = vmatprep.subr.mxu0 0.0
    %5243 = vmatpush2.msra.mxu0 0.0
    %5244 = vmatprep.subr.mxu0 0.0
    %5245 = vmatpush2.msra.mxu0 0.0
    %5246 = vmatprep.subr.mxu0 0.0
    %5247 = vmatpush2.msra.mxu0 0.0
    %5248 = vmatprep.subr.mxu0 0.0
    %5249 = vmatpush2.msra.mxu0 0.0
    %5250 = vmatprep.subr.mxu0 0.0
    %5251 = vmatpush2.msra.mxu0 0.0
    %5252 = vmatprep.subr.mxu0 0.0
    %5253 = vmatpush2.msra.mxu0 0.0
    %5254 = vmatprep.subr.mxu0 0.0
    %5255 = vmatpush2.msra.mxu0 0.0
    %5256 = vmatprep.subr.mxu0 0.0
    %5257 = vmatpush2.msra.mxu0 0.0
    %5258 = vmatprep.subr.mxu0 0.0
    %5259 = vmatpush2.msra.mxu0 0.0
    %5260 = vmatprep.subr.mxu0 0.0
    %5261 = vmatpush2.msra.mxu0 0.0
    %5262 = vmatprep.subr.mxu0 0.0
    %5263 = vmatpush2.msra.mxu0 0.0
    %5264 = vmatprep.subr.mxu0 0.0
    %5265 = vmatpush2.msra.mxu0 0.0
    %5266 = vmatprep.subr.mxu0 0.0
    %5267 = vmatpush2.msra.mxu0 0.0
    %5268 = vmatprep.subr.mxu0 0.0
    %5269 = vmatpush2.msra.mxu0 0.0
    %5270 = vmatprep.mubr.f32.mxu0 0.0
    %5271 = vmatmul.mubr.f32.gmra.mxu0 %v5192
    %v5272 = vpop.f32.mrf.mxu0
    %v5273 = vadd.f32 0.0, %v5272
    %v5274 = vpop.f32.mrf.mxu0
    %5275 = vmatprep.mubr.f32.mxu0 0.0
    %5276 = vmatmul.mubr.f32.gmra.mxu0 %v5195
    %v5277 = vpop.f32.mrf.mxu0
    %v5278 = vadd.f32 0.0, %v5277
    %v5279 = vpop.f32.mrf.mxu0
    %5280 = vmatprep.mubr.f32.mxu0 0.0
    %5281 = vmatmul.mubr.f32.gmra.mxu0 %v5198
    %v5282 = vpop.f32.mrf.mxu0
    %v5283 = vadd.f32 0.0, %v5282
    %v5284 = vpop.f32.mrf.mxu0
    %5285 = vmatprep.mubr.f32.mxu0 0.0
    %5286 = vmatmul.mubr.f32.gmra.mxu0 %v5201
    %v5287 = vpop.f32.mrf.mxu0
    %v5288 = vadd.f32 0.0, %v5287
    %v5289 = vpop.f32.mrf.mxu0
    %5290 = vmatprep.mubr.f32.mxu0 0.0
    %5291 = vmatmul.mubr.f32.gmra.mxu0 %v5204
    %v5292 = vpop.f32.mrf.mxu0
    %v5293 = vadd.f32 0.0, %v5292
    %v5294 = vpop.f32.mrf.mxu0
    %5295 = vdwg.mxu0
    %v5297 = vsel %vm919, %v5174, 0
    %v5300 = vsel %vm919, %v5175, 0
    %v5303 = vsel %vm919, %v5176, 0
    %v5306 = vsel %vm919, %v5177, 0
    %v5309 = vsel %vm919, %v5178, 0
    %5311 = vmatprep.subr.mxu0 0.0
    %5312 = vmatpush1.msra.mxu0 0.0
    %5313 = vmatprep.subr.mxu0 0.0
    %5314 = vmatpush1.msra.mxu0 0.0
    %5315 = vmatprep.subr.mxu0 0.0
    %5316 = vmatpush1.msra.mxu0 0.0
    %5317 = vmatprep.subr.mxu0 0.0
    %5318 = vmatpush1.msra.mxu0 0.0
    %5319 = vmatprep.subr.mxu0 0.0
    %5320 = vmatpush1.msra.mxu0 0.0
    %5321 = vmatprep.subr.mxu0 0.0
    %5322 = vmatpush1.msra.mxu0 0.0
    %5323 = vmatprep.subr.mxu0 0.0
    %5324 = vmatpush1.msra.mxu0 0.0
    %5325 = vmatprep.subr.mxu0 0.0
    %5326 = vmatpush1.msra.mxu0 0.0
    %5327 = vmatprep.subr.mxu0 0.0
    %5328 = vmatpush1.msra.mxu0 0.0
    %5329 = vmatprep.subr.mxu0 0.0
    %5330 = vmatpush1.msra.mxu0 0.0
    %5331 = vmatprep.subr.mxu0 0.0
    %5332 = vmatpush1.msra.mxu0 0.0
    %5333 = vmatprep.subr.mxu0 0.0
    %5334 = vmatpush1.msra.mxu0 %v4806
    %5335 = vmatprep.subr.mxu0 0.0
    %5336 = vmatpush1.msra.mxu0 %v4801
    %5337 = vmatprep.subr.mxu0 0.0
    %5338 = vmatpush1.msra.mxu0 %v4796
    %5339 = vmatprep.subr.mxu0 0.0
    %5340 = vmatpush1.msra.mxu0 %v4791
    %5341 = vmatprep.subr.mxu0 0.0
    %5342 = vmatpush1.msra.mxu0 %v4786
    %5343 = vmatprep.subr.mxu0 0.0
    %5344 = vmatpush2.msra.mxu0 0.0
    %5345 = vmatprep.subr.mxu0 0.0
    %5346 = vmatpush2.msra.mxu0 0.0
    %5347 = vmatprep.subr.mxu0 0.0
    %5348 = vmatpush2.msra.mxu0 0.0
    %5349 = vmatprep.subr.mxu0 0.0
    %5350 = vmatpush2.msra.mxu0 0.0
    %5351 = vmatprep.subr.mxu0 0.0
    %5352 = vmatpush2.msra.mxu0 0.0
    %5353 = vmatprep.subr.mxu0 0.0
    %5354 = vmatpush2.msra.mxu0 0.0
    %5355 = vmatprep.subr.mxu0 0.0
    %5356 = vmatpush2.msra.mxu0 0.0
    %5357 = vmatprep.subr.mxu0 0.0
    %5358 = vmatpush2.msra.mxu0 0.0
    %5359 = vmatprep.subr.mxu0 0.0
    %5360 = vmatpush2.msra.mxu0 0.0
    %5361 = vmatprep.subr.mxu0 0.0
    %5362 = vmatpush2.msra.mxu0 0.0
    %5363 = vmatprep.subr.mxu0 0.0
    %5364 = vmatpush2.msra.mxu0 0.0
    %5365 = vmatprep.subr.mxu0 0.0
    %5366 = vmatpush2.msra.mxu0 0.0
    %5367 = vmatprep.subr.mxu0 0.0
    %5368 = vmatpush2.msra.mxu0 0.0
    %5369 = vmatprep.subr.mxu0 0.0
    %5370 = vmatpush2.msra.mxu0 0.0
    %5371 = vmatprep.subr.mxu0 0.0
    %5372 = vmatpush2.msra.mxu0 0.0
    %5373 = vmatprep.subr.mxu0 0.0
    %5374 = vmatpush2.msra.mxu0 0.0
    %5375 = vmatprep.mubr.f32.mxu0 0.0
    %5376 = vmatmul.mubr.f32.gmra.mxu0 %v5297
    %v5377 = vpop.f32.mrf.mxu0
    %v5378 = vadd.f32 0.0, %v5377
    %v5379 = vpop.f32.mrf.mxu0
    %5380 = vmatprep.mubr.f32.mxu0 0.0
    %5381 = vmatmul.mubr.f32.gmra.mxu0 %v5300
    %v5382 = vpop.f32.mrf.mxu0
    %v5383 = vadd.f32 0.0, %v5382
    %v5384 = vpop.f32.mrf.mxu0
    %5385 = vmatprep.mubr.f32.mxu0 0.0
    %5386 = vmatmul.mubr.f32.gmra.mxu0 %v5303
    %v5387 = vpop.f32.mrf.mxu0
    %v5388 = vadd.f32 0.0, %v5387
    %v5389 = vpop.f32.mrf.mxu0
    %5390 = vmatprep.mubr.f32.mxu0 0.0
    %5391 = vmatmul.mubr.f32.gmra.mxu0 %v5306
    %v5392 = vpop.f32.mrf.mxu0
    %v5393 = vadd.f32 0.0, %v5392
    %v5394 = vpop.f32.mrf.mxu0
    %5395 = vmatprep.mubr.f32.mxu0 0.0
    %5396 = vmatmul.mubr.f32.gmra.mxu0 %v5309
    %v5397 = vpop.f32.mrf.mxu0
    %v5398 = vadd.f32 0.0, %v5397
    %v5399 = vpop.f32.mrf.mxu0
    %5400 = vdwg.mxu0
    %5401 = vrot.lane.b32.xlu0 %v4505, 120
    %v5402 = vpop.permute.xlu0 %5401
    %5403 = vrot.lane.b32.xlu0 %v4510, 120
    %v5404 = vpop.permute.xlu0 %5403
    %5405 = vrot.lane.b32.xlu0 %v4515, 120
    %v5406 = vpop.permute.xlu0 %5405
    %5407 = vrot.lane.b32.xlu0 %v4520, 120
    %v5408 = vpop.permute.xlu0 %5407
    %5409 = vrot.lane.b32.xlu0 %v4525, 120
    %v5410 = vpop.permute.xlu0 %5409
    %5411 = vrot.lane.b32.xlu0 %v4633, 120
    %v5412 = vpop.permute.xlu0 %5411
    %5413 = vrot.lane.b32.xlu0 %v4638, 120
    %v5414 = vpop.permute.xlu0 %5413
    %5415 = vrot.lane.b32.xlu0 %v4643, 120
    %v5416 = vpop.permute.xlu0 %5415
    %5417 = vrot.lane.b32.xlu0 %v4648, 120
    %v5418 = vpop.permute.xlu0 %5417
    %5419 = vrot.lane.b32.xlu0 %v4653, 120
    %v5420 = vpop.permute.xlu0 %5419
    %v5421 = vsel %vm658, %v5402, 0
    %v5423 = vsel %vm658, %v5404, 0
    %v5425 = vsel %vm658, %v5406, 0
    %v5427 = vsel %vm658, %v5408, 0
    %v5429 = vsel %vm658, %v5410, 0
    %v5431 = vsel %vm658, %v5412, 0
    %v5433 = vsel %vm658, %v5414, 0
    %v5435 = vsel %vm658, %v5416, 0
    %v5437 = vsel %vm658, %v5418, 0
    %v5439 = vsel %vm658, %v5420, 0
    %5441 = vmatprep.subr.mxu0 0.0
    %5442 = vmatpush1.xpose.msra.mxu0 0.0
    %5443 = vmatprep.subr.mxu0 0.0
    %5444 = vmatpush1.xpose.msra.mxu0 0.0
    %5445 = vmatprep.subr.mxu0 0.0
    %5446 = vmatpush1.xpose.msra.mxu0 0.0
    %5447 = vmatprep.subr.mxu0 0.0
    %5448 = vmatpush1.xpose.msra.mxu0 0.0
    %5449 = vmatprep.subr.mxu0 0.0
    %5450 = vmatpush1.xpose.msra.mxu0 0.0
    %5451 = vmatprep.subr.mxu0 0.0
    %5452 = vmatpush1.xpose.msra.mxu0 0.0
    %5453 = vmatprep.subr.mxu0 0.0
    %5454 = vmatpush1.xpose.msra.mxu0 0.0
    %5455 = vmatprep.subr.mxu0 0.0
    %5456 = vmatpush1.xpose.msra.mxu0 0.0
    %5457 = vmatprep.subr.mxu0 0.0
    %5458 = vmatpush1.xpose.msra.mxu0 0.0
    %5459 = vmatprep.subr.mxu0 0.0
    %5460 = vmatpush1.xpose.msra.mxu0 0.0
    %5461 = vmatprep.subr.mxu0 0.0
    %5462 = vmatpush1.xpose.msra.mxu0 0.0
    %5463 = vmatprep.subr.mxu0 0.0
    %5464 = vmatpush1.xpose.msra.mxu0 %v5439
    %5465 = vmatprep.subr.mxu0 0.0
    %5466 = vmatpush1.xpose.msra.mxu0 %v5437
    %5467 = vmatprep.subr.mxu0 0.0
    %5468 = vmatpush1.xpose.msra.mxu0 %v5435
    %5469 = vmatprep.subr.mxu0 0.0
    %5470 = vmatpush1.xpose.msra.mxu0 %v5433
    %5471 = vmatprep.subr.mxu0 0.0
    %5472 = vmatpush1.xpose.msra.mxu0 %v5431
    %5473 = vmatprep.subr.mxu0 0.0
    %5474 = vmatpush2.xpose.msra.mxu0 0.0
    %5475 = vmatprep.subr.mxu0 0.0
    %5476 = vmatpush2.xpose.msra.mxu0 0.0
    %5477 = vmatprep.subr.mxu0 0.0
    %5478 = vmatpush2.xpose.msra.mxu0 0.0
    %5479 = vmatprep.subr.mxu0 0.0
    %5480 = vmatpush2.xpose.msra.mxu0 0.0
    %5481 = vmatprep.subr.mxu0 0.0
    %5482 = vmatpush2.xpose.msra.mxu0 0.0
    %5483 = vmatprep.subr.mxu0 0.0
    %5484 = vmatpush2.xpose.msra.mxu0 0.0
    %5485 = vmatprep.subr.mxu0 0.0
    %5486 = vmatpush2.xpose.msra.mxu0 0.0
    %5487 = vmatprep.subr.mxu0 0.0
    %5488 = vmatpush2.xpose.msra.mxu0 0.0
    %5489 = vmatprep.subr.mxu0 0.0
    %5490 = vmatpush2.xpose.msra.mxu0 0.0
    %5491 = vmatprep.subr.mxu0 0.0
    %5492 = vmatpush2.xpose.msra.mxu0 0.0
    %5493 = vmatprep.subr.mxu0 0.0
    %5494 = vmatpush2.xpose.msra.mxu0 0.0
    %5495 = vmatprep.subr.mxu0 0.0
    %5496 = vmatpush2.xpose.msra.mxu0 0.0
    %5497 = vmatprep.subr.mxu0 0.0
    %5498 = vmatpush2.xpose.msra.mxu0 0.0
    %5499 = vmatprep.subr.mxu0 0.0
    %5500 = vmatpush2.xpose.msra.mxu0 0.0
    %5501 = vmatprep.subr.mxu0 0.0
    %5502 = vmatpush2.xpose.msra.mxu0 0.0
    %5503 = vmatprep.subr.mxu0 0.0
    %5504 = vmatpush2.xpose.msra.mxu0 0.0
    %5505 = vmatprep.mubr.f32.mxu0 0.0
    %5506 = vmatmul.mubr.f32.gmra.mxu0 %v5421
    %v5507 = vpop.f32.mrf.mxu0
    %v5508 = vadd.f32 0.0, %v5507
    %v5509 = vpop.f32.mrf.mxu0
    %5510 = vmatprep.mubr.f32.mxu0 0.0
    %5511 = vmatmul.mubr.f32.gmra.mxu0 %v5423
    %v5512 = vpop.f32.mrf.mxu0
    %v5513 = vadd.f32 0.0, %v5512
    %v5514 = vpop.f32.mrf.mxu0
    %5515 = vmatprep.mubr.f32.mxu0 0.0
    %5516 = vmatmul.mubr.f32.gmra.mxu0 %v5425
    %v5517 = vpop.f32.mrf.mxu0
    %v5518 = vadd.f32 0.0, %v5517
    %v5519 = vpop.f32.mrf.mxu0
    %5520 = vmatprep.mubr.f32.mxu0 0.0
    %5521 = vmatmul.mubr.f32.gmra.mxu0 %v5427
    %v5522 = vpop.f32.mrf.mxu0
    %v5523 = vadd.f32 0.0, %v5522
    %v5524 = vpop.f32.mrf.mxu0
    %5525 = vmatprep.mubr.f32.mxu0 0.0
    %5526 = vmatmul.mubr.f32.gmra.mxu0 %v5429
    %v5527 = vpop.f32.mrf.mxu0
    %v5528 = vadd.f32 0.0, %v5527
    %v5529 = vpop.f32.mrf.mxu0
    %5530 = vdwg.mxu0
    %5531 = vrot.lane.b32.xlu0 %v4530, 120
    %v5532 = vpop.permute.xlu0 %5531
    %5533 = vrot.lane.b32.xlu0 %v4535, 120
    %v5534 = vpop.permute.xlu0 %5533
    %5535 = vrot.lane.b32.xlu0 %v4540, 120
    %v5536 = vpop.permute.xlu0 %5535
    %5537 = vrot.lane.b32.xlu0 %v4545, 120
    %v5538 = vpop.permute.xlu0 %5537
    %5539 = vrot.lane.b32.xlu0 %v4550, 120
    %v5540 = vpop.permute.xlu0 %5539
    %5541 = vrot.lane.b32.xlu0 %v4658, 120
    %v5542 = vpop.permute.xlu0 %5541
    %5543 = vrot.lane.b32.xlu0 %v4663, 120
    %v5544 = vpop.permute.xlu0 %5543
    %5545 = vrot.lane.b32.xlu0 %v4668, 120
    %v5546 = vpop.permute.xlu0 %5545
    %5547 = vrot.lane.b32.xlu0 %v4673, 120
    %v5548 = vpop.permute.xlu0 %5547
    %5549 = vrot.lane.b32.xlu0 %v4678, 120
    %v5550 = vpop.permute.xlu0 %5549
    %v5551 = vsel %vm658, %v5532, 0
    %v5553 = vsel %vm658, %v5534, 0
    %v5555 = vsel %vm658, %v5536, 0
    %v5557 = vsel %vm658, %v5538, 0
    %v5559 = vsel %vm658, %v5540, 0
    %v5561 = vsel %vm658, %v5542, 0
    %v5563 = vsel %vm658, %v5544, 0
    %v5565 = vsel %vm658, %v5546, 0
    %v5567 = vsel %vm658, %v5548, 0
    %v5569 = vsel %vm658, %v5550, 0
    %5571 = vmatprep.subr.mxu0 0.0
    %5572 = vmatpush1.xpose.msra.mxu0 0.0
    %5573 = vmatprep.subr.mxu0 0.0
    %5574 = vmatpush1.xpose.msra.mxu0 0.0
    %5575 = vmatprep.subr.mxu0 0.0
    %5576 = vmatpush1.xpose.msra.mxu0 0.0
    %5577 = vmatprep.subr.mxu0 0.0
    %5578 = vmatpush1.xpose.msra.mxu0 0.0
    %5579 = vmatprep.subr.mxu0 0.0
    %5580 = vmatpush1.xpose.msra.mxu0 0.0
    %5581 = vmatprep.subr.mxu0 0.0
    %5582 = vmatpush1.xpose.msra.mxu0 0.0
    %5583 = vmatprep.subr.mxu0 0.0
    %5584 = vmatpush1.xpose.msra.mxu0 0.0
    %5585 = vmatprep.subr.mxu0 0.0
    %5586 = vmatpush1.xpose.msra.mxu0 0.0
    %5587 = vmatprep.subr.mxu0 0.0
    %5588 = vmatpush1.xpose.msra.mxu0 0.0
    %5589 = vmatprep.subr.mxu0 0.0
    %5590 = vmatpush1.xpose.msra.mxu0 0.0
    %5591 = vmatprep.subr.mxu0 0.0
    %5592 = vmatpush1.xpose.msra.mxu0 0.0
    %5593 = vmatprep.subr.mxu0 0.0
    %5594 = vmatpush1.xpose.msra.mxu0 %v5569
    %5595 = vmatprep.subr.mxu0 0.0
    %5596 = vmatpush1.xpose.msra.mxu0 %v5567
    %5597 = vmatprep.subr.mxu0 0.0
    %5598 = vmatpush1.xpose.msra.mxu0 %v5565
    %5599 = vmatprep.subr.mxu0 0.0
    %5600 = vmatpush1.xpose.msra.mxu0 %v5563
    %5601 = vmatprep.subr.mxu0 0.0
    %5602 = vmatpush1.xpose.msra.mxu0 %v5561
    %5603 = vmatprep.subr.mxu0 0.0
    %5604 = vmatpush2.xpose.msra.mxu0 0.0
    %5605 = vmatprep.subr.mxu0 0.0
    %5606 = vmatpush2.xpose.msra.mxu0 0.0
    %5607 = vmatprep.subr.mxu0 0.0
    %5608 = vmatpush2.xpose.msra.mxu0 0.0
    %5609 = vmatprep.subr.mxu0 0.0
    %5610 = vmatpush2.xpose.msra.mxu0 0.0
    %5611 = vmatprep.subr.mxu0 0.0
    %5612 = vmatpush2.xpose.msra.mxu0 0.0
    %5613 = vmatprep.subr.mxu0 0.0
    %5614 = vmatpush2.xpose.msra.mxu0 0.0
    %5615 = vmatprep.subr.mxu0 0.0
    %5616 = vmatpush2.xpose.msra.mxu0 0.0
    %5617 = vmatprep.subr.mxu0 0.0
    %5618 = vmatpush2.xpose.msra.mxu0 0.0
    %5619 = vmatprep.subr.mxu0 0.0
    %5620 = vmatpush2.xpose.msra.mxu0 0.0
    %5621 = vmatprep.subr.mxu0 0.0
    %5622 = vmatpush2.xpose.msra.mxu0 0.0
    %5623 = vmatprep.subr.mxu0 0.0
    %5624 = vmatpush2.xpose.msra.mxu0 0.0
    %5625 = vmatprep.subr.mxu0 0.0
    %5626 = vmatpush2.xpose.msra.mxu0 0.0
    %5627 = vmatprep.subr.mxu0 0.0
    %5628 = vmatpush2.xpose.msra.mxu0 0.0
    %5629 = vmatprep.subr.mxu0 0.0
    %5630 = vmatpush2.xpose.msra.mxu0 0.0
    %5631 = vmatprep.subr.mxu0 0.0
    %5632 = vmatpush2.xpose.msra.mxu0 0.0
    %5633 = vmatprep.subr.mxu0 0.0
    %5634 = vmatpush2.xpose.msra.mxu0 0.0
    %5635 = vmatprep.mubr.f32.mxu0 0.0
    %5636 = vmatmul.mubr.f32.gmra.mxu0 %v5551
    %v5637 = vpop.f32.mrf.mxu0
    %v5638 = vadd.f32 0.0, %v5637
    %v5639 = vpop.f32.mrf.mxu0
    %5640 = vmatprep.mubr.f32.mxu0 0.0
    %5641 = vmatmul.mubr.f32.gmra.mxu0 %v5553
    %v5642 = vpop.f32.mrf.mxu0
    %v5643 = vadd.f32 0.0, %v5642
    %v5644 = vpop.f32.mrf.mxu0
    %5645 = vmatprep.mubr.f32.mxu0 0.0
    %5646 = vmatmul.mubr.f32.gmra.mxu0 %v5555
    %v5647 = vpop.f32.mrf.mxu0
    %v5648 = vadd.f32 0.0, %v5647
    %v5649 = vpop.f32.mrf.mxu0
    %5650 = vmatprep.mubr.f32.mxu0 0.0
    %5651 = vmatmul.mubr.f32.gmra.mxu0 %v5557
    %v5652 = vpop.f32.mrf.mxu0
    %v5653 = vadd.f32 0.0, %v5652
    %v5654 = vpop.f32.mrf.mxu0
    %5655 = vmatprep.mubr.f32.mxu0 0.0
    %5656 = vmatmul.mubr.f32.gmra.mxu0 %v5559
    %v5657 = vpop.f32.mrf.mxu0
    %v5658 = vadd.f32 0.0, %v5657
    %v5659 = vpop.f32.mrf.mxu0
    %5660 = vdwg.mxu0
    %v5661 = vmul.f32 %v5508, 0.35355338
    %v5662 = vmul.f32 %v5513, 0.35355338
    %v5663 = vmul.f32 %v5518, 0.35355338
    %v5664 = vmul.f32 %v5523, 0.35355338
    %v5665 = vmul.f32 %v5528, 0.35355338
    %v5666 = vmul.f32 %v5638, 0.35355338
    %v5667 = vmul.f32 %v5643, 0.35355338
    %v5668 = vmul.f32 %v5648, 0.35355338
    %v5669 = vmul.f32 %v5653, 0.35355338
    %v5670 = vmul.f32 %v5658, 0.35355338
    %v5671 = vadd.f32 %v5661, %v77
    %v5672 = vadd.f32 %v5662, %v77
    %v5673 = vadd.f32 %v5663, %v77
    %v5674 = vadd.f32 %v5664, %v77
    %v5675 = vadd.f32 %v5665, %v77
    %v5676 = vadd.f32 %v5666, %v81
    %v5677 = vadd.f32 %v5667, %v81
    %v5678 = vadd.f32 %v5668, %v81
    %v5679 = vadd.f32 %v5669, %v81
    %v5680 = vadd.f32 %v5670, %v81
    %v5681 = vsel %vm919, %v5671, -inf
    %5682 = vmax.xlane.f32.xlu0 %v5681
    %v5683 = vpop.xlane.xlu0 %5682
    %v5684 = vsel %vm919, %v5672, -inf
    %5685 = vmax.xlane.f32.xlu0 %v5684
    %v5686 = vpop.xlane.xlu0 %5685
    %v5687 = vsel %vm919, %v5673, -inf
    %5688 = vmax.xlane.f32.xlu0 %v5687
    %v5689 = vpop.xlane.xlu0 %5688
    %v5690 = vsel %vm919, %v5674, -inf
    %5691 = vmax.xlane.f32.xlu0 %v5690
    %v5692 = vpop.xlane.xlu0 %5691
    %v5693 = vsel %vm919, %v5675, -inf
    %5694 = vmax.xlane.f32.xlu0 %v5693
    %v5695 = vpop.xlane.xlu0 %5694
    %v5696 = vsel %vm919, %v5676, -inf
    %5697 = vmax.xlane.f32.xlu0 %v5696
    %v5698 = vpop.xlane.xlu0 %5697
    %v5699 = vsel %vm919, %v5677, -inf
    %5700 = vmax.xlane.f32.xlu0 %v5699
    %v5701 = vpop.xlane.xlu0 %5700
    %v5702 = vsel %vm919, %v5678, -inf
    %5703 = vmax.xlane.f32.xlu0 %v5702
    %v5704 = vpop.xlane.xlu0 %5703
    %v5705 = vsel %vm919, %v5679, -inf
    %5706 = vmax.xlane.f32.xlu0 %v5705
    %v5707 = vpop.xlane.xlu0 %5706
    %v5708 = vsel %vm919, %v5680, -inf
    %5709 = vmax.xlane.f32.xlu0 %v5708
    %v5710 = vpop.xlane.xlu0 %5709
    %v5711 = vsub.f32 %v5671, %v5683
    %v5712 = vsub.f32 %v5672, %v5686
    %v5713 = vsub.f32 %v5673, %v5689
    %v5714 = vsub.f32 %v5674, %v5692
    %v5715 = vsub.f32 %v5675, %v5695
    %v5716 = vsub.f32 %v5676, %v5698
    %v5717 = vsub.f32 %v5677, %v5701
    %v5718 = vsub.f32 %v5678, %v5704
    %v5719 = vsub.f32 %v5679, %v5707
    %v5720 = vsub.f32 %v5680, %v5710
    %v5721 = vmul.f32 %v5711, 1.442695
    %v5722 = vpow.pop %v5721
    %v5723 = vmul.f32 %v5712, 1.442695
    %v5724 = vpow.pop %v5723
    %v5725 = vmul.f32 %v5713, 1.442695
    %v5726 = vpow.pop %v5725
    %v5727 = vmul.f32 %v5714, 1.442695
    %v5728 = vpow.pop %v5727
    %v5729 = vmul.f32 %v5715, 1.442695
    %v5730 = vpow.pop %v5729
    %v5731 = vmul.f32 %v5716, 1.442695
    %v5732 = vpow.pop %v5731
    %v5733 = vmul.f32 %v5717, 1.442695
    %v5734 = vpow.pop %v5733
    %v5735 = vmul.f32 %v5718, 1.442695
    %v5736 = vpow.pop %v5735
    %v5737 = vmul.f32 %v5719, 1.442695
    %v5738 = vpow.pop %v5737
    %v5739 = vmul.f32 %v5720, 1.442695
    %v5740 = vpow.pop %v5739
    %v5741 = vsel %vm919, %v5722, 0.0
    %5742 = vadd.xlane.f32.xlu0 %v5741
    %v5743 = vpop.xlane.xlu0 %5742
    %v5744 = vsel %vm919, %v5724, 0.0
    %5745 = vadd.xlane.f32.xlu0 %v5744
    %v5746 = vpop.xlane.xlu0 %5745
    %v5747 = vsel %vm919, %v5726, 0.0
    %5748 = vadd.xlane.f32.xlu0 %v5747
    %v5749 = vpop.xlane.xlu0 %5748
    %v5750 = vsel %vm919, %v5728, 0.0
    %5751 = vadd.xlane.f32.xlu0 %v5750
    %v5752 = vpop.xlane.xlu0 %5751
    %v5753 = vsel %vm919, %v5730, 0.0
    %5754 = vadd.xlane.f32.xlu0 %v5753
    %v5755 = vpop.xlane.xlu0 %5754
    %v5756 = vsel %vm919, %v5732, 0.0
    %5757 = vadd.xlane.f32.xlu0 %v5756
    %v5758 = vpop.xlane.xlu0 %5757
    %v5759 = vsel %vm919, %v5734, 0.0
    %5760 = vadd.xlane.f32.xlu0 %v5759
    %v5761 = vpop.xlane.xlu0 %5760
    %v5762 = vsel %vm919, %v5736, 0.0
    %5763 = vadd.xlane.f32.xlu0 %v5762
    %v5764 = vpop.xlane.xlu0 %5763
    %v5765 = vsel %vm919, %v5738, 0.0
    %5766 = vadd.xlane.f32.xlu0 %v5765
    %v5767 = vpop.xlane.xlu0 %5766
    %v5768 = vsel %vm919, %v5740, 0.0
    %5769 = vadd.xlane.f32.xlu0 %v5768
    %v5770 = vpop.xlane.xlu0 %5769
    %v5771 = vrcp.pop %v5743
    %v5772 = vrcp.pop %v5746
    %v5773 = vrcp.pop %v5749
    %v5774 = vrcp.pop %v5752
    %v5775 = vrcp.pop %v5755
    %v5776 = vrcp.pop %v5758
    %v5777 = vrcp.pop %v5761
    %v5778 = vrcp.pop %v5764
    %v5779 = vrcp.pop %v5767
    %v5780 = vrcp.pop %v5770
    %v5781 = vmul.f32 %v5722, %v5771
    %v5782 = vmul.f32 %v5724, %v5772
    %v5783 = vmul.f32 %v5726, %v5773
    %v5784 = vmul.f32 %v5728, %v5774
    %v5785 = vmul.f32 %v5730, %v5775
    %v5786 = vmul.f32 %v5732, %v5776
    %v5787 = vmul.f32 %v5734, %v5777
    %v5788 = vmul.f32 %v5736, %v5778
    %v5789 = vmul.f32 %v5738, %v5779
    %v5790 = vmul.f32 %v5740, %v5780
    %s5791 = scalar_lea.vmem [#allocation2], 360
    %5792 = vst.msk [vmem:[%s5791] sm:$0xff] %vm919, %v5781
    %5793 = vst.msk [vmem:[%s5791 + $0x8] sm:$0xff] %vm919, %v5782
    %5794 = vst.msk [vmem:[%s5791 + $0x10] sm:$0xff] %vm919, %v5783
    %5795 = vst.msk [vmem:[%s5791 + $0x18] sm:$0xff] %vm919, %v5784
    %5796 = vst.msk [vmem:[%s5791 + $0x20] sm:$0xff] %vm919, %v5785
    %s5797 = scalar_lea.vmem [#allocation2], 520
    %5798 = vst.msk [vmem:[%s5797] sm:$0xff] %vm919, %v5786
    %5799 = vst.msk [vmem:[%s5797 + $0x8] sm:$0xff] %vm919, %v5787
    %5800 = vst.msk [vmem:[%s5797 + $0x10] sm:$0xff] %vm919, %v5788
    %5801 = vst.msk [vmem:[%s5797 + $0x18] sm:$0xff] %vm919, %v5789
    %5802 = vst.msk [vmem:[%s5797 + $0x20] sm:$0xff] %vm919, %v5790
    %5808 = vrot.lane.b32.xlu0 %v4761, 120
    %v5809 = vpop.permute.xlu0 %5808
    %5810 = vrot.lane.b32.xlu0 %v4766, 120
    %v5811 = vpop.permute.xlu0 %5810
    %5812 = vrot.lane.b32.xlu0 %v4771, 120
    %v5813 = vpop.permute.xlu0 %5812
    %5814 = vrot.lane.b32.xlu0 %v4776, 120
    %v5815 = vpop.permute.xlu0 %5814
    %5816 = vrot.lane.b32.xlu0 %v4781, 120
    %v5817 = vpop.permute.xlu0 %5816
    %v5824 = vsel %vm919, %v5781, 0
    %v5827 = vsel %vm919, %v5782, 0
    %v5830 = vsel %vm919, %v5783, 0
    %v5833 = vsel %vm919, %v5784, 0
    %v5836 = vsel %vm919, %v5785, 0
    %5838 = vmatprep.subr.mxu0 0.0
    %5839 = vmatpush1.msra.mxu0 0.0
    %5840 = vmatprep.subr.mxu0 0.0
    %5841 = vmatpush1.msra.mxu0 0.0
    %5842 = vmatprep.subr.mxu0 0.0
    %5843 = vmatpush1.msra.mxu0 0.0
    %5844 = vmatprep.subr.mxu0 0.0
    %5845 = vmatpush1.msra.mxu0 0.0
    %5846 = vmatprep.subr.mxu0 0.0
    %5847 = vmatpush1.msra.mxu0 0.0
    %5848 = vmatprep.subr.mxu0 0.0
    %5849 = vmatpush1.msra.mxu0 0.0
    %5850 = vmatprep.subr.mxu0 0.0
    %5851 = vmatpush1.msra.mxu0 0.0
    %5852 = vmatprep.subr.mxu0 0.0
    %5853 = vmatpush1.msra.mxu0 0.0
    %5854 = vmatprep.subr.mxu0 0.0
    %5855 = vmatpush1.msra.mxu0 0.0
    %5856 = vmatprep.subr.mxu0 0.0
    %5857 = vmatpush1.msra.mxu0 0.0
    %5858 = vmatprep.subr.mxu0 0.0
    %5859 = vmatpush1.msra.mxu0 0.0
    %5860 = vmatprep.subr.mxu0 0.0
    %5861 = vmatpush1.msra.mxu0 %v5817
    %5862 = vmatprep.subr.mxu0 0.0
    %5863 = vmatpush1.msra.mxu0 %v5815
    %5864 = vmatprep.subr.mxu0 0.0
    %5865 = vmatpush1.msra.mxu0 %v5813
    %5866 = vmatprep.subr.mxu0 0.0
    %5867 = vmatpush1.msra.mxu0 %v5811
    %5868 = vmatprep.subr.mxu0 0.0
    %5869 = vmatpush1.msra.mxu0 %v5809
    %5870 = vmatprep.subr.mxu0 0.0
    %5871 = vmatpush2.msra.mxu0 0.0
    %5872 = vmatprep.subr.mxu0 0.0
    %5873 = vmatpush2.msra.mxu0 0.0
    %5874 = vmatprep.subr.mxu0 0.0
    %5875 = vmatpush2.msra.mxu0 0.0
    %5876 = vmatprep.subr.mxu0 0.0
    %5877 = vmatpush2.msra.mxu0 0.0
    %5878 = vmatprep.subr.mxu0 0.0
    %5879 = vmatpush2.msra.mxu0 0.0
    %5880 = vmatprep.subr.mxu0 0.0
    %5881 = vmatpush2.msra.mxu0 0.0
    %5882 = vmatprep.subr.mxu0 0.0
    %5883 = vmatpush2.msra.mxu0 0.0
    %5884 = vmatprep.subr.mxu0 0.0
    %5885 = vmatpush2.msra.mxu0 0.0
    %5886 = vmatprep.subr.mxu0 0.0
    %5887 = vmatpush2.msra.mxu0 0.0
    %5888 = vmatprep.subr.mxu0 0.0
    %5889 = vmatpush2.msra.mxu0 0.0
    %5890 = vmatprep.subr.mxu0 0.0
    %5891 = vmatpush2.msra.mxu0 0.0
    %5892 = vmatprep.subr.mxu0 0.0
    %5893 = vmatpush2.msra.mxu0 0.0
    %5894 = vmatprep.subr.mxu0 0.0
    %5895 = vmatpush2.msra.mxu0 0.0
    %5896 = vmatprep.subr.mxu0 0.0
    %5897 = vmatpush2.msra.mxu0 0.0
    %5898 = vmatprep.subr.mxu0 0.0
    %5899 = vmatpush2.msra.mxu0 0.0
    %5900 = vmatprep.subr.mxu0 0.0
    %5901 = vmatpush2.msra.mxu0 0.0
    %5902 = vmatprep.mubr.f32.mxu0 0.0
    %5903 = vmatmul.mubr.f32.gmra.mxu0 %v5824
    %v5904 = vpop.f32.mrf.mxu0
    %v5905 = vadd.f32 0.0, %v5904
    %v5906 = vpop.f32.mrf.mxu0
    %5907 = vmatprep.mubr.f32.mxu0 0.0
    %5908 = vmatmul.mubr.f32.gmra.mxu0 %v5827
    %v5909 = vpop.f32.mrf.mxu0
    %v5910 = vadd.f32 0.0, %v5909
    %v5911 = vpop.f32.mrf.mxu0
    %5912 = vmatprep.mubr.f32.mxu0 0.0
    %5913 = vmatmul.mubr.f32.gmra.mxu0 %v5830
    %v5914 = vpop.f32.mrf.mxu0
    %v5915 = vadd.f32 0.0, %v5914
    %v5916 = vpop.f32.mrf.mxu0
    %5917 = vmatprep.mubr.f32.mxu0 0.0
    %5918 = vmatmul.mubr.f32.gmra.mxu0 %v5833
    %v5919 = vpop.f32.mrf.mxu0
    %v5920 = vadd.f32 0.0, %v5919
    %v5921 = vpop.f32.mrf.mxu0
    %5922 = vmatprep.mubr.f32.mxu0 0.0
    %5923 = vmatmul.mubr.f32.gmra.mxu0 %v5836
    %v5924 = vpop.f32.mrf.mxu0
    %v5925 = vadd.f32 0.0, %v5924
    %v5926 = vpop.f32.mrf.mxu0
    %5927 = vdwg.mxu0
    %5933 = vrot.lane.b32.xlu0 %v4786, 120
    %v5934 = vpop.permute.xlu0 %5933
    %5935 = vrot.lane.b32.xlu0 %v4791, 120
    %v5936 = vpop.permute.xlu0 %5935
    %5937 = vrot.lane.b32.xlu0 %v4796, 120
    %v5938 = vpop.permute.xlu0 %5937
    %5939 = vrot.lane.b32.xlu0 %v4801, 120
    %v5940 = vpop.permute.xlu0 %5939
    %5941 = vrot.lane.b32.xlu0 %v4806, 120
    %v5942 = vpop.permute.xlu0 %5941
    %v5949 = vsel %vm919, %v5786, 0
    %v5952 = vsel %vm919, %v5787, 0
    %v5955 = vsel %vm919, %v5788, 0
    %v5958 = vsel %vm919, %v5789, 0
    %v5961 = vsel %vm919, %v5790, 0
    %5963 = vmatprep.subr.mxu0 0.0
    %5964 = vmatpush1.msra.mxu0 0.0
    %5965 = vmatprep.subr.mxu0 0.0
    %5966 = vmatpush1.msra.mxu0 0.0
    %5967 = vmatprep.subr.mxu0 0.0
    %5968 = vmatpush1.msra.mxu0 0.0
    %5969 = vmatprep.subr.mxu0 0.0
    %5970 = vmatpush1.msra.mxu0 0.0
    %5971 = vmatprep.subr.mxu0 0.0
    %5972 = vmatpush1.msra.mxu0 0.0
    %5973 = vmatprep.subr.mxu0 0.0
    %5974 = vmatpush1.msra.mxu0 0.0
    %5975 = vmatprep.subr.mxu0 0.0
    %5976 = vmatpush1.msra.mxu0 0.0
    %5977 = vmatprep.subr.mxu0 0.0
    %5978 = vmatpush1.msra.mxu0 0.0
    %5979 = vmatprep.subr.mxu0 0.0
    %5980 = vmatpush1.msra.mxu0 0.0
    %5981 = vmatprep.subr.mxu0 0.0
    %5982 = vmatpush1.msra.mxu0 0.0
    %5983 = vmatprep.subr.mxu0 0.0
    %5984 = vmatpush1.msra.mxu0 0.0
    %5985 = vmatprep.subr.mxu0 0.0
    %5986 = vmatpush1.msra.mxu0 %v5942
    %5987 = vmatprep.subr.mxu0 0.0
    %5988 = vmatpush1.msra.mxu0 %v5940
    %5989 = vmatprep.subr.mxu0 0.0
    %5990 = vmatpush1.msra.mxu0 %v5938
    %5991 = vmatprep.subr.mxu0 0.0
    %5992 = vmatpush1.msra.mxu0 %v5936
    %5993 = vmatprep.subr.mxu0 0.0
    %5994 = vmatpush1.msra.mxu0 %v5934
    %5995 = vmatprep.subr.mxu0 0.0
    %5996 = vmatpush2.msra.mxu0 0.0
    %5997 = vmatprep.subr.mxu0 0.0
    %5998 = vmatpush2.msra.mxu0 0.0
    %5999 = vmatprep.subr.mxu0 0.0
    %6000 = vmatpush2.msra.mxu0 0.0
    %6001 = vmatprep.subr.mxu0 0.0
    %6002 = vmatpush2.msra.mxu0 0.0
    %6003 = vmatprep.subr.mxu0 0.0
    %6004 = vmatpush2.msra.mxu0 0.0
    %6005 = vmatprep.subr.mxu0 0.0
    %6006 = vmatpush2.msra.mxu0 0.0
    %6007 = vmatprep.subr.mxu0 0.0
    %6008 = vmatpush2.msra.mxu0 0.0
    %6009 = vmatprep.subr.mxu0 0.0
    %6010 = vmatpush2.msra.mxu0 0.0
    %6011 = vmatprep.subr.mxu0 0.0
    %6012 = vmatpush2.msra.mxu0 0.0
    %6013 = vmatprep.subr.mxu0 0.0
    %6014 = vmatpush2.msra.mxu0 0.0
    %6015 = vmatprep.subr.mxu0 0.0
    %6016 = vmatpush2.msra.mxu0 0.0
    %6017 = vmatprep.subr.mxu0 0.0
    %6018 = vmatpush2.msra.mxu0 0.0
    %6019 = vmatprep.subr.mxu0 0.0
    %6020 = vmatpush2.msra.mxu0 0.0
    %6021 = vmatprep.subr.mxu0 0.0
    %6022 = vmatpush2.msra.mxu0 0.0
    %6023 = vmatprep.subr.mxu0 0.0
    %6024 = vmatpush2.msra.mxu0 0.0
    %6025 = vmatprep.subr.mxu0 0.0
    %6026 = vmatpush2.msra.mxu0 0.0
    %6027 = vmatprep.mubr.f32.mxu0 0.0
    %6028 = vmatmul.mubr.f32.gmra.mxu0 %v5949
    %v6029 = vpop.f32.mrf.mxu0
    %v6030 = vadd.f32 0.0, %v6029
    %v6031 = vpop.f32.mrf.mxu0
    %6032 = vmatprep.mubr.f32.mxu0 0.0
    %6033 = vmatmul.mubr.f32.gmra.mxu0 %v5952
    %v6034 = vpop.f32.mrf.mxu0
    %v6035 = vadd.f32 0.0, %v6034
    %v6036 = vpop.f32.mrf.mxu0
    %6037 = vmatprep.mubr.f32.mxu0 0.0
    %6038 = vmatmul.mubr.f32.gmra.mxu0 %v5955
    %v6039 = vpop.f32.mrf.mxu0
    %v6040 = vadd.f32 0.0, %v6039
    %v6041 = vpop.f32.mrf.mxu0
    %6042 = vmatprep.mubr.f32.mxu0 0.0
    %6043 = vmatmul.mubr.f32.gmra.mxu0 %v5958
    %v6044 = vpop.f32.mrf.mxu0
    %v6045 = vadd.f32 0.0, %v6044
    %v6046 = vpop.f32.mrf.mxu0
    %6047 = vmatprep.mubr.f32.mxu0 0.0
    %6048 = vmatmul.mubr.f32.gmra.mxu0 %v5961
    %v6049 = vpop.f32.mrf.mxu0
    %v6050 = vadd.f32 0.0, %v6049
    %v6051 = vpop.f32.mrf.mxu0
    %6052 = vdwg.mxu0
    %6053 = vrot.lane.b32.xlu0 %v4505, 112
    %v6054 = vpop.permute.xlu0 %6053
    %6055 = vrot.lane.b32.xlu0 %v4510, 112
    %v6056 = vpop.permute.xlu0 %6055
    %6057 = vrot.lane.b32.xlu0 %v4515, 112
    %v6058 = vpop.permute.xlu0 %6057
    %6059 = vrot.lane.b32.xlu0 %v4520, 112
    %v6060 = vpop.permute.xlu0 %6059
    %6061 = vrot.lane.b32.xlu0 %v4525, 112
    %v6062 = vpop.permute.xlu0 %6061
    %6063 = vrot.lane.b32.xlu0 %v4633, 112
    %v6064 = vpop.permute.xlu0 %6063
    %6065 = vrot.lane.b32.xlu0 %v4638, 112
    %v6066 = vpop.permute.xlu0 %6065
    %6067 = vrot.lane.b32.xlu0 %v4643, 112
    %v6068 = vpop.permute.xlu0 %6067
    %6069 = vrot.lane.b32.xlu0 %v4648, 112
    %v6070 = vpop.permute.xlu0 %6069
    %6071 = vrot.lane.b32.xlu0 %v4653, 112
    %v6072 = vpop.permute.xlu0 %6071
    %v6073 = vsel %vm658, %v6054, 0
    %v6075 = vsel %vm658, %v6056, 0
    %v6077 = vsel %vm658, %v6058, 0
    %v6079 = vsel %vm658, %v6060, 0
    %v6081 = vsel %vm658, %v6062, 0
    %v6083 = vsel %vm658, %v6064, 0
    %v6085 = vsel %vm658, %v6066, 0
    %v6087 = vsel %vm658, %v6068, 0
    %v6089 = vsel %vm658, %v6070, 0
    %v6091 = vsel %vm658, %v6072, 0
    %6093 = vmatprep.subr.mxu0 0.0
    %6094 = vmatpush1.xpose.msra.mxu0 0.0
    %6095 = vmatprep.subr.mxu0 0.0
    %6096 = vmatpush1.xpose.msra.mxu0 0.0
    %6097 = vmatprep.subr.mxu0 0.0
    %6098 = vmatpush1.xpose.msra.mxu0 0.0
    %6099 = vmatprep.subr.mxu0 0.0
    %6100 = vmatpush1.xpose.msra.mxu0 0.0
    %6101 = vmatprep.subr.mxu0 0.0
    %6102 = vmatpush1.xpose.msra.mxu0 0.0
    %6103 = vmatprep.subr.mxu0 0.0
    %6104 = vmatpush1.xpose.msra.mxu0 0.0
    %6105 = vmatprep.subr.mxu0 0.0
    %6106 = vmatpush1.xpose.msra.mxu0 0.0
    %6107 = vmatprep.subr.mxu0 0.0
    %6108 = vmatpush1.xpose.msra.mxu0 0.0
    %6109 = vmatprep.subr.mxu0 0.0
    %6110 = vmatpush1.xpose.msra.mxu0 0.0
    %6111 = vmatprep.subr.mxu0 0.0
    %6112 = vmatpush1.xpose.msra.mxu0 0.0
    %6113 = vmatprep.subr.mxu0 0.0
    %6114 = vmatpush1.xpose.msra.mxu0 0.0
    %6115 = vmatprep.subr.mxu0 0.0
    %6116 = vmatpush1.xpose.msra.mxu0 %v6091
    %6117 = vmatprep.subr.mxu0 0.0
    %6118 = vmatpush1.xpose.msra.mxu0 %v6089
    %6119 = vmatprep.subr.mxu0 0.0
    %6120 = vmatpush1.xpose.msra.mxu0 %v6087
    %6121 = vmatprep.subr.mxu0 0.0
    %6122 = vmatpush1.xpose.msra.mxu0 %v6085
    %6123 = vmatprep.subr.mxu0 0.0
    %6124 = vmatpush1.xpose.msra.mxu0 %v6083
    %6125 = vmatprep.subr.mxu0 0.0
    %6126 = vmatpush2.xpose.msra.mxu0 0.0
    %6127 = vmatprep.subr.mxu0 0.0
    %6128 = vmatpush2.xpose.msra.mxu0 0.0
    %6129 = vmatprep.subr.mxu0 0.0
    %6130 = vmatpush2.xpose.msra.mxu0 0.0
    %6131 = vmatprep.subr.mxu0 0.0
    %6132 = vmatpush2.xpose.msra.mxu0 0.0
    %6133 = vmatprep.subr.mxu0 0.0
    %6134 = vmatpush2.xpose.msra.mxu0 0.0
    %6135 = vmatprep.subr.mxu0 0.0
    %6136 = vmatpush2.xpose.msra.mxu0 0.0
    %6137 = vmatprep.subr.mxu0 0.0
    %6138 = vmatpush2.xpose.msra.mxu0 0.0
    %6139 = vmatprep.subr.mxu0 0.0
    %6140 = vmatpush2.xpose.msra.mxu0 0.0
    %6141 = vmatprep.subr.mxu0 0.0
    %6142 = vmatpush2.xpose.msra.mxu0 0.0
    %6143 = vmatprep.subr.mxu0 0.0
    %6144 = vmatpush2.xpose.msra.mxu0 0.0
    %6145 = vmatprep.subr.mxu0 0.0
    %6146 = vmatpush2.xpose.msra.mxu0 0.0
    %6147 = vmatprep.subr.mxu0 0.0
    %6148 = vmatpush2.xpose.msra.mxu0 0.0
    %6149 = vmatprep.subr.mxu0 0.0
    %6150 = vmatpush2.xpose.msra.mxu0 0.0
    %6151 = vmatprep.subr.mxu0 0.0
    %6152 = vmatpush2.xpose.msra.mxu0 0.0
    %6153 = vmatprep.subr.mxu0 0.0
    %6154 = vmatpush2.xpose.msra.mxu0 0.0
    %6155 = vmatprep.subr.mxu0 0.0
    %6156 = vmatpush2.xpose.msra.mxu0 0.0
    %6157 = vmatprep.mubr.f32.mxu0 0.0
    %6158 = vmatmul.mubr.f32.gmra.mxu0 %v6073
    %v6159 = vpop.f32.mrf.mxu0
    %v6160 = vadd.f32 0.0, %v6159
    %v6161 = vpop.f32.mrf.mxu0
    %6162 = vmatprep.mubr.f32.mxu0 0.0
    %6163 = vmatmul.mubr.f32.gmra.mxu0 %v6075
    %v6164 = vpop.f32.mrf.mxu0
    %v6165 = vadd.f32 0.0, %v6164
    %v6166 = vpop.f32.mrf.mxu0
    %6167 = vmatprep.mubr.f32.mxu0 0.0
    %6168 = vmatmul.mubr.f32.gmra.mxu0 %v6077
    %v6169 = vpop.f32.mrf.mxu0
    %v6170 = vadd.f32 0.0, %v6169
    %v6171 = vpop.f32.mrf.mxu0
    %6172 = vmatprep.mubr.f32.mxu0 0.0
    %6173 = vmatmul.mubr.f32.gmra.mxu0 %v6079
    %v6174 = vpop.f32.mrf.mxu0
    %v6175 = vadd.f32 0.0, %v6174
    %v6176 = vpop.f32.mrf.mxu0
    %6177 = vmatprep.mubr.f32.mxu0 0.0
    %6178 = vmatmul.mubr.f32.gmra.mxu0 %v6081
    %v6179 = vpop.f32.mrf.mxu0
    %v6180 = vadd.f32 0.0, %v6179
    %v6181 = vpop.f32.mrf.mxu0
    %6182 = vdwg.mxu0
    %6183 = vrot.lane.b32.xlu0 %v4530, 112
    %v6184 = vpop.permute.xlu0 %6183
    %6185 = vrot.lane.b32.xlu0 %v4535, 112
    %v6186 = vpop.permute.xlu0 %6185
    %6187 = vrot.lane.b32.xlu0 %v4540, 112
    %v6188 = vpop.permute.xlu0 %6187
    %6189 = vrot.lane.b32.xlu0 %v4545, 112
    %v6190 = vpop.permute.xlu0 %6189
    %6191 = vrot.lane.b32.xlu0 %v4550, 112
    %v6192 = vpop.permute.xlu0 %6191
    %6193 = vrot.lane.b32.xlu0 %v4658, 112
    %v6194 = vpop.permute.xlu0 %6193
    %6195 = vrot.lane.b32.xlu0 %v4663, 112
    %v6196 = vpop.permute.xlu0 %6195
    %6197 = vrot.lane.b32.xlu0 %v4668, 112
    %v6198 = vpop.permute.xlu0 %6197
    %6199 = vrot.lane.b32.xlu0 %v4673, 112
    %v6200 = vpop.permute.xlu0 %6199
    %6201 = vrot.lane.b32.xlu0 %v4678, 112
    %v6202 = vpop.permute.xlu0 %6201
    %v6203 = vsel %vm658, %v6184, 0
    %v6205 = vsel %vm658, %v6186, 0
    %v6207 = vsel %vm658, %v6188, 0
    %v6209 = vsel %vm658, %v6190, 0
    %v6211 = vsel %vm658, %v6192, 0
    %v6213 = vsel %vm658, %v6194, 0
    %v6215 = vsel %vm658, %v6196, 0
    %v6217 = vsel %vm658, %v6198, 0
    %v6219 = vsel %vm658, %v6200, 0
    %v6221 = vsel %vm658, %v6202, 0
    %6223 = vmatprep.subr.mxu0 0.0
    %6224 = vmatpush1.xpose.msra.mxu0 0.0
    %6225 = vmatprep.subr.mxu0 0.0
    %6226 = vmatpush1.xpose.msra.mxu0 0.0
    %6227 = vmatprep.subr.mxu0 0.0
    %6228 = vmatpush1.xpose.msra.mxu0 0.0
    %6229 = vmatprep.subr.mxu0 0.0
    %6230 = vmatpush1.xpose.msra.mxu0 0.0
    %6231 = vmatprep.subr.mxu0 0.0
    %6232 = vmatpush1.xpose.msra.mxu0 0.0
    %6233 = vmatprep.subr.mxu0 0.0
    %6234 = vmatpush1.xpose.msra.mxu0 0.0
    %6235 = vmatprep.subr.mxu0 0.0
    %6236 = vmatpush1.xpose.msra.mxu0 0.0
    %6237 = vmatprep.subr.mxu0 0.0
    %6238 = vmatpush1.xpose.msra.mxu0 0.0
    %6239 = vmatprep.subr.mxu0 0.0
    %6240 = vmatpush1.xpose.msra.mxu0 0.0
    %6241 = vmatprep.subr.mxu0 0.0
    %6242 = vmatpush1.xpose.msra.mxu0 0.0
    %6243 = vmatprep.subr.mxu0 0.0
    %6244 = vmatpush1.xpose.msra.mxu0 0.0
    %6245 = vmatprep.subr.mxu0 0.0
    %6246 = vmatpush1.xpose.msra.mxu0 %v6221
    %6247 = vmatprep.subr.mxu0 0.0
    %6248 = vmatpush1.xpose.msra.mxu0 %v6219
    %6249 = vmatprep.subr.mxu0 0.0
    %6250 = vmatpush1.xpose.msra.mxu0 %v6217
    %6251 = vmatprep.subr.mxu0 0.0
    %6252 = vmatpush1.xpose.msra.mxu0 %v6215
    %6253 = vmatprep.subr.mxu0 0.0
    %6254 = vmatpush1.xpose.msra.mxu0 %v6213
    %6255 = vmatprep.subr.mxu0 0.0
    %6256 = vmatpush2.xpose.msra.mxu0 0.0
    %6257 = vmatprep.subr.mxu0 0.0
    %6258 = vmatpush2.xpose.msra.mxu0 0.0
    %6259 = vmatprep.subr.mxu0 0.0
    %6260 = vmatpush2.xpose.msra.mxu0 0.0
    %6261 = vmatprep.subr.mxu0 0.0
    %6262 = vmatpush2.xpose.msra.mxu0 0.0
    %6263 = vmatprep.subr.mxu0 0.0
    %6264 = vmatpush2.xpose.msra.mxu0 0.0
    %6265 = vmatprep.subr.mxu0 0.0
    %6266 = vmatpush2.xpose.msra.mxu0 0.0
    %6267 = vmatprep.subr.mxu0 0.0
    %6268 = vmatpush2.xpose.msra.mxu0 0.0
    %6269 = vmatprep.subr.mxu0 0.0
    %6270 = vmatpush2.xpose.msra.mxu0 0.0
    %6271 = vmatprep.subr.mxu0 0.0
    %6272 = vmatpush2.xpose.msra.mxu0 0.0
    %6273 = vmatprep.subr.mxu0 0.0
    %6274 = vmatpush2.xpose.msra.mxu0 0.0
    %6275 = vmatprep.subr.mxu0 0.0
    %6276 = vmatpush2.xpose.msra.mxu0 0.0
    %6277 = vmatprep.subr.mxu0 0.0
    %6278 = vmatpush2.xpose.msra.mxu0 0.0
    %6279 = vmatprep.subr.mxu0 0.0
    %6280 = vmatpush2.xpose.msra.mxu0 0.0
    %6281 = vmatprep.subr.mxu0 0.0
    %6282 = vmatpush2.xpose.msra.mxu0 0.0
    %6283 = vmatprep.subr.mxu0 0.0
    %6284 = vmatpush2.xpose.msra.mxu0 0.0
    %6285 = vmatprep.subr.mxu0 0.0
    %6286 = vmatpush2.xpose.msra.mxu0 0.0
    %6287 = vmatprep.mubr.f32.mxu0 0.0
    %6288 = vmatmul.mubr.f32.gmra.mxu0 %v6203
    %v6289 = vpop.f32.mrf.mxu0
    %v6290 = vadd.f32 0.0, %v6289
    %v6291 = vpop.f32.mrf.mxu0
    %6292 = vmatprep.mubr.f32.mxu0 0.0
    %6293 = vmatmul.mubr.f32.gmra.mxu0 %v6205
    %v6294 = vpop.f32.mrf.mxu0
    %v6295 = vadd.f32 0.0, %v6294
    %v6296 = vpop.f32.mrf.mxu0
    %6297 = vmatprep.mubr.f32.mxu0 0.0
    %6298 = vmatmul.mubr.f32.gmra.mxu0 %v6207
    %v6299 = vpop.f32.mrf.mxu0
    %v6300 = vadd.f32 0.0, %v6299
    %v6301 = vpop.f32.mrf.mxu0
    %6302 = vmatprep.mubr.f32.mxu0 0.0
    %6303 = vmatmul.mubr.f32.gmra.mxu0 %v6209
    %v6304 = vpop.f32.mrf.mxu0
    %v6305 = vadd.f32 0.0, %v6304
    %v6306 = vpop.f32.mrf.mxu0
    %6307 = vmatprep.mubr.f32.mxu0 0.0
    %6308 = vmatmul.mubr.f32.gmra.mxu0 %v6211
    %v6309 = vpop.f32.mrf.mxu0
    %v6310 = vadd.f32 0.0, %v6309
    %v6311 = vpop.f32.mrf.mxu0
    %6312 = vdwg.mxu0
    %v6313 = vmul.f32 %v6160, 0.35355338
    %v6314 = vmul.f32 %v6165, 0.35355338
    %v6315 = vmul.f32 %v6170, 0.35355338
    %v6316 = vmul.f32 %v6175, 0.35355338
    %v6317 = vmul.f32 %v6180, 0.35355338
    %v6318 = vmul.f32 %v6290, 0.35355338
    %v6319 = vmul.f32 %v6295, 0.35355338
    %v6320 = vmul.f32 %v6300, 0.35355338
    %v6321 = vmul.f32 %v6305, 0.35355338
    %v6322 = vmul.f32 %v6310, 0.35355338
    %v6323 = vadd.f32 %v6313, %v77
    %v6324 = vadd.f32 %v6314, %v77
    %v6325 = vadd.f32 %v6315, %v77
    %v6326 = vadd.f32 %v6316, %v77
    %v6327 = vadd.f32 %v6317, %v77
    %v6328 = vadd.f32 %v6318, %v81
    %v6329 = vadd.f32 %v6319, %v81
    %v6330 = vadd.f32 %v6320, %v81
    %v6331 = vadd.f32 %v6321, %v81
    %v6332 = vadd.f32 %v6322, %v81
    %v6333 = vsel %vm919, %v6323, -inf
    %6334 = vmax.xlane.f32.xlu0 %v6333
    %v6335 = vpop.xlane.xlu0 %6334
    %v6336 = vsel %vm919, %v6324, -inf
    %6337 = vmax.xlane.f32.xlu0 %v6336
    %v6338 = vpop.xlane.xlu0 %6337
    %v6339 = vsel %vm919, %v6325, -inf
    %6340 = vmax.xlane.f32.xlu0 %v6339
    %v6341 = vpop.xlane.xlu0 %6340
    %v6342 = vsel %vm919, %v6326, -inf
    %6343 = vmax.xlane.f32.xlu0 %v6342
    %v6344 = vpop.xlane.xlu0 %6343
    %v6345 = vsel %vm919, %v6327, -inf
    %6346 = vmax.xlane.f32.xlu0 %v6345
    %v6347 = vpop.xlane.xlu0 %6346
    %v6348 = vsel %vm919, %v6328, -inf
    %6349 = vmax.xlane.f32.xlu0 %v6348
    %v6350 = vpop.xlane.xlu0 %6349
    %v6351 = vsel %vm919, %v6329, -inf
    %6352 = vmax.xlane.f32.xlu0 %v6351
    %v6353 = vpop.xlane.xlu0 %6352
    %v6354 = vsel %vm919, %v6330, -inf
    %6355 = vmax.xlane.f32.xlu0 %v6354
    %v6356 = vpop.xlane.xlu0 %6355
    %v6357 = vsel %vm919, %v6331, -inf
    %6358 = vmax.xlane.f32.xlu0 %v6357
    %v6359 = vpop.xlane.xlu0 %6358
    %v6360 = vsel %vm919, %v6332, -inf
    %6361 = vmax.xlane.f32.xlu0 %v6360
    %v6362 = vpop.xlane.xlu0 %6361
    %v6363 = vsub.f32 %v6323, %v6335
    %v6364 = vsub.f32 %v6324, %v6338
    %v6365 = vsub.f32 %v6325, %v6341
    %v6366 = vsub.f32 %v6326, %v6344
    %v6367 = vsub.f32 %v6327, %v6347
    %v6368 = vsub.f32 %v6328, %v6350
    %v6369 = vsub.f32 %v6329, %v6353
    %v6370 = vsub.f32 %v6330, %v6356
    %v6371 = vsub.f32 %v6331, %v6359
    %v6372 = vsub.f32 %v6332, %v6362
    %v6373 = vmul.f32 %v6363, 1.442695
    %v6374 = vpow.pop %v6373
    %v6375 = vmul.f32 %v6364, 1.442695
    %v6376 = vpow.pop %v6375
    %v6377 = vmul.f32 %v6365, 1.442695
    %v6378 = vpow.pop %v6377
    %v6379 = vmul.f32 %v6366, 1.442695
    %v6380 = vpow.pop %v6379
    %v6381 = vmul.f32 %v6367, 1.442695
    %v6382 = vpow.pop %v6381
    %v6383 = vmul.f32 %v6368, 1.442695
    %v6384 = vpow.pop %v6383
    %v6385 = vmul.f32 %v6369, 1.442695
    %v6386 = vpow.pop %v6385
    %v6387 = vmul.f32 %v6370, 1.442695
    %v6388 = vpow.pop %v6387
    %v6389 = vmul.f32 %v6371, 1.442695
    %v6390 = vpow.pop %v6389
    %v6391 = vmul.f32 %v6372, 1.442695
    %v6392 = vpow.pop %v6391
    %v6393 = vsel %vm919, %v6374, 0.0
    %6394 = vadd.xlane.f32.xlu0 %v6393
    %v6395 = vpop.xlane.xlu0 %6394
    %v6396 = vsel %vm919, %v6376, 0.0
    %6397 = vadd.xlane.f32.xlu0 %v6396
    %v6398 = vpop.xlane.xlu0 %6397
    %v6399 = vsel %vm919, %v6378, 0.0
    %6400 = vadd.xlane.f32.xlu0 %v6399
    %v6401 = vpop.xlane.xlu0 %6400
    %v6402 = vsel %vm919, %v6380, 0.0
    %6403 = vadd.xlane.f32.xlu0 %v6402
    %v6404 = vpop.xlane.xlu0 %6403
    %v6405 = vsel %vm919, %v6382, 0.0
    %6406 = vadd.xlane.f32.xlu0 %v6405
    %v6407 = vpop.xlane.xlu0 %6406
    %v6408 = vsel %vm919, %v6384, 0.0
    %6409 = vadd.xlane.f32.xlu0 %v6408
    %v6410 = vpop.xlane.xlu0 %6409
    %v6411 = vsel %vm919, %v6386, 0.0
    %6412 = vadd.xlane.f32.xlu0 %v6411
    %v6413 = vpop.xlane.xlu0 %6412
    %v6414 = vsel %vm919, %v6388, 0.0
    %6415 = vadd.xlane.f32.xlu0 %v6414
    %v6416 = vpop.xlane.xlu0 %6415
    %v6417 = vsel %vm919, %v6390, 0.0
    %6418 = vadd.xlane.f32.xlu0 %v6417
    %v6419 = vpop.xlane.xlu0 %6418
    %v6420 = vsel %vm919, %v6392, 0.0
    %6421 = vadd.xlane.f32.xlu0 %v6420
    %v6422 = vpop.xlane.xlu0 %6421
    %v6423 = vrcp.pop %v6395
    %v6424 = vrcp.pop %v6398
    %v6425 = vrcp.pop %v6401
    %v6426 = vrcp.pop %v6404
    %v6427 = vrcp.pop %v6407
    %v6428 = vrcp.pop %v6410
    %v6429 = vrcp.pop %v6413
    %v6430 = vrcp.pop %v6416
    %v6431 = vrcp.pop %v6419
    %v6432 = vrcp.pop %v6422
    %v6433 = vmul.f32 %v6374, %v6423
    %v6434 = vmul.f32 %v6376, %v6424
    %v6435 = vmul.f32 %v6378, %v6425
    %v6436 = vmul.f32 %v6380, %v6426
    %v6437 = vmul.f32 %v6382, %v6427
    %v6438 = vmul.f32 %v6384, %v6428
    %v6439 = vmul.f32 %v6386, %v6429
    %v6440 = vmul.f32 %v6388, %v6430
    %v6441 = vmul.f32 %v6390, %v6431
    %v6442 = vmul.f32 %v6392, %v6432
    %s6443 = scalar_lea.vmem [#allocation2], 400
    %6444 = vst.msk [vmem:[%s6443] sm:$0xff] %vm919, %v6433
    %6445 = vst.msk [vmem:[%s6443 + $0x8] sm:$0xff] %vm919, %v6434
    %6446 = vst.msk [vmem:[%s6443 + $0x10] sm:$0xff] %vm919, %v6435
    %6447 = vst.msk [vmem:[%s6443 + $0x18] sm:$0xff] %vm919, %v6436
    %6448 = vst.msk [vmem:[%s6443 + $0x20] sm:$0xff] %vm919, %v6437
    %s6449 = scalar_lea.vmem [#allocation2], 560
    %6450 = vst.msk [vmem:[%s6449] sm:$0xff] %vm919, %v6438
    %6451 = vst.msk [vmem:[%s6449 + $0x8] sm:$0xff] %vm919, %v6439
    %6452 = vst.msk [vmem:[%s6449 + $0x10] sm:$0xff] %vm919, %v6440
    %6453 = vst.msk [vmem:[%s6449 + $0x18] sm:$0xff] %vm919, %v6441
    %6454 = vst.msk [vmem:[%s6449 + $0x20] sm:$0xff] %vm919, %v6442
    %6455 = vrot.lane.b32.xlu0 %v4761, 112
    %v6456 = vpop.permute.xlu0 %6455
    %6457 = vrot.lane.b32.xlu0 %v4766, 112
    %v6458 = vpop.permute.xlu0 %6457
    %6459 = vrot.lane.b32.xlu0 %v4771, 112
    %v6460 = vpop.permute.xlu0 %6459
    %6461 = vrot.lane.b32.xlu0 %v4776, 112
    %v6462 = vpop.permute.xlu0 %6461
    %6463 = vrot.lane.b32.xlu0 %v4781, 112
    %v6464 = vpop.permute.xlu0 %6463
    %v6471 = vsel %vm919, %v6433, 0
    %v6474 = vsel %vm919, %v6434, 0
    %v6477 = vsel %vm919, %v6435, 0
    %v6480 = vsel %vm919, %v6436, 0
    %v6483 = vsel %vm919, %v6437, 0
    %6485 = vmatprep.subr.mxu0 0.0
    %6486 = vmatpush1.msra.mxu0 0.0
    %6487 = vmatprep.subr.mxu0 0.0
    %6488 = vmatpush1.msra.mxu0 0.0
    %6489 = vmatprep.subr.mxu0 0.0
    %6490 = vmatpush1.msra.mxu0 0.0
    %6491 = vmatprep.subr.mxu0 0.0
    %6492 = vmatpush1.msra.mxu0 0.0
    %6493 = vmatprep.subr.mxu0 0.0
    %6494 = vmatpush1.msra.mxu0 0.0
    %6495 = vmatprep.subr.mxu0 0.0
    %6496 = vmatpush1.msra.mxu0 0.0
    %6497 = vmatprep.subr.mxu0 0.0
    %6498 = vmatpush1.msra.mxu0 0.0
    %6499 = vmatprep.subr.mxu0 0.0
    %6500 = vmatpush1.msra.mxu0 0.0
    %6501 = vmatprep.subr.mxu0 0.0
    %6502 = vmatpush1.msra.mxu0 0.0
    %6503 = vmatprep.subr.mxu0 0.0
    %6504 = vmatpush1.msra.mxu0 0.0
    %6505 = vmatprep.subr.mxu0 0.0
    %6506 = vmatpush1.msra.mxu0 0.0
    %6507 = vmatprep.subr.mxu0 0.0
    %6508 = vmatpush1.msra.mxu0 %v6464
    %6509 = vmatprep.subr.mxu0 0.0
    %6510 = vmatpush1.msra.mxu0 %v6462
    %6511 = vmatprep.subr.mxu0 0.0
    %6512 = vmatpush1.msra.mxu0 %v6460
    %6513 = vmatprep.subr.mxu0 0.0
    %6514 = vmatpush1.msra.mxu0 %v6458
    %6515 = vmatprep.subr.mxu0 0.0
    %6516 = vmatpush1.msra.mxu0 %v6456
    %6517 = vmatprep.subr.mxu0 0.0
    %6518 = vmatpush2.msra.mxu0 0.0
    %6519 = vmatprep.subr.mxu0 0.0
    %6520 = vmatpush2.msra.mxu0 0.0
    %6521 = vmatprep.subr.mxu0 0.0
    %6522 = vmatpush2.msra.mxu0 0.0
    %6523 = vmatprep.subr.mxu0 0.0
    %6524 = vmatpush2.msra.mxu0 0.0
    %6525 = vmatprep.subr.mxu0 0.0
    %6526 = vmatpush2.msra.mxu0 0.0
    %6527 = vmatprep.subr.mxu0 0.0
    %6528 = vmatpush2.msra.mxu0 0.0
    %6529 = vmatprep.subr.mxu0 0.0
    %6530 = vmatpush2.msra.mxu0 0.0
    %6531 = vmatprep.subr.mxu0 0.0
    %6532 = vmatpush2.msra.mxu0 0.0
    %6533 = vmatprep.subr.mxu0 0.0
    %6534 = vmatpush2.msra.mxu0 0.0
    %6535 = vmatprep.subr.mxu0 0.0
    %6536 = vmatpush2.msra.mxu0 0.0
    %6537 = vmatprep.subr.mxu0 0.0
    %6538 = vmatpush2.msra.mxu0 0.0
    %6539 = vmatprep.subr.mxu0 0.0
    %6540 = vmatpush2.msra.mxu0 0.0
    %6541 = vmatprep.subr.mxu0 0.0
    %6542 = vmatpush2.msra.mxu0 0.0
    %6543 = vmatprep.subr.mxu0 0.0
    %6544 = vmatpush2.msra.mxu0 0.0
    %6545 = vmatprep.subr.mxu0 0.0
    %6546 = vmatpush2.msra.mxu0 0.0
    %6547 = vmatprep.subr.mxu0 0.0
    %6548 = vmatpush2.msra.mxu0 0.0
    %6549 = vmatprep.mubr.f32.mxu0 0.0
    %6550 = vmatmul.mubr.f32.gmra.mxu0 %v6471
    %v6551 = vpop.f32.mrf.mxu0
    %v6552 = vadd.f32 0.0, %v6551
    %v6553 = vpop.f32.mrf.mxu0
    %6554 = vmatprep.mubr.f32.mxu0 0.0
    %6555 = vmatmul.mubr.f32.gmra.mxu0 %v6474
    %v6556 = vpop.f32.mrf.mxu0
    %v6557 = vadd.f32 0.0, %v6556
    %v6558 = vpop.f32.mrf.mxu0
    %6559 = vmatprep.mubr.f32.mxu0 0.0
    %6560 = vmatmul.mubr.f32.gmra.mxu0 %v6477
    %v6561 = vpop.f32.mrf.mxu0
    %v6562 = vadd.f32 0.0, %v6561
    %v6563 = vpop.f32.mrf.mxu0
    %6564 = vmatprep.mubr.f32.mxu0 0.0
    %6565 = vmatmul.mubr.f32.gmra.mxu0 %v6480
    %v6566 = vpop.f32.mrf.mxu0
    %v6567 = vadd.f32 0.0, %v6566
    %v6568 = vpop.f32.mrf.mxu0
    %6569 = vmatprep.mubr.f32.mxu0 0.0
    %6570 = vmatmul.mubr.f32.gmra.mxu0 %v6483
    %v6571 = vpop.f32.mrf.mxu0
    %v6572 = vadd.f32 0.0, %v6571
    %v6573 = vpop.f32.mrf.mxu0
    %6574 = vdwg.mxu0
    %6575 = vrot.lane.b32.xlu0 %v4786, 112
    %v6576 = vpop.permute.xlu0 %6575
    %6577 = vrot.lane.b32.xlu0 %v4791, 112
    %v6578 = vpop.permute.xlu0 %6577
    %6579 = vrot.lane.b32.xlu0 %v4796, 112
    %v6580 = vpop.permute.xlu0 %6579
    %6581 = vrot.lane.b32.xlu0 %v4801, 112
    %v6582 = vpop.permute.xlu0 %6581
    %6583 = vrot.lane.b32.xlu0 %v4806, 112
    %v6584 = vpop.permute.xlu0 %6583
    %v6591 = vsel %vm919, %v6438, 0
    %v6594 = vsel %vm919, %v6439, 0
    %v6597 = vsel %vm919, %v6440, 0
    %v6600 = vsel %vm919, %v6441, 0
    %v6603 = vsel %vm919, %v6442, 0
    %6605 = vmatprep.subr.mxu0 0.0
    %6606 = vmatpush1.msra.mxu0 0.0
    %6607 = vmatprep.subr.mxu0 0.0
    %6608 = vmatpush1.msra.mxu0 0.0
    %6609 = vmatprep.subr.mxu0 0.0
    %6610 = vmatpush1.msra.mxu0 0.0
    %6611 = vmatprep.subr.mxu0 0.0
    %6612 = vmatpush1.msra.mxu0 0.0
    %6613 = vmatprep.subr.mxu0 0.0
    %6614 = vmatpush1.msra.mxu0 0.0
    %6615 = vmatprep.subr.mxu0 0.0
    %6616 = vmatpush1.msra.mxu0 0.0
    %6617 = vmatprep.subr.mxu0 0.0
    %6618 = vmatpush1.msra.mxu0 0.0
    %6619 = vmatprep.subr.mxu0 0.0
    %6620 = vmatpush1.msra.mxu0 0.0
    %6621 = vmatprep.subr.mxu0 0.0
    %6622 = vmatpush1.msra.mxu0 0.0
    %6623 = vmatprep.subr.mxu0 0.0
    %6624 = vmatpush1.msra.mxu0 0.0
    %6625 = vmatprep.subr.mxu0 0.0
    %6626 = vmatpush1.msra.mxu0 0.0
    %6627 = vmatprep.subr.mxu0 0.0
    %6628 = vmatpush1.msra.mxu0 %v6584
    %6629 = vmatprep.subr.mxu0 0.0
    %6630 = vmatpush1.msra.mxu0 %v6582
    %6631 = vmatprep.subr.mxu0 0.0
    %6632 = vmatpush1.msra.mxu0 %v6580
    %6633 = vmatprep.subr.mxu0 0.0
    %6634 = vmatpush1.msra.mxu0 %v6578
    %6635 = vmatprep.subr.mxu0 0.0
    %6636 = vmatpush1.msra.mxu0 %v6576
    %6637 = vmatprep.subr.mxu0 0.0
    %6638 = vmatpush2.msra.mxu0 0.0
    %6639 = vmatprep.subr.mxu0 0.0
    %6640 = vmatpush2.msra.mxu0 0.0
    %6641 = vmatprep.subr.mxu0 0.0
    %6642 = vmatpush2.msra.mxu0 0.0
    %6643 = vmatprep.subr.mxu0 0.0
    %6644 = vmatpush2.msra.mxu0 0.0
    %6645 = vmatprep.subr.mxu0 0.0
    %6646 = vmatpush2.msra.mxu0 0.0
    %6647 = vmatprep.subr.mxu0 0.0
    %6648 = vmatpush2.msra.mxu0 0.0
    %6649 = vmatprep.subr.mxu0 0.0
    %6650 = vmatpush2.msra.mxu0 0.0
    %6651 = vmatprep.subr.mxu0 0.0
    %6652 = vmatpush2.msra.mxu0 0.0
    %6653 = vmatprep.subr.mxu0 0.0
    %6654 = vmatpush2.msra.mxu0 0.0
    %6655 = vmatprep.subr.mxu0 0.0
    %6656 = vmatpush2.msra.mxu0 0.0
    %6657 = vmatprep.subr.mxu0 0.0
    %6658 = vmatpush2.msra.mxu0 0.0
    %6659 = vmatprep.subr.mxu0 0.0
    %6660 = vmatpush2.msra.mxu0 0.0
    %6661 = vmatprep.subr.mxu0 0.0
    %6662 = vmatpush2.msra.mxu0 0.0
    %6663 = vmatprep.subr.mxu0 0.0
    %6664 = vmatpush2.msra.mxu0 0.0
    %6665 = vmatprep.subr.mxu0 0.0
    %6666 = vmatpush2.msra.mxu0 0.0
    %6667 = vmatprep.subr.mxu0 0.0
    %6668 = vmatpush2.msra.mxu0 0.0
    %6669 = vmatprep.mubr.f32.mxu0 0.0
    %6670 = vmatmul.mubr.f32.gmra.mxu0 %v6591
    %v6671 = vpop.f32.mrf.mxu0
    %v6672 = vadd.f32 0.0, %v6671
    %v6673 = vpop.f32.mrf.mxu0
    %6674 = vmatprep.mubr.f32.mxu0 0.0
    %6675 = vmatmul.mubr.f32.gmra.mxu0 %v6594
    %v6676 = vpop.f32.mrf.mxu0
    %v6677 = vadd.f32 0.0, %v6676
    %v6678 = vpop.f32.mrf.mxu0
    %6679 = vmatprep.mubr.f32.mxu0 0.0
    %6680 = vmatmul.mubr.f32.gmra.mxu0 %v6597
    %v6681 = vpop.f32.mrf.mxu0
    %v6682 = vadd.f32 0.0, %v6681
    %v6683 = vpop.f32.mrf.mxu0
    %6684 = vmatprep.mubr.f32.mxu0 0.0
    %6685 = vmatmul.mubr.f32.gmra.mxu0 %v6600
    %v6686 = vpop.f32.mrf.mxu0
    %v6687 = vadd.f32 0.0, %v6686
    %v6688 = vpop.f32.mrf.mxu0
    %6689 = vmatprep.mubr.f32.mxu0 0.0
    %6690 = vmatmul.mubr.f32.gmra.mxu0 %v6603
    %v6691 = vpop.f32.mrf.mxu0
    %v6692 = vadd.f32 0.0, %v6691
    %v6693 = vpop.f32.mrf.mxu0
    %6694 = vdwg.mxu0
    %6695 = vrot.lane.b32.xlu0 %v4505, 104
    %v6696 = vpop.permute.xlu0 %6695
    %6697 = vrot.lane.b32.xlu0 %v4510, 104
    %v6698 = vpop.permute.xlu0 %6697
    %6699 = vrot.lane.b32.xlu0 %v4515, 104
    %v6700 = vpop.permute.xlu0 %6699
    %6701 = vrot.lane.b32.xlu0 %v4520, 104
    %v6702 = vpop.permute.xlu0 %6701
    %6703 = vrot.lane.b32.xlu0 %v4525, 104
    %v6704 = vpop.permute.xlu0 %6703
    %6705 = vrot.lane.b32.xlu0 %v4633, 104
    %v6706 = vpop.permute.xlu0 %6705
    %6707 = vrot.lane.b32.xlu0 %v4638, 104
    %v6708 = vpop.permute.xlu0 %6707
    %6709 = vrot.lane.b32.xlu0 %v4643, 104
    %v6710 = vpop.permute.xlu0 %6709
    %6711 = vrot.lane.b32.xlu0 %v4648, 104
    %v6712 = vpop.permute.xlu0 %6711
    %6713 = vrot.lane.b32.xlu0 %v4653, 104
    %v6714 = vpop.permute.xlu0 %6713
    %v6715 = vsel %vm658, %v6696, 0
    %v6717 = vsel %vm658, %v6698, 0
    %v6719 = vsel %vm658, %v6700, 0
    %v6721 = vsel %vm658, %v6702, 0
    %v6723 = vsel %vm658, %v6704, 0
    %v6725 = vsel %vm658, %v6706, 0
    %v6727 = vsel %vm658, %v6708, 0
    %v6729 = vsel %vm658, %v6710, 0
    %v6731 = vsel %vm658, %v6712, 0
    %v6733 = vsel %vm658, %v6714, 0
    %6735 = vmatprep.subr.mxu0 0.0
    %6736 = vmatpush1.xpose.msra.mxu0 0.0
    %6737 = vmatprep.subr.mxu0 0.0
    %6738 = vmatpush1.xpose.msra.mxu0 0.0
    %6739 = vmatprep.subr.mxu0 0.0
    %6740 = vmatpush1.xpose.msra.mxu0 0.0
    %6741 = vmatprep.subr.mxu0 0.0
    %6742 = vmatpush1.xpose.msra.mxu0 0.0
    %6743 = vmatprep.subr.mxu0 0.0
    %6744 = vmatpush1.xpose.msra.mxu0 0.0
    %6745 = vmatprep.subr.mxu0 0.0
    %6746 = vmatpush1.xpose.msra.mxu0 0.0
    %6747 = vmatprep.subr.mxu0 0.0
    %6748 = vmatpush1.xpose.msra.mxu0 0.0
    %6749 = vmatprep.subr.mxu0 0.0
    %6750 = vmatpush1.xpose.msra.mxu0 0.0
    %6751 = vmatprep.subr.mxu0 0.0
    %6752 = vmatpush1.xpose.msra.mxu0 0.0
    %6753 = vmatprep.subr.mxu0 0.0
    %6754 = vmatpush1.xpose.msra.mxu0 0.0
    %6755 = vmatprep.subr.mxu0 0.0
    %6756 = vmatpush1.xpose.msra.mxu0 0.0
    %6757 = vmatprep.subr.mxu0 0.0
    %6758 = vmatpush1.xpose.msra.mxu0 %v6733
    %6759 = vmatprep.subr.mxu0 0.0
    %6760 = vmatpush1.xpose.msra.mxu0 %v6731
    %6761 = vmatprep.subr.mxu0 0.0
    %6762 = vmatpush1.xpose.msra.mxu0 %v6729
    %6763 = vmatprep.subr.mxu0 0.0
    %6764 = vmatpush1.xpose.msra.mxu0 %v6727
    %6765 = vmatprep.subr.mxu0 0.0
    %6766 = vmatpush1.xpose.msra.mxu0 %v6725
    %6767 = vmatprep.subr.mxu0 0.0
    %6768 = vmatpush2.xpose.msra.mxu0 0.0
    %6769 = vmatprep.subr.mxu0 0.0
    %6770 = vmatpush2.xpose.msra.mxu0 0.0
    %6771 = vmatprep.subr.mxu0 0.0
    %6772 = vmatpush2.xpose.msra.mxu0 0.0
    %6773 = vmatprep.subr.mxu0 0.0
    %6774 = vmatpush2.xpose.msra.mxu0 0.0
    %6775 = vmatprep.subr.mxu0 0.0
    %6776 = vmatpush2.xpose.msra.mxu0 0.0
    %6777 = vmatprep.subr.mxu0 0.0
    %6778 = vmatpush2.xpose.msra.mxu0 0.0
    %6779 = vmatprep.subr.mxu0 0.0
    %6780 = vmatpush2.xpose.msra.mxu0 0.0
    %6781 = vmatprep.subr.mxu0 0.0
    %6782 = vmatpush2.xpose.msra.mxu0 0.0
    %6783 = vmatprep.subr.mxu0 0.0
    %6784 = vmatpush2.xpose.msra.mxu0 0.0
    %6785 = vmatprep.subr.mxu0 0.0
    %6786 = vmatpush2.xpose.msra.mxu0 0.0
    %6787 = vmatprep.subr.mxu0 0.0
    %6788 = vmatpush2.xpose.msra.mxu0 0.0
    %6789 = vmatprep.subr.mxu0 0.0
    %6790 = vmatpush2.xpose.msra.mxu0 0.0
    %6791 = vmatprep.subr.mxu0 0.0
    %6792 = vmatpush2.xpose.msra.mxu0 0.0
    %6793 = vmatprep.subr.mxu0 0.0
    %6794 = vmatpush2.xpose.msra.mxu0 0.0
    %6795 = vmatprep.subr.mxu0 0.0
    %6796 = vmatpush2.xpose.msra.mxu0 0.0
    %6797 = vmatprep.subr.mxu0 0.0
    %6798 = vmatpush2.xpose.msra.mxu0 0.0
    %6799 = vmatprep.mubr.f32.mxu0 0.0
    %6800 = vmatmul.mubr.f32.gmra.mxu0 %v6715
    %v6801 = vpop.f32.mrf.mxu0
    %v6802 = vadd.f32 0.0, %v6801
    %v6803 = vpop.f32.mrf.mxu0
    %6804 = vmatprep.mubr.f32.mxu0 0.0
    %6805 = vmatmul.mubr.f32.gmra.mxu0 %v6717
    %v6806 = vpop.f32.mrf.mxu0
    %v6807 = vadd.f32 0.0, %v6806
    %v6808 = vpop.f32.mrf.mxu0
    %6809 = vmatprep.mubr.f32.mxu0 0.0
    %6810 = vmatmul.mubr.f32.gmra.mxu0 %v6719
    %v6811 = vpop.f32.mrf.mxu0
    %v6812 = vadd.f32 0.0, %v6811
    %v6813 = vpop.f32.mrf.mxu0
    %6814 = vmatprep.mubr.f32.mxu0 0.0
    %6815 = vmatmul.mubr.f32.gmra.mxu0 %v6721
    %v6816 = vpop.f32.mrf.mxu0
    %v6817 = vadd.f32 0.0, %v6816
    %v6818 = vpop.f32.mrf.mxu0
    %6819 = vmatprep.mubr.f32.mxu0 0.0
    %6820 = vmatmul.mubr.f32.gmra.mxu0 %v6723
    %v6821 = vpop.f32.mrf.mxu0
    %v6822 = vadd.f32 0.0, %v6821
    %v6823 = vpop.f32.mrf.mxu0
    %6824 = vdwg.mxu0
    %6825 = vrot.lane.b32.xlu0 %v4530, 104
    %v6826 = vpop.permute.xlu0 %6825
    %6827 = vrot.lane.b32.xlu0 %v4535, 104
    %v6828 = vpop.permute.xlu0 %6827
    %6829 = vrot.lane.b32.xlu0 %v4540, 104
    %v6830 = vpop.permute.xlu0 %6829
    %6831 = vrot.lane.b32.xlu0 %v4545, 104
    %v6832 = vpop.permute.xlu0 %6831
    %6833 = vrot.lane.b32.xlu0 %v4550, 104
    %v6834 = vpop.permute.xlu0 %6833
    %6835 = vrot.lane.b32.xlu0 %v4658, 104
    %v6836 = vpop.permute.xlu0 %6835
    %6837 = vrot.lane.b32.xlu0 %v4663, 104
    %v6838 = vpop.permute.xlu0 %6837
    %6839 = vrot.lane.b32.xlu0 %v4668, 104
    %v6840 = vpop.permute.xlu0 %6839
    %6841 = vrot.lane.b32.xlu0 %v4673, 104
    %v6842 = vpop.permute.xlu0 %6841
    %6843 = vrot.lane.b32.xlu0 %v4678, 104
    %v6844 = vpop.permute.xlu0 %6843
    %v6845 = vsel %vm658, %v6826, 0
    %v6847 = vsel %vm658, %v6828, 0
    %v6849 = vsel %vm658, %v6830, 0
    %v6851 = vsel %vm658, %v6832, 0
    %v6853 = vsel %vm658, %v6834, 0
    %v6855 = vsel %vm658, %v6836, 0
    %v6857 = vsel %vm658, %v6838, 0
    %v6859 = vsel %vm658, %v6840, 0
    %v6861 = vsel %vm658, %v6842, 0
    %v6863 = vsel %vm658, %v6844, 0
    %6865 = vmatprep.subr.mxu0 0.0
    %6866 = vmatpush1.xpose.msra.mxu0 0.0
    %6867 = vmatprep.subr.mxu0 0.0
    %6868 = vmatpush1.xpose.msra.mxu0 0.0
    %6869 = vmatprep.subr.mxu0 0.0
    %6870 = vmatpush1.xpose.msra.mxu0 0.0
    %6871 = vmatprep.subr.mxu0 0.0
    %6872 = vmatpush1.xpose.msra.mxu0 0.0
    %6873 = vmatprep.subr.mxu0 0.0
    %6874 = vmatpush1.xpose.msra.mxu0 0.0
    %6875 = vmatprep.subr.mxu0 0.0
    %6876 = vmatpush1.xpose.msra.mxu0 0.0
    %6877 = vmatprep.subr.mxu0 0.0
    %6878 = vmatpush1.xpose.msra.mxu0 0.0
    %6879 = vmatprep.subr.mxu0 0.0
    %6880 = vmatpush1.xpose.msra.mxu0 0.0
    %6881 = vmatprep.subr.mxu0 0.0
    %6882 = vmatpush1.xpose.msra.mxu0 0.0
    %6883 = vmatprep.subr.mxu0 0.0
    %6884 = vmatpush1.xpose.msra.mxu0 0.0
    %6885 = vmatprep.subr.mxu0 0.0
    %6886 = vmatpush1.xpose.msra.mxu0 0.0
    %6887 = vmatprep.subr.mxu0 0.0
    %6888 = vmatpush1.xpose.msra.mxu0 %v6863
    %6889 = vmatprep.subr.mxu0 0.0
    %6890 = vmatpush1.xpose.msra.mxu0 %v6861
    %6891 = vmatprep.subr.mxu0 0.0
    %6892 = vmatpush1.xpose.msra.mxu0 %v6859
    %6893 = vmatprep.subr.mxu0 0.0
    %6894 = vmatpush1.xpose.msra.mxu0 %v6857
    %6895 = vmatprep.subr.mxu0 0.0
    %6896 = vmatpush1.xpose.msra.mxu0 %v6855
    %6897 = vmatprep.subr.mxu0 0.0
    %6898 = vmatpush2.xpose.msra.mxu0 0.0
    %6899 = vmatprep.subr.mxu0 0.0
    %6900 = vmatpush2.xpose.msra.mxu0 0.0
    %6901 = vmatprep.subr.mxu0 0.0
    %6902 = vmatpush2.xpose.msra.mxu0 0.0
    %6903 = vmatprep.subr.mxu0 0.0
    %6904 = vmatpush2.xpose.msra.mxu0 0.0
    %6905 = vmatprep.subr.mxu0 0.0
    %6906 = vmatpush2.xpose.msra.mxu0 0.0
    %6907 = vmatprep.subr.mxu0 0.0
    %6908 = vmatpush2.xpose.msra.mxu0 0.0
    %6909 = vmatprep.subr.mxu0 0.0
    %6910 = vmatpush2.xpose.msra.mxu0 0.0
    %6911 = vmatprep.subr.mxu0 0.0
    %6912 = vmatpush2.xpose.msra.mxu0 0.0
    %6913 = vmatprep.subr.mxu0 0.0
    %6914 = vmatpush2.xpose.msra.mxu0 0.0
    %6915 = vmatprep.subr.mxu0 0.0
    %6916 = vmatpush2.xpose.msra.mxu0 0.0
    %6917 = vmatprep.subr.mxu0 0.0
    %6918 = vmatpush2.xpose.msra.mxu0 0.0
    %6919 = vmatprep.subr.mxu0 0.0
    %6920 = vmatpush2.xpose.msra.mxu0 0.0
    %6921 = vmatprep.subr.mxu0 0.0
    %6922 = vmatpush2.xpose.msra.mxu0 0.0
    %6923 = vmatprep.subr.mxu0 0.0
    %6924 = vmatpush2.xpose.msra.mxu0 0.0
    %6925 = vmatprep.subr.mxu0 0.0
    %6926 = vmatpush2.xpose.msra.mxu0 0.0
    %6927 = vmatprep.subr.mxu0 0.0
    %6928 = vmatpush2.xpose.msra.mxu0 0.0
    %6929 = vmatprep.mubr.f32.mxu0 0.0
    %6930 = vmatmul.mubr.f32.gmra.mxu0 %v6845
    %v6931 = vpop.f32.mrf.mxu0
    %v6932 = vadd.f32 0.0, %v6931
    %v6933 = vpop.f32.mrf.mxu0
    %6934 = vmatprep.mubr.f32.mxu0 0.0
    %6935 = vmatmul.mubr.f32.gmra.mxu0 %v6847
    %v6936 = vpop.f32.mrf.mxu0
    %v6937 = vadd.f32 0.0, %v6936
    %v6938 = vpop.f32.mrf.mxu0
    %6939 = vmatprep.mubr.f32.mxu0 0.0
    %6940 = vmatmul.mubr.f32.gmra.mxu0 %v6849
    %v6941 = vpop.f32.mrf.mxu0
    %v6942 = vadd.f32 0.0, %v6941
    %v6943 = vpop.f32.mrf.mxu0
    %6944 = vmatprep.mubr.f32.mxu0 0.0
    %6945 = vmatmul.mubr.f32.gmra.mxu0 %v6851
    %v6946 = vpop.f32.mrf.mxu0
    %v6947 = vadd.f32 0.0, %v6946
    %v6948 = vpop.f32.mrf.mxu0
    %6949 = vmatprep.mubr.f32.mxu0 0.0
    %6950 = vmatmul.mubr.f32.gmra.mxu0 %v6853
    %v6951 = vpop.f32.mrf.mxu0
    %v6952 = vadd.f32 0.0, %v6951
    %v6953 = vpop.f32.mrf.mxu0
    %6954 = vdwg.mxu0
    %v6955 = vmul.f32 %v6802, 0.35355338
    %v6956 = vmul.f32 %v6807, 0.35355338
    %v6957 = vmul.f32 %v6812, 0.35355338
    %v6958 = vmul.f32 %v6817, 0.35355338
    %v6959 = vmul.f32 %v6822, 0.35355338
    %v6960 = vmul.f32 %v6932, 0.35355338
    %v6961 = vmul.f32 %v6937, 0.35355338
    %v6962 = vmul.f32 %v6942, 0.35355338
    %v6963 = vmul.f32 %v6947, 0.35355338
    %v6964 = vmul.f32 %v6952, 0.35355338
    %v6965 = vadd.f32 %v6955, %v77
    %v6966 = vadd.f32 %v6956, %v77
    %v6967 = vadd.f32 %v6957, %v77
    %v6968 = vadd.f32 %v6958, %v77
    %v6969 = vadd.f32 %v6959, %v77
    %v6970 = vadd.f32 %v6960, %v81
    %v6971 = vadd.f32 %v6961, %v81
    %v6972 = vadd.f32 %v6962, %v81
    %v6973 = vadd.f32 %v6963, %v81
    %v6974 = vadd.f32 %v6964, %v81
    %v6975 = vsel %vm919, %v6965, -inf
    %6976 = vmax.xlane.f32.xlu0 %v6975
    %v6977 = vpop.xlane.xlu0 %6976
    %v6978 = vsel %vm919, %v6966, -inf
    %6979 = vmax.xlane.f32.xlu0 %v6978
    %v6980 = vpop.xlane.xlu0 %6979
    %v6981 = vsel %vm919, %v6967, -inf
    %6982 = vmax.xlane.f32.xlu0 %v6981
    %v6983 = vpop.xlane.xlu0 %6982
    %v6984 = vsel %vm919, %v6968, -inf
    %6985 = vmax.xlane.f32.xlu0 %v6984
    %v6986 = vpop.xlane.xlu0 %6985
    %v6987 = vsel %vm919, %v6969, -inf
    %6988 = vmax.xlane.f32.xlu0 %v6987
    %v6989 = vpop.xlane.xlu0 %6988
    %v6990 = vsel %vm919, %v6970, -inf
    %6991 = vmax.xlane.f32.xlu0 %v6990
    %v6992 = vpop.xlane.xlu0 %6991
    %v6993 = vsel %vm919, %v6971, -inf
    %6994 = vmax.xlane.f32.xlu0 %v6993
    %v6995 = vpop.xlane.xlu0 %6994
    %v6996 = vsel %vm919, %v6972, -inf
    %6997 = vmax.xlane.f32.xlu0 %v6996
    %v6998 = vpop.xlane.xlu0 %6997
    %v6999 = vsel %vm919, %v6973, -inf
    %7000 = vmax.xlane.f32.xlu0 %v6999
    %v7001 = vpop.xlane.xlu0 %7000
    %v7002 = vsel %vm919, %v6974, -inf
    %7003 = vmax.xlane.f32.xlu0 %v7002
    %v7004 = vpop.xlane.xlu0 %7003
    %v7005 = vsub.f32 %v6965, %v6977
    %v7006 = vsub.f32 %v6966, %v6980
    %v7007 = vsub.f32 %v6967, %v6983
    %v7008 = vsub.f32 %v6968, %v6986
    %v7009 = vsub.f32 %v6969, %v6989
    %v7010 = vsub.f32 %v6970, %v6992
    %v7011 = vsub.f32 %v6971, %v6995
    %v7012 = vsub.f32 %v6972, %v6998
    %v7013 = vsub.f32 %v6973, %v7001
    %v7014 = vsub.f32 %v6974, %v7004
    %v7015 = vmul.f32 %v7005, 1.442695
    %v7016 = vpow.pop %v7015
    %v7017 = vmul.f32 %v7006, 1.442695
    %v7018 = vpow.pop %v7017
    %v7019 = vmul.f32 %v7007, 1.442695
    %v7020 = vpow.pop %v7019
    %v7021 = vmul.f32 %v7008, 1.442695
    %v7022 = vpow.pop %v7021
    %v7023 = vmul.f32 %v7009, 1.442695
    %v7024 = vpow.pop %v7023
    %v7025 = vmul.f32 %v7010, 1.442695
    %v7026 = vpow.pop %v7025
    %v7027 = vmul.f32 %v7011, 1.442695
    %v7028 = vpow.pop %v7027
    %v7029 = vmul.f32 %v7012, 1.442695
    %v7030 = vpow.pop %v7029
    %v7031 = vmul.f32 %v7013, 1.442695
    %v7032 = vpow.pop %v7031
    %v7033 = vmul.f32 %v7014, 1.442695
    %v7034 = vpow.pop %v7033
    %v7035 = vsel %vm919, %v7016, 0.0
    %7036 = vadd.xlane.f32.xlu0 %v7035
    %v7037 = vpop.xlane.xlu0 %7036
    %v7038 = vsel %vm919, %v7018, 0.0
    %7039 = vadd.xlane.f32.xlu0 %v7038
    %v7040 = vpop.xlane.xlu0 %7039
    %v7041 = vsel %vm919, %v7020, 0.0
    %7042 = vadd.xlane.f32.xlu0 %v7041
    %v7043 = vpop.xlane.xlu0 %7042
    %v7044 = vsel %vm919, %v7022, 0.0
    %7045 = vadd.xlane.f32.xlu0 %v7044
    %v7046 = vpop.xlane.xlu0 %7045
    %v7047 = vsel %vm919, %v7024, 0.0
    %7048 = vadd.xlane.f32.xlu0 %v7047
    %v7049 = vpop.xlane.xlu0 %7048
    %v7050 = vsel %vm919, %v7026, 0.0
    %7051 = vadd.xlane.f32.xlu0 %v7050
    %v7052 = vpop.xlane.xlu0 %7051
    %v7053 = vsel %vm919, %v7028, 0.0
    %7054 = vadd.xlane.f32.xlu0 %v7053
    %v7055 = vpop.xlane.xlu0 %7054
    %v7056 = vsel %vm919, %v7030, 0.0
    %7057 = vadd.xlane.f32.xlu0 %v7056
    %v7058 = vpop.xlane.xlu0 %7057
    %v7059 = vsel %vm919, %v7032, 0.0
    %7060 = vadd.xlane.f32.xlu0 %v7059
    %v7061 = vpop.xlane.xlu0 %7060
    %v7062 = vsel %vm919, %v7034, 0.0
    %7063 = vadd.xlane.f32.xlu0 %v7062
    %v7064 = vpop.xlane.xlu0 %7063
    %v7065 = vrcp.pop %v7037
    %v7066 = vrcp.pop %v7040
    %v7067 = vrcp.pop %v7043
    %v7068 = vrcp.pop %v7046
    %v7069 = vrcp.pop %v7049
    %v7070 = vrcp.pop %v7052
    %v7071 = vrcp.pop %v7055
    %v7072 = vrcp.pop %v7058
    %v7073 = vrcp.pop %v7061
    %v7074 = vrcp.pop %v7064
    %v7075 = vmul.f32 %v7016, %v7065
    %v7076 = vmul.f32 %v7018, %v7066
    %v7077 = vmul.f32 %v7020, %v7067
    %v7078 = vmul.f32 %v7022, %v7068
    %v7079 = vmul.f32 %v7024, %v7069
    %v7080 = vmul.f32 %v7026, %v7070
    %v7081 = vmul.f32 %v7028, %v7071
    %v7082 = vmul.f32 %v7030, %v7072
    %v7083 = vmul.f32 %v7032, %v7073
    %v7084 = vmul.f32 %v7034, %v7074
    %s7085 = scalar_lea.vmem [#allocation2], 440
    %7086 = vst.msk [vmem:[%s7085] sm:$0xff] %vm919, %v7075
    %7087 = vst.msk [vmem:[%s7085 + $0x8] sm:$0xff] %vm919, %v7076
    %7088 = vst.msk [vmem:[%s7085 + $0x10] sm:$0xff] %vm919, %v7077
    %7089 = vst.msk [vmem:[%s7085 + $0x18] sm:$0xff] %vm919, %v7078
    %7090 = vst.msk [vmem:[%s7085 + $0x20] sm:$0xff] %vm919, %v7079
    %s7091 = scalar_lea.vmem [#allocation2], 600
    %7092 = vst.msk [vmem:[%s7091] sm:$0xff] %vm919, %v7080
    %7093 = vst.msk [vmem:[%s7091 + $0x8] sm:$0xff] %vm919, %v7081
    %7094 = vst.msk [vmem:[%s7091 + $0x10] sm:$0xff] %vm919, %v7082
    %7095 = vst.msk [vmem:[%s7091 + $0x18] sm:$0xff] %vm919, %v7083
    %7096 = vst.msk [vmem:[%s7091 + $0x20] sm:$0xff] %vm919, %v7084
    %7097 = vrot.lane.b32.xlu0 %v4761, 104
    %v7098 = vpop.permute.xlu0 %7097
    %7099 = vrot.lane.b32.xlu0 %v4766, 104
    %v7100 = vpop.permute.xlu0 %7099
    %7101 = vrot.lane.b32.xlu0 %v4771, 104
    %v7102 = vpop.permute.xlu0 %7101
    %7103 = vrot.lane.b32.xlu0 %v4776, 104
    %v7104 = vpop.permute.xlu0 %7103
    %7105 = vrot.lane.b32.xlu0 %v4781, 104
    %v7106 = vpop.permute.xlu0 %7105
    %v7113 = vsel %vm919, %v7075, 0
    %v7116 = vsel %vm919, %v7076, 0
    %v7119 = vsel %vm919, %v7077, 0
    %v7122 = vsel %vm919, %v7078, 0
    %v7125 = vsel %vm919, %v7079, 0
    %7127 = vmatprep.subr.mxu0 0.0
    %7128 = vmatpush1.msra.mxu0 0.0
    %7129 = vmatprep.subr.mxu0 0.0
    %7130 = vmatpush1.msra.mxu0 0.0
    %7131 = vmatprep.subr.mxu0 0.0
    %7132 = vmatpush1.msra.mxu0 0.0
    %7133 = vmatprep.subr.mxu0 0.0
    %7134 = vmatpush1.msra.mxu0 0.0
    %7135 = vmatprep.subr.mxu0 0.0
    %7136 = vmatpush1.msra.mxu0 0.0
    %7137 = vmatprep.subr.mxu0 0.0
    %7138 = vmatpush1.msra.mxu0 0.0
    %7139 = vmatprep.subr.mxu0 0.0
    %7140 = vmatpush1.msra.mxu0 0.0
    %7141 = vmatprep.subr.mxu0 0.0
    %7142 = vmatpush1.msra.mxu0 0.0
    %7143 = vmatprep.subr.mxu0 0.0
    %7144 = vmatpush1.msra.mxu0 0.0
    %7145 = vmatprep.subr.mxu0 0.0
    %7146 = vmatpush1.msra.mxu0 0.0
    %7147 = vmatprep.subr.mxu0 0.0
    %7148 = vmatpush1.msra.mxu0 0.0
    %7149 = vmatprep.subr.mxu0 0.0
    %7150 = vmatpush1.msra.mxu0 %v7106
    %7151 = vmatprep.subr.mxu0 0.0
    %7152 = vmatpush1.msra.mxu0 %v7104
    %7153 = vmatprep.subr.mxu0 0.0
    %7154 = vmatpush1.msra.mxu0 %v7102
    %7155 = vmatprep.subr.mxu0 0.0
    %7156 = vmatpush1.msra.mxu0 %v7100
    %7157 = vmatprep.subr.mxu0 0.0
    %7158 = vmatpush1.msra.mxu0 %v7098
    %7159 = vmatprep.subr.mxu0 0.0
    %7160 = vmatpush2.msra.mxu0 0.0
    %7161 = vmatprep.subr.mxu0 0.0
    %7162 = vmatpush2.msra.mxu0 0.0
    %7163 = vmatprep.subr.mxu0 0.0
    %7164 = vmatpush2.msra.mxu0 0.0
    %7165 = vmatprep.subr.mxu0 0.0
    %7166 = vmatpush2.msra.mxu0 0.0
    %7167 = vmatprep.subr.mxu0 0.0
    %7168 = vmatpush2.msra.mxu0 0.0
    %7169 = vmatprep.subr.mxu0 0.0
    %7170 = vmatpush2.msra.mxu0 0.0
    %7171 = vmatprep.subr.mxu0 0.0
    %7172 = vmatpush2.msra.mxu0 0.0
    %7173 = vmatprep.subr.mxu0 0.0
    %7174 = vmatpush2.msra.mxu0 0.0
    %7175 = vmatprep.subr.mxu0 0.0
    %7176 = vmatpush2.msra.mxu0 0.0
    %7177 = vmatprep.subr.mxu0 0.0
    %7178 = vmatpush2.msra.mxu0 0.0
    %7179 = vmatprep.subr.mxu0 0.0
    %7180 = vmatpush2.msra.mxu0 0.0
    %7181 = vmatprep.subr.mxu0 0.0
    %7182 = vmatpush2.msra.mxu0 0.0
    %7183 = vmatprep.subr.mxu0 0.0
    %7184 = vmatpush2.msra.mxu0 0.0
    %7185 = vmatprep.subr.mxu0 0.0
    %7186 = vmatpush2.msra.mxu0 0.0
    %7187 = vmatprep.subr.mxu0 0.0
    %7188 = vmatpush2.msra.mxu0 0.0
    %7189 = vmatprep.subr.mxu0 0.0
    %7190 = vmatpush2.msra.mxu0 0.0
    %7191 = vmatprep.mubr.f32.mxu0 0.0
    %7192 = vmatmul.mubr.f32.gmra.mxu0 %v7113
    %v7193 = vpop.f32.mrf.mxu0
    %v7194 = vadd.f32 0.0, %v7193
    %v7195 = vpop.f32.mrf.mxu0
    %7196 = vmatprep.mubr.f32.mxu0 0.0
    %7197 = vmatmul.mubr.f32.gmra.mxu0 %v7116
    %v7198 = vpop.f32.mrf.mxu0
    %v7199 = vadd.f32 0.0, %v7198
    %v7200 = vpop.f32.mrf.mxu0
    %7201 = vmatprep.mubr.f32.mxu0 0.0
    %7202 = vmatmul.mubr.f32.gmra.mxu0 %v7119
    %v7203 = vpop.f32.mrf.mxu0
    %v7204 = vadd.f32 0.0, %v7203
    %v7205 = vpop.f32.mrf.mxu0
    %7206 = vmatprep.mubr.f32.mxu0 0.0
    %7207 = vmatmul.mubr.f32.gmra.mxu0 %v7122
    %v7208 = vpop.f32.mrf.mxu0
    %v7209 = vadd.f32 0.0, %v7208
    %v7210 = vpop.f32.mrf.mxu0
    %7211 = vmatprep.mubr.f32.mxu0 0.0
    %7212 = vmatmul.mubr.f32.gmra.mxu0 %v7125
    %v7213 = vpop.f32.mrf.mxu0
    %v7214 = vadd.f32 0.0, %v7213
    %v7215 = vpop.f32.mrf.mxu0
    %7216 = vdwg.mxu0
    %7217 = vrot.lane.b32.xlu0 %v4786, 104
    %v7218 = vpop.permute.xlu0 %7217
    %7219 = vrot.lane.b32.xlu0 %v4791, 104
    %v7220 = vpop.permute.xlu0 %7219
    %7221 = vrot.lane.b32.xlu0 %v4796, 104
    %v7222 = vpop.permute.xlu0 %7221
    %7223 = vrot.lane.b32.xlu0 %v4801, 104
    %v7224 = vpop.permute.xlu0 %7223
    %7225 = vrot.lane.b32.xlu0 %v4806, 104
    %v7226 = vpop.permute.xlu0 %7225
    %v7233 = vsel %vm919, %v7080, 0
    %v7236 = vsel %vm919, %v7081, 0
    %v7239 = vsel %vm919, %v7082, 0
    %v7242 = vsel %vm919, %v7083, 0
    %v7245 = vsel %vm919, %v7084, 0
    %7247 = vmatprep.subr.mxu0 0.0
    %7248 = vmatpush1.msra.mxu0 0.0
    %7249 = vmatprep.subr.mxu0 0.0
    %7250 = vmatpush1.msra.mxu0 0.0
    %7251 = vmatprep.subr.mxu0 0.0
    %7252 = vmatpush1.msra.mxu0 0.0
    %7253 = vmatprep.subr.mxu0 0.0
    %7254 = vmatpush1.msra.mxu0 0.0
    %7255 = vmatprep.subr.mxu0 0.0
    %7256 = vmatpush1.msra.mxu0 0.0
    %7257 = vmatprep.subr.mxu0 0.0
    %7258 = vmatpush1.msra.mxu0 0.0
    %7259 = vmatprep.subr.mxu0 0.0
    %7260 = vmatpush1.msra.mxu0 0.0
    %7261 = vmatprep.subr.mxu0 0.0
    %7262 = vmatpush1.msra.mxu0 0.0
    %7263 = vmatprep.subr.mxu0 0.0
    %7264 = vmatpush1.msra.mxu0 0.0
    %7265 = vmatprep.subr.mxu0 0.0
    %7266 = vmatpush1.msra.mxu0 0.0
    %7267 = vmatprep.subr.mxu0 0.0
    %7268 = vmatpush1.msra.mxu0 0.0
    %7269 = vmatprep.subr.mxu0 0.0
    %7270 = vmatpush1.msra.mxu0 %v7226
    %7271 = vmatprep.subr.mxu0 0.0
    %7272 = vmatpush1.msra.mxu0 %v7224
    %7273 = vmatprep.subr.mxu0 0.0
    %7274 = vmatpush1.msra.mxu0 %v7222
    %7275 = vmatprep.subr.mxu0 0.0
    %7276 = vmatpush1.msra.mxu0 %v7220
    %7277 = vmatprep.subr.mxu0 0.0
    %7278 = vmatpush1.msra.mxu0 %v7218
    %7279 = vmatprep.subr.mxu0 0.0
    %7280 = vmatpush2.msra.mxu0 0.0
    %7281 = vmatprep.subr.mxu0 0.0
    %7282 = vmatpush2.msra.mxu0 0.0
    %7283 = vmatprep.subr.mxu0 0.0
    %7284 = vmatpush2.msra.mxu0 0.0
    %7285 = vmatprep.subr.mxu0 0.0
    %7286 = vmatpush2.msra.mxu0 0.0
    %7287 = vmatprep.subr.mxu0 0.0
    %7288 = vmatpush2.msra.mxu0 0.0
    %7289 = vmatprep.subr.mxu0 0.0
    %7290 = vmatpush2.msra.mxu0 0.0
    %7291 = vmatprep.subr.mxu0 0.0
    %7292 = vmatpush2.msra.mxu0 0.0
    %7293 = vmatprep.subr.mxu0 0.0
    %7294 = vmatpush2.msra.mxu0 0.0
    %7295 = vmatprep.subr.mxu0 0.0
    %7296 = vmatpush2.msra.mxu0 0.0
    %7297 = vmatprep.subr.mxu0 0.0
    %7298 = vmatpush2.msra.mxu0 0.0
    %7299 = vmatprep.subr.mxu0 0.0
    %7300 = vmatpush2.msra.mxu0 0.0
    %7301 = vmatprep.subr.mxu0 0.0
    %7302 = vmatpush2.msra.mxu0 0.0
    %7303 = vmatprep.subr.mxu0 0.0
    %7304 = vmatpush2.msra.mxu0 0.0
    %7305 = vmatprep.subr.mxu0 0.0
    %7306 = vmatpush2.msra.mxu0 0.0
    %7307 = vmatprep.subr.mxu0 0.0
    %7308 = vmatpush2.msra.mxu0 0.0
    %7309 = vmatprep.subr.mxu0 0.0
    %7310 = vmatpush2.msra.mxu0 0.0
    %7311 = vmatprep.mubr.f32.mxu0 0.0
    %7312 = vmatmul.mubr.f32.gmra.mxu0 %v7233
    %v7313 = vpop.f32.mrf.mxu0
    %v7314 = vadd.f32 0.0, %v7313
    %v7315 = vpop.f32.mrf.mxu0
    %7316 = vmatprep.mubr.f32.mxu0 0.0
    %7317 = vmatmul.mubr.f32.gmra.mxu0 %v7236
    %v7318 = vpop.f32.mrf.mxu0
    %v7319 = vadd.f32 0.0, %v7318
    %v7320 = vpop.f32.mrf.mxu0
    %7321 = vmatprep.mubr.f32.mxu0 0.0
    %7322 = vmatmul.mubr.f32.gmra.mxu0 %v7239
    %v7323 = vpop.f32.mrf.mxu0
    %v7324 = vadd.f32 0.0, %v7323
    %v7325 = vpop.f32.mrf.mxu0
    %7326 = vmatprep.mubr.f32.mxu0 0.0
    %7327 = vmatmul.mubr.f32.gmra.mxu0 %v7242
    %v7328 = vpop.f32.mrf.mxu0
    %v7329 = vadd.f32 0.0, %v7328
    %v7330 = vpop.f32.mrf.mxu0
    %7331 = vmatprep.mubr.f32.mxu0 0.0
    %7332 = vmatmul.mubr.f32.gmra.mxu0 %v7245
    %v7333 = vpop.f32.mrf.mxu0
    %v7334 = vadd.f32 0.0, %v7333
    %v7335 = vpop.f32.mrf.mxu0
    %7336 = vdwg.mxu0
    %7347 = vrot.lane.b32.xlu0 %v5905, 8
    %v7348 = vpop.permute.xlu0 %7347
    %7349 = vrot.lane.b32.xlu0 %v5910, 8
    %v7350 = vpop.permute.xlu0 %7349
    %7351 = vrot.lane.b32.xlu0 %v5915, 8
    %v7352 = vpop.permute.xlu0 %7351
    %7353 = vrot.lane.b32.xlu0 %v5920, 8
    %v7354 = vpop.permute.xlu0 %7353
    %7355 = vrot.lane.b32.xlu0 %v5925, 8
    %v7356 = vpop.permute.xlu0 %7355
    %7357 = vrot.lane.b32.xlu0 %v6030, 8
    %v7358 = vpop.permute.xlu0 %7357
    %7359 = vrot.lane.b32.xlu0 %v6035, 8
    %v7360 = vpop.permute.xlu0 %7359
    %7361 = vrot.lane.b32.xlu0 %v6040, 8
    %v7362 = vpop.permute.xlu0 %7361
    %7363 = vrot.lane.b32.xlu0 %v6045, 8
    %v7364 = vpop.permute.xlu0 %7363
    %7365 = vrot.lane.b32.xlu0 %v6050, 8
    %v7366 = vpop.permute.xlu0 %7365
    %7387 = vrot.lane.b32.xlu0 %v6552, 16
    %v7388 = vpop.permute.xlu0 %7387
    %7389 = vrot.lane.b32.xlu0 %v6557, 16
    %v7390 = vpop.permute.xlu0 %7389
    %7391 = vrot.lane.b32.xlu0 %v6562, 16
    %v7392 = vpop.permute.xlu0 %7391
    %7393 = vrot.lane.b32.xlu0 %v6567, 16
    %v7394 = vpop.permute.xlu0 %7393
    %7395 = vrot.lane.b32.xlu0 %v6572, 16
    %v7396 = vpop.permute.xlu0 %7395
    %7397 = vrot.lane.b32.xlu0 %v6672, 16
    %v7398 = vpop.permute.xlu0 %7397
    %7399 = vrot.lane.b32.xlu0 %v6677, 16
    %v7400 = vpop.permute.xlu0 %7399
    %7401 = vrot.lane.b32.xlu0 %v6682, 16
    %v7402 = vpop.permute.xlu0 %7401
    %7403 = vrot.lane.b32.xlu0 %v6687, 16
    %v7404 = vpop.permute.xlu0 %7403
    %7405 = vrot.lane.b32.xlu0 %v6692, 16
    %v7406 = vpop.permute.xlu0 %7405
    %7427 = vrot.lane.b32.xlu0 %v7194, 24
    %v7428 = vpop.permute.xlu0 %7427
    %7429 = vrot.lane.b32.xlu0 %v7199, 24
    %v7430 = vpop.permute.xlu0 %7429
    %7431 = vrot.lane.b32.xlu0 %v7204, 24
    %v7432 = vpop.permute.xlu0 %7431
    %7433 = vrot.lane.b32.xlu0 %v7209, 24
    %v7434 = vpop.permute.xlu0 %7433
    %7435 = vrot.lane.b32.xlu0 %v7214, 24
    %v7436 = vpop.permute.xlu0 %7435
    %7437 = vrot.lane.b32.xlu0 %v7314, 24
    %v7438 = vpop.permute.xlu0 %7437
    %7439 = vrot.lane.b32.xlu0 %v7319, 24
    %v7440 = vpop.permute.xlu0 %7439
    %7441 = vrot.lane.b32.xlu0 %v7324, 24
    %v7442 = vpop.permute.xlu0 %7441
    %7443 = vrot.lane.b32.xlu0 %v7329, 24
    %v7444 = vpop.permute.xlu0 %7443
    %7445 = vrot.lane.b32.xlu0 %v7334, 24
    %v7446 = vpop.permute.xlu0 %7445
    %v7457 = vsel %vm658, %v5273, %v7348
    %v7458 = vsel %vm658, %v5278, %v7350
    %v7459 = vsel %vm658, %v5283, %v7352
    %v7460 = vsel %vm658, %v5288, %v7354
    %v7461 = vsel %vm658, %v5293, %v7356
    %v7462 = vsel %vm658, %v5378, %v7358
    %v7463 = vsel %vm658, %v5383, %v7360
    %v7464 = vsel %vm658, %v5388, %v7362
    %v7465 = vsel %vm658, %v5393, %v7364
    %v7466 = vsel %vm658, %v5398, %v7366
    %v7467 = vsel %vm3317, %v7457, %v7388
    %v7468 = vsel %vm3317, %v7458, %v7390
    %v7469 = vsel %vm3317, %v7459, %v7392
    %v7470 = vsel %vm3317, %v7460, %v7394
    %v7471 = vsel %vm3317, %v7461, %v7396
    %v7472 = vsel %vm3317, %v7462, %v7398
    %v7473 = vsel %vm3317, %v7463, %v7400
    %v7474 = vsel %vm3317, %v7464, %v7402
    %v7475 = vsel %vm3317, %v7465, %v7404
    %v7476 = vsel %vm3317, %v7466, %v7406
    %v7477 = vsel %vm3328, %v7467, %v7428
    %v7478 = vsel %vm3328, %v7468, %v7430
    %v7479 = vsel %vm3328, %v7469, %v7432
    %v7480 = vsel %vm3328, %v7470, %v7434
    %v7481 = vsel %vm3328, %v7471, %v7436
    %v7482 = vsel %vm3328, %v7472, %v7438
    %v7483 = vsel %vm3328, %v7473, %v7440
    %v7484 = vsel %vm3328, %v7474, %v7442
    %v7485 = vsel %vm3328, %v7475, %v7444
    %v7486 = vsel %vm3328, %v7476, %v7446
    %s7487 = scalar_lea.vmem %s10, 32
    %v7488 = vld [vmem:[%s7487] sm:$0xff]
    %v7489 = vld [vmem:[%s7487 + $0x8] sm:$0xff]
    %v7490 = vld [vmem:[%s7487 + $0x10] sm:$0xff]
    %v7491 = vld [vmem:[%s7487 + $0x18] sm:$0xff]
    %s7492 = scalar_lea.vmem %s11, 1
    %v7493 = vld [vmem:[%s7492] sm:$0x1]
    %v7495 = vlaneseq
    %v7496 = vshrl.u32 %v7495, 7
    %v7497 = vsub.s32 0, %v7496
    %v7498 = vrot.slane %v7493, %v7497
    %v7501 = vsel %vm86, %v7477, 0
    %v7504 = vsel %vm86, %v7478, 0
    %v7507 = vsel %vm86, %v7479, 0
    %v7510 = vsel %vm86, %v7480, 0
    %v7513 = vsel %vm86, %v7481, 0
    %v7516 = vsel %vm86, %v7482, 0
    %v7519 = vsel %vm86, %v7483, 0
    %v7522 = vsel %vm86, %v7484, 0
    %v7525 = vsel %vm86, %v7485, 0
    %v7528 = vsel %vm86, %v7486, 0
    %7530 = vmatprep.subr.mxu0 0.0
    %7531 = vmatpush1.msra.mxu0 0.0
    %7532 = vmatprep.subr.mxu0 0.0
    %7533 = vmatpush1.msra.mxu0 0.0
    %7534 = vmatprep.subr.mxu0 0.0
    %7535 = vmatpush1.msra.mxu0 0.0
    %7536 = vmatprep.subr.mxu0 0.0
    %7537 = vmatpush1.msra.mxu0 0.0
    %7538 = vmatprep.subr.mxu0 0.0
    %7539 = vmatpush1.msra.mxu0 0.0
    %7540 = vmatprep.subr.mxu0 0.0
    %7541 = vmatpush1.msra.mxu0 0.0
    %7542 = vmatprep.subr.mxu0 0.0
    %7543 = vmatpush1.msra.mxu0 0.0
    %7544 = vmatprep.subr.mxu0 0.0
    %7545 = vmatpush1.msra.mxu0 0.0
    %7546 = vmatprep.subr.mxu0 0.0
    %7547 = vmatpush1.msra.mxu0 0.0
    %7548 = vmatprep.subr.mxu0 0.0
    %7549 = vmatpush1.msra.mxu0 0.0
    %7550 = vmatprep.subr.mxu0 0.0
    %7551 = vmatpush1.msra.mxu0 0.0
    %7552 = vmatprep.subr.mxu0 0.0
    %7553 = vmatpush1.msra.mxu0 0.0
    %7554 = vmatprep.subr.mxu0 0.0
    %7555 = vmatpush1.msra.mxu0 %v7491
    %7556 = vmatprep.subr.mxu0 0.0
    %7557 = vmatpush1.msra.mxu0 %v7490
    %7558 = vmatprep.subr.mxu0 0.0
    %7559 = vmatpush1.msra.mxu0 %v7489
    %7560 = vmatprep.subr.mxu0 0.0
    %7561 = vmatpush1.msra.mxu0 %v7488
    %7562 = vmatprep.subr.mxu0 0.0
    %7563 = vmatpush2.msra.mxu0 0.0
    %7564 = vmatprep.subr.mxu0 0.0
    %7565 = vmatpush2.msra.mxu0 0.0
    %7566 = vmatprep.subr.mxu0 0.0
    %7567 = vmatpush2.msra.mxu0 0.0
    %7568 = vmatprep.subr.mxu0 0.0
    %7569 = vmatpush2.msra.mxu0 0.0
    %7570 = vmatprep.subr.mxu0 0.0
    %7571 = vmatpush2.msra.mxu0 0.0
    %7572 = vmatprep.subr.mxu0 0.0
    %7573 = vmatpush2.msra.mxu0 0.0
    %7574 = vmatprep.subr.mxu0 0.0
    %7575 = vmatpush2.msra.mxu0 0.0
    %7576 = vmatprep.subr.mxu0 0.0
    %7577 = vmatpush2.msra.mxu0 0.0
    %7578 = vmatprep.subr.mxu0 0.0
    %7579 = vmatpush2.msra.mxu0 0.0
    %7580 = vmatprep.subr.mxu0 0.0
    %7581 = vmatpush2.msra.mxu0 0.0
    %7582 = vmatprep.subr.mxu0 0.0
    %7583 = vmatpush2.msra.mxu0 0.0
    %7584 = vmatprep.subr.mxu0 0.0
    %7585 = vmatpush2.msra.mxu0 0.0
    %7586 = vmatprep.subr.mxu0 0.0
    %7587 = vmatpush2.msra.mxu0 0.0
    %7588 = vmatprep.subr.mxu0 0.0
    %7589 = vmatpush2.msra.mxu0 0.0
    %7590 = vmatprep.subr.mxu0 0.0
    %7591 = vmatpush2.msra.mxu0 0.0
    %7592 = vmatprep.subr.mxu0 0.0
    %7593 = vmatpush2.msra.mxu0 0.0
    %7594 = vmatprep.mubr.f32.mxu0 0.0
    %7595 = vmatmul.mubr.f32.gmra.mxu0 %v7501
    %v7596 = vpop.f32.mrf.mxu0
    %v7597 = vadd.f32 %v7498, %v7596
    %v7598 = vpop.f32.mrf.mxu0
    %7599 = vmatprep.mubr.f32.mxu0 0.0
    %7600 = vmatmul.mubr.f32.gmra.mxu0 %v7504
    %v7601 = vpop.f32.mrf.mxu0
    %v7602 = vadd.f32 %v7498, %v7601
    %v7603 = vpop.f32.mrf.mxu0
    %7604 = vmatprep.mubr.f32.mxu0 0.0
    %7605 = vmatmul.mubr.f32.gmra.mxu0 %v7507
    %v7606 = vpop.f32.mrf.mxu0
    %v7607 = vadd.f32 %v7498, %v7606
    %v7608 = vpop.f32.mrf.mxu0
    %7609 = vmatprep.mubr.f32.mxu0 0.0
    %7610 = vmatmul.mubr.f32.gmra.mxu0 %v7510
    %v7611 = vpop.f32.mrf.mxu0
    %v7612 = vadd.f32 %v7498, %v7611
    %v7613 = vpop.f32.mrf.mxu0
    %7614 = vmatprep.mubr.f32.mxu0 0.0
    %7615 = vmatmul.mubr.f32.gmra.mxu0 %v7513
    %v7616 = vpop.f32.mrf.mxu0
    %v7617 = vadd.f32 %v7498, %v7616
    %v7618 = vpop.f32.mrf.mxu0
    %7619 = vmatprep.mubr.f32.mxu0 0.0
    %7620 = vmatmul.mubr.f32.gmra.mxu0 %v7516
    %v7621 = vpop.f32.mrf.mxu0
    %v7622 = vadd.f32 %v7498, %v7621
    %v7623 = vpop.f32.mrf.mxu0
    %7624 = vmatprep.mubr.f32.mxu0 0.0
    %7625 = vmatmul.mubr.f32.gmra.mxu0 %v7519
    %v7626 = vpop.f32.mrf.mxu0
    %v7627 = vadd.f32 %v7498, %v7626
    %v7628 = vpop.f32.mrf.mxu0
    %7629 = vmatprep.mubr.f32.mxu0 0.0
    %7630 = vmatmul.mubr.f32.gmra.mxu0 %v7522
    %v7631 = vpop.f32.mrf.mxu0
    %v7632 = vadd.f32 %v7498, %v7631
    %v7633 = vpop.f32.mrf.mxu0
    %7634 = vmatprep.mubr.f32.mxu0 0.0
    %7635 = vmatmul.mubr.f32.gmra.mxu0 %v7525
    %v7636 = vpop.f32.mrf.mxu0
    %v7637 = vadd.f32 %v7498, %v7636
    %v7638 = vpop.f32.mrf.mxu0
    %7639 = vmatprep.mubr.f32.mxu0 0.0
    %7640 = vmatmul.mubr.f32.gmra.mxu0 %v7528
    %v7641 = vpop.f32.mrf.mxu0
    %v7642 = vadd.f32 %v7498, %v7641
    %v7643 = vpop.f32.mrf.mxu0
    %7644 = vdwg.mxu0
    %v7645 = vadd.f32 %v4209, %v7597
    %v7646 = vadd.f32 %v4210, %v7602
    %v7647 = vadd.f32 %v4211, %v7607
    %v7648 = vadd.f32 %v4212, %v7612
    %v7649 = vadd.f32 %v4213, %v7617
    %v7650 = vadd.f32 %v4214, %v7622
    %v7651 = vadd.f32 %v4215, %v7627
    %v7652 = vadd.f32 %v4216, %v7632
    %v7653 = vadd.f32 %v4217, %v7637
    %v7654 = vadd.f32 %v4218, %v7642
    %v7655 = vsel %vm86, %v7645, 0.0
    %7656 = vadd.xlane.f32.xlu0 %v7655
    %v7657 = vpop.xlane.xlu0 %7656
    %v7658 = vsel %vm86, %v7646, 0.0
    %7659 = vadd.xlane.f32.xlu0 %v7658
    %v7660 = vpop.xlane.xlu0 %7659
    %v7661 = vsel %vm86, %v7647, 0.0
    %7662 = vadd.xlane.f32.xlu0 %v7661
    %v7663 = vpop.xlane.xlu0 %7662
    %v7664 = vsel %vm86, %v7648, 0.0
    %7665 = vadd.xlane.f32.xlu0 %v7664
    %v7666 = vpop.xlane.xlu0 %7665
    %v7667 = vsel %vm86, %v7649, 0.0
    %7668 = vadd.xlane.f32.xlu0 %v7667
    %v7669 = vpop.xlane.xlu0 %7668
    %v7670 = vsel %vm86, %v7650, 0.0
    %7671 = vadd.xlane.f32.xlu0 %v7670
    %v7672 = vpop.xlane.xlu0 %7671
    %v7673 = vsel %vm86, %v7651, 0.0
    %7674 = vadd.xlane.f32.xlu0 %v7673
    %v7675 = vpop.xlane.xlu0 %7674
    %v7676 = vsel %vm86, %v7652, 0.0
    %7677 = vadd.xlane.f32.xlu0 %v7676
    %v7678 = vpop.xlane.xlu0 %7677
    %v7679 = vsel %vm86, %v7653, 0.0
    %7680 = vadd.xlane.f32.xlu0 %v7679
    %v7681 = vpop.xlane.xlu0 %7680
    %v7682 = vsel %vm86, %v7654, 0.0
    %7683 = vadd.xlane.f32.xlu0 %v7682
    %v7684 = vpop.xlane.xlu0 %7683
    %v7685 = vmul.f32 %v7657, %v117
    %v7686 = vmul.f32 %v7660, %v117
    %v7687 = vmul.f32 %v7663, %v117
    %v7688 = vmul.f32 %v7666, %v117
    %v7689 = vmul.f32 %v7669, %v117
    %v7690 = vmul.f32 %v7672, %v117
    %v7691 = vmul.f32 %v7675, %v117
    %v7692 = vmul.f32 %v7678, %v117
    %v7693 = vmul.f32 %v7681, %v117
    %v7694 = vmul.f32 %v7684, %v117
    %v7695 = vsub.f32 %v7645, %v7685
    %v7696 = vsub.f32 %v7646, %v7686
    %v7697 = vsub.f32 %v7647, %v7687
    %v7698 = vsub.f32 %v7648, %v7688
    %v7699 = vsub.f32 %v7649, %v7689
    %v7700 = vsub.f32 %v7650, %v7690
    %v7701 = vsub.f32 %v7651, %v7691
    %v7702 = vsub.f32 %v7652, %v7692
    %v7703 = vsub.f32 %v7653, %v7693
    %v7704 = vsub.f32 %v7654, %v7694
    %v7705 = vmul.f32 %v7695, %v7695
    %v7706 = vmul.f32 %v7696, %v7696
    %v7707 = vmul.f32 %v7697, %v7697
    %v7708 = vmul.f32 %v7698, %v7698
    %v7709 = vmul.f32 %v7699, %v7699
    %v7710 = vmul.f32 %v7700, %v7700
    %v7711 = vmul.f32 %v7701, %v7701
    %v7712 = vmul.f32 %v7702, %v7702
    %v7713 = vmul.f32 %v7703, %v7703
    %v7714 = vmul.f32 %v7704, %v7704
    %v7715 = vsel %vm86, %v7705, 0.0
    %7716 = vadd.xlane.f32.xlu0 %v7715
    %v7717 = vpop.xlane.xlu0 %7716
    %v7718 = vsel %vm86, %v7706, 0.0
    %7719 = vadd.xlane.f32.xlu0 %v7718
    %v7720 = vpop.xlane.xlu0 %7719
    %v7721 = vsel %vm86, %v7707, 0.0
    %7722 = vadd.xlane.f32.xlu0 %v7721
    %v7723 = vpop.xlane.xlu0 %7722
    %v7724 = vsel %vm86, %v7708, 0.0
    %7725 = vadd.xlane.f32.xlu0 %v7724
    %v7726 = vpop.xlane.xlu0 %7725
    %v7727 = vsel %vm86, %v7709, 0.0
    %7728 = vadd.xlane.f32.xlu0 %v7727
    %v7729 = vpop.xlane.xlu0 %7728
    %v7730 = vsel %vm86, %v7710, 0.0
    %7731 = vadd.xlane.f32.xlu0 %v7730
    %v7732 = vpop.xlane.xlu0 %7731
    %v7733 = vsel %vm86, %v7711, 0.0
    %7734 = vadd.xlane.f32.xlu0 %v7733
    %v7735 = vpop.xlane.xlu0 %7734
    %v7736 = vsel %vm86, %v7712, 0.0
    %7737 = vadd.xlane.f32.xlu0 %v7736
    %v7738 = vpop.xlane.xlu0 %7737
    %v7739 = vsel %vm86, %v7713, 0.0
    %7740 = vadd.xlane.f32.xlu0 %v7739
    %v7741 = vpop.xlane.xlu0 %7740
    %v7742 = vsel %vm86, %v7714, 0.0
    %7743 = vadd.xlane.f32.xlu0 %v7742
    %v7744 = vpop.xlane.xlu0 %7743
    %v7745 = vmul.f32 %v7717, %v117
    %v7746 = vmul.f32 %v7720, %v117
    %v7747 = vmul.f32 %v7723, %v117
    %v7748 = vmul.f32 %v7726, %v117
    %v7749 = vmul.f32 %v7729, %v117
    %v7750 = vmul.f32 %v7732, %v117
    %v7751 = vmul.f32 %v7735, %v117
    %v7752 = vmul.f32 %v7738, %v117
    %v7753 = vmul.f32 %v7741, %v117
    %v7754 = vmul.f32 %v7744, %v117
    %v7755 = vadd.f32 %v7745, 1e-12
    %v7756 = vadd.f32 %v7746, 1e-12
    %v7757 = vadd.f32 %v7747, 1e-12
    %v7758 = vadd.f32 %v7748, 1e-12
    %v7759 = vadd.f32 %v7749, 1e-12
    %v7760 = vadd.f32 %v7750, 1e-12
    %v7761 = vadd.f32 %v7751, 1e-12
    %v7762 = vadd.f32 %v7752, 1e-12
    %v7763 = vadd.f32 %v7753, 1e-12
    %v7764 = vadd.f32 %v7754, 1e-12
    %v7765 = vrsqrt.pop %v7755
    %v7766 = vrsqrt.pop %v7756
    %v7767 = vrsqrt.pop %v7757
    %v7768 = vrsqrt.pop %v7758
    %v7769 = vrsqrt.pop %v7759
    %v7770 = vrsqrt.pop %v7760
    %v7771 = vrsqrt.pop %v7761
    %v7772 = vrsqrt.pop %v7762
    %v7773 = vrsqrt.pop %v7763
    %v7774 = vrsqrt.pop %v7764
    %v7775 = vmul.f32 %v7695, %v7765
    %v7776 = vmul.f32 %v7696, %v7766
    %v7777 = vmul.f32 %v7697, %v7767
    %v7778 = vmul.f32 %v7698, %v7768
    %v7779 = vmul.f32 %v7699, %v7769
    %v7780 = vmul.f32 %v7700, %v7770
    %v7781 = vmul.f32 %v7701, %v7771
    %v7782 = vmul.f32 %v7702, %v7772
    %v7783 = vmul.f32 %v7703, %v7773
    %v7784 = vmul.f32 %v7704, %v7774
    %v7785 = vmul.f32 %v7775, %v4367
    %v7786 = vmul.f32 %v7776, %v4367
    %v7787 = vmul.f32 %v7777, %v4367
    %v7788 = vmul.f32 %v7778, %v4367
    %v7789 = vmul.f32 %v7779, %v4367
    %v7790 = vmul.f32 %v7780, %v4367
    %v7791 = vmul.f32 %v7781, %v4367
    %v7792 = vmul.f32 %v7782, %v4367
    %v7793 = vmul.f32 %v7783, %v4367
    %v7794 = vmul.f32 %v7784, %v4367
    %v7795 = vadd.f32 %v7785, %v4383
    %v7796 = vadd.f32 %v7786, %v4383
    %v7797 = vadd.f32 %v7787, %v4383
    %v7798 = vadd.f32 %v7788, %v4383
    %v7799 = vadd.f32 %v7789, %v4383
    %v7800 = vadd.f32 %v7790, %v4383
    %v7801 = vadd.f32 %v7791, %v4383
    %v7802 = vadd.f32 %v7792, %v4383
    %v7803 = vadd.f32 %v7793, %v4383
    %v7804 = vadd.f32 %v7794, %v4383
    %s7805 = scalar_lea.vmem %s12, 32
    %v7806 = vld [vmem:[%s7805] sm:$0xff]
    %v7807 = vld [vmem:[%s7805 + $0x8] sm:$0xff]
    %v7808 = vld [vmem:[%s7805 + $0x10] sm:$0xff]
    %v7809 = vld [vmem:[%s7805 + $0x18] sm:$0xff]
    %s7810 = scalar_lea.vmem %s13, 1
    %v7811 = vld [vmem:[%s7810] sm:$0x1]
    %v7813 = vlaneseq
    %v7814 = vshrl.u32 %v7813, 7
    %v7815 = vsub.s32 0, %v7814
    %v7816 = vrot.slane %v7811, %v7815
    %v7819 = vsel %vm86, %v7795, 0
    %v7822 = vsel %vm86, %v7796, 0
    %v7825 = vsel %vm86, %v7797, 0
    %v7828 = vsel %vm86, %v7798, 0
    %v7831 = vsel %vm86, %v7799, 0
    %v7834 = vsel %vm86, %v7800, 0
    %v7837 = vsel %vm86, %v7801, 0
    %v7840 = vsel %vm86, %v7802, 0
    %v7843 = vsel %vm86, %v7803, 0
    %v7846 = vsel %vm86, %v7804, 0
    %7848 = vmatprep.subr.mxu0 0.0
    %7849 = vmatpush1.msra.mxu0 0.0
    %7850 = vmatprep.subr.mxu0 0.0
    %7851 = vmatpush1.msra.mxu0 0.0
    %7852 = vmatprep.subr.mxu0 0.0
    %7853 = vmatpush1.msra.mxu0 0.0
    %7854 = vmatprep.subr.mxu0 0.0
    %7855 = vmatpush1.msra.mxu0 0.0
    %7856 = vmatprep.subr.mxu0 0.0
    %7857 = vmatpush1.msra.mxu0 0.0
    %7858 = vmatprep.subr.mxu0 0.0
    %7859 = vmatpush1.msra.mxu0 0.0
    %7860 = vmatprep.subr.mxu0 0.0
    %7861 = vmatpush1.msra.mxu0 0.0
    %7862 = vmatprep.subr.mxu0 0.0
    %7863 = vmatpush1.msra.mxu0 0.0
    %7864 = vmatprep.subr.mxu0 0.0
    %7865 = vmatpush1.msra.mxu0 0.0
    %7866 = vmatprep.subr.mxu0 0.0
    %7867 = vmatpush1.msra.mxu0 0.0
    %7868 = vmatprep.subr.mxu0 0.0
    %7869 = vmatpush1.msra.mxu0 0.0
    %7870 = vmatprep.subr.mxu0 0.0
    %7871 = vmatpush1.msra.mxu0 0.0
    %7872 = vmatprep.subr.mxu0 0.0
    %7873 = vmatpush1.msra.mxu0 %v7809
    %7874 = vmatprep.subr.mxu0 0.0
    %7875 = vmatpush1.msra.mxu0 %v7808
    %7876 = vmatprep.subr.mxu0 0.0
    %7877 = vmatpush1.msra.mxu0 %v7807
    %7878 = vmatprep.subr.mxu0 0.0
    %7879 = vmatpush1.msra.mxu0 %v7806
    %7880 = vmatprep.subr.mxu0 0.0
    %7881 = vmatpush2.msra.mxu0 0.0
    %7882 = vmatprep.subr.mxu0 0.0
    %7883 = vmatpush2.msra.mxu0 0.0
    %7884 = vmatprep.subr.mxu0 0.0
    %7885 = vmatpush2.msra.mxu0 0.0
    %7886 = vmatprep.subr.mxu0 0.0
    %7887 = vmatpush2.msra.mxu0 0.0
    %7888 = vmatprep.subr.mxu0 0.0
    %7889 = vmatpush2.msra.mxu0 0.0
    %7890 = vmatprep.subr.mxu0 0.0
    %7891 = vmatpush2.msra.mxu0 0.0
    %7892 = vmatprep.subr.mxu0 0.0
    %7893 = vmatpush2.msra.mxu0 0.0
    %7894 = vmatprep.subr.mxu0 0.0
    %7895 = vmatpush2.msra.mxu0 0.0
    %7896 = vmatprep.subr.mxu0 0.0
    %7897 = vmatpush2.msra.mxu0 0.0
    %7898 = vmatprep.subr.mxu0 0.0
    %7899 = vmatpush2.msra.mxu0 0.0
    %7900 = vmatprep.subr.mxu0 0.0
    %7901 = vmatpush2.msra.mxu0 0.0
    %7902 = vmatprep.subr.mxu0 0.0
    %7903 = vmatpush2.msra.mxu0 0.0
    %7904 = vmatprep.subr.mxu0 0.0
    %7905 = vmatpush2.msra.mxu0 0.0
    %7906 = vmatprep.subr.mxu0 0.0
    %7907 = vmatpush2.msra.mxu0 0.0
    %7908 = vmatprep.subr.mxu0 0.0
    %7909 = vmatpush2.msra.mxu0 0.0
    %7910 = vmatprep.subr.mxu0 0.0
    %7911 = vmatpush2.msra.mxu0 0.0
    %7912 = vmatprep.mubr.f32.mxu0 0.0
    %7913 = vmatmul.mubr.f32.gmra.mxu0 %v7819
    %v7914 = vpop.f32.mrf.mxu0
    %v7915 = vadd.f32 %v7816, %v7914
    %v7916 = vpop.f32.mrf.mxu0
    %7917 = vmatprep.mubr.f32.mxu0 0.0
    %7918 = vmatmul.mubr.f32.gmra.mxu0 %v7822
    %v7919 = vpop.f32.mrf.mxu0
    %v7920 = vadd.f32 %v7816, %v7919
    %v7921 = vpop.f32.mrf.mxu0
    %7922 = vmatprep.mubr.f32.mxu0 0.0
    %7923 = vmatmul.mubr.f32.gmra.mxu0 %v7825
    %v7924 = vpop.f32.mrf.mxu0
    %v7925 = vadd.f32 %v7816, %v7924
    %v7926 = vpop.f32.mrf.mxu0
    %7927 = vmatprep.mubr.f32.mxu0 0.0
    %7928 = vmatmul.mubr.f32.gmra.mxu0 %v7828
    %v7929 = vpop.f32.mrf.mxu0
    %v7930 = vadd.f32 %v7816, %v7929
    %v7931 = vpop.f32.mrf.mxu0
    %7932 = vmatprep.mubr.f32.mxu0 0.0
    %7933 = vmatmul.mubr.f32.gmra.mxu0 %v7831
    %v7934 = vpop.f32.mrf.mxu0
    %v7935 = vadd.f32 %v7816, %v7934
    %v7936 = vpop.f32.mrf.mxu0
    %7937 = vmatprep.mubr.f32.mxu0 0.0
    %7938 = vmatmul.mubr.f32.gmra.mxu0 %v7834
    %v7939 = vpop.f32.mrf.mxu0
    %v7940 = vadd.f32 %v7816, %v7939
    %v7941 = vpop.f32.mrf.mxu0
    %7942 = vmatprep.mubr.f32.mxu0 0.0
    %7943 = vmatmul.mubr.f32.gmra.mxu0 %v7837
    %v7944 = vpop.f32.mrf.mxu0
    %v7945 = vadd.f32 %v7816, %v7944
    %v7946 = vpop.f32.mrf.mxu0
    %7947 = vmatprep.mubr.f32.mxu0 0.0
    %7948 = vmatmul.mubr.f32.gmra.mxu0 %v7840
    %v7949 = vpop.f32.mrf.mxu0
    %v7950 = vadd.f32 %v7816, %v7949
    %v7951 = vpop.f32.mrf.mxu0
    %7952 = vmatprep.mubr.f32.mxu0 0.0
    %7953 = vmatmul.mubr.f32.gmra.mxu0 %v7843
    %v7954 = vpop.f32.mrf.mxu0
    %v7955 = vadd.f32 %v7816, %v7954
    %v7956 = vpop.f32.mrf.mxu0
    %7957 = vmatprep.mubr.f32.mxu0 0.0
    %7958 = vmatmul.mubr.f32.gmra.mxu0 %v7846
    %v7959 = vpop.f32.mrf.mxu0
    %v7960 = vadd.f32 %v7816, %v7959
    %v7961 = vpop.f32.mrf.mxu0
    %7962 = vdwg.mxu0
    %v7963 = vmul.f32 %v7915, 0.5
    %v7964 = vmul.f32 %v7920, 0.5
    %v7965 = vmul.f32 %v7925, 0.5
    %v7966 = vmul.f32 %v7930, 0.5
    %v7967 = vmul.f32 %v7935, 0.5
    %v7968 = vmul.f32 %v7940, 0.5
    %v7969 = vmul.f32 %v7945, 0.5
    %v7970 = vmul.f32 %v7950, 0.5
    %v7971 = vmul.f32 %v7955, 0.5
    %v7972 = vmul.f32 %v7960, 0.5
    %v7973 = vmul.f32 %v7915, 0.70710677
    %v7974 = vmul.f32 %v7920, 0.70710677
    %v7975 = vmul.f32 %v7925, 0.70710677
    %v7976 = vmul.f32 %v7930, 0.70710677
    %v7977 = vmul.f32 %v7935, 0.70710677
    %v7978 = vmul.f32 %v7940, 0.70710677
    %v7979 = vmul.f32 %v7945, 0.70710677
    %v7980 = vmul.f32 %v7950, 0.70710677
    %v7981 = vmul.f32 %v7955, 0.70710677
    %v7982 = vmul.f32 %v7960, 0.70710677
    %vm7983 = vcmp.ge.f32.partialorder %v7973, 0.0
    %vm7984 = vcmp.ge.f32.partialorder %v7974, 0.0
    %vm7985 = vcmp.ge.f32.partialorder %v7975, 0.0
    %vm7986 = vcmp.ge.f32.partialorder %v7976, 0.0
    %vm7987 = vcmp.ge.f32.partialorder %v7977, 0.0
    %vm7988 = vcmp.ge.f32.partialorder %v7978, 0.0
    %vm7989 = vcmp.ge.f32.partialorder %v7979, 0.0
    %vm7990 = vcmp.ge.f32.partialorder %v7980, 0.0
    %vm7991 = vcmp.ge.f32.partialorder %v7981, 0.0
    %vm7992 = vcmp.ge.f32.partialorder %v7982, 0.0
    %v7993 = vsel %vm7983, 1.0, -1.0
    %v7994 = vsel %vm7984, 1.0, -1.0
    %v7995 = vsel %vm7985, 1.0, -1.0
    %v7996 = vsel %vm7986, 1.0, -1.0
    %v7997 = vsel %vm7987, 1.0, -1.0
    %v7998 = vsel %vm7988, 1.0, -1.0
    %v7999 = vsel %vm7989, 1.0, -1.0
    %v8000 = vsel %vm7990, 1.0, -1.0
    %v8001 = vsel %vm7991, 1.0, -1.0
    %v8002 = vsel %vm7992, 1.0, -1.0
    %v8003 = vand.u32 2147483647, %v7973
    %v8004 = vand.u32 2147483647, %v7974
    %v8005 = vand.u32 2147483647, %v7975
    %v8006 = vand.u32 2147483647, %v7976
    %v8007 = vand.u32 2147483647, %v7977
    %v8008 = vand.u32 2147483647, %v7978
    %v8009 = vand.u32 2147483647, %v7979
    %v8010 = vand.u32 2147483647, %v7980
    %v8011 = vand.u32 2147483647, %v7981
    %v8012 = vand.u32 2147483647, %v7982
    %v8013 = vmul.f32 %v8003, 0.3275911
    %v8014 = vmul.f32 %v8004, 0.3275911
    %v8015 = vmul.f32 %v8005, 0.3275911
    %v8016 = vmul.f32 %v8006, 0.3275911
    %v8017 = vmul.f32 %v8007, 0.3275911
    %v8018 = vmul.f32 %v8008, 0.3275911
    %v8019 = vmul.f32 %v8009, 0.3275911
    %v8020 = vmul.f32 %v8010, 0.3275911
    %v8021 = vmul.f32 %v8011, 0.3275911
    %v8022 = vmul.f32 %v8012, 0.3275911
    %v8023 = vadd.f32 %v8013, 1.0
    %v8024 = vadd.f32 %v8014, 1.0
    %v8025 = vadd.f32 %v8015, 1.0
    %v8026 = vadd.f32 %v8016, 1.0
    %v8027 = vadd.f32 %v8017, 1.0
    %v8028 = vadd.f32 %v8018, 1.0
    %v8029 = vadd.f32 %v8019, 1.0
    %v8030 = vadd.f32 %v8020, 1.0
    %v8031 = vadd.f32 %v8021, 1.0
    %v8032 = vadd.f32 %v8022, 1.0
    %v8033 = vrcp.pop %v8023
    %v8034 = vrcp.pop %v8024
    %v8035 = vrcp.pop %v8025
    %v8036 = vrcp.pop %v8026
    %v8037 = vrcp.pop %v8027
    %v8038 = vrcp.pop %v8028
    %v8039 = vrcp.pop %v8029
    %v8040 = vrcp.pop %v8030
    %v8041 = vrcp.pop %v8031
    %v8042 = vrcp.pop %v8032
    %v8043 = vmul.f32 %v8033, 1.0614054
    %v8044 = vmul.f32 %v8034, 1.0614054
    %v8045 = vmul.f32 %v8035, 1.0614054
    %v8046 = vmul.f32 %v8036, 1.0614054
    %v8047 = vmul.f32 %v8037, 1.0614054
    %v8048 = vmul.f32 %v8038, 1.0614054
    %v8049 = vmul.f32 %v8039, 1.0614054
    %v8050 = vmul.f32 %v8040, 1.0614054
    %v8051 = vmul.f32 %v8041, 1.0614054
    %v8052 = vmul.f32 %v8042, 1.0614054
    %v8053 = vadd.f32 %v8043, -1.4531521
    %v8054 = vadd.f32 %v8044, -1.4531521
    %v8055 = vadd.f32 %v8045, -1.4531521
    %v8056 = vadd.f32 %v8046, -1.4531521
    %v8057 = vadd.f32 %v8047, -1.4531521
    %v8058 = vadd.f32 %v8048, -1.4531521
    %v8059 = vadd.f32 %v8049, -1.4531521
    %v8060 = vadd.f32 %v8050, -1.4531521
    %v8061 = vadd.f32 %v8051, -1.4531521
    %v8062 = vadd.f32 %v8052, -1.4531521
    %v8063 = vmul.f32 %v8053, %v8033
    %v8064 = vmul.f32 %v8054, %v8034
    %v8065 = vmul.f32 %v8055, %v8035
    %v8066 = vmul.f32 %v8056, %v8036
    %v8067 = vmul.f32 %v8057, %v8037
    %v8068 = vmul.f32 %v8058, %v8038
    %v8069 = vmul.f32 %v8059, %v8039
    %v8070 = vmul.f32 %v8060, %v8040
    %v8071 = vmul.f32 %v8061, %v8041
    %v8072 = vmul.f32 %v8062, %v8042
    %v8073 = vadd.f32 %v8063, 1.4214138
    %v8074 = vadd.f32 %v8064, 1.4214138
    %v8075 = vadd.f32 %v8065, 1.4214138
    %v8076 = vadd.f32 %v8066, 1.4214138
    %v8077 = vadd.f32 %v8067, 1.4214138
    %v8078 = vadd.f32 %v8068, 1.4214138
    %v8079 = vadd.f32 %v8069, 1.4214138
    %v8080 = vadd.f32 %v8070, 1.4214138
    %v8081 = vadd.f32 %v8071, 1.4214138
    %v8082 = vadd.f32 %v8072, 1.4214138
    %v8083 = vmul.f32 %v8073, %v8033
    %v8084 = vmul.f32 %v8074, %v8034
    %v8085 = vmul.f32 %v8075, %v8035
    %v8086 = vmul.f32 %v8076, %v8036
    %v8087 = vmul.f32 %v8077, %v8037
    %v8088 = vmul.f32 %v8078, %v8038
    %v8089 = vmul.f32 %v8079, %v8039
    %v8090 = vmul.f32 %v8080, %v8040
    %v8091 = vmul.f32 %v8081, %v8041
    %v8092 = vmul.f32 %v8082, %v8042
    %v8093 = vadd.f32 %v8083, -0.28449672
    %v8094 = vadd.f32 %v8084, -0.28449672
    %v8095 = vadd.f32 %v8085, -0.28449672
    %v8096 = vadd.f32 %v8086, -0.28449672
    %v8097 = vadd.f32 %v8087, -0.28449672
    %v8098 = vadd.f32 %v8088, -0.28449672
    %v8099 = vadd.f32 %v8089, -0.28449672
    %v8100 = vadd.f32 %v8090, -0.28449672
    %v8101 = vadd.f32 %v8091, -0.28449672
    %v8102 = vadd.f32 %v8092, -0.28449672
    %v8103 = vmul.f32 %v8093, %v8033
    %v8104 = vmul.f32 %v8094, %v8034
    %v8105 = vmul.f32 %v8095, %v8035
    %v8106 = vmul.f32 %v8096, %v8036
    %v8107 = vmul.f32 %v8097, %v8037
    %v8108 = vmul.f32 %v8098, %v8038
    %v8109 = vmul.f32 %v8099, %v8039
    %v8110 = vmul.f32 %v8100, %v8040
    %v8111 = vmul.f32 %v8101, %v8041
    %v8112 = vmul.f32 %v8102, %v8042
    %v8113 = vadd.f32 %v8103, 0.2548296
    %v8114 = vadd.f32 %v8104, 0.2548296
    %v8115 = vadd.f32 %v8105, 0.2548296
    %v8116 = vadd.f32 %v8106, 0.2548296
    %v8117 = vadd.f32 %v8107, 0.2548296
    %v8118 = vadd.f32 %v8108, 0.2548296
    %v8119 = vadd.f32 %v8109, 0.2548296
    %v8120 = vadd.f32 %v8110, 0.2548296
    %v8121 = vadd.f32 %v8111, 0.2548296
    %v8122 = vadd.f32 %v8112, 0.2548296
    %v8123 = vmul.f32 %v8113, %v8033
    %v8124 = vmul.f32 %v8114, %v8034
    %v8125 = vmul.f32 %v8115, %v8035
    %v8126 = vmul.f32 %v8116, %v8036
    %v8127 = vmul.f32 %v8117, %v8037
    %v8128 = vmul.f32 %v8118, %v8038
    %v8129 = vmul.f32 %v8119, %v8039
    %v8130 = vmul.f32 %v8120, %v8040
    %v8131 = vmul.f32 %v8121, %v8041
    %v8132 = vmul.f32 %v8122, %v8042
    %v8133 = vsub.f32 0.0, %v8003
    %v8134 = vsub.f32 0.0, %v8004
    %v8135 = vsub.f32 0.0, %v8005
    %v8136 = vsub.f32 0.0, %v8006
    %v8137 = vsub.f32 0.0, %v8007
    %v8138 = vsub.f32 0.0, %v8008
    %v8139 = vsub.f32 0.0, %v8009
    %v8140 = vsub.f32 0.0, %v8010
    %v8141 = vsub.f32 0.0, %v8011
    %v8142 = vsub.f32 0.0, %v8012
    %v8143 = vmul.f32 %v8133, %v8003
    %v8144 = vmul.f32 %v8134, %v8004
    %v8145 = vmul.f32 %v8135, %v8005
    %v8146 = vmul.f32 %v8136, %v8006
    %v8147 = vmul.f32 %v8137, %v8007
    %v8148 = vmul.f32 %v8138, %v8008
    %v8149 = vmul.f32 %v8139, %v8009
    %v8150 = vmul.f32 %v8140, %v8010
    %v8151 = vmul.f32 %v8141, %v8011
    %v8152 = vmul.f32 %v8142, %v8012
    %v8153 = vmul.f32 %v8143, 1.442695
    %v8154 = vpow.pop %v8153
    %v8155 = vmul.f32 %v8144, 1.442695
    %v8156 = vpow.pop %v8155
    %v8157 = vmul.f32 %v8145, 1.442695
    %v8158 = vpow.pop %v8157
    %v8159 = vmul.f32 %v8146, 1.442695
    %v8160 = vpow.pop %v8159
    %v8161 = vmul.f32 %v8147, 1.442695
    %v8162 = vpow.pop %v8161
    %v8163 = vmul.f32 %v8148, 1.442695
    %v8164 = vpow.pop %v8163
    %v8165 = vmul.f32 %v8149, 1.442695
    %v8166 = vpow.pop %v8165
    %v8167 = vmul.f32 %v8150, 1.442695
    %v8168 = vpow.pop %v8167
    %v8169 = vmul.f32 %v8151, 1.442695
    %v8170 = vpow.pop %v8169
    %v8171 = vmul.f32 %v8152, 1.442695
    %v8172 = vpow.pop %v8171
    %v8173 = vmul.f32 %v8123, %v8154
    %v8174 = vmul.f32 %v8124, %v8156
    %v8175 = vmul.f32 %v8125, %v8158
    %v8176 = vmul.f32 %v8126, %v8160
    %v8177 = vmul.f32 %v8127, %v8162
    %v8178 = vmul.f32 %v8128, %v8164
    %v8179 = vmul.f32 %v8129, %v8166
    %v8180 = vmul.f32 %v8130, %v8168
    %v8181 = vmul.f32 %v8131, %v8170
    %v8182 = vmul.f32 %v8132, %v8172
    %v8183 = vsub.f32 1.0, %v8173
    %v8184 = vsub.f32 1.0, %v8174
    %v8185 = vsub.f32 1.0, %v8175
    %v8186 = vsub.f32 1.0, %v8176
    %v8187 = vsub.f32 1.0, %v8177
    %v8188 = vsub.f32 1.0, %v8178
    %v8189 = vsub.f32 1.0, %v8179
    %v8190 = vsub.f32 1.0, %v8180
    %v8191 = vsub.f32 1.0, %v8181
    %v8192 = vsub.f32 1.0, %v8182
    %v8193 = vmul.f32 %v7993, %v8183
    %v8194 = vmul.f32 %v7994, %v8184
    %v8195 = vmul.f32 %v7995, %v8185
    %v8196 = vmul.f32 %v7996, %v8186
    %v8197 = vmul.f32 %v7997, %v8187
    %v8198 = vmul.f32 %v7998, %v8188
    %v8199 = vmul.f32 %v7999, %v8189
    %v8200 = vmul.f32 %v8000, %v8190
    %v8201 = vmul.f32 %v8001, %v8191
    %v8202 = vmul.f32 %v8002, %v8192
    %v8203 = vadd.f32 %v8193, 1.0
    %v8204 = vadd.f32 %v8194, 1.0
    %v8205 = vadd.f32 %v8195, 1.0
    %v8206 = vadd.f32 %v8196, 1.0
    %v8207 = vadd.f32 %v8197, 1.0
    %v8208 = vadd.f32 %v8198, 1.0
    %v8209 = vadd.f32 %v8199, 1.0
    %v8210 = vadd.f32 %v8200, 1.0
    %v8211 = vadd.f32 %v8201, 1.0
    %v8212 = vadd.f32 %v8202, 1.0
    %v8213 = vmul.f32 %v7963, %v8203
    %v8214 = vmul.f32 %v7964, %v8204
    %v8215 = vmul.f32 %v7965, %v8205
    %v8216 = vmul.f32 %v7966, %v8206
    %v8217 = vmul.f32 %v7967, %v8207
    %v8218 = vmul.f32 %v7968, %v8208
    %v8219 = vmul.f32 %v7969, %v8209
    %v8220 = vmul.f32 %v7970, %v8210
    %v8221 = vmul.f32 %v7971, %v8211
    %v8222 = vmul.f32 %v7972, %v8212
    %s8223 = scalar_lea.vmem %s14, 128
    %v8224 = vld [vmem:[%s8223] sm:$0xff]
    %v8225 = vld [vmem:[%s8223 + $0x8] sm:$0xff]
    %v8226 = vld [vmem:[%s8223 + $0x10] sm:$0xff]
    %v8227 = vld [vmem:[%s8223 + $0x18] sm:$0xff]
    %v8228 = vld [vmem:[%s8223 + $0x20] sm:$0xff]
    %v8229 = vld [vmem:[%s8223 + $0x28] sm:$0xff]
    %v8230 = vld [vmem:[%s8223 + $0x30] sm:$0xff]
    %v8231 = vld [vmem:[%s8223 + $0x38] sm:$0xff]
    %v8232 = vld [vmem:[%s8223 + $0x40] sm:$0xff]
    %v8233 = vld [vmem:[%s8223 + $0x48] sm:$0xff]
    %v8234 = vld [vmem:[%s8223 + $0x50] sm:$0xff]
    %v8235 = vld [vmem:[%s8223 + $0x58] sm:$0xff]
    %v8236 = vld [vmem:[%s8223 + $0x60] sm:$0xff]
    %v8237 = vld [vmem:[%s8223 + $0x68] sm:$0xff]
    %v8238 = vld [vmem:[%s8223 + $0x70] sm:$0xff]
    %v8239 = vld [vmem:[%s8223 + $0x78] sm:$0xff]
    %s8240 = scalar_lea.vmem %s15, 1
    %v8241 = vld [vmem:[%s8240] sm:$0x1]
    %v8243 = vlaneseq
    %v8244 = vshrl.u32 %v8243, 7
    %v8245 = vsub.s32 0, %v8244
    %v8246 = vrot.slane %v8241, %v8245
    %8248 = vmatprep.subr.mxu0 0.0
    %8249 = vmatpush1.msra.mxu0 %v8239
    %8250 = vmatprep.subr.mxu0 0.0
    %8251 = vmatpush1.msra.mxu0 %v8238
    %8252 = vmatprep.subr.mxu0 0.0
    %8253 = vmatpush1.msra.mxu0 %v8237
    %8254 = vmatprep.subr.mxu0 0.0
    %8255 = vmatpush1.msra.mxu0 %v8236
    %8256 = vmatprep.subr.mxu0 0.0
    %8257 = vmatpush1.msra.mxu0 %v8235
    %8258 = vmatprep.subr.mxu0 0.0
    %8259 = vmatpush1.msra.mxu0 %v8234
    %8260 = vmatprep.subr.mxu0 0.0
    %8261 = vmatpush1.msra.mxu0 %v8233
    %8262 = vmatprep.subr.mxu0 0.0
    %8263 = vmatpush1.msra.mxu0 %v8232
    %8264 = vmatprep.subr.mxu0 0.0
    %8265 = vmatpush1.msra.mxu0 %v8231
    %8266 = vmatprep.subr.mxu0 0.0
    %8267 = vmatpush1.msra.mxu0 %v8230
    %8268 = vmatprep.subr.mxu0 0.0
    %8269 = vmatpush1.msra.mxu0 %v8229
    %8270 = vmatprep.subr.mxu0 0.0
    %8271 = vmatpush1.msra.mxu0 %v8228
    %8272 = vmatprep.subr.mxu0 0.0
    %8273 = vmatpush1.msra.mxu0 %v8227
    %8274 = vmatprep.subr.mxu0 0.0
    %8275 = vmatpush1.msra.mxu0 %v8226
    %8276 = vmatprep.subr.mxu0 0.0
    %8277 = vmatpush1.msra.mxu0 %v8225
    %8278 = vmatprep.subr.mxu0 0.0
    %8279 = vmatpush1.msra.mxu0 %v8224
    %8280 = vmatprep.subr.mxu0 0.0
    %8281 = vmatpush2.msra.mxu0 0.0
    %8282 = vmatprep.subr.mxu0 0.0
    %8283 = vmatpush2.msra.mxu0 0.0
    %8284 = vmatprep.subr.mxu0 0.0
    %8285 = vmatpush2.msra.mxu0 0.0
    %8286 = vmatprep.subr.mxu0 0.0
    %8287 = vmatpush2.msra.mxu0 0.0
    %8288 = vmatprep.subr.mxu0 0.0
    %8289 = vmatpush2.msra.mxu0 0.0
    %8290 = vmatprep.subr.mxu0 0.0
    %8291 = vmatpush2.msra.mxu0 0.0
    %8292 = vmatprep.subr.mxu0 0.0
    %8293 = vmatpush2.msra.mxu0 0.0
    %8294 = vmatprep.subr.mxu0 0.0
    %8295 = vmatpush2.msra.mxu0 0.0
    %8296 = vmatprep.subr.mxu0 0.0
    %8297 = vmatpush2.msra.mxu0 0.0
    %8298 = vmatprep.subr.mxu0 0.0
    %8299 = vmatpush2.msra.mxu0 0.0
    %8300 = vmatprep.subr.mxu0 0.0
    %8301 = vmatpush2.msra.mxu0 0.0
    %8302 = vmatprep.subr.mxu0 0.0
    %8303 = vmatpush2.msra.mxu0 0.0
    %8304 = vmatprep.subr.mxu0 0.0
    %8305 = vmatpush2.msra.mxu0 0.0
    %8306 = vmatprep.subr.mxu0 0.0
    %8307 = vmatpush2.msra.mxu0 0.0
    %8308 = vmatprep.subr.mxu0 0.0
    %8309 = vmatpush2.msra.mxu0 0.0
    %8310 = vmatprep.subr.mxu0 0.0
    %8311 = vmatpush2.msra.mxu0 0.0
    %8312 = vmatprep.mubr.f32.mxu0 0.0
    %8313 = vmatmul.mubr.f32.gmra.mxu0 %v8213
    %v8314 = vpop.f32.mrf.mxu0
    %v8315 = vadd.f32 %v8246, %v8314
    %v8316 = vpop.f32.mrf.mxu0
    %8317 = vmatprep.mubr.f32.mxu0 0.0
    %8318 = vmatmul.mubr.f32.gmra.mxu0 %v8214
    %v8319 = vpop.f32.mrf.mxu0
    %v8320 = vadd.f32 %v8246, %v8319
    %v8321 = vpop.f32.mrf.mxu0
    %8322 = vmatprep.mubr.f32.mxu0 0.0
    %8323 = vmatmul.mubr.f32.gmra.mxu0 %v8215
    %v8324 = vpop.f32.mrf.mxu0
    %v8325 = vadd.f32 %v8246, %v8324
    %v8326 = vpop.f32.mrf.mxu0
    %8327 = vmatprep.mubr.f32.mxu0 0.0
    %8328 = vmatmul.mubr.f32.gmra.mxu0 %v8216
    %v8329 = vpop.f32.mrf.mxu0
    %v8330 = vadd.f32 %v8246, %v8329
    %v8331 = vpop.f32.mrf.mxu0
    %8332 = vmatprep.mubr.f32.mxu0 0.0
    %8333 = vmatmul.mubr.f32.gmra.mxu0 %v8217
    %v8334 = vpop.f32.mrf.mxu0
    %v8335 = vadd.f32 %v8246, %v8334
    %v8336 = vpop.f32.mrf.mxu0
    %8337 = vmatprep.mubr.f32.mxu0 0.0
    %8338 = vmatmul.mubr.f32.gmra.mxu0 %v8218
    %v8339 = vpop.f32.mrf.mxu0
    %v8340 = vadd.f32 %v8246, %v8339
    %v8341 = vpop.f32.mrf.mxu0
    %8342 = vmatprep.mubr.f32.mxu0 0.0
    %8343 = vmatmul.mubr.f32.gmra.mxu0 %v8219
    %v8344 = vpop.f32.mrf.mxu0
    %v8345 = vadd.f32 %v8246, %v8344
    %v8346 = vpop.f32.mrf.mxu0
    %8347 = vmatprep.mubr.f32.mxu0 0.0
    %8348 = vmatmul.mubr.f32.gmra.mxu0 %v8220
    %v8349 = vpop.f32.mrf.mxu0
    %v8350 = vadd.f32 %v8246, %v8349
    %v8351 = vpop.f32.mrf.mxu0
    %8352 = vmatprep.mubr.f32.mxu0 0.0
    %8353 = vmatmul.mubr.f32.gmra.mxu0 %v8221
    %v8354 = vpop.f32.mrf.mxu0
    %v8355 = vadd.f32 %v8246, %v8354
    %v8356 = vpop.f32.mrf.mxu0
    %8357 = vmatprep.mubr.f32.mxu0 0.0
    %8358 = vmatmul.mubr.f32.gmra.mxu0 %v8222
    %v8359 = vpop.f32.mrf.mxu0
    %v8360 = vadd.f32 %v8246, %v8359
    %v8361 = vpop.f32.mrf.mxu0
    %8362 = vdwg.mxu0
    %v8363 = vadd.f32 %v7645, %v8315
    %v8364 = vadd.f32 %v7646, %v8320
    %v8365 = vadd.f32 %v7647, %v8325
    %v8366 = vadd.f32 %v7648, %v8330
    %v8367 = vadd.f32 %v7649, %v8335
    %v8368 = vadd.f32 %v7650, %v8340
    %v8369 = vadd.f32 %v7651, %v8345
    %v8370 = vadd.f32 %v7652, %v8350
    %v8371 = vadd.f32 %v7653, %v8355
    %v8372 = vadd.f32 %v7654, %v8360
    %s8373 = scalar_lea.vmem %s16, 80
    %8374 = vst.msk [vmem:[%s8373] sm:$0xff] %vm86, %v8363
    %8375 = vst.msk [vmem:[%s8373 + $0x8] sm:$0xff] %vm86, %v8364
    %8376 = vst.msk [vmem:[%s8373 + $0x10] sm:$0xff] %vm86, %v8365
    %8377 = vst.msk [vmem:[%s8373 + $0x18] sm:$0xff] %vm86, %v8366
    %8378 = vst.msk [vmem:[%s8373 + $0x20] sm:$0xff] %vm86, %v8367
    %8379 = vst.msk [vmem:[%s8373 + $0x28] sm:$0xff] %vm86, %v8368
    %8380 = vst.msk [vmem:[%s8373 + $0x30] sm:$0xff] %vm86, %v8369
    %8381 = vst.msk [vmem:[%s8373 + $0x38] sm:$0xff] %vm86, %v8370
    %8382 = vst.msk [vmem:[%s8373 + $0x40] sm:$0xff] %vm86, %v8371
    %8383 = vst.msk [vmem:[%s8373 + $0x48] sm:$0xff] %vm86, %v8372
    // Predicated region
    $region66: #{transformer_forward.1} parent=1 // pred_check
      _
    $region67: #{transformer_forward.1} parent=1 // pred_check_branch
      %8385 = sbr.rel (0) target = $region69
    $region68: #{transformer_forward.1} parent=1 // pred_region
      _
    $region69: #{transformer_forward.1} parent=1 // pred_fallthru
      _
    // Predicated region
    $region70: #{transformer_forward.1} parent=1 // pred_check
      _
    $region71: #{transformer_forward.1} parent=1 // pred_check_branch
      %8387 = sbr.rel (0) target = $region73
    $region72: #{transformer_forward.1} parent=1 // pred_region
      %s8389 = ssub.s32 10240, 10240
      %8390 = vsyncadd [#allocation3], %s8389
      %s8391 = sshll.u32 [#allocation2], 4
      %s8392 = int_to_ptr.vmem [resolvable:$true] %s8391
      %8397 = dma.vmem_to_hbm [thread:$0]  %s8392, 10240, %s17, [#allocation3], 128, 128, 8
    $region73: #{transformer_forward.1} parent=1 // pred_fallthru
      _
    // Predicated region
    $region74: #{transformer_forward.1} parent=1 // pred_check
      _
    $region75: #{transformer_forward.1} parent=1 // pred_check_branch
      %8399 = sbr.rel (0) target = $region77
    $region76: #{transformer_forward.1} parent=1 // pred_region
      _
    $region77: #{transformer_forward.1} parent=1 // pred_fallthru
      _
    // Predicated region
    $region78: #{transformer_forward.1} parent=1 // pred_check
      _
    $region79: #{transformer_forward.1} parent=1 // pred_check_branch
      %8401 = sbr.rel (0) target = $region81
    $region80: #{transformer_forward.1} parent=1 // pred_region
      %8402 = dma.done [#allocation3], 10240
    $region81: #{transformer_forward.1} parent=1 // pred_fallthru
      _
    %8403 = vsyncpa [#allocation3], 1

</llo_original>
